<compile_context>
chip_gen: v6e
topology: v6e:2x2x1
jax: 0.10.0
libtpu: 0.0.40
codegen_flags: <defaults>
</compile_context>

<pallas_src>
import functools
import random

import jax
import jax.numpy as jnp
from jax import lax
from jax.experimental import pallas as pl
from jax.experimental.pallas import tpu as pltpu

EPS = 1e-5


# ----------------------------------------------------------------------------
# fused kernel: BN1+ReLU+1x1 conv -> BN2+ReLU+3x3 conv (9 tap matmuls)
#               -> BN3+ReLU+dw3x3 -> permuted group max-pool -> concat stores
# ----------------------------------------------------------------------------
def _fused_kernel(x_ref, g1_ref, b1_ref, g2_ref, b2_ref, g3_ref, b3_ref,
                  w1_ref, w2_ref, w3_ref, sel_ref, o_ref,
                  pad2_ref, pad3_ref,
                  *, N, H, W, in_planes, interC, growth, G):
    M = N * H * W
    inv_m = 1.0 / float(M)

    x = x_ref[...]                                             # [M, in_planes] f32

    def bn_relu(t, g_ref, b_ref):
        # training-mode BatchNorm, single-pass stats: var = E[t^2] - mean^2
        mean = jnp.sum(t, axis=0, keepdims=True) * inv_m       # [1, C]
        mean_sq = jnp.sum(t * t, axis=0, keepdims=True) * inv_m
        var = jnp.maximum(mean_sq - mean * mean, 0.0)          # guard cancellation
        scale = g_ref[...] * lax.rsqrt(var + EPS)
        shift = b_ref[...] - mean * scale
        return jnp.maximum(t * scale + shift, 0.0)

    # ---- stage 1: BN1 + ReLU + 1x1 conv (single bf16 MXU matmul) ------------
    act1 = bn_relu(x, g1_ref, b1_ref)                          # [M, in_planes]
    out1 = jnp.dot(act1.astype(jnp.bfloat16), w1_ref[...],
                   preferred_element_type=jnp.float32)         # [M, interC]

    # ---- stage 2: BN2 + ReLU + 3x3 conv as 9 tap-accumulated matmuls --------
    act2 = bn_relu(out1, g2_ref, b2_ref)                       # [M, interC]

    # zero-padded spatial scratch: write the interior, zero only the halo
    pad2_ref[:, 1:H + 1, 1:W + 1, :] = act2.reshape(N, H, W, interC)
    zrow2 = jnp.zeros((N, 1, W + 2, interC), jnp.float32)
    zcol2 = jnp.zeros((N, H + 2, 1, interC), jnp.float32)
    pad2_ref[:, 0:1, :, :] = zrow2
    pad2_ref[:, H + 1:H + 2, :, :] = zrow2
    pad2_ref[:, :, 0:1, :] = zcol2
    pad2_ref[:, :, W + 1:W + 2, :] = zcol2

    out_dc = jnp.zeros((M, growth), jnp.float32)
    for dy in range(3):
        for dx in range(3):
            win = pad2_ref[:, dy:dy + H, dx:dx + W, :].reshape(M, interC)
            out_dc = out_dc + jnp.dot(win.astype(jnp.bfloat16), w2_ref[dy, dx],
                                      preferred_element_type=jnp.float32)

    # ---- stage 3: BN3 + ReLU + depthwise 3x3 + permuted group max-pool ------
    act3 = bn_relu(out_dc, g3_ref, b3_ref)                     # [M, growth]

    pad3_ref[:, 1:H + 1, 1:W + 1, :] = act3.reshape(N, H, W, growth)
    zrow3 = jnp.zeros((N, 1, W + 2, growth), jnp.float32)
    zcol3 = jnp.zeros((N, H + 2, 1, growth), jnp.float32)
    pad3_ref[:, 0:1, :, :] = zrow3
    pad3_ref[:, H + 1:H + 2, :, :] = zrow3
    pad3_ref[:, :, 0:1, :] = zcol3
    pad3_ref[:, :, W + 1:W + 2, :] = zcol3

    dw = jnp.zeros((N, H, W, growth), jnp.float32)
    for dy in range(3):
        for dx in range(3):
            # w3_ref[dy, dx] has shape [1, growth] -> per-channel (depthwise) tap
            dw = dw + pad3_ref[:, dy:dy + H, dx:dx + W, :] * w3_ref[dy, dx]
    dw2d = dw.reshape(M, growth)

    # static channel permutation + MaxPool3d((G,1,1)):
    #   pooled[:, g] = max_j dw2d[:, index[g*G + j]]
    # applied as G per-group [growth, growth] 0/1 selection matmuls folded into
    # a running max (no [M, G*growth] intermediate, exact column picks).
    pooled = jnp.dot(dw2d, sel_ref[0], preferred_element_type=jnp.float32)
    for j in range(1, G):
        pooled = jnp.maximum(
            pooled, jnp.dot(dw2d, sel_ref[j], preferred_element_type=jnp.float32))

    # final cat((pooled, out_dc, x[:, :in_planes-growth])) via direct slice stores
    out_c = in_planes + growth
    o_ref[:, 0:growth] = pooled
    o_ref[:, growth:2 * growth] = out_dc
    o_ref[:, 2 * growth:out_c] = x[:, :in_planes - growth]


# ----------------------------------------------------------------------------
# wrappers
# ----------------------------------------------------------------------------
def prcn_forward_nhwc(x_nhwc, p, index_mod, G):
    N, H, W, in_planes = x_nhwc.shape
    interC = p["w1"].shape[1]
    growth = p["w2"].shape[-1]
    M = N * H * W
    out_c = in_planes + growth

    x2d = x_nhwc.reshape(M, in_planes).astype(jnp.float32)

    # weight prep (tiny, wrapper-side): bf16 MXU operands, per-group 0/1
    # selection matrices encoding the static channel permutation.
    w1 = p["w1"].astype(jnp.bfloat16)                     # [in_planes, interC]
    w2 = p["w2"].astype(jnp.bfloat16)                     # [3, 3, interC, growth]
    w3 = p["w3"].astype(jnp.float32)                      # [3, 3, 1, growth]

    sel_host = [[[1.0 if index_mod[g * G + j] == c else 0.0
                  for g in range(growth)]
                 for c in range(growth)]
                for j in range(G)]
    sels = jnp.array(sel_host, jnp.float32)               # [G, growth, growth]

    def c2(v):  # per-channel vector -> [1, C] for in-kernel broadcast
        return v.reshape(1, -1).astype(jnp.float32)

    kern = functools.partial(_fused_kernel, N=N, H=H, W=W, in_planes=in_planes,
                             interC=interC, growth=growth, G=G)

    out2d = pl.pallas_call(
        kern,
        out_shape=jax.ShapeDtypeStruct((M, out_c), jnp.float32),
        # grid-less call: every operand is a full block resident in VMEM, so no
        # double-buffering of the big input/output for a single-step pipeline.
        in_specs=[pl.BlockSpec(memory_space=pltpu.MemorySpace.VMEM)
                  for _ in range(11)],
        out_specs=pl.BlockSpec(memory_space=pltpu.MemorySpace.VMEM),
        scratch_shapes=[
            pltpu.VMEM((N, H + 2, W + 2, interC), jnp.float32),
            pltpu.VMEM((N, H + 2, W + 2, growth), jnp.float32),
        ],
        compiler_params=pltpu.CompilerParams(
            vmem_limit_bytes=32 * 1024 * 1024),
    )(x2d, c2(p["g1"]), c2(p["b1"]), c2(p["g2"]), c2(p["b2"]),
      c2(p["g3"]), c2(p["b3"]), w1, w2, w3, sels)

    return out2d.reshape(N, H, W, out_c)


def prcn_forward(x_nchw, p, index_mod, G):
    x_nhwc = jnp.transpose(x_nchw, (0, 2, 3, 1)).astype(jnp.float32)   # -> NHWC
    out = prcn_forward_nhwc(x_nhwc, p, index_mod, G)
    return jnp.transpose(out, (0, 3, 1, 2))                            # -> NCHW


# ----------------------------------------------------------------------------
# pure-JAX reference (f32 end to end) for sanity checking
# ----------------------------------------------------------------------------
def reference(x_nchw, p, index_mod, G):
    x = jnp.transpose(x_nchw, (0, 2, 3, 1)).astype(jnp.float32)
    in_planes = x.shape[-1]

    def bn_relu(t, gamma, beta):
        m = jnp.mean(t, axis=(0, 1, 2))
        v = jnp.var(t, axis=(0, 1, 2))
        return jnp.maximum((t - m) / jnp.sqrt(v + EPS) * gamma + beta, 0.0)

    dn = ("NHWC", "HWIO", "NHWC")
    a1 = bn_relu(x, p["g1"], p["b1"])
    out1 = jnp.einsum("nhwc,cd->nhwd", a1, p["w1"])
    a2 = bn_relu(out1, p["g2"], p["b2"])
    out_dc = jax.lax.conv_general_dilated(a2, p["w2"], (1, 1), "SAME",
                                          dimension_numbers=dn)
    growth = out_dc.shape[-1]
    a3 = bn_relu(out_dc, p["g3"], p["b3"])
    dw = jax.lax.conv_general_dilated(a3, p["w3"], (1, 1), "SAME",
                                      dimension_numbers=dn,
                                      feature_group_count=growth)
    gathered = dw[..., jnp.array(index_mod)]
    pooled = jnp.max(gathered.reshape(*dw.shape[:3], growth, G), axis=-1)
    keep = x[..., : in_planes - growth]
    out = jnp.concatenate([pooled, out_dc, keep], axis=-1)
    return jnp.transpose(out, (0, 3, 1, 2))


# ----------------------------------------------------------------------------
if __name__ == "__main__":
    in_planes, growth_rate, G = 8, 4, 4
    interC = 4 * growth_rate
    N, H, W = 2, 16, 16

    # deterministic channel permutation (module builds it with random.shuffle)
    perm = list(range(growth_rate * G))
    random.Random(0).shuffle(perm)
    # TODO(synk): the original PyTorch code indexes a growth_rate-channel tensor
    # with indices up to growth_rate*G-1 (out of range); we take them modulo
    # growth_rate so the permutation + MaxPool3d((G,1,1)) is well-defined.
    index_mod = [i % growth_rate for i in perm]

    key = jax.random.PRNGKey(0)
    ks = jax.random.split(key, 10)
    params = {
        "g1": 1.0 + 0.1 * jax.random.normal(ks[0], (in_planes,), jnp.float32),
        "b1": 0.1 * jax.random.normal(ks[1], (in_planes,), jnp.float32),
        "w1": 0.3 * jax.random.normal(ks[2], (in_planes, interC), jnp.float32),
        "g2": 1.0 + 0.1 * jax.random.normal(ks[3], (interC,), jnp.float32),
        "b2": 0.1 * jax.random.normal(ks[4], (interC,), jnp.float32),
        "w2": 0.2 * jax.random.normal(ks[5], (3, 3, interC, growth_rate), jnp.float32),
        "g3": 1.0 + 0.1 * jax.random.normal(ks[6], (growth_rate,), jnp.float32),
        "b3": 0.1 * jax.random.normal(ks[7], (growth_rate,), jnp.float32),
        "w3": 0.3 * jax.random.normal(ks[8], (3, 3, 1, growth_rate), jnp.float32),
    }
    x = jax.random.normal(ks[9], (N, in_planes, H, W), jnp.float32)

    fwd = jax.jit(functools.partial(prcn_forward, index_mod=tuple(index_mod), G=G))
    out = jax.block_until_ready(fwd(x, params))

    assert out.shape == (N, in_planes + growth_rate, H, W), out.shape

    ref = jax.block_until_ready(reference(x, params, index_mod, G))
    max_err = float(jnp.max(jnp.abs(out - ref)))
    if max_err > 5e-2:
        raise AssertionError(f"kernel/reference mismatch: max abs err {max_err}")

    print("KERNEL_OK")
</pallas_src>

<mosaic_0001>
module attributes {stable_mosaic.version = 11 : i64} {
  func.func @_fused_kernel(%arg0: memref<512x8xf32, #tpu.memory_space<vmem>>, %arg1: memref<1x8xf32, #tpu.memory_space<vmem>>, %arg2: memref<1x8xf32, #tpu.memory_space<vmem>>, %arg3: memref<1x16xf32, #tpu.memory_space<vmem>>, %arg4: memref<1x16xf32, #tpu.memory_space<vmem>>, %arg5: memref<1x4xf32, #tpu.memory_space<vmem>>, %arg6: memref<1x4xf32, #tpu.memory_space<vmem>>, %arg7: memref<8x16xbf16, #tpu.memory_space<vmem>>, %arg8: memref<3x3x16x4xbf16, #tpu.memory_space<vmem>>, %arg9: memref<3x3x1x4xf32, #tpu.memory_space<vmem>>, %arg10: memref<4x4x4xf32, #tpu.memory_space<vmem>>, %arg11: memref<512x12xf32, #tpu.memory_space<vmem>>, %arg12: memref<2x18x18x16xf32, #tpu.memory_space<vmem>>, %arg13: memref<2x18x18x4xf32, #tpu.memory_space<vmem>>) attributes {dimension_semantics = [], scalar_prefetch = 0 : i64, scratch_operands = 2 : i64, tpu.core_type = #tpu.core_type<tc>} {
    %c0 = arith.constant 0 : index
    %c0_0 = arith.constant 0 : index
    %0 = vector.load %arg0[%c0, %c0_0] : memref<512x8xf32, #tpu.memory_space<vmem>>, vector<512x8xf32>
    %cst = arith.constant dense<0.000000e+00> : vector<8xf32>
    %1 = vector.multi_reduction <add>, %0, %cst [0] : vector<512x8xf32> to vector<8xf32>
    %2 = vector.shape_cast %1 : vector<8xf32> to vector<1x8xf32>
    %cst_1 = arith.constant 0.001953125 : f32
    %3 = vector.broadcast %cst_1 : f32 to vector<1x8xf32>
    %4 = arith.mulf %2, %3 : vector<1x8xf32>
    %5 = arith.mulf %0, %0 : vector<512x8xf32>
    %cst_2 = arith.constant dense<0.000000e+00> : vector<8xf32>
    %6 = vector.multi_reduction <add>, %5, %cst_2 [0] : vector<512x8xf32> to vector<8xf32>
    %7 = vector.shape_cast %6 : vector<8xf32> to vector<1x8xf32>
    %cst_3 = arith.constant 0.001953125 : f32
    %8 = vector.broadcast %cst_3 : f32 to vector<1x8xf32>
    %9 = arith.mulf %7, %8 : vector<1x8xf32>
    %10 = arith.mulf %4, %4 : vector<1x8xf32>
    %11 = arith.subf %9, %10 : vector<1x8xf32>
    %cst_4 = arith.constant 0.000000e+00 : f32
    %12 = vector.broadcast %cst_4 : f32 to vector<1x8xf32>
    %13 = arith.maximumf %11, %12 : vector<1x8xf32>
    %c0_5 = arith.constant 0 : index
    %c0_6 = arith.constant 0 : index
    %14 = vector.load %arg1[%c0_5, %c0_6] : memref<1x8xf32, #tpu.memory_space<vmem>>, vector<1x8xf32>
    %cst_7 = arith.constant 9.99999974E-6 : f32
    %15 = vector.broadcast %cst_7 : f32 to vector<1x8xf32>
    %16 = arith.addf %13, %15 : vector<1x8xf32>
    %17 = math.rsqrt %16 : vector<1x8xf32>
    %18 = arith.mulf %14, %17 : vector<1x8xf32>
    %c0_8 = arith.constant 0 : index
    %c0_9 = arith.constant 0 : index
    %19 = vector.load %arg2[%c0_8, %c0_9] : memref<1x8xf32, #tpu.memory_space<vmem>>, vector<1x8xf32>
    %20 = arith.mulf %4, %18 : vector<1x8xf32>
    %21 = arith.subf %19, %20 : vector<1x8xf32>
    %22 = vector.broadcast %18 : vector<1x8xf32> to vector<512x8xf32>
    %23 = arith.mulf %0, %22 : vector<512x8xf32>
    %24 = vector.broadcast %21 : vector<1x8xf32> to vector<512x8xf32>
    %25 = arith.addf %23, %24 : vector<512x8xf32>
    %cst_10 = arith.constant 0.000000e+00 : f32
    %26 = vector.broadcast %cst_10 : f32 to vector<512x8xf32>
    %27 = arith.maximumf %25, %26 : vector<512x8xf32>
    %28 = arith.truncf %27 : vector<512x8xf32> to vector<512x8xbf16>
    %c0_11 = arith.constant 0 : index
    %c0_12 = arith.constant 0 : index
    %29 = vector.load %arg7[%c0_11, %c0_12] : memref<8x16xbf16, #tpu.memory_space<vmem>>, vector<8x16xbf16>
    %cst_13 = arith.constant dense<0.000000e+00> : vector<512x16xf32>
    %30 = tpu.matmul %28, %29, %cst_13 {dimension_numbers = #tpu.dot_dimension_numbers<[1], [0], [0], [1], [0, 0, 1, 1], [], []>} : vector<512x8xbf16>, vector<8x16xbf16>, vector<512x16xf32> -> vector<512x16xf32>
    %cst_14 = arith.constant dense<0.000000e+00> : vector<16xf32>
    %31 = vector.multi_reduction <add>, %30, %cst_14 [0] : vector<512x16xf32> to vector<16xf32>
    %32 = vector.shape_cast %31 : vector<16xf32> to vector<1x16xf32>
    %cst_15 = arith.constant 0.001953125 : f32
    %33 = vector.broadcast %cst_15 : f32 to vector<1x16xf32>
    %34 = arith.mulf %32, %33 : vector<1x16xf32>
    %35 = arith.mulf %30, %30 : vector<512x16xf32>
    %cst_16 = arith.constant dense<0.000000e+00> : vector<16xf32>
    %36 = vector.multi_reduction <add>, %35, %cst_16 [0] : vector<512x16xf32> to vector<16xf32>
    %37 = vector.shape_cast %36 : vector<16xf32> to vector<1x16xf32>
    %cst_17 = arith.constant 0.001953125 : f32
    %38 = vector.broadcast %cst_17 : f32 to vector<1x16xf32>
    %39 = arith.mulf %37, %38 : vector<1x16xf32>
    %40 = arith.mulf %34, %34 : vector<1x16xf32>
    %41 = arith.subf %39, %40 : vector<1x16xf32>
    %cst_18 = arith.constant 0.000000e+00 : f32
    %42 = vector.broadcast %cst_18 : f32 to vector<1x16xf32>
    %43 = arith.maximumf %41, %42 : vector<1x16xf32>
    %c0_19 = arith.constant 0 : index
    %c0_20 = arith.constant 0 : index
    %44 = vector.load %arg3[%c0_19, %c0_20] : memref<1x16xf32, #tpu.memory_space<vmem>>, vector<1x16xf32>
    %cst_21 = arith.constant 9.99999974E-6 : f32
    %45 = vector.broadcast %cst_21 : f32 to vector<1x16xf32>
    %46 = arith.addf %43, %45 : vector<1x16xf32>
    %47 = math.rsqrt %46 : vector<1x16xf32>
    %48 = arith.mulf %44, %47 : vector<1x16xf32>
    %c0_22 = arith.constant 0 : index
    %c0_23 = arith.constant 0 : index
    %49 = vector.load %arg4[%c0_22, %c0_23] : memref<1x16xf32, #tpu.memory_space<vmem>>, vector<1x16xf32>
    %50 = arith.mulf %34, %48 : vector<1x16xf32>
    %51 = arith.subf %49, %50 : vector<1x16xf32>
    %52 = vector.broadcast %48 : vector<1x16xf32> to vector<512x16xf32>
    %53 = arith.mulf %30, %52 : vector<512x16xf32>
    %54 = vector.broadcast %51 : vector<1x16xf32> to vector<512x16xf32>
    %55 = arith.addf %53, %54 : vector<512x16xf32>
    %cst_24 = arith.constant 0.000000e+00 : f32
    %56 = vector.broadcast %cst_24 : f32 to vector<512x16xf32>
    %57 = arith.maximumf %55, %56 : vector<512x16xf32>
    %58 = vector.shape_cast %57 : vector<512x16xf32> to vector<2x16x16x16xf32>
    %c0_25 = arith.constant 0 : index
    %c1 = arith.constant 1 : index
    %c1_26 = arith.constant 1 : index
    %c0_27 = arith.constant 0 : index
    %59 = vector.load %arg12[%c0_25, %c1, %c1_26, %c0_27] : memref<2x18x18x16xf32, #tpu.memory_space<vmem>>, vector<2x16x16x16xf32>
    tpu.vector_store %arg12[%c0_25, %c1, %c1_26, %c0_27], %58 {strides = array<i32>} : memref<2x18x18x16xf32, #tpu.memory_space<vmem>>, vector<2x16x16x16xf32>,
    %cst_28 = arith.constant 0.000000e+00 : f32
    %60 = vector.broadcast %cst_28 : f32 to vector<2x1x18x16xf32>
    %cst_29 = arith.constant 0.000000e+00 : f32
    %61 = vector.broadcast %cst_29 : f32 to vector<2x18x1x16xf32>
    %c0_30 = arith.constant 0 : index
    %c0_31 = arith.constant 0 : index
    %c0_32 = arith.constant 0 : index
    %c0_33 = arith.constant 0 : index
    %62 = vector.load %arg12[%c0_30, %c0_31, %c0_32, %c0_33] : memref<2x18x18x16xf32, #tpu.memory_space<vmem>>, vector<2x1x18x16xf32>
    tpu.vector_store %arg12[%c0_30, %c0_31, %c0_32, %c0_33], %60 {strides = array<i32>} : memref<2x18x18x16xf32, #tpu.memory_space<vmem>>, vector<2x1x18x16xf32>,
    %c0_34 = arith.constant 0 : index
    %c17 = arith.constant 17 : index
    %c0_35 = arith.constant 0 : index
    %c0_36 = arith.constant 0 : index
    %63 = vector.load %arg12[%c0_34, %c17, %c0_35, %c0_36] : memref<2x18x18x16xf32, #tpu.memory_space<vmem>>, vector<2x1x18x16xf32>
    tpu.vector_store %arg12[%c0_34, %c17, %c0_35, %c0_36], %60 {strides = array<i32>} : memref<2x18x18x16xf32, #tpu.memory_space<vmem>>, vector<2x1x18x16xf32>,
    %c0_37 = arith.constant 0 : index
    %c0_38 = arith.constant 0 : index
    %c0_39 = arith.constant 0 : index
    %c0_40 = arith.constant 0 : index
    %64 = vector.load %arg12[%c0_37, %c0_38, %c0_39, %c0_40] : memref<2x18x18x16xf32, #tpu.memory_space<vmem>>, vector<2x18x1x16xf32>
    tpu.vector_store %arg12[%c0_37, %c0_38, %c0_39, %c0_40], %61 {strides = array<i32>} : memref<2x18x18x16xf32, #tpu.memory_space<vmem>>, vector<2x18x1x16xf32>,
    %c0_41 = arith.constant 0 : index
    %c0_42 = arith.constant 0 : index
    %c17_43 = arith.constant 17 : index
    %c0_44 = arith.constant 0 : index
    %65 = vector.load %arg12[%c0_41, %c0_42, %c17_43, %c0_44] : memref<2x18x18x16xf32, #tpu.memory_space<vmem>>, vector<2x18x1x16xf32>
    tpu.vector_store %arg12[%c0_41, %c0_42, %c17_43, %c0_44], %61 {strides = array<i32>} : memref<2x18x18x16xf32, #tpu.memory_space<vmem>>, vector<2x18x1x16xf32>,
    %cst_45 = arith.constant 0.000000e+00 : f32
    %66 = vector.broadcast %cst_45 : f32 to vector<512x4xf32>
    %c0_46 = arith.constant 0 : index
    %c0_47 = arith.constant 0 : index
    %c0_48 = arith.constant 0 : index
    %c0_49 = arith.constant 0 : index
    %67 = vector.load %arg12[%c0_46, %c0_47, %c0_48, %c0_49] : memref<2x18x18x16xf32, #tpu.memory_space<vmem>>, vector<2x16x16x16xf32>
    %68 = vector.shape_cast %67 : vector<2x16x16x16xf32> to vector<512x16xf32>
    %69 = arith.truncf %68 : vector<512x16xf32> to vector<512x16xbf16>
    %c0_50 = arith.constant 0 : index
    %c0_51 = arith.constant 0 : index
    %c0_52 = arith.constant 0 : index
    %c0_53 = arith.constant 0 : index
    %70 = vector.load %arg8[%c0_50, %c0_51, %c0_52, %c0_53] : memref<3x3x16x4xbf16, #tpu.memory_space<vmem>>, vector<1x1x16x4xbf16>
    %71 = vector.shape_cast %70 : vector<1x1x16x4xbf16> to vector<16x4xbf16>
    %cst_54 = arith.constant dense<0.000000e+00> : vector<512x4xf32>
    %72 = tpu.matmul %69, %71, %cst_54 {dimension_numbers = #tpu.dot_dimension_numbers<[1], [0], [0], [1], [0, 0, 1, 1], [], []>} : vector<512x16xbf16>, vector<16x4xbf16>, vector<512x4xf32> -> vector<512x4xf32>
    %73 = arith.addf %66, %72 : vector<512x4xf32>
    %c0_55 = arith.constant 0 : index
    %c0_56 = arith.constant 0 : index
    %c1_57 = arith.constant 1 : index
    %c0_58 = arith.constant 0 : index
    %74 = vector.load %arg12[%c0_55, %c0_56, %c1_57, %c0_58] : memref<2x18x18x16xf32, #tpu.memory_space<vmem>>, vector<2x16x16x16xf32>
    %75 = vector.shape_cast %74 : vector<2x16x16x16xf32> to vector<512x16xf32>
    %76 = arith.truncf %75 : vector<512x16xf32> to vector<512x16xbf16>
    %c0_59 = arith.constant 0 : index
    %c1_60 = arith.constant 1 : index
    %c0_61 = arith.constant 0 : index
    %c0_62 = arith.constant 0 : index
    %77 = vector.load %arg8[%c0_59, %c1_60, %c0_61, %c0_62] : memref<3x3x16x4xbf16, #tpu.memory_space<vmem>>, vector<1x1x16x4xbf16>
    %78 = vector.shape_cast %77 : vector<1x1x16x4xbf16> to vector<16x4xbf16>
    %cst_63 = arith.constant dense<0.000000e+00> : vector<512x4xf32>
    %79 = tpu.matmul %76, %78, %cst_63 {dimension_numbers = #tpu.dot_dimension_numbers<[1], [0], [0], [1], [0, 0, 1, 1], [], []>} : vector<512x16xbf16>, vector<16x4xbf16>, vector<512x4xf32> -> vector<512x4xf32>
    %80 = arith.addf %73, %79 : vector<512x4xf32>
    %c0_64 = arith.constant 0 : index
    %c0_65 = arith.constant 0 : index
    %c2 = arith.constant 2 : index
    %c0_66 = arith.constant 0 : index
    %81 = vector.load %arg12[%c0_64, %c0_65, %c2, %c0_66] : memref<2x18x18x16xf32, #tpu.memory_space<vmem>>, vector<2x16x16x16xf32>
    %82 = vector.shape_cast %81 : vector<2x16x16x16xf32> to vector<512x16xf32>
    %83 = arith.truncf %82 : vector<512x16xf32> to vector<512x16xbf16>
    %c0_67 = arith.constant 0 : index
    %c2_68 = arith.constant 2 : index
    %c0_69 = arith.constant 0 : index
    %c0_70 = arith.constant 0 : index
    %84 = vector.load %arg8[%c0_67, %c2_68, %c0_69, %c0_70] : memref<3x3x16x4xbf16, #tpu.memory_space<vmem>>, vector<1x1x16x4xbf16>
    %85 = vector.shape_cast %84 : vector<1x1x16x4xbf16> to vector<16x4xbf16>
    %cst_71 = arith.constant dense<0.000000e+00> : vector<512x4xf32>
    %86 = tpu.matmul %83, %85, %cst_71 {dimension_numbers = #tpu.dot_dimension_numbers<[1], [0], [0], [1], [0, 0, 1, 1], [], []>} : vector<512x16xbf16>, vector<16x4xbf16>, vector<512x4xf32> -> vector<512x4xf32>
    %87 = arith.addf %80, %86 : vector<512x4xf32>
    %c0_72 = arith.constant 0 : index
    %c1_73 = arith.constant 1 : index
    %c0_74 = arith.constant 0 : index
    %c0_75 = arith.constant 0 : index
    %88 = vector.load %arg12[%c0_72, %c1_73, %c0_74, %c0_75] : memref<2x18x18x16xf32, #tpu.memory_space<vmem>>, vector<2x16x16x16xf32>
    %89 = vector.shape_cast %88 : vector<2x16x16x16xf32> to vector<512x16xf32>
    %90 = arith.truncf %89 : vector<512x16xf32> to vector<512x16xbf16>
    %c1_76 = arith.constant 1 : index
    %c0_77 = arith.constant 0 : index
    %c0_78 = arith.constant 0 : index
    %c0_79 = arith.constant 0 : index
    %91 = vector.load %arg8[%c1_76, %c0_77, %c0_78, %c0_79] : memref<3x3x16x4xbf16, #tpu.memory_space<vmem>>, vector<1x1x16x4xbf16>
    %92 = vector.shape_cast %91 : vector<1x1x16x4xbf16> to vector<16x4xbf16>
    %cst_80 = arith.constant dense<0.000000e+00> : vector<512x4xf32>
    %93 = tpu.matmul %90, %92, %cst_80 {dimension_numbers = #tpu.dot_dimension_numbers<[1], [0], [0], [1], [0, 0, 1, 1], [], []>} : vector<512x16xbf16>, vector<16x4xbf16>, vector<512x4xf32> -> vector<512x4xf32>
    %94 = arith.addf %87, %93 : vector<512x4xf32>
    %c0_81 = arith.constant 0 : index
    %c1_82 = arith.constant 1 : index
    %c1_83 = arith.constant 1 : index
    %c0_84 = arith.constant 0 : index
    %95 = vector.load %arg12[%c0_81, %c1_82, %c1_83, %c0_84] : memref<2x18x18x16xf32, #tpu.memory_space<vmem>>, vector<2x16x16x16xf32>
    %96 = vector.shape_cast %95 : vector<2x16x16x16xf32> to vector<512x16xf32>
    %97 = arith.truncf %96 : vector<512x16xf32> to vector<512x16xbf16>
    %c1_85 = arith.constant 1 : index
    %c1_86 = arith.constant 1 : index
    %c0_87 = arith.constant 0 : index
    %c0_88 = arith.constant 0 : index
    %98 = vector.load %arg8[%c1_85, %c1_86, %c0_87, %c0_88] : memref<3x3x16x4xbf16, #tpu.memory_space<vmem>>, vector<1x1x16x4xbf16>
    %99 = vector.shape_cast %98 : vector<1x1x16x4xbf16> to vector<16x4xbf16>
    %cst_89 = arith.constant dense<0.000000e+00> : vector<512x4xf32>
    %100 = tpu.matmul %97, %99, %cst_89 {dimension_numbers = #tpu.dot_dimension_numbers<[1], [0], [0], [1], [0, 0, 1, 1], [], []>} : vector<512x16xbf16>, vector<16x4xbf16>, vector<512x4xf32> -> vector<512x4xf32>
    %101 = arith.addf %94, %100 : vector<512x4xf32>
    %c0_90 = arith.constant 0 : index
    %c1_91 = arith.constant 1 : index
    %c2_92 = arith.constant 2 : index
    %c0_93 = arith.constant 0 : index
    %102 = vector.load %arg12[%c0_90, %c1_91, %c2_92, %c0_93] : memref<2x18x18x16xf32, #tpu.memory_space<vmem>>, vector<2x16x16x16xf32>
    %103 = vector.shape_cast %102 : vector<2x16x16x16xf32> to vector<512x16xf32>
    %104 = arith.truncf %103 : vector<512x16xf32> to vector<512x16xbf16>
    %c1_94 = arith.constant 1 : index
    %c2_95 = arith.constant 2 : index
    %c0_96 = arith.constant 0 : index
    %c0_97 = arith.constant 0 : index
    %105 = vector.load %arg8[%c1_94, %c2_95, %c0_96, %c0_97] : memref<3x3x16x4xbf16, #tpu.memory_space<vmem>>, vector<1x1x16x4xbf16>
    %106 = vector.shape_cast %105 : vector<1x1x16x4xbf16> to vector<16x4xbf16>
    %cst_98 = arith.constant dense<0.000000e+00> : vector<512x4xf32>
    %107 = tpu.matmul %104, %106, %cst_98 {dimension_numbers = #tpu.dot_dimension_numbers<[1], [0], [0], [1], [0, 0, 1, 1], [], []>} : vector<512x16xbf16>, vector<16x4xbf16>, vector<512x4xf32> -> vector<512x4xf32>
    %108 = arith.addf %101, %107 : vector<512x4xf32>
    %c0_99 = arith.constant 0 : index
    %c2_100 = arith.constant 2 : index
    %c0_101 = arith.constant 0 : index
    %c0_102 = arith.constant 0 : index
    %109 = vector.load %arg12[%c0_99, %c2_100, %c0_101, %c0_102] : memref<2x18x18x16xf32, #tpu.memory_space<vmem>>, vector<2x16x16x16xf32>
    %110 = vector.shape_cast %109 : vector<2x16x16x16xf32> to vector<512x16xf32>
    %111 = arith.truncf %110 : vector<512x16xf32> to vector<512x16xbf16>
    %c2_103 = arith.constant 2 : index
    %c0_104 = arith.constant 0 : index
    %c0_105 = arith.constant 0 : index
    %c0_106 = arith.constant 0 : index
    %112 = vector.load %arg8[%c2_103, %c0_104, %c0_105, %c0_106] : memref<3x3x16x4xbf16, #tpu.memory_space<vmem>>, vector<1x1x16x4xbf16>
    %113 = vector.shape_cast %112 : vector<1x1x16x4xbf16> to vector<16x4xbf16>
    %cst_107 = arith.constant dense<0.000000e+00> : vector<512x4xf32>
    %114 = tpu.matmul %111, %113, %cst_107 {dimension_numbers = #tpu.dot_dimension_numbers<[1], [0], [0], [1], [0, 0, 1, 1], [], []>} : vector<512x16xbf16>, vector<16x4xbf16>, vector<512x4xf32> -> vector<512x4xf32>
    %115 = arith.addf %108, %114 : vector<512x4xf32>
    %c0_108 = arith.constant 0 : index
    %c2_109 = arith.constant 2 : index
    %c1_110 = arith.constant 1 : index
    %c0_111 = arith.constant 0 : index
    %116 = vector.load %arg12[%c0_108, %c2_109, %c1_110, %c0_111] : memref<2x18x18x16xf32, #tpu.memory_space<vmem>>, vector<2x16x16x16xf32>
    %117 = vector.shape_cast %116 : vector<2x16x16x16xf32> to vector<512x16xf32>
    %118 = arith.truncf %117 : vector<512x16xf32> to vector<512x16xbf16>
    %c2_112 = arith.constant 2 : index
    %c1_113 = arith.constant 1 : index
    %c0_114 = arith.constant 0 : index
    %c0_115 = arith.constant 0 : index
    %119 = vector.load %arg8[%c2_112, %c1_113, %c0_114, %c0_115] : memref<3x3x16x4xbf16, #tpu.memory_space<vmem>>, vector<1x1x16x4xbf16>
    %120 = vector.shape_cast %119 : vector<1x1x16x4xbf16> to vector<16x4xbf16>
    %cst_116 = arith.constant dense<0.000000e+00> : vector<512x4xf32>
    %121 = tpu.matmul %118, %120, %cst_116 {dimension_numbers = #tpu.dot_dimension_numbers<[1], [0], [0], [1], [0, 0, 1, 1], [], []>} : vector<512x16xbf16>, vector<16x4xbf16>, vector<512x4xf32> -> vector<512x4xf32>
    %122 = arith.addf %115, %121 : vector<512x4xf32>
    %c0_117 = arith.constant 0 : index
    %c2_118 = arith.constant 2 : index
    %c2_119 = arith.constant 2 : index
    %c0_120 = arith.constant 0 : index
    %123 = vector.load %arg12[%c0_117, %c2_118, %c2_119, %c0_120] : memref<2x18x18x16xf32, #tpu.memory_space<vmem>>, vector<2x16x16x16xf32>
    %124 = vector.shape_cast %123 : vector<2x16x16x16xf32> to vector<512x16xf32>
    %125 = arith.truncf %124 : vector<512x16xf32> to vector<512x16xbf16>
    %c2_121 = arith.constant 2 : index
    %c2_122 = arith.constant 2 : index
    %c0_123 = arith.constant 0 : index
    %c0_124 = arith.constant 0 : index
    %126 = vector.load %arg8[%c2_121, %c2_122, %c0_123, %c0_124] : memref<3x3x16x4xbf16, #tpu.memory_space<vmem>>, vector<1x1x16x4xbf16>
    %127 = vector.shape_cast %126 : vector<1x1x16x4xbf16> to vector<16x4xbf16>
    %cst_125 = arith.constant dense<0.000000e+00> : vector<512x4xf32>
    %128 = tpu.matmul %125, %127, %cst_125 {dimension_numbers = #tpu.dot_dimension_numbers<[1], [0], [0], [1], [0, 0, 1, 1], [], []>} : vector<512x16xbf16>, vector<16x4xbf16>, vector<512x4xf32> -> vector<512x4xf32>
    %129 = arith.addf %122, %128 : vector<512x4xf32>
    %cst_126 = arith.constant dense<0.000000e+00> : vector<4xf32>
    %130 = vector.multi_reduction <add>, %129, %cst_126 [0] : vector<512x4xf32> to vector<4xf32>
    %131 = vector.shape_cast %130 : vector<4xf32> to vector<1x4xf32>
    %cst_127 = arith.constant 0.001953125 : f32
    %132 = vector.broadcast %cst_127 : f32 to vector<1x4xf32>
    %133 = arith.mulf %131, %132 : vector<1x4xf32>
    %134 = arith.mulf %129, %129 : vector<512x4xf32>
    %cst_128 = arith.constant dense<0.000000e+00> : vector<4xf32>
    %135 = vector.multi_reduction <add>, %134, %cst_128 [0] : vector<512x4xf32> to vector<4xf32>
    %136 = vector.shape_cast %135 : vector<4xf32> to vector<1x4xf32>
    %cst_129 = arith.constant 0.001953125 : f32
    %137 = vector.broadcast %cst_129 : f32 to vector<1x4xf32>
    %138 = arith.mulf %136, %137 : vector<1x4xf32>
    %139 = arith.mulf %133, %133 : vector<1x4xf32>
    %140 = arith.subf %138, %139 : vector<1x4xf32>
    %cst_130 = arith.constant 0.000000e+00 : f32
    %141 = vector.broadcast %cst_130 : f32 to vector<1x4xf32>
    %142 = arith.maximumf %140, %141 : vector<1x4xf32>
    %c0_131 = arith.constant 0 : index
    %c0_132 = arith.constant 0 : index
    %143 = vector.load %arg5[%c0_131, %c0_132] : memref<1x4xf32, #tpu.memory_space<vmem>>, vector<1x4xf32>
    %cst_133 = arith.constant 9.99999974E-6 : f32
    %144 = vector.broadcast %cst_133 : f32 to vector<1x4xf32>
    %145 = arith.addf %142, %144 : vector<1x4xf32>
    %146 = math.rsqrt %145 : vector<1x4xf32>
    %147 = arith.mulf %143, %146 : vector<1x4xf32>
    %c0_134 = arith.constant 0 : index
    %c0_135 = arith.constant 0 : index
    %148 = vector.load %arg6[%c0_134, %c0_135] : memref<1x4xf32, #tpu.memory_space<vmem>>, vector<1x4xf32>
    %149 = arith.mulf %133, %147 : vector<1x4xf32>
    %150 = arith.subf %148, %149 : vector<1x4xf32>
    %151 = vector.broadcast %147 : vector<1x4xf32> to vector<512x4xf32>
    %152 = arith.mulf %129, %151 : vector<512x4xf32>
    %153 = vector.broadcast %150 : vector<1x4xf32> to vector<512x4xf32>
    %154 = arith.addf %152, %153 : vector<512x4xf32>
    %cst_136 = arith.constant 0.000000e+00 : f32
    %155 = vector.broadcast %cst_136 : f32 to vector<512x4xf32>
    %156 = arith.maximumf %154, %155 : vector<512x4xf32>
    %157 = vector.shape_cast %156 : vector<512x4xf32> to vector<2x16x16x4xf32>
    %c0_137 = arith.constant 0 : index
    %c1_138 = arith.constant 1 : index
    %c1_139 = arith.constant 1 : index
    %c0_140 = arith.constant 0 : index
    %158 = vector.load %arg13[%c0_137, %c1_138, %c1_139, %c0_140] : memref<2x18x18x4xf32, #tpu.memory_space<vmem>>, vector<2x16x16x4xf32>
    tpu.vector_store %arg13[%c0_137, %c1_138, %c1_139, %c0_140], %157 {strides = array<i32>} : memref<2x18x18x4xf32, #tpu.memory_space<vmem>>, vector<2x16x16x4xf32>,
    %cst_141 = arith.constant 0.000000e+00 : f32
    %159 = vector.broadcast %cst_141 : f32 to vector<2x1x18x4xf32>
    %cst_142 = arith.constant 0.000000e+00 : f32
    %160 = vector.broadcast %cst_142 : f32 to vector<2x18x1x4xf32>
    %c0_143 = arith.constant 0 : index
    %c0_144 = arith.constant 0 : index
    %c0_145 = arith.constant 0 : index
    %c0_146 = arith.constant 0 : index
    %161 = vector.load %arg13[%c0_143, %c0_144, %c0_145, %c0_146] : memref<2x18x18x4xf32, #tpu.memory_space<vmem>>, vector<2x1x18x4xf32>
    tpu.vector_store %arg13[%c0_143, %c0_144, %c0_145, %c0_146], %159 {strides = array<i32>} : memref<2x18x18x4xf32, #tpu.memory_space<vmem>>, vector<2x1x18x4xf32>,
    %c0_147 = arith.constant 0 : index
    %c17_148 = arith.constant 17 : index
    %c0_149 = arith.constant 0 : index
    %c0_150 = arith.constant 0 : index
    %162 = vector.load %arg13[%c0_147, %c17_148, %c0_149, %c0_150] : memref<2x18x18x4xf32, #tpu.memory_space<vmem>>, vector<2x1x18x4xf32>
    tpu.vector_store %arg13[%c0_147, %c17_148, %c0_149, %c0_150], %159 {strides = array<i32>} : memref<2x18x18x4xf32, #tpu.memory_space<vmem>>, vector<2x1x18x4xf32>,
    %c0_151 = arith.constant 0 : index
    %c0_152 = arith.constant 0 : index
    %c0_153 = arith.constant 0 : index
    %c0_154 = arith.constant 0 : index
    %163 = vector.load %arg13[%c0_151, %c0_152, %c0_153, %c0_154] : memref<2x18x18x4xf32, #tpu.memory_space<vmem>>, vector<2x18x1x4xf32>
    tpu.vector_store %arg13[%c0_151, %c0_152, %c0_153, %c0_154], %160 {strides = array<i32>} : memref<2x18x18x4xf32, #tpu.memory_space<vmem>>, vector<2x18x1x4xf32>,
    %c0_155 = arith.constant 0 : index
    %c0_156 = arith.constant 0 : index
    %c17_157 = arith.constant 17 : index
    %c0_158 = arith.constant 0 : index
    %164 = vector.load %arg13[%c0_155, %c0_156, %c17_157, %c0_158] : memref<2x18x18x4xf32, #tpu.memory_space<vmem>>, vector<2x18x1x4xf32>
    tpu.vector_store %arg13[%c0_155, %c0_156, %c17_157, %c0_158], %160 {strides = array<i32>} : memref<2x18x18x4xf32, #tpu.memory_space<vmem>>, vector<2x18x1x4xf32>,
    %cst_159 = arith.constant 0.000000e+00 : f32
    %165 = vector.broadcast %cst_159 : f32 to vector<2x16x16x4xf32>
    %c0_160 = arith.constant 0 : index
    %c0_161 = arith.constant 0 : index
    %c0_162 = arith.constant 0 : index
    %c0_163 = arith.constant 0 : index
    %166 = vector.load %arg13[%c0_160, %c0_161, %c0_162, %c0_163] : memref<2x18x18x4xf32, #tpu.memory_space<vmem>>, vector<2x16x16x4xf32>
    %c0_164 = arith.constant 0 : index
    %c0_165 = arith.constant 0 : index
    %c0_166 = arith.constant 0 : index
    %c0_167 = arith.constant 0 : index
    %167 = vector.load %arg9[%c0_164, %c0_165, %c0_166, %c0_167] : memref<3x3x1x4xf32, #tpu.memory_space<vmem>>, vector<1x1x1x4xf32>
    %168 = vector.shape_cast %167 : vector<1x1x1x4xf32> to vector<1x4xf32>
    %169 = vector.shape_cast %168 : vector<1x4xf32> to vector<1x1x1x4xf32>
    %170 = vector.broadcast %169 : vector<1x1x1x4xf32> to vector<2x16x16x4xf32>
    %171 = arith.mulf %166, %170 : vector<2x16x16x4xf32>
    %172 = arith.addf %165, %171 : vector<2x16x16x4xf32>
    %c0_168 = arith.constant 0 : index
    %c0_169 = arith.constant 0 : index
    %c1_170 = arith.constant 1 : index
    %c0_171 = arith.constant 0 : index
    %173 = vector.load %arg13[%c0_168, %c0_169, %c1_170, %c0_171] : memref<2x18x18x4xf32, #tpu.memory_space<vmem>>, vector<2x16x16x4xf32>
    %c0_172 = arith.constant 0 : index
    %c1_173 = arith.constant 1 : index
    %c0_174 = arith.constant 0 : index
    %c0_175 = arith.constant 0 : index
    %174 = vector.load %arg9[%c0_172, %c1_173, %c0_174, %c0_175] : memref<3x3x1x4xf32, #tpu.memory_space<vmem>>, vector<1x1x1x4xf32>
    %175 = vector.shape_cast %174 : vector<1x1x1x4xf32> to vector<1x4xf32>
    %176 = vector.shape_cast %175 : vector<1x4xf32> to vector<1x1x1x4xf32>
    %177 = vector.broadcast %176 : vector<1x1x1x4xf32> to vector<2x16x16x4xf32>
    %178 = arith.mulf %173, %177 : vector<2x16x16x4xf32>
    %179 = arith.addf %172, %178 : vector<2x16x16x4xf32>
    %c0_176 = arith.constant 0 : index
    %c0_177 = arith.constant 0 : index
    %c2_178 = arith.constant 2 : index
    %c0_179 = arith.constant 0 : index
    %180 = vector.load %arg13[%c0_176, %c0_177, %c2_178, %c0_179] : memref<2x18x18x4xf32, #tpu.memory_space<vmem>>, vector<2x16x16x4xf32>
    %c0_180 = arith.constant 0 : index
    %c2_181 = arith.constant 2 : index
    %c0_182 = arith.constant 0 : index
    %c0_183 = arith.constant 0 : index
    %181 = vector.load %arg9[%c0_180, %c2_181, %c0_182, %c0_183] : memref<3x3x1x4xf32, #tpu.memory_space<vmem>>, vector<1x1x1x4xf32>
    %182 = vector.shape_cast %181 : vector<1x1x1x4xf32> to vector<1x4xf32>
    %183 = vector.shape_cast %182 : vector<1x4xf32> to vector<1x1x1x4xf32>
    %184 = vector.broadcast %183 : vector<1x1x1x4xf32> to vector<2x16x16x4xf32>
    %185 = arith.mulf %180, %184 : vector<2x16x16x4xf32>
    %186 = arith.addf %179, %185 : vector<2x16x16x4xf32>
    %c0_184 = arith.constant 0 : index
    %c1_185 = arith.constant 1 : index
    %c0_186 = arith.constant 0 : index
    %c0_187 = arith.constant 0 : index
    %187 = vector.load %arg13[%c0_184, %c1_185, %c0_186, %c0_187] : memref<2x18x18x4xf32, #tpu.memory_space<vmem>>, vector<2x16x16x4xf32>
    %c1_188 = arith.constant 1 : index
    %c0_189 = arith.constant 0 : index
    %c0_190 = arith.constant 0 : index
    %c0_191 = arith.constant 0 : index
    %188 = vector.load %arg9[%c1_188, %c0_189, %c0_190, %c0_191] : memref<3x3x1x4xf32, #tpu.memory_space<vmem>>, vector<1x1x1x4xf32>
    %189 = vector.shape_cast %188 : vector<1x1x1x4xf32> to vector<1x4xf32>
    %190 = vector.shape_cast %189 : vector<1x4xf32> to vector<1x1x1x4xf32>
    %191 = vector.broadcast %190 : vector<1x1x1x4xf32> to vector<2x16x16x4xf32>
    %192 = arith.mulf %187, %191 : vector<2x16x16x4xf32>
    %193 = arith.addf %186, %192 : vector<2x16x16x4xf32>
    %c0_192 = arith.constant 0 : index
    %c1_193 = arith.constant 1 : index
    %c1_194 = arith.constant 1 : index
    %c0_195 = arith.constant 0 : index
    %194 = vector.load %arg13[%c0_192, %c1_193, %c1_194, %c0_195] : memref<2x18x18x4xf32, #tpu.memory_space<vmem>>, vector<2x16x16x4xf32>
    %c1_196 = arith.constant 1 : index
    %c1_197 = arith.constant 1 : index
    %c0_198 = arith.constant 0 : index
    %c0_199 = arith.constant 0 : index
    %195 = vector.load %arg9[%c1_196, %c1_197, %c0_198, %c0_199] : memref<3x3x1x4xf32, #tpu.memory_space<vmem>>, vector<1x1x1x4xf32>
    %196 = vector.shape_cast %195 : vector<1x1x1x4xf32> to vector<1x4xf32>
    %197 = vector.shape_cast %196 : vector<1x4xf32> to vector<1x1x1x4xf32>
    %198 = vector.broadcast %197 : vector<1x1x1x4xf32> to vector<2x16x16x4xf32>
    %199 = arith.mulf %194, %198 : vector<2x16x16x4xf32>
    %200 = arith.addf %193, %199 : vector<2x16x16x4xf32>
    %c0_200 = arith.constant 0 : index
    %c1_201 = arith.constant 1 : index
    %c2_202 = arith.constant 2 : index
    %c0_203 = arith.constant 0 : index
    %201 = vector.load %arg13[%c0_200, %c1_201, %c2_202, %c0_203] : memref<2x18x18x4xf32, #tpu.memory_space<vmem>>, vector<2x16x16x4xf32>
    %c1_204 = arith.constant 1 : index
    %c2_205 = arith.constant 2 : index
    %c0_206 = arith.constant 0 : index
    %c0_207 = arith.constant 0 : index
    %202 = vector.load %arg9[%c1_204, %c2_205, %c0_206, %c0_207] : memref<3x3x1x4xf32, #tpu.memory_space<vmem>>, vector<1x1x1x4xf32>
    %203 = vector.shape_cast %202 : vector<1x1x1x4xf32> to vector<1x4xf32>
    %204 = vector.shape_cast %203 : vector<1x4xf32> to vector<1x1x1x4xf32>
    %205 = vector.broadcast %204 : vector<1x1x1x4xf32> to vector<2x16x16x4xf32>
    %206 = arith.mulf %201, %205 : vector<2x16x16x4xf32>
    %207 = arith.addf %200, %206 : vector<2x16x16x4xf32>
    %c0_208 = arith.constant 0 : index
    %c2_209 = arith.constant 2 : index
    %c0_210 = arith.constant 0 : index
    %c0_211 = arith.constant 0 : index
    %208 = vector.load %arg13[%c0_208, %c2_209, %c0_210, %c0_211] : memref<2x18x18x4xf32, #tpu.memory_space<vmem>>, vector<2x16x16x4xf32>
    %c2_212 = arith.constant 2 : index
    %c0_213 = arith.constant 0 : index
    %c0_214 = arith.constant 0 : index
    %c0_215 = arith.constant 0 : index
    %209 = vector.load %arg9[%c2_212, %c0_213, %c0_214, %c0_215] : memref<3x3x1x4xf32, #tpu.memory_space<vmem>>, vector<1x1x1x4xf32>
    %210 = vector.shape_cast %209 : vector<1x1x1x4xf32> to vector<1x4xf32>
    %211 = vector.shape_cast %210 : vector<1x4xf32> to vector<1x1x1x4xf32>
    %212 = vector.broadcast %211 : vector<1x1x1x4xf32> to vector<2x16x16x4xf32>
    %213 = arith.mulf %208, %212 : vector<2x16x16x4xf32>
    %214 = arith.addf %207, %213 : vector<2x16x16x4xf32>
    %c0_216 = arith.constant 0 : index
    %c2_217 = arith.constant 2 : index
    %c1_218 = arith.constant 1 : index
    %c0_219 = arith.constant 0 : index
    %215 = vector.load %arg13[%c0_216, %c2_217, %c1_218, %c0_219] : memref<2x18x18x4xf32, #tpu.memory_space<vmem>>, vector<2x16x16x4xf32>
    %c2_220 = arith.constant 2 : index
    %c1_221 = arith.constant 1 : index
    %c0_222 = arith.constant 0 : index
    %c0_223 = arith.constant 0 : index
    %216 = vector.load %arg9[%c2_220, %c1_221, %c0_222, %c0_223] : memref<3x3x1x4xf32, #tpu.memory_space<vmem>>, vector<1x1x1x4xf32>
    %217 = vector.shape_cast %216 : vector<1x1x1x4xf32> to vector<1x4xf32>
    %218 = vector.shape_cast %217 : vector<1x4xf32> to vector<1x1x1x4xf32>
    %219 = vector.broadcast %218 : vector<1x1x1x4xf32> to vector<2x16x16x4xf32>
    %220 = arith.mulf %215, %219 : vector<2x16x16x4xf32>
    %221 = arith.addf %214, %220 : vector<2x16x16x4xf32>
    %c0_224 = arith.constant 0 : index
    %c2_225 = arith.constant 2 : index
    %c2_226 = arith.constant 2 : index
    %c0_227 = arith.constant 0 : index
    %222 = vector.load %arg13[%c0_224, %c2_225, %c2_226, %c0_227] : memref<2x18x18x4xf32, #tpu.memory_space<vmem>>, vector<2x16x16x4xf32>
    %c2_228 = arith.constant 2 : index
    %c2_229 = arith.constant 2 : index
    %c0_230 = arith.constant 0 : index
    %c0_231 = arith.constant 0 : index
    %223 = vector.load %arg9[%c2_228, %c2_229, %c0_230, %c0_231] : memref<3x3x1x4xf32, #tpu.memory_space<vmem>>, vector<1x1x1x4xf32>
    %224 = vector.shape_cast %223 : vector<1x1x1x4xf32> to vector<1x4xf32>
    %225 = vector.shape_cast %224 : vector<1x4xf32> to vector<1x1x1x4xf32>
    %226 = vector.broadcast %225 : vector<1x1x1x4xf32> to vector<2x16x16x4xf32>
    %227 = arith.mulf %222, %226 : vector<2x16x16x4xf32>
    %228 = arith.addf %221, %227 : vector<2x16x16x4xf32>
    %229 = vector.shape_cast %228 : vector<2x16x16x4xf32> to vector<512x4xf32>
    %c0_232 = arith.constant 0 : index
    %c0_233 = arith.constant 0 : index
    %c0_234 = arith.constant 0 : index
    %230 = vector.load %arg10[%c0_232, %c0_233, %c0_234] : memref<4x4x4xf32, #tpu.memory_space<vmem>>, vector<1x4x4xf32>
    %231 = vector.shape_cast %230 : vector<1x4x4xf32> to vector<4x4xf32>
    %cst_235 = arith.constant dense<0.000000e+00> : vector<512x4xf32>
    %232 = tpu.matmul %229, %231, %cst_235 {dimension_numbers = #tpu.dot_dimension_numbers<[1], [0], [0], [1], [0, 0, 1, 1], [], []>} : vector<512x4xf32>, vector<4x4xf32>, vector<512x4xf32> -> vector<512x4xf32>
    %c1_236 = arith.constant 1 : index
    %c0_237 = arith.constant 0 : index
    %c0_238 = arith.constant 0 : index
    %233 = vector.load %arg10[%c1_236, %c0_237, %c0_238] : memref<4x4x4xf32, #tpu.memory_space<vmem>>, vector<1x4x4xf32>
    %234 = vector.shape_cast %233 : vector<1x4x4xf32> to vector<4x4xf32>
    %cst_239 = arith.constant dense<0.000000e+00> : vector<512x4xf32>
    %235 = tpu.matmul %229, %234, %cst_239 {dimension_numbers = #tpu.dot_dimension_numbers<[1], [0], [0], [1], [0, 0, 1, 1], [], []>} : vector<512x4xf32>, vector<4x4xf32>, vector<512x4xf32> -> vector<512x4xf32>
    %236 = arith.maximumf %232, %235 : vector<512x4xf32>
    %c2_240 = arith.constant 2 : index
    %c0_241 = arith.constant 0 : index
    %c0_242 = arith.constant 0 : index
    %237 = vector.load %arg10[%c2_240, %c0_241, %c0_242] : memref<4x4x4xf32, #tpu.memory_space<vmem>>, vector<1x4x4xf32>
    %238 = vector.shape_cast %237 : vector<1x4x4xf32> to vector<4x4xf32>
    %cst_243 = arith.constant dense<0.000000e+00> : vector<512x4xf32>
    %239 = tpu.matmul %229, %238, %cst_243 {dimension_numbers = #tpu.dot_dimension_numbers<[1], [0], [0], [1], [0, 0, 1, 1], [], []>} : vector<512x4xf32>, vector<4x4xf32>, vector<512x4xf32> -> vector<512x4xf32>
    %240 = arith.maximumf %236, %239 : vector<512x4xf32>
    %c3 = arith.constant 3 : index
    %c0_244 = arith.constant 0 : index
    %c0_245 = arith.constant 0 : index
    %241 = vector.load %arg10[%c3, %c0_244, %c0_245] : memref<4x4x4xf32, #tpu.memory_space<vmem>>, vector<1x4x4xf32>
    %242 = vector.shape_cast %241 : vector<1x4x4xf32> to vector<4x4xf32>
    %cst_246 = arith.constant dense<0.000000e+00> : vector<512x4xf32>
    %243 = tpu.matmul %229, %242, %cst_246 {dimension_numbers = #tpu.dot_dimension_numbers<[1], [0], [0], [1], [0, 0, 1, 1], [], []>} : vector<512x4xf32>, vector<4x4xf32>, vector<512x4xf32> -> vector<512x4xf32>
    %244 = arith.maximumf %240, %243 : vector<512x4xf32>
    %c0_247 = arith.constant 0 : index
    %c0_248 = arith.constant 0 : index
    %245 = vector.load %arg11[%c0_247, %c0_248] : memref<512x12xf32, #tpu.memory_space<vmem>>, vector<512x4xf32>
    tpu.vector_store %arg11[%c0_247, %c0_248], %244 {strides = array<i32>} : memref<512x12xf32, #tpu.memory_space<vmem>>, vector<512x4xf32>,
    %c0_249 = arith.constant 0 : index
    %c4 = arith.constant 4 : index
    %246 = vector.load %arg11[%c0_249, %c4] : memref<512x12xf32, #tpu.memory_space<vmem>>, vector<512x4xf32>
    tpu.vector_store %arg11[%c0_249, %c4], %129 {strides = array<i32>} : memref<512x12xf32, #tpu.memory_space<vmem>>, vector<512x4xf32>,
    %247 = vector.extract_strided_slice %0 {offsets = [0, 0], sizes = [512, 4], strides = [1, 1]} : vector<512x8xf32> to vector<512x4xf32>
    %c0_250 = arith.constant 0 : index
    %c8 = arith.constant 8 : index
    %248 = vector.load %arg11[%c0_250, %c8] : memref<512x12xf32, #tpu.memory_space<vmem>>, vector<512x4xf32>
    tpu.vector_store %arg11[%c0_250, %c8], %247 {strides = array<i32>} : memref<512x12xf32, #tpu.memory_space<vmem>>, vector<512x4xf32>,
    return
  }
}

</mosaic_0001>

<llo_original>
// kernel: prcn_forward.1
$region0: #{prcn_forward.1}
  #allocation0 [shape = 'u32[]', space=smem, size = 0x4, offset = 0x4, fixed_abs, tag = 'smem constant byte address 0x4 - core index']
  #allocation1 [shape = 'u32[144,128]{1,0:T(1,128)}', space=vmem, size = 0x12000, scoped, tag = 'internal scratch']
  #allocation2 [shape = 'f32[2,18,18,16]{3,2,1,0:T(8,128)}', space=vmem, size = 0x6c000, scoped, tag = 'scratch operand']
  #allocation3 [shape = 'f32[2,18,18,4]{3,2,1,0:T(8,128)}', space=vmem, size = 0x6c000, scoped, tag = 'scratch operand']
  %s0 = inlined_call_operand.vmem [shape: f32[512,8], index: 0, kind: input, shape index: {}]
  %s1 = inlined_call_operand.vmem [shape: f32[1,8], index: 1, kind: input, shape index: {}]
  %s2 = inlined_call_operand.vmem [shape: f32[1,8], index: 2, kind: input, shape index: {}]
  %s3 = inlined_call_operand.vmem [shape: f32[1,16], index: 3, kind: input, shape index: {}]
  %s4 = inlined_call_operand.vmem [shape: f32[1,16], index: 4, kind: input, shape index: {}]
  %s5 = inlined_call_operand.vmem [shape: f32[1,4], index: 5, kind: input, shape index: {}]
  %s6 = inlined_call_operand.vmem [shape: f32[1,4], index: 6, kind: input, shape index: {}]
  %s7 = inlined_call_operand.vmem [shape: bf16[8,16], index: 7, kind: input, shape index: {}]
  %s8 = inlined_call_operand.vmem [shape: bf16[3,3,16,4], index: 8, kind: input, shape index: {}]
  %s9 = inlined_call_operand.vmem [shape: f32[3,3,1,4], index: 9, kind: input, shape index: {}]
  %s10 = inlined_call_operand.vmem [shape: f32[4,4,4], index: 10, kind: input, shape index: {}]
  %s11 = inlined_call_operand.vmem [shape: f32[512,12], index: 11, kind: output, shape index: {}]
  %s12 = sld [smem:[#allocation0]]
  $region54: #{prcn_forward.1} parent=0
    _
  %s14 = ssub.s32 1, %s12
  %s15 = scalar_select 0, %s14, %s12
  // Predicated region
  $region2: #{prcn_forward.1} parent=0 // pred_check
    _
  $region3: #{prcn_forward.1} parent=0 // pred_check_branch
    %17 = sbr.rel (0) target = $region5
  $region4: #{prcn_forward.1} parent=0 // pred_region
    _
  $region5: #{prcn_forward.1} parent=0 // pred_fallthru
    _
  // Predicated region
  $region6: #{prcn_forward.1} parent=0 // pred_check
    _
  $region7: #{prcn_forward.1} parent=0 // pred_check_branch
    %19 = sbr.rel (0) target = $region9
  $region8: #{prcn_forward.1} parent=0 // pred_region
    _
  $region9: #{prcn_forward.1} parent=0 // pred_fallthru
    _
  // Predicated region
  $region10: #{prcn_forward.1} parent=0 // pred_check
    _
  $region11: #{prcn_forward.1} parent=0 // pred_check_branch
    %21 = sbr.rel (0) target = $region13
  $region12: #{prcn_forward.1} parent=0 // pred_region
    _
  $region13: #{prcn_forward.1} parent=0 // pred_fallthru
    _
  // Predicated region
  $region14: #{prcn_forward.1} parent=0 // pred_check
    _
  $region15: #{prcn_forward.1} parent=0 // pred_check_branch
    %23 = sbr.rel (0) target = $region17
  $region16: #{prcn_forward.1} parent=0 // pred_region
    _
  $region17: #{prcn_forward.1} parent=0 // pred_fallthru
    _
  // Predicated region
  $region18: #{prcn_forward.1} parent=0 // pred_check
    _
  $region19: #{prcn_forward.1} parent=0 // pred_check_branch
    %25 = sbr.rel (0) target = $region21
  $region20: #{prcn_forward.1} parent=0 // pred_region
    _
  $region21: #{prcn_forward.1} parent=0 // pred_fallthru
    _
  // Predicated region
  $region22: #{prcn_forward.1} parent=0 // pred_check
    _
  $region23: #{prcn_forward.1} parent=0 // pred_check_branch
    %27 = sbr.rel (0) target = $region25
  $region24: #{prcn_forward.1} parent=0 // pred_region
    _
  $region25: #{prcn_forward.1} parent=0 // pred_fallthru
    _
  // Predicated region
  $region26: #{prcn_forward.1} parent=0 // pred_check
    _
  $region27: #{prcn_forward.1} parent=0 // pred_check_branch
    %29 = sbr.rel (0) target = $region29
  $region28: #{prcn_forward.1} parent=0 // pred_region
    _
  $region29: #{prcn_forward.1} parent=0 // pred_fallthru
    _
  // Predicated region
  $region30: #{prcn_forward.1} parent=0 // pred_check
    _
  $region31: #{prcn_forward.1} parent=0 // pred_check_branch
    %31 = sbr.rel (0) target = $region33
  $region32: #{prcn_forward.1} parent=0 // pred_region
    _
  $region33: #{prcn_forward.1} parent=0 // pred_fallthru
    _
  // Predicated region
  $region34: #{prcn_forward.1} parent=0 // pred_check
    _
  $region35: #{prcn_forward.1} parent=0 // pred_check_branch
    %33 = sbr.rel (0) target = $region37
  $region36: #{prcn_forward.1} parent=0 // pred_region
    _
  $region37: #{prcn_forward.1} parent=0 // pred_fallthru
    _
  // Predicated region
  $region38: #{prcn_forward.1} parent=0 // pred_check
    _
  $region39: #{prcn_forward.1} parent=0 // pred_check_branch
    %35 = sbr.rel (0) target = $region41
  $region40: #{prcn_forward.1} parent=0 // pred_region
    _
  $region41: #{prcn_forward.1} parent=0 // pred_fallthru
    _
  // Predicated region
  $region42: #{prcn_forward.1} parent=0 // pred_check
    _
  $region43: #{prcn_forward.1} parent=0 // pred_check_branch
    %37 = sbr.rel (0) target = $region45
  $region44: #{prcn_forward.1} parent=0 // pred_region
    _
  $region45: #{prcn_forward.1} parent=0 // pred_fallthru
    _
  %v39 = vld [vmem:[%s0] sm:$0xff]
  %v40 = vld [vmem:[%s0 + $0x8] sm:$0xff]
  %v41 = vld [vmem:[%s0 + $0x10] sm:$0xff]
  %v42 = vld [vmem:[%s0 + $0x18] sm:$0xff]
  %v43 = vld [vmem:[%s0 + $0x20] sm:$0xff]
  %v44 = vld [vmem:[%s0 + $0x28] sm:$0xff]
  %v45 = vld [vmem:[%s0 + $0x30] sm:$0xff]
  %v46 = vld [vmem:[%s0 + $0x38] sm:$0xff]
  %v47 = vld [vmem:[%s0 + $0x40] sm:$0xff]
  %v48 = vld [vmem:[%s0 + $0x48] sm:$0xff]
  %v49 = vld [vmem:[%s0 + $0x50] sm:$0xff]
  %v50 = vld [vmem:[%s0 + $0x58] sm:$0xff]
  %v51 = vld [vmem:[%s0 + $0x60] sm:$0xff]
  %v52 = vld [vmem:[%s0 + $0x68] sm:$0xff]
  %v53 = vld [vmem:[%s0 + $0x70] sm:$0xff]
  %v54 = vld [vmem:[%s0 + $0x78] sm:$0xff]
  %v55 = vld [vmem:[%s0 + $0x80] sm:$0xff]
  %v56 = vld [vmem:[%s0 + $0x88] sm:$0xff]
  %v57 = vld [vmem:[%s0 + $0x90] sm:$0xff]
  %v58 = vld [vmem:[%s0 + $0x98] sm:$0xff]
  %v59 = vld [vmem:[%s0 + $0xa0] sm:$0xff]
  %v60 = vld [vmem:[%s0 + $0xa8] sm:$0xff]
  %v61 = vld [vmem:[%s0 + $0xb0] sm:$0xff]
  %v62 = vld [vmem:[%s0 + $0xb8] sm:$0xff]
  %v63 = vld [vmem:[%s0 + $0xc0] sm:$0xff]
  %v64 = vld [vmem:[%s0 + $0xc8] sm:$0xff]
  %v65 = vld [vmem:[%s0 + $0xd0] sm:$0xff]
  %v66 = vld [vmem:[%s0 + $0xd8] sm:$0xff]
  %v67 = vld [vmem:[%s0 + $0xe0] sm:$0xff]
  %v68 = vld [vmem:[%s0 + $0xe8] sm:$0xff]
  %v69 = vld [vmem:[%s0 + $0xf0] sm:$0xff]
  %v70 = vld [vmem:[%s0 + $0xf8] sm:$0xff]
  %v71 = vld [vmem:[%s0 + $0x100] sm:$0xff]
  %v72 = vld [vmem:[%s0 + $0x108] sm:$0xff]
  %v73 = vld [vmem:[%s0 + $0x110] sm:$0xff]
  %v74 = vld [vmem:[%s0 + $0x118] sm:$0xff]
  %v75 = vld [vmem:[%s0 + $0x120] sm:$0xff]
  %v76 = vld [vmem:[%s0 + $0x128] sm:$0xff]
  %v77 = vld [vmem:[%s0 + $0x130] sm:$0xff]
  %v78 = vld [vmem:[%s0 + $0x138] sm:$0xff]
  %v79 = vld [vmem:[%s0 + $0x140] sm:$0xff]
  %v80 = vld [vmem:[%s0 + $0x148] sm:$0xff]
  %v81 = vld [vmem:[%s0 + $0x150] sm:$0xff]
  %v82 = vld [vmem:[%s0 + $0x158] sm:$0xff]
  %v83 = vld [vmem:[%s0 + $0x160] sm:$0xff]
  %v84 = vld [vmem:[%s0 + $0x168] sm:$0xff]
  %v85 = vld [vmem:[%s0 + $0x170] sm:$0xff]
  %v86 = vld [vmem:[%s0 + $0x178] sm:$0xff]
  %v87 = vld [vmem:[%s0 + $0x180] sm:$0xff]
  %v88 = vld [vmem:[%s0 + $0x188] sm:$0xff]
  %v89 = vld [vmem:[%s0 + $0x190] sm:$0xff]
  %v90 = vld [vmem:[%s0 + $0x198] sm:$0xff]
  %v91 = vld [vmem:[%s0 + $0x1a0] sm:$0xff]
  %v92 = vld [vmem:[%s0 + $0x1a8] sm:$0xff]
  %v93 = vld [vmem:[%s0 + $0x1b0] sm:$0xff]
  %v94 = vld [vmem:[%s0 + $0x1b8] sm:$0xff]
  %v95 = vld [vmem:[%s0 + $0x1c0] sm:$0xff]
  %v96 = vld [vmem:[%s0 + $0x1c8] sm:$0xff]
  %v97 = vld [vmem:[%s0 + $0x1d0] sm:$0xff]
  %v98 = vld [vmem:[%s0 + $0x1d8] sm:$0xff]
  %v99 = vld [vmem:[%s0 + $0x1e0] sm:$0xff]
  %v100 = vld [vmem:[%s0 + $0x1e8] sm:$0xff]
  %v101 = vld [vmem:[%s0 + $0x1f0] sm:$0xff]
  %v102 = vld [vmem:[%s0 + $0x1f8] sm:$0xff]
  %vm103 = vcmask 64512
  %v104 = vsel %vm103, %v39, 0.0
  %v105 = vsel %vm103, %v40, 0.0
  %v106 = vadd.f32 %v104, %v105
  %v107 = vsel %vm103, %v41, 0.0
  %v108 = vadd.f32 %v106, %v107
  %v109 = vsel %vm103, %v42, 0.0
  %v110 = vadd.f32 %v108, %v109
  %v111 = vsel %vm103, %v43, 0.0
  %v112 = vadd.f32 %v110, %v111
  %v113 = vsel %vm103, %v44, 0.0
  %v114 = vadd.f32 %v112, %v113
  %v115 = vsel %vm103, %v45, 0.0
  %v116 = vadd.f32 %v114, %v115
  %v117 = vsel %vm103, %v46, 0.0
  %v118 = vadd.f32 %v116, %v117
  %v119 = vsel %vm103, %v47, 0.0
  %v120 = vadd.f32 %v118, %v119
  %v121 = vsel %vm103, %v48, 0.0
  %v122 = vadd.f32 %v120, %v121
  %v123 = vsel %vm103, %v49, 0.0
  %v124 = vadd.f32 %v122, %v123
  %v125 = vsel %vm103, %v50, 0.0
  %v126 = vadd.f32 %v124, %v125
  %v127 = vsel %vm103, %v51, 0.0
  %v128 = vadd.f32 %v126, %v127
  %v129 = vsel %vm103, %v52, 0.0
  %v130 = vadd.f32 %v128, %v129
  %v131 = vsel %vm103, %v53, 0.0
  %v132 = vadd.f32 %v130, %v131
  %v133 = vsel %vm103, %v54, 0.0
  %v134 = vadd.f32 %v132, %v133
  %v135 = vsel %vm103, %v55, 0.0
  %v136 = vadd.f32 %v134, %v135
  %v137 = vsel %vm103, %v56, 0.0
  %v138 = vadd.f32 %v136, %v137
  %v139 = vsel %vm103, %v57, 0.0
  %v140 = vadd.f32 %v138, %v139
  %v141 = vsel %vm103, %v58, 0.0
  %v142 = vadd.f32 %v140, %v141
  %v143 = vsel %vm103, %v59, 0.0
  %v144 = vadd.f32 %v142, %v143
  %v145 = vsel %vm103, %v60, 0.0
  %v146 = vadd.f32 %v144, %v145
  %v147 = vsel %vm103, %v61, 0.0
  %v148 = vadd.f32 %v146, %v147
  %v149 = vsel %vm103, %v62, 0.0
  %v150 = vadd.f32 %v148, %v149
  %v151 = vsel %vm103, %v63, 0.0
  %v152 = vadd.f32 %v150, %v151
  %v153 = vsel %vm103, %v64, 0.0
  %v154 = vadd.f32 %v152, %v153
  %v155 = vsel %vm103, %v65, 0.0
  %v156 = vadd.f32 %v154, %v155
  %v157 = vsel %vm103, %v66, 0.0
  %v158 = vadd.f32 %v156, %v157
  %v159 = vsel %vm103, %v67, 0.0
  %v160 = vadd.f32 %v158, %v159
  %v161 = vsel %vm103, %v68, 0.0
  %v162 = vadd.f32 %v160, %v161
  %v163 = vsel %vm103, %v69, 0.0
  %v164 = vadd.f32 %v162, %v163
  %v165 = vsel %vm103, %v70, 0.0
  %v166 = vadd.f32 %v164, %v165
  %v167 = vsel %vm103, %v71, 0.0
  %v168 = vadd.f32 %v166, %v167
  %v169 = vsel %vm103, %v72, 0.0
  %v170 = vadd.f32 %v168, %v169
  %v171 = vsel %vm103, %v73, 0.0
  %v172 = vadd.f32 %v170, %v171
  %v173 = vsel %vm103, %v74, 0.0
  %v174 = vadd.f32 %v172, %v173
  %v175 = vsel %vm103, %v75, 0.0
  %v176 = vadd.f32 %v174, %v175
  %v177 = vsel %vm103, %v76, 0.0
  %v178 = vadd.f32 %v176, %v177
  %v179 = vsel %vm103, %v77, 0.0
  %v180 = vadd.f32 %v178, %v179
  %v181 = vsel %vm103, %v78, 0.0
  %v182 = vadd.f32 %v180, %v181
  %v183 = vsel %vm103, %v79, 0.0
  %v184 = vadd.f32 %v182, %v183
  %v185 = vsel %vm103, %v80, 0.0
  %v186 = vadd.f32 %v184, %v185
  %v187 = vsel %vm103, %v81, 0.0
  %v188 = vadd.f32 %v186, %v187
  %v189 = vsel %vm103, %v82, 0.0
  %v190 = vadd.f32 %v188, %v189
  %v191 = vsel %vm103, %v83, 0.0
  %v192 = vadd.f32 %v190, %v191
  %v193 = vsel %vm103, %v84, 0.0
  %v194 = vadd.f32 %v192, %v193
  %v195 = vsel %vm103, %v85, 0.0
  %v196 = vadd.f32 %v194, %v195
  %v197 = vsel %vm103, %v86, 0.0
  %v198 = vadd.f32 %v196, %v197
  %v199 = vsel %vm103, %v87, 0.0
  %v200 = vadd.f32 %v198, %v199
  %v201 = vsel %vm103, %v88, 0.0
  %v202 = vadd.f32 %v200, %v201
  %v203 = vsel %vm103, %v89, 0.0
  %v204 = vadd.f32 %v202, %v203
  %v205 = vsel %vm103, %v90, 0.0
  %v206 = vadd.f32 %v204, %v205
  %v207 = vsel %vm103, %v91, 0.0
  %v208 = vadd.f32 %v206, %v207
  %v209 = vsel %vm103, %v92, 0.0
  %v210 = vadd.f32 %v208, %v209
  %v211 = vsel %vm103, %v93, 0.0
  %v212 = vadd.f32 %v210, %v211
  %v213 = vsel %vm103, %v94, 0.0
  %v214 = vadd.f32 %v212, %v213
  %v215 = vsel %vm103, %v95, 0.0
  %v216 = vadd.f32 %v214, %v215
  %v217 = vsel %vm103, %v96, 0.0
  %v218 = vadd.f32 %v216, %v217
  %v219 = vsel %vm103, %v97, 0.0
  %v220 = vadd.f32 %v218, %v219
  %v221 = vsel %vm103, %v98, 0.0
  %v222 = vadd.f32 %v220, %v221
  %v223 = vsel %vm103, %v99, 0.0
  %v224 = vadd.f32 %v222, %v223
  %v225 = vsel %vm103, %v100, 0.0
  %v226 = vadd.f32 %v224, %v225
  %v227 = vsel %vm103, %v101, 0.0
  %v228 = vadd.f32 %v226, %v227
  %v229 = vsel %vm103, %v102, 0.0
  %v230 = vadd.f32 %v228, %v229
  %v231 = vrot.slane %v230, 4
  %v232 = vadd.f32 %v230, %v231
  %v233 = vrot.slane %v232, 2
  %v234 = vadd.f32 %v232, %v233
  %v235 = vrot.slane %v234, 1
  %v236 = vadd.f32 %v234, %v235
  %v237 = vmul.f32 %v236, 0.001953125
  %v238 = vmul.f32 %v39, %v39
  %v239 = vmul.f32 %v40, %v40
  %v240 = vmul.f32 %v41, %v41
  %v241 = vmul.f32 %v42, %v42
  %v242 = vmul.f32 %v43, %v43
  %v243 = vmul.f32 %v44, %v44
  %v244 = vmul.f32 %v45, %v45
  %v245 = vmul.f32 %v46, %v46
  %v246 = vmul.f32 %v47, %v47
  %v247 = vmul.f32 %v48, %v48
  %v248 = vmul.f32 %v49, %v49
  %v249 = vmul.f32 %v50, %v50
  %v250 = vmul.f32 %v51, %v51
  %v251 = vmul.f32 %v52, %v52
  %v252 = vmul.f32 %v53, %v53
  %v253 = vmul.f32 %v54, %v54
  %v254 = vmul.f32 %v55, %v55
  %v255 = vmul.f32 %v56, %v56
  %v256 = vmul.f32 %v57, %v57
  %v257 = vmul.f32 %v58, %v58
  %v258 = vmul.f32 %v59, %v59
  %v259 = vmul.f32 %v60, %v60
  %v260 = vmul.f32 %v61, %v61
  %v261 = vmul.f32 %v62, %v62
  %v262 = vmul.f32 %v63, %v63
  %v263 = vmul.f32 %v64, %v64
  %v264 = vmul.f32 %v65, %v65
  %v265 = vmul.f32 %v66, %v66
  %v266 = vmul.f32 %v67, %v67
  %v267 = vmul.f32 %v68, %v68
  %v268 = vmul.f32 %v69, %v69
  %v269 = vmul.f32 %v70, %v70
  %v270 = vmul.f32 %v71, %v71
  %v271 = vmul.f32 %v72, %v72
  %v272 = vmul.f32 %v73, %v73
  %v273 = vmul.f32 %v74, %v74
  %v274 = vmul.f32 %v75, %v75
  %v275 = vmul.f32 %v76, %v76
  %v276 = vmul.f32 %v77, %v77
  %v277 = vmul.f32 %v78, %v78
  %v278 = vmul.f32 %v79, %v79
  %v279 = vmul.f32 %v80, %v80
  %v280 = vmul.f32 %v81, %v81
  %v281 = vmul.f32 %v82, %v82
  %v282 = vmul.f32 %v83, %v83
  %v283 = vmul.f32 %v84, %v84
  %v284 = vmul.f32 %v85, %v85
  %v285 = vmul.f32 %v86, %v86
  %v286 = vmul.f32 %v87, %v87
  %v287 = vmul.f32 %v88, %v88
  %v288 = vmul.f32 %v89, %v89
  %v289 = vmul.f32 %v90, %v90
  %v290 = vmul.f32 %v91, %v91
  %v291 = vmul.f32 %v92, %v92
  %v292 = vmul.f32 %v93, %v93
  %v293 = vmul.f32 %v94, %v94
  %v294 = vmul.f32 %v95, %v95
  %v295 = vmul.f32 %v96, %v96
  %v296 = vmul.f32 %v97, %v97
  %v297 = vmul.f32 %v98, %v98
  %v298 = vmul.f32 %v99, %v99
  %v299 = vmul.f32 %v100, %v100
  %v300 = vmul.f32 %v101, %v101
  %v301 = vmul.f32 %v102, %v102
  %v302 = vsel %vm103, %v238, 0.0
  %v303 = vsel %vm103, %v239, 0.0
  %v304 = vadd.f32 %v302, %v303
  %v305 = vsel %vm103, %v240, 0.0
  %v306 = vadd.f32 %v304, %v305
  %v307 = vsel %vm103, %v241, 0.0
  %v308 = vadd.f32 %v306, %v307
  %v309 = vsel %vm103, %v242, 0.0
  %v310 = vadd.f32 %v308, %v309
  %v311 = vsel %vm103, %v243, 0.0
  %v312 = vadd.f32 %v310, %v311
  %v313 = vsel %vm103, %v244, 0.0
  %v314 = vadd.f32 %v312, %v313
  %v315 = vsel %vm103, %v245, 0.0
  %v316 = vadd.f32 %v314, %v315
  %v317 = vsel %vm103, %v246, 0.0
  %v318 = vadd.f32 %v316, %v317
  %v319 = vsel %vm103, %v247, 0.0
  %v320 = vadd.f32 %v318, %v319
  %v321 = vsel %vm103, %v248, 0.0
  %v322 = vadd.f32 %v320, %v321
  %v323 = vsel %vm103, %v249, 0.0
  %v324 = vadd.f32 %v322, %v323
  %v325 = vsel %vm103, %v250, 0.0
  %v326 = vadd.f32 %v324, %v325
  %v327 = vsel %vm103, %v251, 0.0
  %v328 = vadd.f32 %v326, %v327
  %v329 = vsel %vm103, %v252, 0.0
  %v330 = vadd.f32 %v328, %v329
  %v331 = vsel %vm103, %v253, 0.0
  %v332 = vadd.f32 %v330, %v331
  %v333 = vsel %vm103, %v254, 0.0
  %v334 = vadd.f32 %v332, %v333
  %v335 = vsel %vm103, %v255, 0.0
  %v336 = vadd.f32 %v334, %v335
  %v337 = vsel %vm103, %v256, 0.0
  %v338 = vadd.f32 %v336, %v337
  %v339 = vsel %vm103, %v257, 0.0
  %v340 = vadd.f32 %v338, %v339
  %v341 = vsel %vm103, %v258, 0.0
  %v342 = vadd.f32 %v340, %v341
  %v343 = vsel %vm103, %v259, 0.0
  %v344 = vadd.f32 %v342, %v343
  %v345 = vsel %vm103, %v260, 0.0
  %v346 = vadd.f32 %v344, %v345
  %v347 = vsel %vm103, %v261, 0.0
  %v348 = vadd.f32 %v346, %v347
  %v349 = vsel %vm103, %v262, 0.0
  %v350 = vadd.f32 %v348, %v349
  %v351 = vsel %vm103, %v263, 0.0
  %v352 = vadd.f32 %v350, %v351
  %v353 = vsel %vm103, %v264, 0.0
  %v354 = vadd.f32 %v352, %v353
  %v355 = vsel %vm103, %v265, 0.0
  %v356 = vadd.f32 %v354, %v355
  %v357 = vsel %vm103, %v266, 0.0
  %v358 = vadd.f32 %v356, %v357
  %v359 = vsel %vm103, %v267, 0.0
  %v360 = vadd.f32 %v358, %v359
  %v361 = vsel %vm103, %v268, 0.0
  %v362 = vadd.f32 %v360, %v361
  %v363 = vsel %vm103, %v269, 0.0
  %v364 = vadd.f32 %v362, %v363
  %v365 = vsel %vm103, %v270, 0.0
  %v366 = vadd.f32 %v364, %v365
  %v367 = vsel %vm103, %v271, 0.0
  %v368 = vadd.f32 %v366, %v367
  %v369 = vsel %vm103, %v272, 0.0
  %v370 = vadd.f32 %v368, %v369
  %v371 = vsel %vm103, %v273, 0.0
  %v372 = vadd.f32 %v370, %v371
  %v373 = vsel %vm103, %v274, 0.0
  %v374 = vadd.f32 %v372, %v373
  %v375 = vsel %vm103, %v275, 0.0
  %v376 = vadd.f32 %v374, %v375
  %v377 = vsel %vm103, %v276, 0.0
  %v378 = vadd.f32 %v376, %v377
  %v379 = vsel %vm103, %v277, 0.0
  %v380 = vadd.f32 %v378, %v379
  %v381 = vsel %vm103, %v278, 0.0
  %v382 = vadd.f32 %v380, %v381
  %v383 = vsel %vm103, %v279, 0.0
  %v384 = vadd.f32 %v382, %v383
  %v385 = vsel %vm103, %v280, 0.0
  %v386 = vadd.f32 %v384, %v385
  %v387 = vsel %vm103, %v281, 0.0
  %v388 = vadd.f32 %v386, %v387
  %v389 = vsel %vm103, %v282, 0.0
  %v390 = vadd.f32 %v388, %v389
  %v391 = vsel %vm103, %v283, 0.0
  %v392 = vadd.f32 %v390, %v391
  %v393 = vsel %vm103, %v284, 0.0
  %v394 = vadd.f32 %v392, %v393
  %v395 = vsel %vm103, %v285, 0.0
  %v396 = vadd.f32 %v394, %v395
  %v397 = vsel %vm103, %v286, 0.0
  %v398 = vadd.f32 %v396, %v397
  %v399 = vsel %vm103, %v287, 0.0
  %v400 = vadd.f32 %v398, %v399
  %v401 = vsel %vm103, %v288, 0.0
  %v402 = vadd.f32 %v400, %v401
  %v403 = vsel %vm103, %v289, 0.0
  %v404 = vadd.f32 %v402, %v403
  %v405 = vsel %vm103, %v290, 0.0
  %v406 = vadd.f32 %v404, %v405
  %v407 = vsel %vm103, %v291, 0.0
  %v408 = vadd.f32 %v406, %v407
  %v409 = vsel %vm103, %v292, 0.0
  %v410 = vadd.f32 %v408, %v409
  %v411 = vsel %vm103, %v293, 0.0
  %v412 = vadd.f32 %v410, %v411
  %v413 = vsel %vm103, %v294, 0.0
  %v414 = vadd.f32 %v412, %v413
  %v415 = vsel %vm103, %v295, 0.0
  %v416 = vadd.f32 %v414, %v415
  %v417 = vsel %vm103, %v296, 0.0
  %v418 = vadd.f32 %v416, %v417
  %v419 = vsel %vm103, %v297, 0.0
  %v420 = vadd.f32 %v418, %v419
  %v421 = vsel %vm103, %v298, 0.0
  %v422 = vadd.f32 %v420, %v421
  %v423 = vsel %vm103, %v299, 0.0
  %v424 = vadd.f32 %v422, %v423
  %v425 = vsel %vm103, %v300, 0.0
  %v426 = vadd.f32 %v424, %v425
  %v427 = vsel %vm103, %v301, 0.0
  %v428 = vadd.f32 %v426, %v427
  %v429 = vrot.slane %v428, 4
  %v430 = vadd.f32 %v428, %v429
  %v431 = vrot.slane %v430, 2
  %v432 = vadd.f32 %v430, %v431
  %v433 = vrot.slane %v432, 1
  %v434 = vadd.f32 %v432, %v433
  %v435 = vmul.f32 %v434, 0.001953125
  %v436 = vmul.f32 %v237, %v237
  %v437 = vsub.f32 %v435, %v436
  %v438 = vmax.f32 %v437, 0.0
  %v439 = vld [vmem:[%s1] sm:$0x1]
  %v440 = vadd.f32 %v438, 1e-05
  %v441 = vrsqrt.pop %v440
  %v442 = vmul.f32 %v439, %v441
  %v443 = vld [vmem:[%s2] sm:$0x1]
  %v444 = vmul.f32 %v237, %v442
  %v445 = vsub.f32 %v443, %v444
  %v447 = vlaneseq
  %v448 = vshrl.u32 %v447, 7
  %v449 = vsub.s32 0, %v448
  %v450 = vrot.slane %v442, %v449
  %v452 = vmul.f32 %v39, %v450
  %v453 = vmul.f32 %v40, %v450
  %v454 = vmul.f32 %v41, %v450
  %v455 = vmul.f32 %v42, %v450
  %v456 = vmul.f32 %v43, %v450
  %v457 = vmul.f32 %v44, %v450
  %v458 = vmul.f32 %v45, %v450
  %v459 = vmul.f32 %v46, %v450
  %v460 = vmul.f32 %v47, %v450
  %v461 = vmul.f32 %v48, %v450
  %v462 = vmul.f32 %v49, %v450
  %v463 = vmul.f32 %v50, %v450
  %v464 = vmul.f32 %v51, %v450
  %v465 = vmul.f32 %v52, %v450
  %v466 = vmul.f32 %v53, %v450
  %v467 = vmul.f32 %v54, %v450
  %v468 = vmul.f32 %v55, %v450
  %v469 = vmul.f32 %v56, %v450
  %v470 = vmul.f32 %v57, %v450
  %v471 = vmul.f32 %v58, %v450
  %v472 = vmul.f32 %v59, %v450
  %v473 = vmul.f32 %v60, %v450
  %v474 = vmul.f32 %v61, %v450
  %v475 = vmul.f32 %v62, %v450
  %v476 = vmul.f32 %v63, %v450
  %v477 = vmul.f32 %v64, %v450
  %v478 = vmul.f32 %v65, %v450
  %v479 = vmul.f32 %v66, %v450
  %v480 = vmul.f32 %v67, %v450
  %v481 = vmul.f32 %v68, %v450
  %v482 = vmul.f32 %v69, %v450
  %v483 = vmul.f32 %v70, %v450
  %v484 = vmul.f32 %v71, %v450
  %v485 = vmul.f32 %v72, %v450
  %v486 = vmul.f32 %v73, %v450
  %v487 = vmul.f32 %v74, %v450
  %v488 = vmul.f32 %v75, %v450
  %v489 = vmul.f32 %v76, %v450
  %v490 = vmul.f32 %v77, %v450
  %v491 = vmul.f32 %v78, %v450
  %v492 = vmul.f32 %v79, %v450
  %v493 = vmul.f32 %v80, %v450
  %v494 = vmul.f32 %v81, %v450
  %v495 = vmul.f32 %v82, %v450
  %v496 = vmul.f32 %v83, %v450
  %v497 = vmul.f32 %v84, %v450
  %v498 = vmul.f32 %v85, %v450
  %v499 = vmul.f32 %v86, %v450
  %v500 = vmul.f32 %v87, %v450
  %v501 = vmul.f32 %v88, %v450
  %v502 = vmul.f32 %v89, %v450
  %v503 = vmul.f32 %v90, %v450
  %v504 = vmul.f32 %v91, %v450
  %v505 = vmul.f32 %v92, %v450
  %v506 = vmul.f32 %v93, %v450
  %v507 = vmul.f32 %v94, %v450
  %v508 = vmul.f32 %v95, %v450
  %v509 = vmul.f32 %v96, %v450
  %v510 = vmul.f32 %v97, %v450
  %v511 = vmul.f32 %v98, %v450
  %v512 = vmul.f32 %v99, %v450
  %v513 = vmul.f32 %v100, %v450
  %v514 = vmul.f32 %v101, %v450
  %v515 = vmul.f32 %v102, %v450
  %v517 = vlaneseq
  %v518 = vshrl.u32 %v517, 7
  %v519 = vsub.s32 0, %v518
  %v520 = vrot.slane %v445, %v519
  %v522 = vadd.f32 %v452, %v520
  %v523 = vadd.f32 %v453, %v520
  %v524 = vadd.f32 %v454, %v520
  %v525 = vadd.f32 %v455, %v520
  %v526 = vadd.f32 %v456, %v520
  %v527 = vadd.f32 %v457, %v520
  %v528 = vadd.f32 %v458, %v520
  %v529 = vadd.f32 %v459, %v520
  %v530 = vadd.f32 %v460, %v520
  %v531 = vadd.f32 %v461, %v520
  %v532 = vadd.f32 %v462, %v520
  %v533 = vadd.f32 %v463, %v520
  %v534 = vadd.f32 %v464, %v520
  %v535 = vadd.f32 %v465, %v520
  %v536 = vadd.f32 %v466, %v520
  %v537 = vadd.f32 %v467, %v520
  %v538 = vadd.f32 %v468, %v520
  %v539 = vadd.f32 %v469, %v520
  %v540 = vadd.f32 %v470, %v520
  %v541 = vadd.f32 %v471, %v520
  %v542 = vadd.f32 %v472, %v520
  %v543 = vadd.f32 %v473, %v520
  %v544 = vadd.f32 %v474, %v520
  %v545 = vadd.f32 %v475, %v520
  %v546 = vadd.f32 %v476, %v520
  %v547 = vadd.f32 %v477, %v520
  %v548 = vadd.f32 %v478, %v520
  %v549 = vadd.f32 %v479, %v520
  %v550 = vadd.f32 %v480, %v520
  %v551 = vadd.f32 %v481, %v520
  %v552 = vadd.f32 %v482, %v520
  %v553 = vadd.f32 %v483, %v520
  %v554 = vadd.f32 %v484, %v520
  %v555 = vadd.f32 %v485, %v520
  %v556 = vadd.f32 %v486, %v520
  %v557 = vadd.f32 %v487, %v520
  %v558 = vadd.f32 %v488, %v520
  %v559 = vadd.f32 %v489, %v520
  %v560 = vadd.f32 %v490, %v520
  %v561 = vadd.f32 %v491, %v520
  %v562 = vadd.f32 %v492, %v520
  %v563 = vadd.f32 %v493, %v520
  %v564 = vadd.f32 %v494, %v520
  %v565 = vadd.f32 %v495, %v520
  %v566 = vadd.f32 %v496, %v520
  %v567 = vadd.f32 %v497, %v520
  %v568 = vadd.f32 %v498, %v520
  %v569 = vadd.f32 %v499, %v520
  %v570 = vadd.f32 %v500, %v520
  %v571 = vadd.f32 %v501, %v520
  %v572 = vadd.f32 %v502, %v520
  %v573 = vadd.f32 %v503, %v520
  %v574 = vadd.f32 %v504, %v520
  %v575 = vadd.f32 %v505, %v520
  %v576 = vadd.f32 %v506, %v520
  %v577 = vadd.f32 %v507, %v520
  %v578 = vadd.f32 %v508, %v520
  %v579 = vadd.f32 %v509, %v520
  %v580 = vadd.f32 %v510, %v520
  %v581 = vadd.f32 %v511, %v520
  %v582 = vadd.f32 %v512, %v520
  %v583 = vadd.f32 %v513, %v520
  %v584 = vadd.f32 %v514, %v520
  %v585 = vadd.f32 %v515, %v520
  %v586 = vmax.f32 %v522, 0.0
  %v587 = vmax.f32 %v523, 0.0
  %v588 = vmax.f32 %v524, 0.0
  %v589 = vmax.f32 %v525, 0.0
  %v590 = vmax.f32 %v526, 0.0
  %v591 = vmax.f32 %v527, 0.0
  %v592 = vmax.f32 %v528, 0.0
  %v593 = vmax.f32 %v529, 0.0
  %v594 = vmax.f32 %v530, 0.0
  %v595 = vmax.f32 %v531, 0.0
  %v596 = vmax.f32 %v532, 0.0
  %v597 = vmax.f32 %v533, 0.0
  %v598 = vmax.f32 %v534, 0.0
  %v599 = vmax.f32 %v535, 0.0
  %v600 = vmax.f32 %v536, 0.0
  %v601 = vmax.f32 %v537, 0.0
  %v602 = vmax.f32 %v538, 0.0
  %v603 = vmax.f32 %v539, 0.0
  %v604 = vmax.f32 %v540, 0.0
  %v605 = vmax.f32 %v541, 0.0
  %v606 = vmax.f32 %v542, 0.0
  %v607 = vmax.f32 %v543, 0.0
  %v608 = vmax.f32 %v544, 0.0
  %v609 = vmax.f32 %v545, 0.0
  %v610 = vmax.f32 %v546, 0.0
  %v611 = vmax.f32 %v547, 0.0
  %v612 = vmax.f32 %v548, 0.0
  %v613 = vmax.f32 %v549, 0.0
  %v614 = vmax.f32 %v550, 0.0
  %v615 = vmax.f32 %v551, 0.0
  %v616 = vmax.f32 %v552, 0.0
  %v617 = vmax.f32 %v553, 0.0
  %v618 = vmax.f32 %v554, 0.0
  %v619 = vmax.f32 %v555, 0.0
  %v620 = vmax.f32 %v556, 0.0
  %v621 = vmax.f32 %v557, 0.0
  %v622 = vmax.f32 %v558, 0.0
  %v623 = vmax.f32 %v559, 0.0
  %v624 = vmax.f32 %v560, 0.0
  %v625 = vmax.f32 %v561, 0.0
  %v626 = vmax.f32 %v562, 0.0
  %v627 = vmax.f32 %v563, 0.0
  %v628 = vmax.f32 %v564, 0.0
  %v629 = vmax.f32 %v565, 0.0
  %v630 = vmax.f32 %v566, 0.0
  %v631 = vmax.f32 %v567, 0.0
  %v632 = vmax.f32 %v568, 0.0
  %v633 = vmax.f32 %v569, 0.0
  %v634 = vmax.f32 %v570, 0.0
  %v635 = vmax.f32 %v571, 0.0
  %v636 = vmax.f32 %v572, 0.0
  %v637 = vmax.f32 %v573, 0.0
  %v638 = vmax.f32 %v574, 0.0
  %v639 = vmax.f32 %v575, 0.0
  %v640 = vmax.f32 %v576, 0.0
  %v641 = vmax.f32 %v577, 0.0
  %v642 = vmax.f32 %v578, 0.0
  %v643 = vmax.f32 %v579, 0.0
  %v644 = vmax.f32 %v580, 0.0
  %v645 = vmax.f32 %v581, 0.0
  %v646 = vmax.f32 %v582, 0.0
  %v647 = vmax.f32 %v583, 0.0
  %v648 = vmax.f32 %v584, 0.0
  %v649 = vmax.f32 %v585, 0.0
  %v650 = vpack.c.bf16 %v587, %v586
  %v651 = vpack.c.bf16 %v589, %v588
  %v652 = vpack.c.bf16 %v591, %v590
  %v653 = vpack.c.bf16 %v593, %v592
  %v654 = vpack.c.bf16 %v595, %v594
  %v655 = vpack.c.bf16 %v597, %v596
  %v656 = vpack.c.bf16 %v599, %v598
  %v657 = vpack.c.bf16 %v601, %v600
  %v658 = vpack.c.bf16 %v603, %v602
  %v659 = vpack.c.bf16 %v605, %v604
  %v660 = vpack.c.bf16 %v607, %v606
  %v661 = vpack.c.bf16 %v609, %v608
  %v662 = vpack.c.bf16 %v611, %v610
  %v663 = vpack.c.bf16 %v613, %v612
  %v664 = vpack.c.bf16 %v615, %v614
  %v665 = vpack.c.bf16 %v617, %v616
  %v666 = vpack.c.bf16 %v619, %v618
  %v667 = vpack.c.bf16 %v621, %v620
  %v668 = vpack.c.bf16 %v623, %v622
  %v669 = vpack.c.bf16 %v625, %v624
  %v670 = vpack.c.bf16 %v627, %v626
  %v671 = vpack.c.bf16 %v629, %v628
  %v672 = vpack.c.bf16 %v631, %v630
  %v673 = vpack.c.bf16 %v633, %v632
  %v674 = vpack.c.bf16 %v635, %v634
  %v675 = vpack.c.bf16 %v637, %v636
  %v676 = vpack.c.bf16 %v639, %v638
  %v677 = vpack.c.bf16 %v641, %v640
  %v678 = vpack.c.bf16 %v643, %v642
  %v679 = vpack.c.bf16 %v645, %v644
  %v680 = vpack.c.bf16 %v647, %v646
  %v681 = vpack.c.bf16 %v649, %v648
  %v682 = vld [vmem:[%s7] sm:$0xf]
  %v684 = vsel %vm103, %v650, 0
  %v687 = vsel %vm103, %v651, 0
  %v690 = vsel %vm103, %v652, 0
  %v693 = vsel %vm103, %v653, 0
  %v696 = vsel %vm103, %v654, 0
  %v699 = vsel %vm103, %v655, 0
  %v702 = vsel %vm103, %v656, 0
  %v705 = vsel %vm103, %v657, 0
  %v708 = vsel %vm103, %v658, 0
  %v711 = vsel %vm103, %v659, 0
  %v714 = vsel %vm103, %v660, 0
  %v717 = vsel %vm103, %v661, 0
  %v720 = vsel %vm103, %v662, 0
  %v723 = vsel %vm103, %v663, 0
  %v726 = vsel %vm103, %v664, 0
  %v729 = vsel %vm103, %v665, 0
  %v732 = vsel %vm103, %v666, 0
  %v735 = vsel %vm103, %v667, 0
  %v738 = vsel %vm103, %v668, 0
  %v741 = vsel %vm103, %v669, 0
  %v744 = vsel %vm103, %v670, 0
  %v747 = vsel %vm103, %v671, 0
  %v750 = vsel %vm103, %v672, 0
  %v753 = vsel %vm103, %v673, 0
  %v756 = vsel %vm103, %v674, 0
  %v759 = vsel %vm103, %v675, 0
  %v762 = vsel %vm103, %v676, 0
  %v765 = vsel %vm103, %v677, 0
  %v768 = vsel %vm103, %v678, 0
  %v771 = vsel %vm103, %v679, 0
  %v774 = vsel %vm103, %v680, 0
  %v777 = vsel %vm103, %v681, 0
  %vm779 = vcmask 1043456
  %v781 = vsel %vm779, %v682, 0
  %783 = vmatprep.subr.bf16.mxu0 0
  %784 = vmatpush1.bf16.msra.mxu0 0
  %785 = vmatprep.subr.bf16.mxu0 0
  %786 = vmatpush1.bf16.msra.mxu0 0
  %787 = vmatprep.subr.bf16.mxu0 0
  %788 = vmatpush1.bf16.msra.mxu0 0
  %789 = vmatprep.subr.bf16.mxu0 0
  %790 = vmatpush1.bf16.msra.mxu0 0
  %791 = vmatprep.subr.bf16.mxu0 0
  %792 = vmatpush1.bf16.msra.mxu0 0
  %793 = vmatprep.subr.bf16.mxu0 0
  %794 = vmatpush1.bf16.msra.mxu0 0
  %795 = vmatprep.subr.bf16.mxu0 0
  %796 = vmatpush1.bf16.msra.mxu0 0
  %797 = vmatprep.subr.bf16.mxu0 0
  %798 = vmatpush1.bf16.msra.mxu0 %v781
  %799 = vmatprep.subr.bf16.mxu0 0
  %800 = vmatpush2.bf16.msra.mxu0 0
  %801 = vmatprep.subr.bf16.mxu0 0
  %802 = vmatpush2.bf16.msra.mxu0 0
  %803 = vmatprep.subr.bf16.mxu0 0
  %804 = vmatpush2.bf16.msra.mxu0 0
  %805 = vmatprep.subr.bf16.mxu0 0
  %806 = vmatpush2.bf16.msra.mxu0 0
  %807 = vmatprep.subr.bf16.mxu0 0
  %808 = vmatpush2.bf16.msra.mxu0 0
  %809 = vmatprep.subr.bf16.mxu0 0
  %810 = vmatpush2.bf16.msra.mxu0 0
  %811 = vmatprep.subr.bf16.mxu0 0
  %812 = vmatpush2.bf16.msra.mxu0 0
  %813 = vmatprep.subr.bf16.mxu0 0
  %814 = vmatpush2.bf16.msra.mxu0 0
  %815 = vmatprep.mubr.bf16.mxu0 0
  %816 = vmatmul.mubr.bf16.gmra.mxu0 %v684
  %v817 = vpop.f32.mrf.mxu0
  %v818 = vadd.f32 0.0, %v817
  %v819 = vpop.f32.mrf.mxu0
  %v820 = vpop.f32.mrf.mxu0
  %v821 = vadd.f32 0.0, %v820
  %v822 = vpop.f32.mrf.mxu0
  %823 = vmatprep.mubr.bf16.mxu0 0
  %824 = vmatmul.mubr.bf16.gmra.mxu0 %v687
  %v825 = vpop.f32.mrf.mxu0
  %v826 = vadd.f32 0.0, %v825
  %v827 = vpop.f32.mrf.mxu0
  %v828 = vpop.f32.mrf.mxu0
  %v829 = vadd.f32 0.0, %v828
  %v830 = vpop.f32.mrf.mxu0
  %831 = vmatprep.mubr.bf16.mxu0 0
  %832 = vmatmul.mubr.bf16.gmra.mxu0 %v690
  %v833 = vpop.f32.mrf.mxu0
  %v834 = vadd.f32 0.0, %v833
  %v835 = vpop.f32.mrf.mxu0
  %v836 = vpop.f32.mrf.mxu0
  %v837 = vadd.f32 0.0, %v836
  %v838 = vpop.f32.mrf.mxu0
  %839 = vmatprep.mubr.bf16.mxu0 0
  %840 = vmatmul.mubr.bf16.gmra.mxu0 %v693
  %v841 = vpop.f32.mrf.mxu0
  %v842 = vadd.f32 0.0, %v841
  %v843 = vpop.f32.mrf.mxu0
  %v844 = vpop.f32.mrf.mxu0
  %v845 = vadd.f32 0.0, %v844
  %v846 = vpop.f32.mrf.mxu0
  %847 = vmatprep.mubr.bf16.mxu0 0
  %848 = vmatmul.mubr.bf16.gmra.mxu0 %v696
  %v849 = vpop.f32.mrf.mxu0
  %v850 = vadd.f32 0.0, %v849
  %v851 = vpop.f32.mrf.mxu0
  %v852 = vpop.f32.mrf.mxu0
  %v853 = vadd.f32 0.0, %v852
  %v854 = vpop.f32.mrf.mxu0
  %855 = vmatprep.mubr.bf16.mxu0 0
  %856 = vmatmul.mubr.bf16.gmra.mxu0 %v699
  %v857 = vpop.f32.mrf.mxu0
  %v858 = vadd.f32 0.0, %v857
  %v859 = vpop.f32.mrf.mxu0
  %v860 = vpop.f32.mrf.mxu0
  %v861 = vadd.f32 0.0, %v860
  %v862 = vpop.f32.mrf.mxu0
  %863 = vmatprep.mubr.bf16.mxu0 0
  %864 = vmatmul.mubr.bf16.gmra.mxu0 %v702
  %v865 = vpop.f32.mrf.mxu0
  %v866 = vadd.f32 0.0, %v865
  %v867 = vpop.f32.mrf.mxu0
  %v868 = vpop.f32.mrf.mxu0
  %v869 = vadd.f32 0.0, %v868
  %v870 = vpop.f32.mrf.mxu0
  %871 = vmatprep.mubr.bf16.mxu0 0
  %872 = vmatmul.mubr.bf16.gmra.mxu0 %v705
  %v873 = vpop.f32.mrf.mxu0
  %v874 = vadd.f32 0.0, %v873
  %v875 = vpop.f32.mrf.mxu0
  %v876 = vpop.f32.mrf.mxu0
  %v877 = vadd.f32 0.0, %v876
  %v878 = vpop.f32.mrf.mxu0
  %879 = vmatprep.mubr.bf16.mxu0 0
  %880 = vmatmul.mubr.bf16.gmra.mxu0 %v708
  %v881 = vpop.f32.mrf.mxu0
  %v882 = vadd.f32 0.0, %v881
  %v883 = vpop.f32.mrf.mxu0
  %v884 = vpop.f32.mrf.mxu0
  %v885 = vadd.f32 0.0, %v884
  %v886 = vpop.f32.mrf.mxu0
  %887 = vmatprep.mubr.bf16.mxu0 0
  %888 = vmatmul.mubr.bf16.gmra.mxu0 %v711
  %v889 = vpop.f32.mrf.mxu0
  %v890 = vadd.f32 0.0, %v889
  %v891 = vpop.f32.mrf.mxu0
  %v892 = vpop.f32.mrf.mxu0
  %v893 = vadd.f32 0.0, %v892
  %v894 = vpop.f32.mrf.mxu0
  %895 = vmatprep.mubr.bf16.mxu0 0
  %896 = vmatmul.mubr.bf16.gmra.mxu0 %v714
  %v897 = vpop.f32.mrf.mxu0
  %v898 = vadd.f32 0.0, %v897
  %v899 = vpop.f32.mrf.mxu0
  %v900 = vpop.f32.mrf.mxu0
  %v901 = vadd.f32 0.0, %v900
  %v902 = vpop.f32.mrf.mxu0
  %903 = vmatprep.mubr.bf16.mxu0 0
  %904 = vmatmul.mubr.bf16.gmra.mxu0 %v717
  %v905 = vpop.f32.mrf.mxu0
  %v906 = vadd.f32 0.0, %v905
  %v907 = vpop.f32.mrf.mxu0
  %v908 = vpop.f32.mrf.mxu0
  %v909 = vadd.f32 0.0, %v908
  %v910 = vpop.f32.mrf.mxu0
  %911 = vmatprep.mubr.bf16.mxu0 0
  %912 = vmatmul.mubr.bf16.gmra.mxu0 %v720
  %v913 = vpop.f32.mrf.mxu0
  %v914 = vadd.f32 0.0, %v913
  %v915 = vpop.f32.mrf.mxu0
  %v916 = vpop.f32.mrf.mxu0
  %v917 = vadd.f32 0.0, %v916
  %v918 = vpop.f32.mrf.mxu0
  %919 = vmatprep.mubr.bf16.mxu0 0
  %920 = vmatmul.mubr.bf16.gmra.mxu0 %v723
  %v921 = vpop.f32.mrf.mxu0
  %v922 = vadd.f32 0.0, %v921
  %v923 = vpop.f32.mrf.mxu0
  %v924 = vpop.f32.mrf.mxu0
  %v925 = vadd.f32 0.0, %v924
  %v926 = vpop.f32.mrf.mxu0
  %927 = vmatprep.mubr.bf16.mxu0 0
  %928 = vmatmul.mubr.bf16.gmra.mxu0 %v726
  %v929 = vpop.f32.mrf.mxu0
  %v930 = vadd.f32 0.0, %v929
  %v931 = vpop.f32.mrf.mxu0
  %v932 = vpop.f32.mrf.mxu0
  %v933 = vadd.f32 0.0, %v932
  %v934 = vpop.f32.mrf.mxu0
  %935 = vmatprep.mubr.bf16.mxu0 0
  %936 = vmatmul.mubr.bf16.gmra.mxu0 %v729
  %v937 = vpop.f32.mrf.mxu0
  %v938 = vadd.f32 0.0, %v937
  %v939 = vpop.f32.mrf.mxu0
  %v940 = vpop.f32.mrf.mxu0
  %v941 = vadd.f32 0.0, %v940
  %v942 = vpop.f32.mrf.mxu0
  %943 = vmatprep.mubr.bf16.mxu0 0
  %944 = vmatmul.mubr.bf16.gmra.mxu0 %v732
  %v945 = vpop.f32.mrf.mxu0
  %v946 = vadd.f32 0.0, %v945
  %v947 = vpop.f32.mrf.mxu0
  %v948 = vpop.f32.mrf.mxu0
  %v949 = vadd.f32 0.0, %v948
  %v950 = vpop.f32.mrf.mxu0
  %951 = vmatprep.mubr.bf16.mxu0 0
  %952 = vmatmul.mubr.bf16.gmra.mxu0 %v735
  %v953 = vpop.f32.mrf.mxu0
  %v954 = vadd.f32 0.0, %v953
  %v955 = vpop.f32.mrf.mxu0
  %v956 = vpop.f32.mrf.mxu0
  %v957 = vadd.f32 0.0, %v956
  %v958 = vpop.f32.mrf.mxu0
  %959 = vmatprep.mubr.bf16.mxu0 0
  %960 = vmatmul.mubr.bf16.gmra.mxu0 %v738
  %v961 = vpop.f32.mrf.mxu0
  %v962 = vadd.f32 0.0, %v961
  %v963 = vpop.f32.mrf.mxu0
  %v964 = vpop.f32.mrf.mxu0
  %v965 = vadd.f32 0.0, %v964
  %v966 = vpop.f32.mrf.mxu0
  %967 = vmatprep.mubr.bf16.mxu0 0
  %968 = vmatmul.mubr.bf16.gmra.mxu0 %v741
  %v969 = vpop.f32.mrf.mxu0
  %v970 = vadd.f32 0.0, %v969
  %v971 = vpop.f32.mrf.mxu0
  %v972 = vpop.f32.mrf.mxu0
  %v973 = vadd.f32 0.0, %v972
  %v974 = vpop.f32.mrf.mxu0
  %975 = vmatprep.mubr.bf16.mxu0 0
  %976 = vmatmul.mubr.bf16.gmra.mxu0 %v744
  %v977 = vpop.f32.mrf.mxu0
  %v978 = vadd.f32 0.0, %v977
  %v979 = vpop.f32.mrf.mxu0
  %v980 = vpop.f32.mrf.mxu0
  %v981 = vadd.f32 0.0, %v980
  %v982 = vpop.f32.mrf.mxu0
  %983 = vmatprep.mubr.bf16.mxu0 0
  %984 = vmatmul.mubr.bf16.gmra.mxu0 %v747
  %v985 = vpop.f32.mrf.mxu0
  %v986 = vadd.f32 0.0, %v985
  %v987 = vpop.f32.mrf.mxu0
  %v988 = vpop.f32.mrf.mxu0
  %v989 = vadd.f32 0.0, %v988
  %v990 = vpop.f32.mrf.mxu0
  %991 = vmatprep.mubr.bf16.mxu0 0
  %992 = vmatmul.mubr.bf16.gmra.mxu0 %v750
  %v993 = vpop.f32.mrf.mxu0
  %v994 = vadd.f32 0.0, %v993
  %v995 = vpop.f32.mrf.mxu0
  %v996 = vpop.f32.mrf.mxu0
  %v997 = vadd.f32 0.0, %v996
  %v998 = vpop.f32.mrf.mxu0
  %999 = vmatprep.mubr.bf16.mxu0 0
  %1000 = vmatmul.mubr.bf16.gmra.mxu0 %v753
  %v1001 = vpop.f32.mrf.mxu0
  %v1002 = vadd.f32 0.0, %v1001
  %v1003 = vpop.f32.mrf.mxu0
  %v1004 = vpop.f32.mrf.mxu0
  %v1005 = vadd.f32 0.0, %v1004
  %v1006 = vpop.f32.mrf.mxu0
  %1007 = vmatprep.mubr.bf16.mxu0 0
  %1008 = vmatmul.mubr.bf16.gmra.mxu0 %v756
  %v1009 = vpop.f32.mrf.mxu0
  %v1010 = vadd.f32 0.0, %v1009
  %v1011 = vpop.f32.mrf.mxu0
  %v1012 = vpop.f32.mrf.mxu0
  %v1013 = vadd.f32 0.0, %v1012
  %v1014 = vpop.f32.mrf.mxu0
  %1015 = vmatprep.mubr.bf16.mxu0 0
  %1016 = vmatmul.mubr.bf16.gmra.mxu0 %v759
  %v1017 = vpop.f32.mrf.mxu0
  %v1018 = vadd.f32 0.0, %v1017
  %v1019 = vpop.f32.mrf.mxu0
  %v1020 = vpop.f32.mrf.mxu0
  %v1021 = vadd.f32 0.0, %v1020
  %v1022 = vpop.f32.mrf.mxu0
  %1023 = vmatprep.mubr.bf16.mxu0 0
  %1024 = vmatmul.mubr.bf16.gmra.mxu0 %v762
  %v1025 = vpop.f32.mrf.mxu0
  %v1026 = vadd.f32 0.0, %v1025
  %v1027 = vpop.f32.mrf.mxu0
  %v1028 = vpop.f32.mrf.mxu0
  %v1029 = vadd.f32 0.0, %v1028
  %v1030 = vpop.f32.mrf.mxu0
  %1031 = vmatprep.mubr.bf16.mxu0 0
  %1032 = vmatmul.mubr.bf16.gmra.mxu0 %v765
  %v1033 = vpop.f32.mrf.mxu0
  %v1034 = vadd.f32 0.0, %v1033
  %v1035 = vpop.f32.mrf.mxu0
  %v1036 = vpop.f32.mrf.mxu0
  %v1037 = vadd.f32 0.0, %v1036
  %v1038 = vpop.f32.mrf.mxu0
  %1039 = vmatprep.mubr.bf16.mxu0 0
  %1040 = vmatmul.mubr.bf16.gmra.mxu0 %v768
  %v1041 = vpop.f32.mrf.mxu0
  %v1042 = vadd.f32 0.0, %v1041
  %v1043 = vpop.f32.mrf.mxu0
  %v1044 = vpop.f32.mrf.mxu0
  %v1045 = vadd.f32 0.0, %v1044
  %v1046 = vpop.f32.mrf.mxu0
  %1047 = vmatprep.mubr.bf16.mxu0 0
  %1048 = vmatmul.mubr.bf16.gmra.mxu0 %v771
  %v1049 = vpop.f32.mrf.mxu0
  %v1050 = vadd.f32 0.0, %v1049
  %v1051 = vpop.f32.mrf.mxu0
  %v1052 = vpop.f32.mrf.mxu0
  %v1053 = vadd.f32 0.0, %v1052
  %v1054 = vpop.f32.mrf.mxu0
  %1055 = vmatprep.mubr.bf16.mxu0 0
  %1056 = vmatmul.mubr.bf16.gmra.mxu0 %v774
  %v1057 = vpop.f32.mrf.mxu0
  %v1058 = vadd.f32 0.0, %v1057
  %v1059 = vpop.f32.mrf.mxu0
  %v1060 = vpop.f32.mrf.mxu0
  %v1061 = vadd.f32 0.0, %v1060
  %v1062 = vpop.f32.mrf.mxu0
  %1063 = vmatprep.mubr.bf16.mxu0 0
  %1064 = vmatmul.mubr.bf16.gmra.mxu0 %v777
  %v1065 = vpop.f32.mrf.mxu0
  %v1066 = vadd.f32 0.0, %v1065
  %v1067 = vpop.f32.mrf.mxu0
  %v1068 = vpop.f32.mrf.mxu0
  %v1069 = vadd.f32 0.0, %v1068
  %v1070 = vpop.f32.mrf.mxu0
  %1071 = vdwg.mxu0
  %vm1072 = vcmask 130048
  %v1073 = vsel %vm1072, %v818, 0.0
  %v1074 = vsel %vm1072, %v821, 0.0
  %v1075 = vadd.f32 %v1073, %v1074
  %v1076 = vsel %vm1072, %v826, 0.0
  %v1077 = vadd.f32 %v1075, %v1076
  %v1078 = vsel %vm1072, %v829, 0.0
  %v1079 = vadd.f32 %v1077, %v1078
  %v1080 = vsel %vm1072, %v834, 0.0
  %v1081 = vadd.f32 %v1079, %v1080
  %v1082 = vsel %vm1072, %v837, 0.0
  %v1083 = vadd.f32 %v1081, %v1082
  %v1084 = vsel %vm1072, %v842, 0.0
  %v1085 = vadd.f32 %v1083, %v1084
  %v1086 = vsel %vm1072, %v845, 0.0
  %v1087 = vadd.f32 %v1085, %v1086
  %v1088 = vsel %vm1072, %v850, 0.0
  %v1089 = vadd.f32 %v1087, %v1088
  %v1090 = vsel %vm1072, %v853, 0.0
  %v1091 = vadd.f32 %v1089, %v1090
  %v1092 = vsel %vm1072, %v858, 0.0
  %v1093 = vadd.f32 %v1091, %v1092
  %v1094 = vsel %vm1072, %v861, 0.0
  %v1095 = vadd.f32 %v1093, %v1094
  %v1096 = vsel %vm1072, %v866, 0.0
  %v1097 = vadd.f32 %v1095, %v1096
  %v1098 = vsel %vm1072, %v869, 0.0
  %v1099 = vadd.f32 %v1097, %v1098
  %v1100 = vsel %vm1072, %v874, 0.0
  %v1101 = vadd.f32 %v1099, %v1100
  %v1102 = vsel %vm1072, %v877, 0.0
  %v1103 = vadd.f32 %v1101, %v1102
  %v1104 = vsel %vm1072, %v882, 0.0
  %v1105 = vadd.f32 %v1103, %v1104
  %v1106 = vsel %vm1072, %v885, 0.0
  %v1107 = vadd.f32 %v1105, %v1106
  %v1108 = vsel %vm1072, %v890, 0.0
  %v1109 = vadd.f32 %v1107, %v1108
  %v1110 = vsel %vm1072, %v893, 0.0
  %v1111 = vadd.f32 %v1109, %v1110
  %v1112 = vsel %vm1072, %v898, 0.0
  %v1113 = vadd.f32 %v1111, %v1112
  %v1114 = vsel %vm1072, %v901, 0.0
  %v1115 = vadd.f32 %v1113, %v1114
  %v1116 = vsel %vm1072, %v906, 0.0
  %v1117 = vadd.f32 %v1115, %v1116
  %v1118 = vsel %vm1072, %v909, 0.0
  %v1119 = vadd.f32 %v1117, %v1118
  %v1120 = vsel %vm1072, %v914, 0.0
  %v1121 = vadd.f32 %v1119, %v1120
  %v1122 = vsel %vm1072, %v917, 0.0
  %v1123 = vadd.f32 %v1121, %v1122
  %v1124 = vsel %vm1072, %v922, 0.0
  %v1125 = vadd.f32 %v1123, %v1124
  %v1126 = vsel %vm1072, %v925, 0.0
  %v1127 = vadd.f32 %v1125, %v1126
  %v1128 = vsel %vm1072, %v930, 0.0
  %v1129 = vadd.f32 %v1127, %v1128
  %v1130 = vsel %vm1072, %v933, 0.0
  %v1131 = vadd.f32 %v1129, %v1130
  %v1132 = vsel %vm1072, %v938, 0.0
  %v1133 = vadd.f32 %v1131, %v1132
  %v1134 = vsel %vm1072, %v941, 0.0
  %v1135 = vadd.f32 %v1133, %v1134
  %v1136 = vsel %vm1072, %v946, 0.0
  %v1137 = vadd.f32 %v1135, %v1136
  %v1138 = vsel %vm1072, %v949, 0.0
  %v1139 = vadd.f32 %v1137, %v1138
  %v1140 = vsel %vm1072, %v954, 0.0
  %v1141 = vadd.f32 %v1139, %v1140
  %v1142 = vsel %vm1072, %v957, 0.0
  %v1143 = vadd.f32 %v1141, %v1142
  %v1144 = vsel %vm1072, %v962, 0.0
  %v1145 = vadd.f32 %v1143, %v1144
  %v1146 = vsel %vm1072, %v965, 0.0
  %v1147 = vadd.f32 %v1145, %v1146
  %v1148 = vsel %vm1072, %v970, 0.0
  %v1149 = vadd.f32 %v1147, %v1148
  %v1150 = vsel %vm1072, %v973, 0.0
  %v1151 = vadd.f32 %v1149, %v1150
  %v1152 = vsel %vm1072, %v978, 0.0
  %v1153 = vadd.f32 %v1151, %v1152
  %v1154 = vsel %vm1072, %v981, 0.0
  %v1155 = vadd.f32 %v1153, %v1154
  %v1156 = vsel %vm1072, %v986, 0.0
  %v1157 = vadd.f32 %v1155, %v1156
  %v1158 = vsel %vm1072, %v989, 0.0
  %v1159 = vadd.f32 %v1157, %v1158
  %v1160 = vsel %vm1072, %v994, 0.0
  %v1161 = vadd.f32 %v1159, %v1160
  %v1162 = vsel %vm1072, %v997, 0.0
  %v1163 = vadd.f32 %v1161, %v1162
  %v1164 = vsel %vm1072, %v1002, 0.0
  %v1165 = vadd.f32 %v1163, %v1164
  %v1166 = vsel %vm1072, %v1005, 0.0
  %v1167 = vadd.f32 %v1165, %v1166
  %v1168 = vsel %vm1072, %v1010, 0.0
  %v1169 = vadd.f32 %v1167, %v1168
  %v1170 = vsel %vm1072, %v1013, 0.0
  %v1171 = vadd.f32 %v1169, %v1170
  %v1172 = vsel %vm1072, %v1018, 0.0
  %v1173 = vadd.f32 %v1171, %v1172
  %v1174 = vsel %vm1072, %v1021, 0.0
  %v1175 = vadd.f32 %v1173, %v1174
  %v1176 = vsel %vm1072, %v1026, 0.0
  %v1177 = vadd.f32 %v1175, %v1176
  %v1178 = vsel %vm1072, %v1029, 0.0
  %v1179 = vadd.f32 %v1177, %v1178
  %v1180 = vsel %vm1072, %v1034, 0.0
  %v1181 = vadd.f32 %v1179, %v1180
  %v1182 = vsel %vm1072, %v1037, 0.0
  %v1183 = vadd.f32 %v1181, %v1182
  %v1184 = vsel %vm1072, %v1042, 0.0
  %v1185 = vadd.f32 %v1183, %v1184
  %v1186 = vsel %vm1072, %v1045, 0.0
  %v1187 = vadd.f32 %v1185, %v1186
  %v1188 = vsel %vm1072, %v1050, 0.0
  %v1189 = vadd.f32 %v1187, %v1188
  %v1190 = vsel %vm1072, %v1053, 0.0
  %v1191 = vadd.f32 %v1189, %v1190
  %v1192 = vsel %vm1072, %v1058, 0.0
  %v1193 = vadd.f32 %v1191, %v1192
  %v1194 = vsel %vm1072, %v1061, 0.0
  %v1195 = vadd.f32 %v1193, %v1194
  %v1196 = vsel %vm1072, %v1066, 0.0
  %v1197 = vadd.f32 %v1195, %v1196
  %v1198 = vsel %vm1072, %v1069, 0.0
  %v1199 = vadd.f32 %v1197, %v1198
  %v1200 = vrot.slane %v1199, 4
  %v1201 = vadd.f32 %v1199, %v1200
  %v1202 = vrot.slane %v1201, 2
  %v1203 = vadd.f32 %v1201, %v1202
  %v1204 = vrot.slane %v1203, 1
  %v1205 = vadd.f32 %v1203, %v1204
  %v1206 = vmul.f32 %v1205, 0.001953125
  %v1207 = vmul.f32 %v818, %v818
  %v1208 = vmul.f32 %v821, %v821
  %v1209 = vmul.f32 %v826, %v826
  %v1210 = vmul.f32 %v829, %v829
  %v1211 = vmul.f32 %v834, %v834
  %v1212 = vmul.f32 %v837, %v837
  %v1213 = vmul.f32 %v842, %v842
  %v1214 = vmul.f32 %v845, %v845
  %v1215 = vmul.f32 %v850, %v850
  %v1216 = vmul.f32 %v853, %v853
  %v1217 = vmul.f32 %v858, %v858
  %v1218 = vmul.f32 %v861, %v861
  %v1219 = vmul.f32 %v866, %v866
  %v1220 = vmul.f32 %v869, %v869
  %v1221 = vmul.f32 %v874, %v874
  %v1222 = vmul.f32 %v877, %v877
  %v1223 = vmul.f32 %v882, %v882
  %v1224 = vmul.f32 %v885, %v885
  %v1225 = vmul.f32 %v890, %v890
  %v1226 = vmul.f32 %v893, %v893
  %v1227 = vmul.f32 %v898, %v898
  %v1228 = vmul.f32 %v901, %v901
  %v1229 = vmul.f32 %v906, %v906
  %v1230 = vmul.f32 %v909, %v909
  %v1231 = vmul.f32 %v914, %v914
  %v1232 = vmul.f32 %v917, %v917
  %v1233 = vmul.f32 %v922, %v922
  %v1234 = vmul.f32 %v925, %v925
  %v1235 = vmul.f32 %v930, %v930
  %v1236 = vmul.f32 %v933, %v933
  %v1237 = vmul.f32 %v938, %v938
  %v1238 = vmul.f32 %v941, %v941
  %v1239 = vmul.f32 %v946, %v946
  %v1240 = vmul.f32 %v949, %v949
  %v1241 = vmul.f32 %v954, %v954
  %v1242 = vmul.f32 %v957, %v957
  %v1243 = vmul.f32 %v962, %v962
  %v1244 = vmul.f32 %v965, %v965
  %v1245 = vmul.f32 %v970, %v970
  %v1246 = vmul.f32 %v973, %v973
  %v1247 = vmul.f32 %v978, %v978
  %v1248 = vmul.f32 %v981, %v981
  %v1249 = vmul.f32 %v986, %v986
  %v1250 = vmul.f32 %v989, %v989
  %v1251 = vmul.f32 %v994, %v994
  %v1252 = vmul.f32 %v997, %v997
  %v1253 = vmul.f32 %v1002, %v1002
  %v1254 = vmul.f32 %v1005, %v1005
  %v1255 = vmul.f32 %v1010, %v1010
  %v1256 = vmul.f32 %v1013, %v1013
  %v1257 = vmul.f32 %v1018, %v1018
  %v1258 = vmul.f32 %v1021, %v1021
  %v1259 = vmul.f32 %v1026, %v1026
  %v1260 = vmul.f32 %v1029, %v1029
  %v1261 = vmul.f32 %v1034, %v1034
  %v1262 = vmul.f32 %v1037, %v1037
  %v1263 = vmul.f32 %v1042, %v1042
  %v1264 = vmul.f32 %v1045, %v1045
  %v1265 = vmul.f32 %v1050, %v1050
  %v1266 = vmul.f32 %v1053, %v1053
  %v1267 = vmul.f32 %v1058, %v1058
  %v1268 = vmul.f32 %v1061, %v1061
  %v1269 = vmul.f32 %v1066, %v1066
  %v1270 = vmul.f32 %v1069, %v1069
  %v1271 = vsel %vm1072, %v1207, 0.0
  %v1272 = vsel %vm1072, %v1208, 0.0
  %v1273 = vadd.f32 %v1271, %v1272
  %v1274 = vsel %vm1072, %v1209, 0.0
  %v1275 = vadd.f32 %v1273, %v1274
  %v1276 = vsel %vm1072, %v1210, 0.0
  %v1277 = vadd.f32 %v1275, %v1276
  %v1278 = vsel %vm1072, %v1211, 0.0
  %v1279 = vadd.f32 %v1277, %v1278
  %v1280 = vsel %vm1072, %v1212, 0.0
  %v1281 = vadd.f32 %v1279, %v1280
  %v1282 = vsel %vm1072, %v1213, 0.0
  %v1283 = vadd.f32 %v1281, %v1282
  %v1284 = vsel %vm1072, %v1214, 0.0
  %v1285 = vadd.f32 %v1283, %v1284
  %v1286 = vsel %vm1072, %v1215, 0.0
  %v1287 = vadd.f32 %v1285, %v1286
  %v1288 = vsel %vm1072, %v1216, 0.0
  %v1289 = vadd.f32 %v1287, %v1288
  %v1290 = vsel %vm1072, %v1217, 0.0
  %v1291 = vadd.f32 %v1289, %v1290
  %v1292 = vsel %vm1072, %v1218, 0.0
  %v1293 = vadd.f32 %v1291, %v1292
  %v1294 = vsel %vm1072, %v1219, 0.0
  %v1295 = vadd.f32 %v1293, %v1294
  %v1296 = vsel %vm1072, %v1220, 0.0
  %v1297 = vadd.f32 %v1295, %v1296
  %v1298 = vsel %vm1072, %v1221, 0.0
  %v1299 = vadd.f32 %v1297, %v1298
  %v1300 = vsel %vm1072, %v1222, 0.0
  %v1301 = vadd.f32 %v1299, %v1300
  %v1302 = vsel %vm1072, %v1223, 0.0
  %v1303 = vadd.f32 %v1301, %v1302
  %v1304 = vsel %vm1072, %v1224, 0.0
  %v1305 = vadd.f32 %v1303, %v1304
  %v1306 = vsel %vm1072, %v1225, 0.0
  %v1307 = vadd.f32 %v1305, %v1306
  %v1308 = vsel %vm1072, %v1226, 0.0
  %v1309 = vadd.f32 %v1307, %v1308
  %v1310 = vsel %vm1072, %v1227, 0.0
  %v1311 = vadd.f32 %v1309, %v1310
  %v1312 = vsel %vm1072, %v1228, 0.0
  %v1313 = vadd.f32 %v1311, %v1312
  %v1314 = vsel %vm1072, %v1229, 0.0
  %v1315 = vadd.f32 %v1313, %v1314
  %v1316 = vsel %vm1072, %v1230, 0.0
  %v1317 = vadd.f32 %v1315, %v1316
  %v1318 = vsel %vm1072, %v1231, 0.0
  %v1319 = vadd.f32 %v1317, %v1318
  %v1320 = vsel %vm1072, %v1232, 0.0
  %v1321 = vadd.f32 %v1319, %v1320
  %v1322 = vsel %vm1072, %v1233, 0.0
  %v1323 = vadd.f32 %v1321, %v1322
  %v1324 = vsel %vm1072, %v1234, 0.0
  %v1325 = vadd.f32 %v1323, %v1324
  %v1326 = vsel %vm1072, %v1235, 0.0
  %v1327 = vadd.f32 %v1325, %v1326
  %v1328 = vsel %vm1072, %v1236, 0.0
  %v1329 = vadd.f32 %v1327, %v1328
  %v1330 = vsel %vm1072, %v1237, 0.0
  %v1331 = vadd.f32 %v1329, %v1330
  %v1332 = vsel %vm1072, %v1238, 0.0
  %v1333 = vadd.f32 %v1331, %v1332
  %v1334 = vsel %vm1072, %v1239, 0.0
  %v1335 = vadd.f32 %v1333, %v1334
  %v1336 = vsel %vm1072, %v1240, 0.0
  %v1337 = vadd.f32 %v1335, %v1336
  %v1338 = vsel %vm1072, %v1241, 0.0
  %v1339 = vadd.f32 %v1337, %v1338
  %v1340 = vsel %vm1072, %v1242, 0.0
  %v1341 = vadd.f32 %v1339, %v1340
  %v1342 = vsel %vm1072, %v1243, 0.0
  %v1343 = vadd.f32 %v1341, %v1342
  %v1344 = vsel %vm1072, %v1244, 0.0
  %v1345 = vadd.f32 %v1343, %v1344
  %v1346 = vsel %vm1072, %v1245, 0.0
  %v1347 = vadd.f32 %v1345, %v1346
  %v1348 = vsel %vm1072, %v1246, 0.0
  %v1349 = vadd.f32 %v1347, %v1348
  %v1350 = vsel %vm1072, %v1247, 0.0
  %v1351 = vadd.f32 %v1349, %v1350
  %v1352 = vsel %vm1072, %v1248, 0.0
  %v1353 = vadd.f32 %v1351, %v1352
  %v1354 = vsel %vm1072, %v1249, 0.0
  %v1355 = vadd.f32 %v1353, %v1354
  %v1356 = vsel %vm1072, %v1250, 0.0
  %v1357 = vadd.f32 %v1355, %v1356
  %v1358 = vsel %vm1072, %v1251, 0.0
  %v1359 = vadd.f32 %v1357, %v1358
  %v1360 = vsel %vm1072, %v1252, 0.0
  %v1361 = vadd.f32 %v1359, %v1360
  %v1362 = vsel %vm1072, %v1253, 0.0
  %v1363 = vadd.f32 %v1361, %v1362
  %v1364 = vsel %vm1072, %v1254, 0.0
  %v1365 = vadd.f32 %v1363, %v1364
  %v1366 = vsel %vm1072, %v1255, 0.0
  %v1367 = vadd.f32 %v1365, %v1366
  %v1368 = vsel %vm1072, %v1256, 0.0
  %v1369 = vadd.f32 %v1367, %v1368
  %v1370 = vsel %vm1072, %v1257, 0.0
  %v1371 = vadd.f32 %v1369, %v1370
  %v1372 = vsel %vm1072, %v1258, 0.0
  %v1373 = vadd.f32 %v1371, %v1372
  %v1374 = vsel %vm1072, %v1259, 0.0
  %v1375 = vadd.f32 %v1373, %v1374
  %v1376 = vsel %vm1072, %v1260, 0.0
  %v1377 = vadd.f32 %v1375, %v1376
  %v1378 = vsel %vm1072, %v1261, 0.0
  %v1379 = vadd.f32 %v1377, %v1378
  %v1380 = vsel %vm1072, %v1262, 0.0
  %v1381 = vadd.f32 %v1379, %v1380
  %v1382 = vsel %vm1072, %v1263, 0.0
  %v1383 = vadd.f32 %v1381, %v1382
  %v1384 = vsel %vm1072, %v1264, 0.0
  %v1385 = vadd.f32 %v1383, %v1384
  %v1386 = vsel %vm1072, %v1265, 0.0
  %v1387 = vadd.f32 %v1385, %v1386
  %v1388 = vsel %vm1072, %v1266, 0.0
  %v1389 = vadd.f32 %v1387, %v1388
  %v1390 = vsel %vm1072, %v1267, 0.0
  %v1391 = vadd.f32 %v1389, %v1390
  %v1392 = vsel %vm1072, %v1268, 0.0
  %v1393 = vadd.f32 %v1391, %v1392
  %v1394 = vsel %vm1072, %v1269, 0.0
  %v1395 = vadd.f32 %v1393, %v1394
  %v1396 = vsel %vm1072, %v1270, 0.0
  %v1397 = vadd.f32 %v1395, %v1396
  %v1398 = vrot.slane %v1397, 4
  %v1399 = vadd.f32 %v1397, %v1398
  %v1400 = vrot.slane %v1399, 2
  %v1401 = vadd.f32 %v1399, %v1400
  %v1402 = vrot.slane %v1401, 1
  %v1403 = vadd.f32 %v1401, %v1402
  %v1404 = vmul.f32 %v1403, 0.001953125
  %v1405 = vmul.f32 %v1206, %v1206
  %v1406 = vsub.f32 %v1404, %v1405
  %v1407 = vmax.f32 %v1406, 0.0
  %v1408 = vld [vmem:[%s3] sm:$0x1]
  %v1409 = vadd.f32 %v1407, 1e-05
  %v1410 = vrsqrt.pop %v1409
  %v1411 = vmul.f32 %v1408, %v1410
  %v1412 = vld [vmem:[%s4] sm:$0x1]
  %v1413 = vmul.f32 %v1206, %v1411
  %v1414 = vsub.f32 %v1412, %v1413
  %v1416 = vlaneseq
  %v1417 = vshrl.u32 %v1416, 7
  %v1418 = vsub.s32 0, %v1417
  %v1419 = vrot.slane %v1411, %v1418
  %v1421 = vmul.f32 %v818, %v1419
  %v1422 = vmul.f32 %v821, %v1419
  %v1423 = vmul.f32 %v826, %v1419
  %v1424 = vmul.f32 %v829, %v1419
  %v1425 = vmul.f32 %v834, %v1419
  %v1426 = vmul.f32 %v837, %v1419
  %v1427 = vmul.f32 %v842, %v1419
  %v1428 = vmul.f32 %v845, %v1419
  %v1429 = vmul.f32 %v850, %v1419
  %v1430 = vmul.f32 %v853, %v1419
  %v1431 = vmul.f32 %v858, %v1419
  %v1432 = vmul.f32 %v861, %v1419
  %v1433 = vmul.f32 %v866, %v1419
  %v1434 = vmul.f32 %v869, %v1419
  %v1435 = vmul.f32 %v874, %v1419
  %v1436 = vmul.f32 %v877, %v1419
  %v1437 = vmul.f32 %v882, %v1419
  %v1438 = vmul.f32 %v885, %v1419
  %v1439 = vmul.f32 %v890, %v1419
  %v1440 = vmul.f32 %v893, %v1419
  %v1441 = vmul.f32 %v898, %v1419
  %v1442 = vmul.f32 %v901, %v1419
  %v1443 = vmul.f32 %v906, %v1419
  %v1444 = vmul.f32 %v909, %v1419
  %v1445 = vmul.f32 %v914, %v1419
  %v1446 = vmul.f32 %v917, %v1419
  %v1447 = vmul.f32 %v922, %v1419
  %v1448 = vmul.f32 %v925, %v1419
  %v1449 = vmul.f32 %v930, %v1419
  %v1450 = vmul.f32 %v933, %v1419
  %v1451 = vmul.f32 %v938, %v1419
  %v1452 = vmul.f32 %v941, %v1419
  %v1453 = vmul.f32 %v946, %v1419
  %v1454 = vmul.f32 %v949, %v1419
  %v1455 = vmul.f32 %v954, %v1419
  %v1456 = vmul.f32 %v957, %v1419
  %v1457 = vmul.f32 %v962, %v1419
  %v1458 = vmul.f32 %v965, %v1419
  %v1459 = vmul.f32 %v970, %v1419
  %v1460 = vmul.f32 %v973, %v1419
  %v1461 = vmul.f32 %v978, %v1419
  %v1462 = vmul.f32 %v981, %v1419
  %v1463 = vmul.f32 %v986, %v1419
  %v1464 = vmul.f32 %v989, %v1419
  %v1465 = vmul.f32 %v994, %v1419
  %v1466 = vmul.f32 %v997, %v1419
  %v1467 = vmul.f32 %v1002, %v1419
  %v1468 = vmul.f32 %v1005, %v1419
  %v1469 = vmul.f32 %v1010, %v1419
  %v1470 = vmul.f32 %v1013, %v1419
  %v1471 = vmul.f32 %v1018, %v1419
  %v1472 = vmul.f32 %v1021, %v1419
  %v1473 = vmul.f32 %v1026, %v1419
  %v1474 = vmul.f32 %v1029, %v1419
  %v1475 = vmul.f32 %v1034, %v1419
  %v1476 = vmul.f32 %v1037, %v1419
  %v1477 = vmul.f32 %v1042, %v1419
  %v1478 = vmul.f32 %v1045, %v1419
  %v1479 = vmul.f32 %v1050, %v1419
  %v1480 = vmul.f32 %v1053, %v1419
  %v1481 = vmul.f32 %v1058, %v1419
  %v1482 = vmul.f32 %v1061, %v1419
  %v1483 = vmul.f32 %v1066, %v1419
  %v1484 = vmul.f32 %v1069, %v1419
  %v1486 = vlaneseq
  %v1487 = vshrl.u32 %v1486, 7
  %v1488 = vsub.s32 0, %v1487
  %v1489 = vrot.slane %v1414, %v1488
  %v1491 = vadd.f32 %v1421, %v1489
  %v1492 = vadd.f32 %v1422, %v1489
  %v1493 = vadd.f32 %v1423, %v1489
  %v1494 = vadd.f32 %v1424, %v1489
  %v1495 = vadd.f32 %v1425, %v1489
  %v1496 = vadd.f32 %v1426, %v1489
  %v1497 = vadd.f32 %v1427, %v1489
  %v1498 = vadd.f32 %v1428, %v1489
  %v1499 = vadd.f32 %v1429, %v1489
  %v1500 = vadd.f32 %v1430, %v1489
  %v1501 = vadd.f32 %v1431, %v1489
  %v1502 = vadd.f32 %v1432, %v1489
  %v1503 = vadd.f32 %v1433, %v1489
  %v1504 = vadd.f32 %v1434, %v1489
  %v1505 = vadd.f32 %v1435, %v1489
  %v1506 = vadd.f32 %v1436, %v1489
  %v1507 = vadd.f32 %v1437, %v1489
  %v1508 = vadd.f32 %v1438, %v1489
  %v1509 = vadd.f32 %v1439, %v1489
  %v1510 = vadd.f32 %v1440, %v1489
  %v1511 = vadd.f32 %v1441, %v1489
  %v1512 = vadd.f32 %v1442, %v1489
  %v1513 = vadd.f32 %v1443, %v1489
  %v1514 = vadd.f32 %v1444, %v1489
  %v1515 = vadd.f32 %v1445, %v1489
  %v1516 = vadd.f32 %v1446, %v1489
  %v1517 = vadd.f32 %v1447, %v1489
  %v1518 = vadd.f32 %v1448, %v1489
  %v1519 = vadd.f32 %v1449, %v1489
  %v1520 = vadd.f32 %v1450, %v1489
  %v1521 = vadd.f32 %v1451, %v1489
  %v1522 = vadd.f32 %v1452, %v1489
  %v1523 = vadd.f32 %v1453, %v1489
  %v1524 = vadd.f32 %v1454, %v1489
  %v1525 = vadd.f32 %v1455, %v1489
  %v1526 = vadd.f32 %v1456, %v1489
  %v1527 = vadd.f32 %v1457, %v1489
  %v1528 = vadd.f32 %v1458, %v1489
  %v1529 = vadd.f32 %v1459, %v1489
  %v1530 = vadd.f32 %v1460, %v1489
  %v1531 = vadd.f32 %v1461, %v1489
  %v1532 = vadd.f32 %v1462, %v1489
  %v1533 = vadd.f32 %v1463, %v1489
  %v1534 = vadd.f32 %v1464, %v1489
  %v1535 = vadd.f32 %v1465, %v1489
  %v1536 = vadd.f32 %v1466, %v1489
  %v1537 = vadd.f32 %v1467, %v1489
  %v1538 = vadd.f32 %v1468, %v1489
  %v1539 = vadd.f32 %v1469, %v1489
  %v1540 = vadd.f32 %v1470, %v1489
  %v1541 = vadd.f32 %v1471, %v1489
  %v1542 = vadd.f32 %v1472, %v1489
  %v1543 = vadd.f32 %v1473, %v1489
  %v1544 = vadd.f32 %v1474, %v1489
  %v1545 = vadd.f32 %v1475, %v1489
  %v1546 = vadd.f32 %v1476, %v1489
  %v1547 = vadd.f32 %v1477, %v1489
  %v1548 = vadd.f32 %v1478, %v1489
  %v1549 = vadd.f32 %v1479, %v1489
  %v1550 = vadd.f32 %v1480, %v1489
  %v1551 = vadd.f32 %v1481, %v1489
  %v1552 = vadd.f32 %v1482, %v1489
  %v1553 = vadd.f32 %v1483, %v1489
  %v1554 = vadd.f32 %v1484, %v1489
  %v1555 = vmax.f32 %v1491, 0.0
  %v1556 = vmax.f32 %v1492, 0.0
  %v1557 = vmax.f32 %v1493, 0.0
  %v1558 = vmax.f32 %v1494, 0.0
  %v1559 = vmax.f32 %v1495, 0.0
  %v1560 = vmax.f32 %v1496, 0.0
  %v1561 = vmax.f32 %v1497, 0.0
  %v1562 = vmax.f32 %v1498, 0.0
  %v1563 = vmax.f32 %v1499, 0.0
  %v1564 = vmax.f32 %v1500, 0.0
  %v1565 = vmax.f32 %v1501, 0.0
  %v1566 = vmax.f32 %v1502, 0.0
  %v1567 = vmax.f32 %v1503, 0.0
  %v1568 = vmax.f32 %v1504, 0.0
  %v1569 = vmax.f32 %v1505, 0.0
  %v1570 = vmax.f32 %v1506, 0.0
  %v1571 = vmax.f32 %v1507, 0.0
  %v1572 = vmax.f32 %v1508, 0.0
  %v1573 = vmax.f32 %v1509, 0.0
  %v1574 = vmax.f32 %v1510, 0.0
  %v1575 = vmax.f32 %v1511, 0.0
  %v1576 = vmax.f32 %v1512, 0.0
  %v1577 = vmax.f32 %v1513, 0.0
  %v1578 = vmax.f32 %v1514, 0.0
  %v1579 = vmax.f32 %v1515, 0.0
  %v1580 = vmax.f32 %v1516, 0.0
  %v1581 = vmax.f32 %v1517, 0.0
  %v1582 = vmax.f32 %v1518, 0.0
  %v1583 = vmax.f32 %v1519, 0.0
  %v1584 = vmax.f32 %v1520, 0.0
  %v1585 = vmax.f32 %v1521, 0.0
  %v1586 = vmax.f32 %v1522, 0.0
  %v1587 = vmax.f32 %v1523, 0.0
  %v1588 = vmax.f32 %v1524, 0.0
  %v1589 = vmax.f32 %v1525, 0.0
  %v1590 = vmax.f32 %v1526, 0.0
  %v1591 = vmax.f32 %v1527, 0.0
  %v1592 = vmax.f32 %v1528, 0.0
  %v1593 = vmax.f32 %v1529, 0.0
  %v1594 = vmax.f32 %v1530, 0.0
  %v1595 = vmax.f32 %v1531, 0.0
  %v1596 = vmax.f32 %v1532, 0.0
  %v1597 = vmax.f32 %v1533, 0.0
  %v1598 = vmax.f32 %v1534, 0.0
  %v1599 = vmax.f32 %v1535, 0.0
  %v1600 = vmax.f32 %v1536, 0.0
  %v1601 = vmax.f32 %v1537, 0.0
  %v1602 = vmax.f32 %v1538, 0.0
  %v1603 = vmax.f32 %v1539, 0.0
  %v1604 = vmax.f32 %v1540, 0.0
  %v1605 = vmax.f32 %v1541, 0.0
  %v1606 = vmax.f32 %v1542, 0.0
  %v1607 = vmax.f32 %v1543, 0.0
  %v1608 = vmax.f32 %v1544, 0.0
  %v1609 = vmax.f32 %v1545, 0.0
  %v1610 = vmax.f32 %v1546, 0.0
  %v1611 = vmax.f32 %v1547, 0.0
  %v1612 = vmax.f32 %v1548, 0.0
  %v1613 = vmax.f32 %v1549, 0.0
  %v1614 = vmax.f32 %v1550, 0.0
  %v1615 = vmax.f32 %v1551, 0.0
  %v1616 = vmax.f32 %v1552, 0.0
  %v1617 = vmax.f32 %v1553, 0.0
  %v1618 = vmax.f32 %v1554, 0.0
  %s1619 = scalar_lea.vmem [#allocation2], 24
  %1620 = vst.msk [vmem:[%s1619 + $0x1] sm:$0xff] %vm1072, %v1555
  %1621 = vst.msk [vmem:[%s1619 + $0x9] sm:$0xff] %vm1072, %v1556
  %1622 = vst.msk [vmem:[%s1619 + $0x19] sm:$0xff] %vm1072, %v1557
  %1623 = vst.msk [vmem:[%s1619 + $0x21] sm:$0xff] %vm1072, %v1558
  %1624 = vst.msk [vmem:[%s1619 + $0x31] sm:$0xff] %vm1072, %v1559
  %1625 = vst.msk [vmem:[%s1619 + $0x39] sm:$0xff] %vm1072, %v1560
  %1626 = vst.msk [vmem:[%s1619 + $0x49] sm:$0xff] %vm1072, %v1561
  %1627 = vst.msk [vmem:[%s1619 + $0x51] sm:$0xff] %vm1072, %v1562
  %1628 = vst.msk [vmem:[%s1619 + $0x61] sm:$0xff] %vm1072, %v1563
  %1629 = vst.msk [vmem:[%s1619 + $0x69] sm:$0xff] %vm1072, %v1564
  %1630 = vst.msk [vmem:[%s1619 + $0x79] sm:$0xff] %vm1072, %v1565
  %1631 = vst.msk [vmem:[%s1619 + $0x81] sm:$0xff] %vm1072, %v1566
  %1632 = vst.msk [vmem:[%s1619 + $0x91] sm:$0xff] %vm1072, %v1567
  %1633 = vst.msk [vmem:[%s1619 + $0x99] sm:$0xff] %vm1072, %v1568
  %1634 = vst.msk [vmem:[%s1619 + $0xa9] sm:$0xff] %vm1072, %v1569
  %1635 = vst.msk [vmem:[%s1619 + $0xb1] sm:$0xff] %vm1072, %v1570
  %1636 = vst.msk [vmem:[%s1619 + $0xc1] sm:$0xff] %vm1072, %v1571
  %1637 = vst.msk [vmem:[%s1619 + $0xc9] sm:$0xff] %vm1072, %v1572
  %1638 = vst.msk [vmem:[%s1619 + $0xd9] sm:$0xff] %vm1072, %v1573
  %1639 = vst.msk [vmem:[%s1619 + $0xe1] sm:$0xff] %vm1072, %v1574
  %1640 = vst.msk [vmem:[%s1619 + $0xf1] sm:$0xff] %vm1072, %v1575
  %1641 = vst.msk [vmem:[%s1619 + $0xf9] sm:$0xff] %vm1072, %v1576
  %1642 = vst.msk [vmem:[%s1619 + $0x109] sm:$0xff] %vm1072, %v1577
  %1643 = vst.msk [vmem:[%s1619 + $0x111] sm:$0xff] %vm1072, %v1578
  %1644 = vst.msk [vmem:[%s1619 + $0x121] sm:$0xff] %vm1072, %v1579
  %1645 = vst.msk [vmem:[%s1619 + $0x129] sm:$0xff] %vm1072, %v1580
  %1646 = vst.msk [vmem:[%s1619 + $0x139] sm:$0xff] %vm1072, %v1581
  %1647 = vst.msk [vmem:[%s1619 + $0x141] sm:$0xff] %vm1072, %v1582
  %1648 = vst.msk [vmem:[%s1619 + $0x151] sm:$0xff] %vm1072, %v1583
  %1649 = vst.msk [vmem:[%s1619 + $0x159] sm:$0xff] %vm1072, %v1584
  %1650 = vst.msk [vmem:[%s1619 + $0x169] sm:$0xff] %vm1072, %v1585
  %1651 = vst.msk [vmem:[%s1619 + $0x171] sm:$0xff] %vm1072, %v1586
  %1652 = vst.msk [vmem:[%s1619 + $0x1b1] sm:$0xff] %vm1072, %v1587
  %1653 = vst.msk [vmem:[%s1619 + $0x1b9] sm:$0xff] %vm1072, %v1588
  %1654 = vst.msk [vmem:[%s1619 + $0x1c9] sm:$0xff] %vm1072, %v1589
  %1655 = vst.msk [vmem:[%s1619 + $0x1d1] sm:$0xff] %vm1072, %v1590
  %1656 = vst.msk [vmem:[%s1619 + $0x1e1] sm:$0xff] %vm1072, %v1591
  %1657 = vst.msk [vmem:[%s1619 + $0x1e9] sm:$0xff] %vm1072, %v1592
  %1658 = vst.msk [vmem:[%s1619 + $0x1f9] sm:$0xff] %vm1072, %v1593
  %1659 = vst.msk [vmem:[%s1619 + $0x201] sm:$0xff] %vm1072, %v1594
  %1660 = vst.msk [vmem:[%s1619 + $0x211] sm:$0xff] %vm1072, %v1595
  %1661 = vst.msk [vmem:[%s1619 + $0x219] sm:$0xff] %vm1072, %v1596
  %1662 = vst.msk [vmem:[%s1619 + $0x229] sm:$0xff] %vm1072, %v1597
  %1663 = vst.msk [vmem:[%s1619 + $0x231] sm:$0xff] %vm1072, %v1598
  %1664 = vst.msk [vmem:[%s1619 + $0x241] sm:$0xff] %vm1072, %v1599
  %1665 = vst.msk [vmem:[%s1619 + $0x249] sm:$0xff] %vm1072, %v1600
  %1666 = vst.msk [vmem:[%s1619 + $0x259] sm:$0xff] %vm1072, %v1601
  %1667 = vst.msk [vmem:[%s1619 + $0x261] sm:$0xff] %vm1072, %v1602
  %1668 = vst.msk [vmem:[%s1619 + $0x271] sm:$0xff] %vm1072, %v1603
  %1669 = vst.msk [vmem:[%s1619 + $0x279] sm:$0xff] %vm1072, %v1604
  %1670 = vst.msk [vmem:[%s1619 + $0x289] sm:$0xff] %vm1072, %v1605
  %1671 = vst.msk [vmem:[%s1619 + $0x291] sm:$0xff] %vm1072, %v1606
  %1672 = vst.msk [vmem:[%s1619 + $0x2a1] sm:$0xff] %vm1072, %v1607
  %1673 = vst.msk [vmem:[%s1619 + $0x2a9] sm:$0xff] %vm1072, %v1608
  %1674 = vst.msk [vmem:[%s1619 + $0x2b9] sm:$0xff] %vm1072, %v1609
  %1675 = vst.msk [vmem:[%s1619 + $0x2c1] sm:$0xff] %vm1072, %v1610
  %1676 = vst.msk [vmem:[%s1619 + $0x2d1] sm:$0xff] %vm1072, %v1611
  %1677 = vst.msk [vmem:[%s1619 + $0x2d9] sm:$0xff] %vm1072, %v1612
  %1678 = vst.msk [vmem:[%s1619 + $0x2e9] sm:$0xff] %vm1072, %v1613
  %1679 = vst.msk [vmem:[%s1619 + $0x2f1] sm:$0xff] %vm1072, %v1614
  %1680 = vst.msk [vmem:[%s1619 + $0x301] sm:$0xff] %vm1072, %v1615
  %1681 = vst.msk [vmem:[%s1619 + $0x309] sm:$0xff] %vm1072, %v1616
  %1682 = vst.msk [vmem:[%s1619 + $0x319] sm:$0xff] %vm1072, %v1617
  %1683 = vst.msk [vmem:[%s1619 + $0x321] sm:$0xff] %vm1072, %v1618
  %1684 = vst.msk [vmem:[#allocation2] sm:$0xff] %vm1072, 0.0
  %1685 = vst.msk [vmem:[#allocation2 + $0x8] sm:$0xff] %vm1072, 0.0
  %vm1686 = vcmask 123904
  %1687 = vst.msk [vmem:[#allocation2 + $0x10] sm:$0x3] %vm1686, 0.0
  %1688 = vst.msk [vmem:[#allocation2 + $0x1b0] sm:$0xff] %vm1072, 0.0
  %1689 = vst.msk [vmem:[#allocation2 + $0x1b8] sm:$0xff] %vm1072, 0.0
  %1690 = vst.msk [vmem:[#allocation2 + $0x1c0] sm:$0x3] %vm1686, 0.0
  %s1691 = scalar_lea.vmem [#allocation2], 408
  %1692 = vst.msk [vmem:[%s1691] sm:$0xff] %vm1072, 0.0
  %1693 = vst.msk [vmem:[%s1691 + $0x8] sm:$0xff] %vm1072, 0.0
  %1694 = vst.msk [vmem:[%s1691 + $0x10] sm:$0x3] %vm1686, 0.0
  %1695 = vst.msk [vmem:[%s1691 + $0x1b0] sm:$0xff] %vm1072, 0.0
  %1696 = vst.msk [vmem:[%s1691 + $0x1b8] sm:$0xff] %vm1072, 0.0
  %1697 = vst.msk [vmem:[%s1691 + $0x1c0] sm:$0x3] %vm1686, 0.0
  %vm1698 = vcmask 122880
  %1699 = vst.msk [vmem:[#allocation2] sm:$0x1] %vm1698, 0.0
  %1700 = vst.msk [vmem:[#allocation2 + $0x18] sm:$0x1] %vm1698, 0.0
  %1701 = vst.msk [vmem:[#allocation2 + $0x30] sm:$0x1] %vm1698, 0.0
  %1702 = vst.msk [vmem:[#allocation2 + $0x48] sm:$0x1] %vm1698, 0.0
  %1703 = vst.msk [vmem:[#allocation2 + $0x60] sm:$0x1] %vm1698, 0.0
  %1704 = vst.msk [vmem:[#allocation2 + $0x78] sm:$0x1] %vm1698, 0.0
  %1705 = vst.msk [vmem:[#allocation2 + $0x90] sm:$0x1] %vm1698, 0.0
  %1706 = vst.msk [vmem:[#allocation2 + $0xa8] sm:$0x1] %vm1698, 0.0
  %1707 = vst.msk [vmem:[#allocation2 + $0xc0] sm:$0x1] %vm1698, 0.0
  %1708 = vst.msk [vmem:[#allocation2 + $0xd8] sm:$0x1] %vm1698, 0.0
  %1709 = vst.msk [vmem:[#allocation2 + $0xf0] sm:$0x1] %vm1698, 0.0
  %1710 = vst.msk [vmem:[#allocation2 + $0x108] sm:$0x1] %vm1698, 0.0
  %1711 = vst.msk [vmem:[#allocation2 + $0x120] sm:$0x1] %vm1698, 0.0
  %1712 = vst.msk [vmem:[#allocation2 + $0x138] sm:$0x1] %vm1698, 0.0
  %1713 = vst.msk [vmem:[#allocation2 + $0x150] sm:$0x1] %vm1698, 0.0
  %1714 = vst.msk [vmem:[#allocation2 + $0x168] sm:$0x1] %vm1698, 0.0
  %1715 = vst.msk [vmem:[#allocation2 + $0x180] sm:$0x1] %vm1698, 0.0
  %1716 = vst.msk [vmem:[#allocation2 + $0x198] sm:$0x1] %vm1698, 0.0
  %1717 = vst.msk [vmem:[#allocation2 + $0x1b0] sm:$0x1] %vm1698, 0.0
  %1718 = vst.msk [vmem:[#allocation2 + $0x1c8] sm:$0x1] %vm1698, 0.0
  %1719 = vst.msk [vmem:[#allocation2 + $0x1e0] sm:$0x1] %vm1698, 0.0
  %1720 = vst.msk [vmem:[#allocation2 + $0x1f8] sm:$0x1] %vm1698, 0.0
  %1721 = vst.msk [vmem:[#allocation2 + $0x210] sm:$0x1] %vm1698, 0.0
  %1722 = vst.msk [vmem:[#allocation2 + $0x228] sm:$0x1] %vm1698, 0.0
  %1723 = vst.msk [vmem:[#allocation2 + $0x240] sm:$0x1] %vm1698, 0.0
  %1724 = vst.msk [vmem:[#allocation2 + $0x258] sm:$0x1] %vm1698, 0.0
  %1725 = vst.msk [vmem:[#allocation2 + $0x270] sm:$0x1] %vm1698, 0.0
  %1726 = vst.msk [vmem:[#allocation2 + $0x288] sm:$0x1] %vm1698, 0.0
  %1727 = vst.msk [vmem:[#allocation2 + $0x2a0] sm:$0x1] %vm1698, 0.0
  %1728 = vst.msk [vmem:[#allocation2 + $0x2b8] sm:$0x1] %vm1698, 0.0
  %1729 = vst.msk [vmem:[#allocation2 + $0x2d0] sm:$0x1] %vm1698, 0.0
  %1730 = vst.msk [vmem:[#allocation2 + $0x2e8] sm:$0x1] %vm1698, 0.0
  %1731 = vst.msk [vmem:[#allocation2 + $0x300] sm:$0x1] %vm1698, 0.0
  %1732 = vst.msk [vmem:[#allocation2 + $0x318] sm:$0x1] %vm1698, 0.0
  %1733 = vst.msk [vmem:[#allocation2 + $0x330] sm:$0x1] %vm1698, 0.0
  %1734 = vst.msk [vmem:[#allocation2 + $0x348] sm:$0x1] %vm1698, 0.0
  %1735 = vst.msk [vmem:[#allocation2 + $0x11] sm:$0x1] %vm1698, 0.0
  %1736 = vst.msk [vmem:[#allocation2 + $0x29] sm:$0x1] %vm1698, 0.0
  %1737 = vst.msk [vmem:[#allocation2 + $0x41] sm:$0x1] %vm1698, 0.0
  %1738 = vst.msk [vmem:[#allocation2 + $0x59] sm:$0x1] %vm1698, 0.0
  %1739 = vst.msk [vmem:[#allocation2 + $0x71] sm:$0x1] %vm1698, 0.0
  %1740 = vst.msk [vmem:[#allocation2 + $0x89] sm:$0x1] %vm1698, 0.0
  %1741 = vst.msk [vmem:[#allocation2 + $0xa1] sm:$0x1] %vm1698, 0.0
  %1742 = vst.msk [vmem:[#allocation2 + $0xb9] sm:$0x1] %vm1698, 0.0
  %1743 = vst.msk [vmem:[#allocation2 + $0xd1] sm:$0x1] %vm1698, 0.0
  %1744 = vst.msk [vmem:[#allocation2 + $0xe9] sm:$0x1] %vm1698, 0.0
  %1745 = vst.msk [vmem:[#allocation2 + $0x101] sm:$0x1] %vm1698, 0.0
  %1746 = vst.msk [vmem:[#allocation2 + $0x119] sm:$0x1] %vm1698, 0.0
  %1747 = vst.msk [vmem:[#allocation2 + $0x131] sm:$0x1] %vm1698, 0.0
  %1748 = vst.msk [vmem:[#allocation2 + $0x149] sm:$0x1] %vm1698, 0.0
  %1749 = vst.msk [vmem:[#allocation2 + $0x161] sm:$0x1] %vm1698, 0.0
  %1750 = vst.msk [vmem:[#allocation2 + $0x179] sm:$0x1] %vm1698, 0.0
  %1751 = vst.msk [vmem:[#allocation2 + $0x191] sm:$0x1] %vm1698, 0.0
  %1752 = vst.msk [vmem:[#allocation2 + $0x1a9] sm:$0x1] %vm1698, 0.0
  %1753 = vst.msk [vmem:[#allocation2 + $0x1c1] sm:$0x1] %vm1698, 0.0
  %1754 = vst.msk [vmem:[#allocation2 + $0x1d9] sm:$0x1] %vm1698, 0.0
  %1755 = vst.msk [vmem:[#allocation2 + $0x1f1] sm:$0x1] %vm1698, 0.0
  %1756 = vst.msk [vmem:[#allocation2 + $0x209] sm:$0x1] %vm1698, 0.0
  %1757 = vst.msk [vmem:[#allocation2 + $0x221] sm:$0x1] %vm1698, 0.0
  %1758 = vst.msk [vmem:[#allocation2 + $0x239] sm:$0x1] %vm1698, 0.0
  %1759 = vst.msk [vmem:[#allocation2 + $0x251] sm:$0x1] %vm1698, 0.0
  %1760 = vst.msk [vmem:[#allocation2 + $0x269] sm:$0x1] %vm1698, 0.0
  %1761 = vst.msk [vmem:[#allocation2 + $0x281] sm:$0x1] %vm1698, 0.0
  %1762 = vst.msk [vmem:[#allocation2 + $0x299] sm:$0x1] %vm1698, 0.0
  %1763 = vst.msk [vmem:[#allocation2 + $0x2b1] sm:$0x1] %vm1698, 0.0
  %1764 = vst.msk [vmem:[#allocation2 + $0x2c9] sm:$0x1] %vm1698, 0.0
  %1765 = vst.msk [vmem:[#allocation2 + $0x2e1] sm:$0x1] %vm1698, 0.0
  %1766 = vst.msk [vmem:[#allocation2 + $0x2f9] sm:$0x1] %vm1698, 0.0
  %1767 = vst.msk [vmem:[#allocation2 + $0x311] sm:$0x1] %vm1698, 0.0
  %1768 = vst.msk [vmem:[#allocation2 + $0x329] sm:$0x1] %vm1698, 0.0
  %1769 = vst.msk [vmem:[#allocation2 + $0x341] sm:$0x1] %vm1698, 0.0
  %1770 = vst.msk [vmem:[#allocation2 + $0x359] sm:$0x1] %vm1698, 0.0
  %v1771 = vld [vmem:[#allocation2] sm:$0xff]
  %v1772 = vld [vmem:[#allocation2 + $0x8] sm:$0xff]
  %v1773 = vld [vmem:[#allocation2 + $0x18] sm:$0xff]
  %v1774 = vld [vmem:[#allocation2 + $0x20] sm:$0xff]
  %v1775 = vld [vmem:[#allocation2 + $0x30] sm:$0xff]
  %v1776 = vld [vmem:[#allocation2 + $0x38] sm:$0xff]
  %v1777 = vld [vmem:[#allocation2 + $0x48] sm:$0xff]
  %v1778 = vld [vmem:[#allocation2 + $0x50] sm:$0xff]
  %v1779 = vld [vmem:[#allocation2 + $0x60] sm:$0xff]
  %v1780 = vld [vmem:[#allocation2 + $0x68] sm:$0xff]
  %v1781 = vld [vmem:[#allocation2 + $0x78] sm:$0xff]
  %v1782 = vld [vmem:[#allocation2 + $0x80] sm:$0xff]
  %v1783 = vld [vmem:[#allocation2 + $0x90] sm:$0xff]
  %v1784 = vld [vmem:[#allocation2 + $0x98] sm:$0xff]
  %v1785 = vld [vmem:[#allocation2 + $0xa8] sm:$0xff]
  %v1786 = vld [vmem:[#allocation2 + $0xb0] sm:$0xff]
  %v1787 = vld [vmem:[#allocation2 + $0xc0] sm:$0xff]
  %v1788 = vld [vmem:[#allocation2 + $0xc8] sm:$0xff]
  %v1789 = vld [vmem:[#allocation2 + $0xd8] sm:$0xff]
  %v1790 = vld [vmem:[#allocation2 + $0xe0] sm:$0xff]
  %v1791 = vld [vmem:[#allocation2 + $0xf0] sm:$0xff]
  %v1792 = vld [vmem:[#allocation2 + $0xf8] sm:$0xff]
  %v1793 = vld [vmem:[#allocation2 + $0x108] sm:$0xff]
  %v1794 = vld [vmem:[#allocation2 + $0x110] sm:$0xff]
  %v1795 = vld [vmem:[#allocation2 + $0x120] sm:$0xff]
  %v1796 = vld [vmem:[#allocation2 + $0x128] sm:$0xff]
  %v1797 = vld [vmem:[#allocation2 + $0x138] sm:$0xff]
  %v1798 = vld [vmem:[#allocation2 + $0x140] sm:$0xff]
  %v1799 = vld [vmem:[#allocation2 + $0x150] sm:$0xff]
  %v1800 = vld [vmem:[#allocation2 + $0x158] sm:$0xff]
  %v1801 = vld [vmem:[#allocation2 + $0x168] sm:$0xff]
  %v1802 = vld [vmem:[#allocation2 + $0x170] sm:$0xff]
  %v1803 = vld [vmem:[#allocation2 + $0x1b0] sm:$0xff]
  %v1804 = vld [vmem:[#allocation2 + $0x1b8] sm:$0xff]
  %v1805 = vld [vmem:[#allocation2 + $0x1c8] sm:$0xff]
  %v1806 = vld [vmem:[#allocation2 + $0x1d0] sm:$0xff]
  %v1807 = vld [vmem:[#allocation2 + $0x1e0] sm:$0xff]
  %v1808 = vld [vmem:[#allocation2 + $0x1e8] sm:$0xff]
  %v1809 = vld [vmem:[#allocation2 + $0x1f8] sm:$0xff]
  %v1810 = vld [vmem:[#allocation2 + $0x200] sm:$0xff]
  %v1811 = vld [vmem:[#allocation2 + $0x210] sm:$0xff]
  %v1812 = vld [vmem:[#allocation2 + $0x218] sm:$0xff]
  %v1813 = vld [vmem:[#allocation2 + $0x228] sm:$0xff]
  %v1814 = vld [vmem:[#allocation2 + $0x230] sm:$0xff]
  %v1815 = vld [vmem:[#allocation2 + $0x240] sm:$0xff]
  %v1816 = vld [vmem:[#allocation2 + $0x248] sm:$0xff]
  %v1817 = vld [vmem:[#allocation2 + $0x258] sm:$0xff]
  %v1818 = vld [vmem:[#allocation2 + $0x260] sm:$0xff]
  %v1819 = vld [vmem:[#allocation2 + $0x270] sm:$0xff]
  %v1820 = vld [vmem:[#allocation2 + $0x278] sm:$0xff]
  %v1821 = vld [vmem:[#allocation2 + $0x288] sm:$0xff]
  %v1822 = vld [vmem:[#allocation2 + $0x290] sm:$0xff]
  %v1823 = vld [vmem:[#allocation2 + $0x2a0] sm:$0xff]
  %v1824 = vld [vmem:[#allocation2 + $0x2a8] sm:$0xff]
  %v1825 = vld [vmem:[#allocation2 + $0x2b8] sm:$0xff]
  %v1826 = vld [vmem:[#allocation2 + $0x2c0] sm:$0xff]
  %v1827 = vld [vmem:[#allocation2 + $0x2d0] sm:$0xff]
  %v1828 = vld [vmem:[#allocation2 + $0x2d8] sm:$0xff]
  %v1829 = vld [vmem:[#allocation2 + $0x2e8] sm:$0xff]
  %v1830 = vld [vmem:[#allocation2 + $0x2f0] sm:$0xff]
  %v1831 = vld [vmem:[#allocation2 + $0x300] sm:$0xff]
  %v1832 = vld [vmem:[#allocation2 + $0x308] sm:$0xff]
  %v1833 = vld [vmem:[#allocation2 + $0x318] sm:$0xff]
  %v1834 = vld [vmem:[#allocation2 + $0x320] sm:$0xff]
  %v1835 = vpack.c.bf16 %v1772, %v1771
  %v1836 = vpack.c.bf16 %v1774, %v1773
  %v1837 = vpack.c.bf16 %v1776, %v1775
  %v1838 = vpack.c.bf16 %v1778, %v1777
  %v1839 = vpack.c.bf16 %v1780, %v1779
  %v1840 = vpack.c.bf16 %v1782, %v1781
  %v1841 = vpack.c.bf16 %v1784, %v1783
  %v1842 = vpack.c.bf16 %v1786, %v1785
  %v1843 = vpack.c.bf16 %v1788, %v1787
  %v1844 = vpack.c.bf16 %v1790, %v1789
  %v1845 = vpack.c.bf16 %v1792, %v1791
  %v1846 = vpack.c.bf16 %v1794, %v1793
  %v1847 = vpack.c.bf16 %v1796, %v1795
  %v1848 = vpack.c.bf16 %v1798, %v1797
  %v1849 = vpack.c.bf16 %v1800, %v1799
  %v1850 = vpack.c.bf16 %v1802, %v1801
  %v1851 = vpack.c.bf16 %v1804, %v1803
  %v1852 = vpack.c.bf16 %v1806, %v1805
  %v1853 = vpack.c.bf16 %v1808, %v1807
  %v1854 = vpack.c.bf16 %v1810, %v1809
  %v1855 = vpack.c.bf16 %v1812, %v1811
  %v1856 = vpack.c.bf16 %v1814, %v1813
  %v1857 = vpack.c.bf16 %v1816, %v1815
  %v1858 = vpack.c.bf16 %v1818, %v1817
  %v1859 = vpack.c.bf16 %v1820, %v1819
  %v1860 = vpack.c.bf16 %v1822, %v1821
  %v1861 = vpack.c.bf16 %v1824, %v1823
  %v1862 = vpack.c.bf16 %v1826, %v1825
  %v1863 = vpack.c.bf16 %v1828, %v1827
  %v1864 = vpack.c.bf16 %v1830, %v1829
  %v1865 = vpack.c.bf16 %v1832, %v1831
  %v1866 = vpack.c.bf16 %v1834, %v1833
  %v1867 = vld [vmem:[%s8] sm:$0xf]
  %v1868 = vld [vmem:[%s8 + $0x4] sm:$0xf]
  %v1869 = vld [vmem:[#allocation2 + $0x1] sm:$0xff]
  %v1870 = vld [vmem:[#allocation2 + $0x9] sm:$0xff]
  %v1871 = vld [vmem:[#allocation2 + $0x19] sm:$0xff]
  %v1872 = vld [vmem:[#allocation2 + $0x21] sm:$0xff]
  %v1873 = vld [vmem:[#allocation2 + $0x31] sm:$0xff]
  %v1874 = vld [vmem:[#allocation2 + $0x39] sm:$0xff]
  %v1875 = vld [vmem:[#allocation2 + $0x49] sm:$0xff]
  %v1876 = vld [vmem:[#allocation2 + $0x51] sm:$0xff]
  %v1877 = vld [vmem:[#allocation2 + $0x61] sm:$0xff]
  %v1878 = vld [vmem:[#allocation2 + $0x69] sm:$0xff]
  %v1879 = vld [vmem:[#allocation2 + $0x79] sm:$0xff]
  %v1880 = vld [vmem:[#allocation2 + $0x81] sm:$0xff]
  %v1881 = vld [vmem:[#allocation2 + $0x91] sm:$0xff]
  %v1882 = vld [vmem:[#allocation2 + $0x99] sm:$0xff]
  %v1883 = vld [vmem:[#allocation2 + $0xa9] sm:$0xff]
  %v1884 = vld [vmem:[#allocation2 + $0xb1] sm:$0xff]
  %v1885 = vld [vmem:[#allocation2 + $0xc1] sm:$0xff]
  %v1886 = vld [vmem:[#allocation2 + $0xc9] sm:$0xff]
  %v1887 = vld [vmem:[#allocation2 + $0xd9] sm:$0xff]
  %v1888 = vld [vmem:[#allocation2 + $0xe1] sm:$0xff]
  %v1889 = vld [vmem:[#allocation2 + $0xf1] sm:$0xff]
  %v1890 = vld [vmem:[#allocation2 + $0xf9] sm:$0xff]
  %v1891 = vld [vmem:[#allocation2 + $0x109] sm:$0xff]
  %v1892 = vld [vmem:[#allocation2 + $0x111] sm:$0xff]
  %v1893 = vld [vmem:[#allocation2 + $0x121] sm:$0xff]
  %v1894 = vld [vmem:[#allocation2 + $0x129] sm:$0xff]
  %v1895 = vld [vmem:[#allocation2 + $0x139] sm:$0xff]
  %v1896 = vld [vmem:[#allocation2 + $0x141] sm:$0xff]
  %v1897 = vld [vmem:[#allocation2 + $0x151] sm:$0xff]
  %v1898 = vld [vmem:[#allocation2 + $0x159] sm:$0xff]
  %v1899 = vld [vmem:[#allocation2 + $0x169] sm:$0xff]
  %v1900 = vld [vmem:[#allocation2 + $0x171] sm:$0xff]
  %v1901 = vld [vmem:[#allocation2 + $0x1b1] sm:$0xff]
  %v1902 = vld [vmem:[#allocation2 + $0x1b9] sm:$0xff]
  %v1903 = vld [vmem:[#allocation2 + $0x1c9] sm:$0xff]
  %v1904 = vld [vmem:[#allocation2 + $0x1d1] sm:$0xff]
  %v1905 = vld [vmem:[#allocation2 + $0x1e1] sm:$0xff]
  %v1906 = vld [vmem:[#allocation2 + $0x1e9] sm:$0xff]
  %v1907 = vld [vmem:[#allocation2 + $0x1f9] sm:$0xff]
  %v1908 = vld [vmem:[#allocation2 + $0x201] sm:$0xff]
  %v1909 = vld [vmem:[#allocation2 + $0x211] sm:$0xff]
  %v1910 = vld [vmem:[#allocation2 + $0x219] sm:$0xff]
  %v1911 = vld [vmem:[#allocation2 + $0x229] sm:$0xff]
  %v1912 = vld [vmem:[#allocation2 + $0x231] sm:$0xff]
  %v1913 = vld [vmem:[#allocation2 + $0x241] sm:$0xff]
  %v1914 = vld [vmem:[#allocation2 + $0x249] sm:$0xff]
  %v1915 = vld [vmem:[#allocation2 + $0x259] sm:$0xff]
  %v1916 = vld [vmem:[#allocation2 + $0x261] sm:$0xff]
  %v1917 = vld [vmem:[#allocation2 + $0x271] sm:$0xff]
  %v1918 = vld [vmem:[#allocation2 + $0x279] sm:$0xff]
  %v1919 = vld [vmem:[#allocation2 + $0x289] sm:$0xff]
  %v1920 = vld [vmem:[#allocation2 + $0x291] sm:$0xff]
  %v1921 = vld [vmem:[#allocation2 + $0x2a1] sm:$0xff]
  %v1922 = vld [vmem:[#allocation2 + $0x2a9] sm:$0xff]
  %v1923 = vld [vmem:[#allocation2 + $0x2b9] sm:$0xff]
  %v1924 = vld [vmem:[#allocation2 + $0x2c1] sm:$0xff]
  %v1925 = vld [vmem:[#allocation2 + $0x2d1] sm:$0xff]
  %v1926 = vld [vmem:[#allocation2 + $0x2d9] sm:$0xff]
  %v1927 = vld [vmem:[#allocation2 + $0x2e9] sm:$0xff]
  %v1928 = vld [vmem:[#allocation2 + $0x2f1] sm:$0xff]
  %v1929 = vld [vmem:[#allocation2 + $0x301] sm:$0xff]
  %v1930 = vld [vmem:[#allocation2 + $0x309] sm:$0xff]
  %v1931 = vld [vmem:[#allocation2 + $0x319] sm:$0xff]
  %v1932 = vld [vmem:[#allocation2 + $0x321] sm:$0xff]
  %v1933 = vpack.c.bf16 %v1870, %v1869
  %v1934 = vpack.c.bf16 %v1872, %v1871
  %v1935 = vpack.c.bf16 %v1874, %v1873
  %v1936 = vpack.c.bf16 %v1876, %v1875
  %v1937 = vpack.c.bf16 %v1878, %v1877
  %v1938 = vpack.c.bf16 %v1880, %v1879
  %v1939 = vpack.c.bf16 %v1882, %v1881
  %v1940 = vpack.c.bf16 %v1884, %v1883
  %v1941 = vpack.c.bf16 %v1886, %v1885
  %v1942 = vpack.c.bf16 %v1888, %v1887
  %v1943 = vpack.c.bf16 %v1890, %v1889
  %v1944 = vpack.c.bf16 %v1892, %v1891
  %v1945 = vpack.c.bf16 %v1894, %v1893
  %v1946 = vpack.c.bf16 %v1896, %v1895
  %v1947 = vpack.c.bf16 %v1898, %v1897
  %v1948 = vpack.c.bf16 %v1900, %v1899
  %v1949 = vpack.c.bf16 %v1902, %v1901
  %v1950 = vpack.c.bf16 %v1904, %v1903
  %v1951 = vpack.c.bf16 %v1906, %v1905
  %v1952 = vpack.c.bf16 %v1908, %v1907
  %v1953 = vpack.c.bf16 %v1910, %v1909
  %v1954 = vpack.c.bf16 %v1912, %v1911
  %v1955 = vpack.c.bf16 %v1914, %v1913
  %v1956 = vpack.c.bf16 %v1916, %v1915
  %v1957 = vpack.c.bf16 %v1918, %v1917
  %v1958 = vpack.c.bf16 %v1920, %v1919
  %v1959 = vpack.c.bf16 %v1922, %v1921
  %v1960 = vpack.c.bf16 %v1924, %v1923
  %v1961 = vpack.c.bf16 %v1926, %v1925
  %v1962 = vpack.c.bf16 %v1928, %v1927
  %v1963 = vpack.c.bf16 %v1930, %v1929
  %v1964 = vpack.c.bf16 %v1932, %v1931
  %s1965 = scalar_lea.vmem %s8, 8
  %v1966 = vld [vmem:[%s1965] sm:$0xf]
  %v1967 = vld [vmem:[%s1965 + $0x4] sm:$0xf]
  %v1970 = vunpack.c.l.b16 %v1966
  %v1971 = vunpack.c.l.b16 %v1967
  %v1972 = vpack.c.b16 %v1971, %v1970
  %v1975 = vsel %vm1072, %v1933, 0
  %v1978 = vsel %vm1072, %v1934, 0
  %v1981 = vsel %vm1072, %v1935, 0
  %v1984 = vsel %vm1072, %v1936, 0
  %v1987 = vsel %vm1072, %v1937, 0
  %v1990 = vsel %vm1072, %v1938, 0
  %v1993 = vsel %vm1072, %v1939, 0
  %v1996 = vsel %vm1072, %v1940, 0
  %v1999 = vsel %vm1072, %v1941, 0
  %v2002 = vsel %vm1072, %v1942, 0
  %v2005 = vsel %vm1072, %v1943, 0
  %v2008 = vsel %vm1072, %v1944, 0
  %v2011 = vsel %vm1072, %v1945, 0
  %v2014 = vsel %vm1072, %v1946, 0
  %v2017 = vsel %vm1072, %v1947, 0
  %v2020 = vsel %vm1072, %v1948, 0
  %v2023 = vsel %vm1072, %v1949, 0
  %v2026 = vsel %vm1072, %v1950, 0
  %v2029 = vsel %vm1072, %v1951, 0
  %v2032 = vsel %vm1072, %v1952, 0
  %v2035 = vsel %vm1072, %v1953, 0
  %v2038 = vsel %vm1072, %v1954, 0
  %v2041 = vsel %vm1072, %v1955, 0
  %v2044 = vsel %vm1072, %v1956, 0
  %v2047 = vsel %vm1072, %v1957, 0
  %v2050 = vsel %vm1072, %v1958, 0
  %v2053 = vsel %vm1072, %v1959, 0
  %v2056 = vsel %vm1072, %v1960, 0
  %v2059 = vsel %vm1072, %v1961, 0
  %v2062 = vsel %vm1072, %v1962, 0
  %v2065 = vsel %vm1072, %v1963, 0
  %v2068 = vsel %vm1072, %v1964, 0
  %2070 = vmatprep.subr.bf16.mxu0 0
  %2071 = vmatpush1.bf16.msra.mxu0 0
  %2072 = vmatprep.subr.bf16.mxu0 0
  %2073 = vmatpush1.bf16.msra.mxu0 0
  %2074 = vmatprep.subr.bf16.mxu0 0
  %2075 = vmatpush1.bf16.msra.mxu0 0
  %2076 = vmatprep.subr.bf16.mxu0 0
  %2077 = vmatpush1.bf16.msra.mxu0 0
  %2078 = vmatprep.subr.bf16.mxu0 0
  %2079 = vmatpush1.bf16.msra.mxu0 0
  %2080 = vmatprep.subr.bf16.mxu0 0
  %2081 = vmatpush1.bf16.msra.mxu0 0
  %2082 = vmatprep.subr.bf16.mxu0 0
  %2083 = vmatpush1.bf16.msra.mxu0 0
  %2084 = vmatprep.subr.bf16.mxu0 0
  %2085 = vmatpush1.bf16.msra.mxu0 %v1972
  %2086 = vmatprep.subr.bf16.mxu0 0
  %2087 = vmatpush2.bf16.msra.mxu0 0
  %2088 = vmatprep.subr.bf16.mxu0 0
  %2089 = vmatpush2.bf16.msra.mxu0 0
  %2090 = vmatprep.subr.bf16.mxu0 0
  %2091 = vmatpush2.bf16.msra.mxu0 0
  %2092 = vmatprep.subr.bf16.mxu0 0
  %2093 = vmatpush2.bf16.msra.mxu0 0
  %2094 = vmatprep.subr.bf16.mxu0 0
  %2095 = vmatpush2.bf16.msra.mxu0 0
  %2096 = vmatprep.subr.bf16.mxu0 0
  %2097 = vmatpush2.bf16.msra.mxu0 0
  %2098 = vmatprep.subr.bf16.mxu0 0
  %2099 = vmatpush2.bf16.msra.mxu0 0
  %2100 = vmatprep.subr.bf16.mxu0 0
  %2101 = vmatpush2.bf16.msra.mxu0 0
  %2102 = vmatprep.mubr.bf16.mxu0 0
  %2103 = vmatmul.mubr.bf16.gmra.mxu0 %v1975
  %v2104 = vpop.f32.mrf.mxu0
  %v2105 = vadd.f32 0.0, %v2104
  %v2106 = vpop.f32.mrf.mxu0
  %v2107 = vpop.f32.mrf.mxu0
  %v2108 = vadd.f32 0.0, %v2107
  %v2109 = vpop.f32.mrf.mxu0
  %2110 = vmatprep.mubr.bf16.mxu0 0
  %2111 = vmatmul.mubr.bf16.gmra.mxu0 %v1978
  %v2112 = vpop.f32.mrf.mxu0
  %v2113 = vadd.f32 0.0, %v2112
  %v2114 = vpop.f32.mrf.mxu0
  %v2115 = vpop.f32.mrf.mxu0
  %v2116 = vadd.f32 0.0, %v2115
  %v2117 = vpop.f32.mrf.mxu0
  %2118 = vmatprep.mubr.bf16.mxu0 0
  %2119 = vmatmul.mubr.bf16.gmra.mxu0 %v1981
  %v2120 = vpop.f32.mrf.mxu0
  %v2121 = vadd.f32 0.0, %v2120
  %v2122 = vpop.f32.mrf.mxu0
  %v2123 = vpop.f32.mrf.mxu0
  %v2124 = vadd.f32 0.0, %v2123
  %v2125 = vpop.f32.mrf.mxu0
  %2126 = vmatprep.mubr.bf16.mxu0 0
  %2127 = vmatmul.mubr.bf16.gmra.mxu0 %v1984
  %v2128 = vpop.f32.mrf.mxu0
  %v2129 = vadd.f32 0.0, %v2128
  %v2130 = vpop.f32.mrf.mxu0
  %v2131 = vpop.f32.mrf.mxu0
  %v2132 = vadd.f32 0.0, %v2131
  %v2133 = vpop.f32.mrf.mxu0
  %2134 = vmatprep.mubr.bf16.mxu0 0
  %2135 = vmatmul.mubr.bf16.gmra.mxu0 %v1987
  %v2136 = vpop.f32.mrf.mxu0
  %v2137 = vadd.f32 0.0, %v2136
  %v2138 = vpop.f32.mrf.mxu0
  %v2139 = vpop.f32.mrf.mxu0
  %v2140 = vadd.f32 0.0, %v2139
  %v2141 = vpop.f32.mrf.mxu0
  %2142 = vmatprep.mubr.bf16.mxu0 0
  %2143 = vmatmul.mubr.bf16.gmra.mxu0 %v1990
  %v2144 = vpop.f32.mrf.mxu0
  %v2145 = vadd.f32 0.0, %v2144
  %v2146 = vpop.f32.mrf.mxu0
  %v2147 = vpop.f32.mrf.mxu0
  %v2148 = vadd.f32 0.0, %v2147
  %v2149 = vpop.f32.mrf.mxu0
  %2150 = vmatprep.mubr.bf16.mxu0 0
  %2151 = vmatmul.mubr.bf16.gmra.mxu0 %v1993
  %v2152 = vpop.f32.mrf.mxu0
  %v2153 = vadd.f32 0.0, %v2152
  %v2154 = vpop.f32.mrf.mxu0
  %v2155 = vpop.f32.mrf.mxu0
  %v2156 = vadd.f32 0.0, %v2155
  %v2157 = vpop.f32.mrf.mxu0
  %2158 = vmatprep.mubr.bf16.mxu0 0
  %2159 = vmatmul.mubr.bf16.gmra.mxu0 %v1996
  %v2160 = vpop.f32.mrf.mxu0
  %v2161 = vadd.f32 0.0, %v2160
  %v2162 = vpop.f32.mrf.mxu0
  %v2163 = vpop.f32.mrf.mxu0
  %v2164 = vadd.f32 0.0, %v2163
  %v2165 = vpop.f32.mrf.mxu0
  %2166 = vmatprep.mubr.bf16.mxu0 0
  %2167 = vmatmul.mubr.bf16.gmra.mxu0 %v1999
  %v2168 = vpop.f32.mrf.mxu0
  %v2169 = vadd.f32 0.0, %v2168
  %v2170 = vpop.f32.mrf.mxu0
  %v2171 = vpop.f32.mrf.mxu0
  %v2172 = vadd.f32 0.0, %v2171
  %v2173 = vpop.f32.mrf.mxu0
  %2174 = vmatprep.mubr.bf16.mxu0 0
  %2175 = vmatmul.mubr.bf16.gmra.mxu0 %v2002
  %v2176 = vpop.f32.mrf.mxu0
  %v2177 = vadd.f32 0.0, %v2176
  %v2178 = vpop.f32.mrf.mxu0
  %v2179 = vpop.f32.mrf.mxu0
  %v2180 = vadd.f32 0.0, %v2179
  %v2181 = vpop.f32.mrf.mxu0
  %2182 = vmatprep.mubr.bf16.mxu0 0
  %2183 = vmatmul.mubr.bf16.gmra.mxu0 %v2005
  %v2184 = vpop.f32.mrf.mxu0
  %v2185 = vadd.f32 0.0, %v2184
  %v2186 = vpop.f32.mrf.mxu0
  %v2187 = vpop.f32.mrf.mxu0
  %v2188 = vadd.f32 0.0, %v2187
  %v2189 = vpop.f32.mrf.mxu0
  %2190 = vmatprep.mubr.bf16.mxu0 0
  %2191 = vmatmul.mubr.bf16.gmra.mxu0 %v2008
  %v2192 = vpop.f32.mrf.mxu0
  %v2193 = vadd.f32 0.0, %v2192
  %v2194 = vpop.f32.mrf.mxu0
  %v2195 = vpop.f32.mrf.mxu0
  %v2196 = vadd.f32 0.0, %v2195
  %v2197 = vpop.f32.mrf.mxu0
  %2198 = vmatprep.mubr.bf16.mxu0 0
  %2199 = vmatmul.mubr.bf16.gmra.mxu0 %v2011
  %v2200 = vpop.f32.mrf.mxu0
  %v2201 = vadd.f32 0.0, %v2200
  %v2202 = vpop.f32.mrf.mxu0
  %v2203 = vpop.f32.mrf.mxu0
  %v2204 = vadd.f32 0.0, %v2203
  %v2205 = vpop.f32.mrf.mxu0
  %2206 = vmatprep.mubr.bf16.mxu0 0
  %2207 = vmatmul.mubr.bf16.gmra.mxu0 %v2014
  %v2208 = vpop.f32.mrf.mxu0
  %v2209 = vadd.f32 0.0, %v2208
  %v2210 = vpop.f32.mrf.mxu0
  %v2211 = vpop.f32.mrf.mxu0
  %v2212 = vadd.f32 0.0, %v2211
  %v2213 = vpop.f32.mrf.mxu0
  %2214 = vmatprep.mubr.bf16.mxu0 0
  %2215 = vmatmul.mubr.bf16.gmra.mxu0 %v2017
  %v2216 = vpop.f32.mrf.mxu0
  %v2217 = vadd.f32 0.0, %v2216
  %v2218 = vpop.f32.mrf.mxu0
  %v2219 = vpop.f32.mrf.mxu0
  %v2220 = vadd.f32 0.0, %v2219
  %v2221 = vpop.f32.mrf.mxu0
  %2222 = vmatprep.mubr.bf16.mxu0 0
  %2223 = vmatmul.mubr.bf16.gmra.mxu0 %v2020
  %v2224 = vpop.f32.mrf.mxu0
  %v2225 = vadd.f32 0.0, %v2224
  %v2226 = vpop.f32.mrf.mxu0
  %v2227 = vpop.f32.mrf.mxu0
  %v2228 = vadd.f32 0.0, %v2227
  %v2229 = vpop.f32.mrf.mxu0
  %2230 = vmatprep.mubr.bf16.mxu0 0
  %2231 = vmatmul.mubr.bf16.gmra.mxu0 %v2023
  %v2232 = vpop.f32.mrf.mxu0
  %v2233 = vadd.f32 0.0, %v2232
  %v2234 = vpop.f32.mrf.mxu0
  %v2235 = vpop.f32.mrf.mxu0
  %v2236 = vadd.f32 0.0, %v2235
  %v2237 = vpop.f32.mrf.mxu0
  %2238 = vmatprep.mubr.bf16.mxu0 0
  %2239 = vmatmul.mubr.bf16.gmra.mxu0 %v2026
  %v2240 = vpop.f32.mrf.mxu0
  %v2241 = vadd.f32 0.0, %v2240
  %v2242 = vpop.f32.mrf.mxu0
  %v2243 = vpop.f32.mrf.mxu0
  %v2244 = vadd.f32 0.0, %v2243
  %v2245 = vpop.f32.mrf.mxu0
  %2246 = vmatprep.mubr.bf16.mxu0 0
  %2247 = vmatmul.mubr.bf16.gmra.mxu0 %v2029
  %v2248 = vpop.f32.mrf.mxu0
  %v2249 = vadd.f32 0.0, %v2248
  %v2250 = vpop.f32.mrf.mxu0
  %v2251 = vpop.f32.mrf.mxu0
  %v2252 = vadd.f32 0.0, %v2251
  %v2253 = vpop.f32.mrf.mxu0
  %2254 = vmatprep.mubr.bf16.mxu0 0
  %2255 = vmatmul.mubr.bf16.gmra.mxu0 %v2032
  %v2256 = vpop.f32.mrf.mxu0
  %v2257 = vadd.f32 0.0, %v2256
  %v2258 = vpop.f32.mrf.mxu0
  %v2259 = vpop.f32.mrf.mxu0
  %v2260 = vadd.f32 0.0, %v2259
  %v2261 = vpop.f32.mrf.mxu0
  %2262 = vmatprep.mubr.bf16.mxu0 0
  %2263 = vmatmul.mubr.bf16.gmra.mxu0 %v2035
  %v2264 = vpop.f32.mrf.mxu0
  %v2265 = vadd.f32 0.0, %v2264
  %v2266 = vpop.f32.mrf.mxu0
  %v2267 = vpop.f32.mrf.mxu0
  %v2268 = vadd.f32 0.0, %v2267
  %v2269 = vpop.f32.mrf.mxu0
  %2270 = vmatprep.mubr.bf16.mxu0 0
  %2271 = vmatmul.mubr.bf16.gmra.mxu0 %v2038
  %v2272 = vpop.f32.mrf.mxu0
  %v2273 = vadd.f32 0.0, %v2272
  %v2274 = vpop.f32.mrf.mxu0
  %v2275 = vpop.f32.mrf.mxu0
  %v2276 = vadd.f32 0.0, %v2275
  %v2277 = vpop.f32.mrf.mxu0
  %2278 = vmatprep.mubr.bf16.mxu0 0
  %2279 = vmatmul.mubr.bf16.gmra.mxu0 %v2041
  %v2280 = vpop.f32.mrf.mxu0
  %v2281 = vadd.f32 0.0, %v2280
  %v2282 = vpop.f32.mrf.mxu0
  %v2283 = vpop.f32.mrf.mxu0
  %v2284 = vadd.f32 0.0, %v2283
  %v2285 = vpop.f32.mrf.mxu0
  %2286 = vmatprep.mubr.bf16.mxu0 0
  %2287 = vmatmul.mubr.bf16.gmra.mxu0 %v2044
  %v2288 = vpop.f32.mrf.mxu0
  %v2289 = vadd.f32 0.0, %v2288
  %v2290 = vpop.f32.mrf.mxu0
  %v2291 = vpop.f32.mrf.mxu0
  %v2292 = vadd.f32 0.0, %v2291
  %v2293 = vpop.f32.mrf.mxu0
  %2294 = vmatprep.mubr.bf16.mxu0 0
  %2295 = vmatmul.mubr.bf16.gmra.mxu0 %v2047
  %v2296 = vpop.f32.mrf.mxu0
  %v2297 = vadd.f32 0.0, %v2296
  %v2298 = vpop.f32.mrf.mxu0
  %v2299 = vpop.f32.mrf.mxu0
  %v2300 = vadd.f32 0.0, %v2299
  %v2301 = vpop.f32.mrf.mxu0
  %2302 = vmatprep.mubr.bf16.mxu0 0
  %2303 = vmatmul.mubr.bf16.gmra.mxu0 %v2050
  %v2304 = vpop.f32.mrf.mxu0
  %v2305 = vadd.f32 0.0, %v2304
  %v2306 = vpop.f32.mrf.mxu0
  %v2307 = vpop.f32.mrf.mxu0
  %v2308 = vadd.f32 0.0, %v2307
  %v2309 = vpop.f32.mrf.mxu0
  %2310 = vmatprep.mubr.bf16.mxu0 0
  %2311 = vmatmul.mubr.bf16.gmra.mxu0 %v2053
  %v2312 = vpop.f32.mrf.mxu0
  %v2313 = vadd.f32 0.0, %v2312
  %v2314 = vpop.f32.mrf.mxu0
  %v2315 = vpop.f32.mrf.mxu0
  %v2316 = vadd.f32 0.0, %v2315
  %v2317 = vpop.f32.mrf.mxu0
  %2318 = vmatprep.mubr.bf16.mxu0 0
  %2319 = vmatmul.mubr.bf16.gmra.mxu0 %v2056
  %v2320 = vpop.f32.mrf.mxu0
  %v2321 = vadd.f32 0.0, %v2320
  %v2322 = vpop.f32.mrf.mxu0
  %v2323 = vpop.f32.mrf.mxu0
  %v2324 = vadd.f32 0.0, %v2323
  %v2325 = vpop.f32.mrf.mxu0
  %2326 = vmatprep.mubr.bf16.mxu0 0
  %2327 = vmatmul.mubr.bf16.gmra.mxu0 %v2059
  %v2328 = vpop.f32.mrf.mxu0
  %v2329 = vadd.f32 0.0, %v2328
  %v2330 = vpop.f32.mrf.mxu0
  %v2331 = vpop.f32.mrf.mxu0
  %v2332 = vadd.f32 0.0, %v2331
  %v2333 = vpop.f32.mrf.mxu0
  %2334 = vmatprep.mubr.bf16.mxu0 0
  %2335 = vmatmul.mubr.bf16.gmra.mxu0 %v2062
  %v2336 = vpop.f32.mrf.mxu0
  %v2337 = vadd.f32 0.0, %v2336
  %v2338 = vpop.f32.mrf.mxu0
  %v2339 = vpop.f32.mrf.mxu0
  %v2340 = vadd.f32 0.0, %v2339
  %v2341 = vpop.f32.mrf.mxu0
  %2342 = vmatprep.mubr.bf16.mxu0 0
  %2343 = vmatmul.mubr.bf16.gmra.mxu0 %v2065
  %v2344 = vpop.f32.mrf.mxu0
  %v2345 = vadd.f32 0.0, %v2344
  %v2346 = vpop.f32.mrf.mxu0
  %v2347 = vpop.f32.mrf.mxu0
  %v2348 = vadd.f32 0.0, %v2347
  %v2349 = vpop.f32.mrf.mxu0
  %2350 = vmatprep.mubr.bf16.mxu0 0
  %2351 = vmatmul.mubr.bf16.gmra.mxu0 %v2068
  %v2352 = vpop.f32.mrf.mxu0
  %v2353 = vadd.f32 0.0, %v2352
  %v2354 = vpop.f32.mrf.mxu0
  %v2355 = vpop.f32.mrf.mxu0
  %v2356 = vadd.f32 0.0, %v2355
  %v2357 = vpop.f32.mrf.mxu0
  %2358 = vdwg.mxu0
  %v2361 = vunpack.c.l.b16 %v1867
  %v2362 = vunpack.c.l.b16 %v1868
  %v2363 = vpack.c.b16 %v2362, %v2361
  %v2366 = vsel %vm1072, %v1835, 0
  %v2369 = vsel %vm1072, %v1836, 0
  %v2372 = vsel %vm1072, %v1837, 0
  %v2375 = vsel %vm1072, %v1838, 0
  %v2378 = vsel %vm1072, %v1839, 0
  %v2381 = vsel %vm1072, %v1840, 0
  %v2384 = vsel %vm1072, %v1841, 0
  %v2387 = vsel %vm1072, %v1842, 0
  %v2390 = vsel %vm1072, %v1843, 0
  %v2393 = vsel %vm1072, %v1844, 0
  %v2396 = vsel %vm1072, %v1845, 0
  %v2399 = vsel %vm1072, %v1846, 0
  %v2402 = vsel %vm1072, %v1847, 0
  %v2405 = vsel %vm1072, %v1848, 0
  %v2408 = vsel %vm1072, %v1849, 0
  %v2411 = vsel %vm1072, %v1850, 0
  %v2414 = vsel %vm1072, %v1851, 0
  %v2417 = vsel %vm1072, %v1852, 0
  %v2420 = vsel %vm1072, %v1853, 0
  %v2423 = vsel %vm1072, %v1854, 0
  %v2426 = vsel %vm1072, %v1855, 0
  %v2429 = vsel %vm1072, %v1856, 0
  %v2432 = vsel %vm1072, %v1857, 0
  %v2435 = vsel %vm1072, %v1858, 0
  %v2438 = vsel %vm1072, %v1859, 0
  %v2441 = vsel %vm1072, %v1860, 0
  %v2444 = vsel %vm1072, %v1861, 0
  %v2447 = vsel %vm1072, %v1862, 0
  %v2450 = vsel %vm1072, %v1863, 0
  %v2453 = vsel %vm1072, %v1864, 0
  %v2456 = vsel %vm1072, %v1865, 0
  %v2459 = vsel %vm1072, %v1866, 0
  %2461 = vmatprep.subr.bf16.mxu0 0
  %2462 = vmatpush1.bf16.msra.mxu0 0
  %2463 = vmatprep.subr.bf16.mxu0 0
  %2464 = vmatpush1.bf16.msra.mxu0 0
  %2465 = vmatprep.subr.bf16.mxu0 0
  %2466 = vmatpush1.bf16.msra.mxu0 0
  %2467 = vmatprep.subr.bf16.mxu0 0
  %2468 = vmatpush1.bf16.msra.mxu0 0
  %2469 = vmatprep.subr.bf16.mxu0 0
  %2470 = vmatpush1.bf16.msra.mxu0 0
  %2471 = vmatprep.subr.bf16.mxu0 0
  %2472 = vmatpush1.bf16.msra.mxu0 0
  %2473 = vmatprep.subr.bf16.mxu0 0
  %2474 = vmatpush1.bf16.msra.mxu0 0
  %2475 = vmatprep.subr.bf16.mxu0 0
  %2476 = vmatpush1.bf16.msra.mxu0 %v2363
  %2477 = vmatprep.subr.bf16.mxu0 0
  %2478 = vmatpush2.bf16.msra.mxu0 0
  %2479 = vmatprep.subr.bf16.mxu0 0
  %2480 = vmatpush2.bf16.msra.mxu0 0
  %2481 = vmatprep.subr.bf16.mxu0 0
  %2482 = vmatpush2.bf16.msra.mxu0 0
  %2483 = vmatprep.subr.bf16.mxu0 0
  %2484 = vmatpush2.bf16.msra.mxu0 0
  %2485 = vmatprep.subr.bf16.mxu0 0
  %2486 = vmatpush2.bf16.msra.mxu0 0
  %2487 = vmatprep.subr.bf16.mxu0 0
  %2488 = vmatpush2.bf16.msra.mxu0 0
  %2489 = vmatprep.subr.bf16.mxu0 0
  %2490 = vmatpush2.bf16.msra.mxu0 0
  %2491 = vmatprep.subr.bf16.mxu0 0
  %2492 = vmatpush2.bf16.msra.mxu0 0
  %2493 = vmatprep.mubr.bf16.mxu0 0
  %2494 = vmatmul.mubr.bf16.gmra.mxu0 %v2366
  %v2495 = vpop.f32.mrf.mxu0
  %v2496 = vadd.f32 %v2105, %v2495
  %v2497 = vpop.f32.mrf.mxu0
  %v2498 = vpop.f32.mrf.mxu0
  %v2499 = vadd.f32 %v2108, %v2498
  %v2500 = vpop.f32.mrf.mxu0
  %2501 = vmatprep.mubr.bf16.mxu0 0
  %2502 = vmatmul.mubr.bf16.gmra.mxu0 %v2369
  %v2503 = vpop.f32.mrf.mxu0
  %v2504 = vadd.f32 %v2113, %v2503
  %v2505 = vpop.f32.mrf.mxu0
  %v2506 = vpop.f32.mrf.mxu0
  %v2507 = vadd.f32 %v2116, %v2506
  %v2508 = vpop.f32.mrf.mxu0
  %2509 = vmatprep.mubr.bf16.mxu0 0
  %2510 = vmatmul.mubr.bf16.gmra.mxu0 %v2372
  %v2511 = vpop.f32.mrf.mxu0
  %v2512 = vadd.f32 %v2121, %v2511
  %v2513 = vpop.f32.mrf.mxu0
  %v2514 = vpop.f32.mrf.mxu0
  %v2515 = vadd.f32 %v2124, %v2514
  %v2516 = vpop.f32.mrf.mxu0
  %2517 = vmatprep.mubr.bf16.mxu0 0
  %2518 = vmatmul.mubr.bf16.gmra.mxu0 %v2375
  %v2519 = vpop.f32.mrf.mxu0
  %v2520 = vadd.f32 %v2129, %v2519
  %v2521 = vpop.f32.mrf.mxu0
  %v2522 = vpop.f32.mrf.mxu0
  %v2523 = vadd.f32 %v2132, %v2522
  %v2524 = vpop.f32.mrf.mxu0
  %2525 = vmatprep.mubr.bf16.mxu0 0
  %2526 = vmatmul.mubr.bf16.gmra.mxu0 %v2378
  %v2527 = vpop.f32.mrf.mxu0
  %v2528 = vadd.f32 %v2137, %v2527
  %v2529 = vpop.f32.mrf.mxu0
  %v2530 = vpop.f32.mrf.mxu0
  %v2531 = vadd.f32 %v2140, %v2530
  %v2532 = vpop.f32.mrf.mxu0
  %2533 = vmatprep.mubr.bf16.mxu0 0
  %2534 = vmatmul.mubr.bf16.gmra.mxu0 %v2381
  %v2535 = vpop.f32.mrf.mxu0
  %v2536 = vadd.f32 %v2145, %v2535
  %v2537 = vpop.f32.mrf.mxu0
  %v2538 = vpop.f32.mrf.mxu0
  %v2539 = vadd.f32 %v2148, %v2538
  %v2540 = vpop.f32.mrf.mxu0
  %2541 = vmatprep.mubr.bf16.mxu0 0
  %2542 = vmatmul.mubr.bf16.gmra.mxu0 %v2384
  %v2543 = vpop.f32.mrf.mxu0
  %v2544 = vadd.f32 %v2153, %v2543
  %v2545 = vpop.f32.mrf.mxu0
  %v2546 = vpop.f32.mrf.mxu0
  %v2547 = vadd.f32 %v2156, %v2546
  %v2548 = vpop.f32.mrf.mxu0
  %2549 = vmatprep.mubr.bf16.mxu0 0
  %2550 = vmatmul.mubr.bf16.gmra.mxu0 %v2387
  %v2551 = vpop.f32.mrf.mxu0
  %v2552 = vadd.f32 %v2161, %v2551
  %v2553 = vpop.f32.mrf.mxu0
  %v2554 = vpop.f32.mrf.mxu0
  %v2555 = vadd.f32 %v2164, %v2554
  %v2556 = vpop.f32.mrf.mxu0
  %2557 = vmatprep.mubr.bf16.mxu0 0
  %2558 = vmatmul.mubr.bf16.gmra.mxu0 %v2390
  %v2559 = vpop.f32.mrf.mxu0
  %v2560 = vadd.f32 %v2169, %v2559
  %v2561 = vpop.f32.mrf.mxu0
  %v2562 = vpop.f32.mrf.mxu0
  %v2563 = vadd.f32 %v2172, %v2562
  %v2564 = vpop.f32.mrf.mxu0
  %2565 = vmatprep.mubr.bf16.mxu0 0
  %2566 = vmatmul.mubr.bf16.gmra.mxu0 %v2393
  %v2567 = vpop.f32.mrf.mxu0
  %v2568 = vadd.f32 %v2177, %v2567
  %v2569 = vpop.f32.mrf.mxu0
  %v2570 = vpop.f32.mrf.mxu0
  %v2571 = vadd.f32 %v2180, %v2570
  %v2572 = vpop.f32.mrf.mxu0
  %2573 = vmatprep.mubr.bf16.mxu0 0
  %2574 = vmatmul.mubr.bf16.gmra.mxu0 %v2396
  %v2575 = vpop.f32.mrf.mxu0
  %v2576 = vadd.f32 %v2185, %v2575
  %v2577 = vpop.f32.mrf.mxu0
  %v2578 = vpop.f32.mrf.mxu0
  %v2579 = vadd.f32 %v2188, %v2578
  %v2580 = vpop.f32.mrf.mxu0
  %2581 = vmatprep.mubr.bf16.mxu0 0
  %2582 = vmatmul.mubr.bf16.gmra.mxu0 %v2399
  %v2583 = vpop.f32.mrf.mxu0
  %v2584 = vadd.f32 %v2193, %v2583
  %v2585 = vpop.f32.mrf.mxu0
  %v2586 = vpop.f32.mrf.mxu0
  %v2587 = vadd.f32 %v2196, %v2586
  %v2588 = vpop.f32.mrf.mxu0
  %2589 = vmatprep.mubr.bf16.mxu0 0
  %2590 = vmatmul.mubr.bf16.gmra.mxu0 %v2402
  %v2591 = vpop.f32.mrf.mxu0
  %v2592 = vadd.f32 %v2201, %v2591
  %v2593 = vpop.f32.mrf.mxu0
  %v2594 = vpop.f32.mrf.mxu0
  %v2595 = vadd.f32 %v2204, %v2594
  %v2596 = vpop.f32.mrf.mxu0
  %2597 = vmatprep.mubr.bf16.mxu0 0
  %2598 = vmatmul.mubr.bf16.gmra.mxu0 %v2405
  %v2599 = vpop.f32.mrf.mxu0
  %v2600 = vadd.f32 %v2209, %v2599
  %v2601 = vpop.f32.mrf.mxu0
  %v2602 = vpop.f32.mrf.mxu0
  %v2603 = vadd.f32 %v2212, %v2602
  %v2604 = vpop.f32.mrf.mxu0
  %2605 = vmatprep.mubr.bf16.mxu0 0
  %2606 = vmatmul.mubr.bf16.gmra.mxu0 %v2408
  %v2607 = vpop.f32.mrf.mxu0
  %v2608 = vadd.f32 %v2217, %v2607
  %v2609 = vpop.f32.mrf.mxu0
  %v2610 = vpop.f32.mrf.mxu0
  %v2611 = vadd.f32 %v2220, %v2610
  %v2612 = vpop.f32.mrf.mxu0
  %2613 = vmatprep.mubr.bf16.mxu0 0
  %2614 = vmatmul.mubr.bf16.gmra.mxu0 %v2411
  %v2615 = vpop.f32.mrf.mxu0
  %v2616 = vadd.f32 %v2225, %v2615
  %v2617 = vpop.f32.mrf.mxu0
  %v2618 = vpop.f32.mrf.mxu0
  %v2619 = vadd.f32 %v2228, %v2618
  %v2620 = vpop.f32.mrf.mxu0
  %2621 = vmatprep.mubr.bf16.mxu0 0
  %2622 = vmatmul.mubr.bf16.gmra.mxu0 %v2414
  %v2623 = vpop.f32.mrf.mxu0
  %v2624 = vadd.f32 %v2233, %v2623
  %v2625 = vpop.f32.mrf.mxu0
  %v2626 = vpop.f32.mrf.mxu0
  %v2627 = vadd.f32 %v2236, %v2626
  %v2628 = vpop.f32.mrf.mxu0
  %2629 = vmatprep.mubr.bf16.mxu0 0
  %2630 = vmatmul.mubr.bf16.gmra.mxu0 %v2417
  %v2631 = vpop.f32.mrf.mxu0
  %v2632 = vadd.f32 %v2241, %v2631
  %v2633 = vpop.f32.mrf.mxu0
  %v2634 = vpop.f32.mrf.mxu0
  %v2635 = vadd.f32 %v2244, %v2634
  %v2636 = vpop.f32.mrf.mxu0
  %2637 = vmatprep.mubr.bf16.mxu0 0
  %2638 = vmatmul.mubr.bf16.gmra.mxu0 %v2420
  %v2639 = vpop.f32.mrf.mxu0
  %v2640 = vadd.f32 %v2249, %v2639
  %v2641 = vpop.f32.mrf.mxu0
  %v2642 = vpop.f32.mrf.mxu0
  %v2643 = vadd.f32 %v2252, %v2642
  %v2644 = vpop.f32.mrf.mxu0
  %2645 = vmatprep.mubr.bf16.mxu0 0
  %2646 = vmatmul.mubr.bf16.gmra.mxu0 %v2423
  %v2647 = vpop.f32.mrf.mxu0
  %v2648 = vadd.f32 %v2257, %v2647
  %v2649 = vpop.f32.mrf.mxu0
  %v2650 = vpop.f32.mrf.mxu0
  %v2651 = vadd.f32 %v2260, %v2650
  %v2652 = vpop.f32.mrf.mxu0
  %2653 = vmatprep.mubr.bf16.mxu0 0
  %2654 = vmatmul.mubr.bf16.gmra.mxu0 %v2426
  %v2655 = vpop.f32.mrf.mxu0
  %v2656 = vadd.f32 %v2265, %v2655
  %v2657 = vpop.f32.mrf.mxu0
  %v2658 = vpop.f32.mrf.mxu0
  %v2659 = vadd.f32 %v2268, %v2658
  %v2660 = vpop.f32.mrf.mxu0
  %2661 = vmatprep.mubr.bf16.mxu0 0
  %2662 = vmatmul.mubr.bf16.gmra.mxu0 %v2429
  %v2663 = vpop.f32.mrf.mxu0
  %v2664 = vadd.f32 %v2273, %v2663
  %v2665 = vpop.f32.mrf.mxu0
  %v2666 = vpop.f32.mrf.mxu0
  %v2667 = vadd.f32 %v2276, %v2666
  %v2668 = vpop.f32.mrf.mxu0
  %2669 = vmatprep.mubr.bf16.mxu0 0
  %2670 = vmatmul.mubr.bf16.gmra.mxu0 %v2432
  %v2671 = vpop.f32.mrf.mxu0
  %v2672 = vadd.f32 %v2281, %v2671
  %v2673 = vpop.f32.mrf.mxu0
  %v2674 = vpop.f32.mrf.mxu0
  %v2675 = vadd.f32 %v2284, %v2674
  %v2676 = vpop.f32.mrf.mxu0
  %2677 = vmatprep.mubr.bf16.mxu0 0
  %2678 = vmatmul.mubr.bf16.gmra.mxu0 %v2435
  %v2679 = vpop.f32.mrf.mxu0
  %v2680 = vadd.f32 %v2289, %v2679
  %v2681 = vpop.f32.mrf.mxu0
  %v2682 = vpop.f32.mrf.mxu0
  %v2683 = vadd.f32 %v2292, %v2682
  %v2684 = vpop.f32.mrf.mxu0
  %2685 = vmatprep.mubr.bf16.mxu0 0
  %2686 = vmatmul.mubr.bf16.gmra.mxu0 %v2438
  %v2687 = vpop.f32.mrf.mxu0
  %v2688 = vadd.f32 %v2297, %v2687
  %v2689 = vpop.f32.mrf.mxu0
  %v2690 = vpop.f32.mrf.mxu0
  %v2691 = vadd.f32 %v2300, %v2690
  %v2692 = vpop.f32.mrf.mxu0
  %2693 = vmatprep.mubr.bf16.mxu0 0
  %2694 = vmatmul.mubr.bf16.gmra.mxu0 %v2441
  %v2695 = vpop.f32.mrf.mxu0
  %v2696 = vadd.f32 %v2305, %v2695
  %v2697 = vpop.f32.mrf.mxu0
  %v2698 = vpop.f32.mrf.mxu0
  %v2699 = vadd.f32 %v2308, %v2698
  %v2700 = vpop.f32.mrf.mxu0
  %2701 = vmatprep.mubr.bf16.mxu0 0
  %2702 = vmatmul.mubr.bf16.gmra.mxu0 %v2444
  %v2703 = vpop.f32.mrf.mxu0
  %v2704 = vadd.f32 %v2313, %v2703
  %v2705 = vpop.f32.mrf.mxu0
  %v2706 = vpop.f32.mrf.mxu0
  %v2707 = vadd.f32 %v2316, %v2706
  %v2708 = vpop.f32.mrf.mxu0
  %2709 = vmatprep.mubr.bf16.mxu0 0
  %2710 = vmatmul.mubr.bf16.gmra.mxu0 %v2447
  %v2711 = vpop.f32.mrf.mxu0
  %v2712 = vadd.f32 %v2321, %v2711
  %v2713 = vpop.f32.mrf.mxu0
  %v2714 = vpop.f32.mrf.mxu0
  %v2715 = vadd.f32 %v2324, %v2714
  %v2716 = vpop.f32.mrf.mxu0
  %2717 = vmatprep.mubr.bf16.mxu0 0
  %2718 = vmatmul.mubr.bf16.gmra.mxu0 %v2450
  %v2719 = vpop.f32.mrf.mxu0
  %v2720 = vadd.f32 %v2329, %v2719
  %v2721 = vpop.f32.mrf.mxu0
  %v2722 = vpop.f32.mrf.mxu0
  %v2723 = vadd.f32 %v2332, %v2722
  %v2724 = vpop.f32.mrf.mxu0
  %2725 = vmatprep.mubr.bf16.mxu0 0
  %2726 = vmatmul.mubr.bf16.gmra.mxu0 %v2453
  %v2727 = vpop.f32.mrf.mxu0
  %v2728 = vadd.f32 %v2337, %v2727
  %v2729 = vpop.f32.mrf.mxu0
  %v2730 = vpop.f32.mrf.mxu0
  %v2731 = vadd.f32 %v2340, %v2730
  %v2732 = vpop.f32.mrf.mxu0
  %2733 = vmatprep.mubr.bf16.mxu0 0
  %2734 = vmatmul.mubr.bf16.gmra.mxu0 %v2456
  %v2735 = vpop.f32.mrf.mxu0
  %v2736 = vadd.f32 %v2345, %v2735
  %v2737 = vpop.f32.mrf.mxu0
  %v2738 = vpop.f32.mrf.mxu0
  %v2739 = vadd.f32 %v2348, %v2738
  %v2740 = vpop.f32.mrf.mxu0
  %2741 = vmatprep.mubr.bf16.mxu0 0
  %2742 = vmatmul.mubr.bf16.gmra.mxu0 %v2459
  %v2743 = vpop.f32.mrf.mxu0
  %v2744 = vadd.f32 %v2353, %v2743
  %v2745 = vpop.f32.mrf.mxu0
  %v2746 = vpop.f32.mrf.mxu0
  %v2747 = vadd.f32 %v2356, %v2746
  %v2748 = vpop.f32.mrf.mxu0
  %2749 = vdwg.mxu0
  %v2750 = vld [vmem:[#allocation2 + $0x2] sm:$0xff]
  %v2751 = vld [vmem:[#allocation2 + $0xa] sm:$0xff]
  %v2752 = vld [vmem:[#allocation2 + $0x1a] sm:$0xff]
  %v2753 = vld [vmem:[#allocation2 + $0x22] sm:$0xff]
  %v2754 = vld [vmem:[#allocation2 + $0x32] sm:$0xff]
  %v2755 = vld [vmem:[#allocation2 + $0x3a] sm:$0xff]
  %v2756 = vld [vmem:[#allocation2 + $0x4a] sm:$0xff]
  %v2757 = vld [vmem:[#allocation2 + $0x52] sm:$0xff]
  %v2758 = vld [vmem:[#allocation2 + $0x62] sm:$0xff]
  %v2759 = vld [vmem:[#allocation2 + $0x6a] sm:$0xff]
  %v2760 = vld [vmem:[#allocation2 + $0x7a] sm:$0xff]
  %v2761 = vld [vmem:[#allocation2 + $0x82] sm:$0xff]
  %v2762 = vld [vmem:[#allocation2 + $0x92] sm:$0xff]
  %v2763 = vld [vmem:[#allocation2 + $0x9a] sm:$0xff]
  %v2764 = vld [vmem:[#allocation2 + $0xaa] sm:$0xff]
  %v2765 = vld [vmem:[#allocation2 + $0xb2] sm:$0xff]
  %v2766 = vld [vmem:[#allocation2 + $0xc2] sm:$0xff]
  %v2767 = vld [vmem:[#allocation2 + $0xca] sm:$0xff]
  %v2768 = vld [vmem:[#allocation2 + $0xda] sm:$0xff]
  %v2769 = vld [vmem:[#allocation2 + $0xe2] sm:$0xff]
  %v2770 = vld [vmem:[#allocation2 + $0xf2] sm:$0xff]
  %v2771 = vld [vmem:[#allocation2 + $0xfa] sm:$0xff]
  %v2772 = vld [vmem:[#allocation2 + $0x10a] sm:$0xff]
  %v2773 = vld [vmem:[#allocation2 + $0x112] sm:$0xff]
  %v2774 = vld [vmem:[#allocation2 + $0x122] sm:$0xff]
  %v2775 = vld [vmem:[#allocation2 + $0x12a] sm:$0xff]
  %v2776 = vld [vmem:[#allocation2 + $0x13a] sm:$0xff]
  %v2777 = vld [vmem:[#allocation2 + $0x142] sm:$0xff]
  %v2778 = vld [vmem:[#allocation2 + $0x152] sm:$0xff]
  %v2779 = vld [vmem:[#allocation2 + $0x15a] sm:$0xff]
  %v2780 = vld [vmem:[#allocation2 + $0x16a] sm:$0xff]
  %v2781 = vld [vmem:[#allocation2 + $0x172] sm:$0xff]
  %v2782 = vld [vmem:[#allocation2 + $0x1b2] sm:$0xff]
  %v2783 = vld [vmem:[#allocation2 + $0x1ba] sm:$0xff]
  %v2784 = vld [vmem:[#allocation2 + $0x1ca] sm:$0xff]
  %v2785 = vld [vmem:[#allocation2 + $0x1d2] sm:$0xff]
  %v2786 = vld [vmem:[#allocation2 + $0x1e2] sm:$0xff]
  %v2787 = vld [vmem:[#allocation2 + $0x1ea] sm:$0xff]
  %v2788 = vld [vmem:[#allocation2 + $0x1fa] sm:$0xff]
  %v2789 = vld [vmem:[#allocation2 + $0x202] sm:$0xff]
  %v2790 = vld [vmem:[#allocation2 + $0x212] sm:$0xff]
  %v2791 = vld [vmem:[#allocation2 + $0x21a] sm:$0xff]
  %v2792 = vld [vmem:[#allocation2 + $0x22a] sm:$0xff]
  %v2793 = vld [vmem:[#allocation2 + $0x232] sm:$0xff]
  %v2794 = vld [vmem:[#allocation2 + $0x242] sm:$0xff]
  %v2795 = vld [vmem:[#allocation2 + $0x24a] sm:$0xff]
  %v2796 = vld [vmem:[#allocation2 + $0x25a] sm:$0xff]
  %v2797 = vld [vmem:[#allocation2 + $0x262] sm:$0xff]
  %v2798 = vld [vmem:[#allocation2 + $0x272] sm:$0xff]
  %v2799 = vld [vmem:[#allocation2 + $0x27a] sm:$0xff]
  %v2800 = vld [vmem:[#allocation2 + $0x28a] sm:$0xff]
  %v2801 = vld [vmem:[#allocation2 + $0x292] sm:$0xff]
  %v2802 = vld [vmem:[#allocation2 + $0x2a2] sm:$0xff]
  %v2803 = vld [vmem:[#allocation2 + $0x2aa] sm:$0xff]
  %v2804 = vld [vmem:[#allocation2 + $0x2ba] sm:$0xff]
  %v2805 = vld [vmem:[#allocation2 + $0x2c2] sm:$0xff]
  %v2806 = vld [vmem:[#allocation2 + $0x2d2] sm:$0xff]
  %v2807 = vld [vmem:[#allocation2 + $0x2da] sm:$0xff]
  %v2808 = vld [vmem:[#allocation2 + $0x2ea] sm:$0xff]
  %v2809 = vld [vmem:[#allocation2 + $0x2f2] sm:$0xff]
  %v2810 = vld [vmem:[#allocation2 + $0x302] sm:$0xff]
  %v2811 = vld [vmem:[#allocation2 + $0x30a] sm:$0xff]
  %v2812 = vld [vmem:[#allocation2 + $0x31a] sm:$0xff]
  %v2813 = vld [vmem:[#allocation2 + $0x322] sm:$0xff]
  %v2814 = vpack.c.bf16 %v2751, %v2750
  %v2815 = vpack.c.bf16 %v2753, %v2752
  %v2816 = vpack.c.bf16 %v2755, %v2754
  %v2817 = vpack.c.bf16 %v2757, %v2756
  %v2818 = vpack.c.bf16 %v2759, %v2758
  %v2819 = vpack.c.bf16 %v2761, %v2760
  %v2820 = vpack.c.bf16 %v2763, %v2762
  %v2821 = vpack.c.bf16 %v2765, %v2764
  %v2822 = vpack.c.bf16 %v2767, %v2766
  %v2823 = vpack.c.bf16 %v2769, %v2768
  %v2824 = vpack.c.bf16 %v2771, %v2770
  %v2825 = vpack.c.bf16 %v2773, %v2772
  %v2826 = vpack.c.bf16 %v2775, %v2774
  %v2827 = vpack.c.bf16 %v2777, %v2776
  %v2828 = vpack.c.bf16 %v2779, %v2778
  %v2829 = vpack.c.bf16 %v2781, %v2780
  %v2830 = vpack.c.bf16 %v2783, %v2782
  %v2831 = vpack.c.bf16 %v2785, %v2784
  %v2832 = vpack.c.bf16 %v2787, %v2786
  %v2833 = vpack.c.bf16 %v2789, %v2788
  %v2834 = vpack.c.bf16 %v2791, %v2790
  %v2835 = vpack.c.bf16 %v2793, %v2792
  %v2836 = vpack.c.bf16 %v2795, %v2794
  %v2837 = vpack.c.bf16 %v2797, %v2796
  %v2838 = vpack.c.bf16 %v2799, %v2798
  %v2839 = vpack.c.bf16 %v2801, %v2800
  %v2840 = vpack.c.bf16 %v2803, %v2802
  %v2841 = vpack.c.bf16 %v2805, %v2804
  %v2842 = vpack.c.bf16 %v2807, %v2806
  %v2843 = vpack.c.bf16 %v2809, %v2808
  %v2844 = vpack.c.bf16 %v2811, %v2810
  %v2845 = vpack.c.bf16 %v2813, %v2812
  %s2846 = scalar_lea.vmem %s8, 16
  %v2847 = vld [vmem:[%s2846] sm:$0xf]
  %v2848 = vld [vmem:[%s2846 + $0x4] sm:$0xf]
  %v2851 = vunpack.c.l.b16 %v2847
  %v2852 = vunpack.c.l.b16 %v2848
  %v2853 = vpack.c.b16 %v2852, %v2851
  %v2856 = vsel %vm1072, %v2814, 0
  %v2859 = vsel %vm1072, %v2815, 0
  %v2862 = vsel %vm1072, %v2816, 0
  %v2865 = vsel %vm1072, %v2817, 0
  %v2868 = vsel %vm1072, %v2818, 0
  %v2871 = vsel %vm1072, %v2819, 0
  %v2874 = vsel %vm1072, %v2820, 0
  %v2877 = vsel %vm1072, %v2821, 0
  %v2880 = vsel %vm1072, %v2822, 0
  %v2883 = vsel %vm1072, %v2823, 0
  %v2886 = vsel %vm1072, %v2824, 0
  %v2889 = vsel %vm1072, %v2825, 0
  %v2892 = vsel %vm1072, %v2826, 0
  %v2895 = vsel %vm1072, %v2827, 0
  %v2898 = vsel %vm1072, %v2828, 0
  %v2901 = vsel %vm1072, %v2829, 0
  %v2904 = vsel %vm1072, %v2830, 0
  %v2907 = vsel %vm1072, %v2831, 0
  %v2910 = vsel %vm1072, %v2832, 0
  %v2913 = vsel %vm1072, %v2833, 0
  %v2916 = vsel %vm1072, %v2834, 0
  %v2919 = vsel %vm1072, %v2835, 0
  %v2922 = vsel %vm1072, %v2836, 0
  %v2925 = vsel %vm1072, %v2837, 0
  %v2928 = vsel %vm1072, %v2838, 0
  %v2931 = vsel %vm1072, %v2839, 0
  %v2934 = vsel %vm1072, %v2840, 0
  %v2937 = vsel %vm1072, %v2841, 0
  %v2940 = vsel %vm1072, %v2842, 0
  %v2943 = vsel %vm1072, %v2843, 0
  %v2946 = vsel %vm1072, %v2844, 0
  %v2949 = vsel %vm1072, %v2845, 0
  %2951 = vmatprep.subr.bf16.mxu0 0
  %2952 = vmatpush1.bf16.msra.mxu0 0
  %2953 = vmatprep.subr.bf16.mxu0 0
  %2954 = vmatpush1.bf16.msra.mxu0 0
  %2955 = vmatprep.subr.bf16.mxu0 0
  %2956 = vmatpush1.bf16.msra.mxu0 0
  %2957 = vmatprep.subr.bf16.mxu0 0
  %2958 = vmatpush1.bf16.msra.mxu0 0
  %2959 = vmatprep.subr.bf16.mxu0 0
  %2960 = vmatpush1.bf16.msra.mxu0 0
  %2961 = vmatprep.subr.bf16.mxu0 0
  %2962 = vmatpush1.bf16.msra.mxu0 0
  %2963 = vmatprep.subr.bf16.mxu0 0
  %2964 = vmatpush1.bf16.msra.mxu0 0
  %2965 = vmatprep.subr.bf16.mxu0 0
  %2966 = vmatpush1.bf16.msra.mxu0 %v2853
  %2967 = vmatprep.subr.bf16.mxu0 0
  %2968 = vmatpush2.bf16.msra.mxu0 0
  %2969 = vmatprep.subr.bf16.mxu0 0
  %2970 = vmatpush2.bf16.msra.mxu0 0
  %2971 = vmatprep.subr.bf16.mxu0 0
  %2972 = vmatpush2.bf16.msra.mxu0 0
  %2973 = vmatprep.subr.bf16.mxu0 0
  %2974 = vmatpush2.bf16.msra.mxu0 0
  %2975 = vmatprep.subr.bf16.mxu0 0
  %2976 = vmatpush2.bf16.msra.mxu0 0
  %2977 = vmatprep.subr.bf16.mxu0 0
  %2978 = vmatpush2.bf16.msra.mxu0 0
  %2979 = vmatprep.subr.bf16.mxu0 0
  %2980 = vmatpush2.bf16.msra.mxu0 0
  %2981 = vmatprep.subr.bf16.mxu0 0
  %2982 = vmatpush2.bf16.msra.mxu0 0
  %2983 = vmatprep.mubr.bf16.mxu0 0
  %2984 = vmatmul.mubr.bf16.gmra.mxu0 %v2856
  %v2985 = vpop.f32.mrf.mxu0
  %v2986 = vadd.f32 0.0, %v2985
  %v2987 = vpop.f32.mrf.mxu0
  %v2988 = vpop.f32.mrf.mxu0
  %v2989 = vadd.f32 0.0, %v2988
  %v2990 = vpop.f32.mrf.mxu0
  %2991 = vmatprep.mubr.bf16.mxu0 0
  %2992 = vmatmul.mubr.bf16.gmra.mxu0 %v2859
  %v2993 = vpop.f32.mrf.mxu0
  %v2994 = vadd.f32 0.0, %v2993
  %v2995 = vpop.f32.mrf.mxu0
  %v2996 = vpop.f32.mrf.mxu0
  %v2997 = vadd.f32 0.0, %v2996
  %v2998 = vpop.f32.mrf.mxu0
  %2999 = vmatprep.mubr.bf16.mxu0 0
  %3000 = vmatmul.mubr.bf16.gmra.mxu0 %v2862
  %v3001 = vpop.f32.mrf.mxu0
  %v3002 = vadd.f32 0.0, %v3001
  %v3003 = vpop.f32.mrf.mxu0
  %v3004 = vpop.f32.mrf.mxu0
  %v3005 = vadd.f32 0.0, %v3004
  %v3006 = vpop.f32.mrf.mxu0
  %3007 = vmatprep.mubr.bf16.mxu0 0
  %3008 = vmatmul.mubr.bf16.gmra.mxu0 %v2865
  %v3009 = vpop.f32.mrf.mxu0
  %v3010 = vadd.f32 0.0, %v3009
  %v3011 = vpop.f32.mrf.mxu0
  %v3012 = vpop.f32.mrf.mxu0
  %v3013 = vadd.f32 0.0, %v3012
  %v3014 = vpop.f32.mrf.mxu0
  %3015 = vmatprep.mubr.bf16.mxu0 0
  %3016 = vmatmul.mubr.bf16.gmra.mxu0 %v2868
  %v3017 = vpop.f32.mrf.mxu0
  %v3018 = vadd.f32 0.0, %v3017
  %v3019 = vpop.f32.mrf.mxu0
  %v3020 = vpop.f32.mrf.mxu0
  %v3021 = vadd.f32 0.0, %v3020
  %v3022 = vpop.f32.mrf.mxu0
  %3023 = vmatprep.mubr.bf16.mxu0 0
  %3024 = vmatmul.mubr.bf16.gmra.mxu0 %v2871
  %v3025 = vpop.f32.mrf.mxu0
  %v3026 = vadd.f32 0.0, %v3025
  %v3027 = vpop.f32.mrf.mxu0
  %v3028 = vpop.f32.mrf.mxu0
  %v3029 = vadd.f32 0.0, %v3028
  %v3030 = vpop.f32.mrf.mxu0
  %3031 = vmatprep.mubr.bf16.mxu0 0
  %3032 = vmatmul.mubr.bf16.gmra.mxu0 %v2874
  %v3033 = vpop.f32.mrf.mxu0
  %v3034 = vadd.f32 0.0, %v3033
  %v3035 = vpop.f32.mrf.mxu0
  %v3036 = vpop.f32.mrf.mxu0
  %v3037 = vadd.f32 0.0, %v3036
  %v3038 = vpop.f32.mrf.mxu0
  %3039 = vmatprep.mubr.bf16.mxu0 0
  %3040 = vmatmul.mubr.bf16.gmra.mxu0 %v2877
  %v3041 = vpop.f32.mrf.mxu0
  %v3042 = vadd.f32 0.0, %v3041
  %v3043 = vpop.f32.mrf.mxu0
  %v3044 = vpop.f32.mrf.mxu0
  %v3045 = vadd.f32 0.0, %v3044
  %v3046 = vpop.f32.mrf.mxu0
  %3047 = vmatprep.mubr.bf16.mxu0 0
  %3048 = vmatmul.mubr.bf16.gmra.mxu0 %v2880
  %v3049 = vpop.f32.mrf.mxu0
  %v3050 = vadd.f32 0.0, %v3049
  %v3051 = vpop.f32.mrf.mxu0
  %v3052 = vpop.f32.mrf.mxu0
  %v3053 = vadd.f32 0.0, %v3052
  %v3054 = vpop.f32.mrf.mxu0
  %3055 = vmatprep.mubr.bf16.mxu0 0
  %3056 = vmatmul.mubr.bf16.gmra.mxu0 %v2883
  %v3057 = vpop.f32.mrf.mxu0
  %v3058 = vadd.f32 0.0, %v3057
  %v3059 = vpop.f32.mrf.mxu0
  %v3060 = vpop.f32.mrf.mxu0
  %v3061 = vadd.f32 0.0, %v3060
  %v3062 = vpop.f32.mrf.mxu0
  %3063 = vmatprep.mubr.bf16.mxu0 0
  %3064 = vmatmul.mubr.bf16.gmra.mxu0 %v2886
  %v3065 = vpop.f32.mrf.mxu0
  %v3066 = vadd.f32 0.0, %v3065
  %v3067 = vpop.f32.mrf.mxu0
  %v3068 = vpop.f32.mrf.mxu0
  %v3069 = vadd.f32 0.0, %v3068
  %v3070 = vpop.f32.mrf.mxu0
  %3071 = vmatprep.mubr.bf16.mxu0 0
  %3072 = vmatmul.mubr.bf16.gmra.mxu0 %v2889
  %v3073 = vpop.f32.mrf.mxu0
  %v3074 = vadd.f32 0.0, %v3073
  %v3075 = vpop.f32.mrf.mxu0
  %v3076 = vpop.f32.mrf.mxu0
  %v3077 = vadd.f32 0.0, %v3076
  %v3078 = vpop.f32.mrf.mxu0
  %3079 = vmatprep.mubr.bf16.mxu0 0
  %3080 = vmatmul.mubr.bf16.gmra.mxu0 %v2892
  %v3081 = vpop.f32.mrf.mxu0
  %v3082 = vadd.f32 0.0, %v3081
  %v3083 = vpop.f32.mrf.mxu0
  %v3084 = vpop.f32.mrf.mxu0
  %v3085 = vadd.f32 0.0, %v3084
  %v3086 = vpop.f32.mrf.mxu0
  %3087 = vmatprep.mubr.bf16.mxu0 0
  %3088 = vmatmul.mubr.bf16.gmra.mxu0 %v2895
  %v3089 = vpop.f32.mrf.mxu0
  %v3090 = vadd.f32 0.0, %v3089
  %v3091 = vpop.f32.mrf.mxu0
  %v3092 = vpop.f32.mrf.mxu0
  %v3093 = vadd.f32 0.0, %v3092
  %v3094 = vpop.f32.mrf.mxu0
  %3095 = vmatprep.mubr.bf16.mxu0 0
  %3096 = vmatmul.mubr.bf16.gmra.mxu0 %v2898
  %v3097 = vpop.f32.mrf.mxu0
  %v3098 = vadd.f32 0.0, %v3097
  %v3099 = vpop.f32.mrf.mxu0
  %v3100 = vpop.f32.mrf.mxu0
  %v3101 = vadd.f32 0.0, %v3100
  %v3102 = vpop.f32.mrf.mxu0
  %3103 = vmatprep.mubr.bf16.mxu0 0
  %3104 = vmatmul.mubr.bf16.gmra.mxu0 %v2901
  %v3105 = vpop.f32.mrf.mxu0
  %v3106 = vadd.f32 0.0, %v3105
  %v3107 = vpop.f32.mrf.mxu0
  %v3108 = vpop.f32.mrf.mxu0
  %v3109 = vadd.f32 0.0, %v3108
  %v3110 = vpop.f32.mrf.mxu0
  %3111 = vmatprep.mubr.bf16.mxu0 0
  %3112 = vmatmul.mubr.bf16.gmra.mxu0 %v2904
  %v3113 = vpop.f32.mrf.mxu0
  %v3114 = vadd.f32 0.0, %v3113
  %v3115 = vpop.f32.mrf.mxu0
  %v3116 = vpop.f32.mrf.mxu0
  %v3117 = vadd.f32 0.0, %v3116
  %v3118 = vpop.f32.mrf.mxu0
  %3119 = vmatprep.mubr.bf16.mxu0 0
  %3120 = vmatmul.mubr.bf16.gmra.mxu0 %v2907
  %v3121 = vpop.f32.mrf.mxu0
  %v3122 = vadd.f32 0.0, %v3121
  %v3123 = vpop.f32.mrf.mxu0
  %v3124 = vpop.f32.mrf.mxu0
  %v3125 = vadd.f32 0.0, %v3124
  %v3126 = vpop.f32.mrf.mxu0
  %3127 = vmatprep.mubr.bf16.mxu0 0
  %3128 = vmatmul.mubr.bf16.gmra.mxu0 %v2910
  %v3129 = vpop.f32.mrf.mxu0
  %v3130 = vadd.f32 0.0, %v3129
  %v3131 = vpop.f32.mrf.mxu0
  %v3132 = vpop.f32.mrf.mxu0
  %v3133 = vadd.f32 0.0, %v3132
  %v3134 = vpop.f32.mrf.mxu0
  %3135 = vmatprep.mubr.bf16.mxu0 0
  %3136 = vmatmul.mubr.bf16.gmra.mxu0 %v2913
  %v3137 = vpop.f32.mrf.mxu0
  %v3138 = vadd.f32 0.0, %v3137
  %v3139 = vpop.f32.mrf.mxu0
  %v3140 = vpop.f32.mrf.mxu0
  %v3141 = vadd.f32 0.0, %v3140
  %v3142 = vpop.f32.mrf.mxu0
  %3143 = vmatprep.mubr.bf16.mxu0 0
  %3144 = vmatmul.mubr.bf16.gmra.mxu0 %v2916
  %v3145 = vpop.f32.mrf.mxu0
  %v3146 = vadd.f32 0.0, %v3145
  %v3147 = vpop.f32.mrf.mxu0
  %v3148 = vpop.f32.mrf.mxu0
  %v3149 = vadd.f32 0.0, %v3148
  %v3150 = vpop.f32.mrf.mxu0
  %3151 = vmatprep.mubr.bf16.mxu0 0
  %3152 = vmatmul.mubr.bf16.gmra.mxu0 %v2919
  %v3153 = vpop.f32.mrf.mxu0
  %v3154 = vadd.f32 0.0, %v3153
  %v3155 = vpop.f32.mrf.mxu0
  %v3156 = vpop.f32.mrf.mxu0
  %v3157 = vadd.f32 0.0, %v3156
  %v3158 = vpop.f32.mrf.mxu0
  %3159 = vmatprep.mubr.bf16.mxu0 0
  %3160 = vmatmul.mubr.bf16.gmra.mxu0 %v2922
  %v3161 = vpop.f32.mrf.mxu0
  %v3162 = vadd.f32 0.0, %v3161
  %v3163 = vpop.f32.mrf.mxu0
  %v3164 = vpop.f32.mrf.mxu0
  %v3165 = vadd.f32 0.0, %v3164
  %v3166 = vpop.f32.mrf.mxu0
  %3167 = vmatprep.mubr.bf16.mxu0 0
  %3168 = vmatmul.mubr.bf16.gmra.mxu0 %v2925
  %v3169 = vpop.f32.mrf.mxu0
  %v3170 = vadd.f32 0.0, %v3169
  %v3171 = vpop.f32.mrf.mxu0
  %v3172 = vpop.f32.mrf.mxu0
  %v3173 = vadd.f32 0.0, %v3172
  %v3174 = vpop.f32.mrf.mxu0
  %3175 = vmatprep.mubr.bf16.mxu0 0
  %3176 = vmatmul.mubr.bf16.gmra.mxu0 %v2928
  %v3177 = vpop.f32.mrf.mxu0
  %v3178 = vadd.f32 0.0, %v3177
  %v3179 = vpop.f32.mrf.mxu0
  %v3180 = vpop.f32.mrf.mxu0
  %v3181 = vadd.f32 0.0, %v3180
  %v3182 = vpop.f32.mrf.mxu0
  %3183 = vmatprep.mubr.bf16.mxu0 0
  %3184 = vmatmul.mubr.bf16.gmra.mxu0 %v2931
  %v3185 = vpop.f32.mrf.mxu0
  %v3186 = vadd.f32 0.0, %v3185
  %v3187 = vpop.f32.mrf.mxu0
  %v3188 = vpop.f32.mrf.mxu0
  %v3189 = vadd.f32 0.0, %v3188
  %v3190 = vpop.f32.mrf.mxu0
  %3191 = vmatprep.mubr.bf16.mxu0 0
  %3192 = vmatmul.mubr.bf16.gmra.mxu0 %v2934
  %v3193 = vpop.f32.mrf.mxu0
  %v3194 = vadd.f32 0.0, %v3193
  %v3195 = vpop.f32.mrf.mxu0
  %v3196 = vpop.f32.mrf.mxu0
  %v3197 = vadd.f32 0.0, %v3196
  %v3198 = vpop.f32.mrf.mxu0
  %3199 = vmatprep.mubr.bf16.mxu0 0
  %3200 = vmatmul.mubr.bf16.gmra.mxu0 %v2937
  %v3201 = vpop.f32.mrf.mxu0
  %v3202 = vadd.f32 0.0, %v3201
  %v3203 = vpop.f32.mrf.mxu0
  %v3204 = vpop.f32.mrf.mxu0
  %v3205 = vadd.f32 0.0, %v3204
  %v3206 = vpop.f32.mrf.mxu0
  %3207 = vmatprep.mubr.bf16.mxu0 0
  %3208 = vmatmul.mubr.bf16.gmra.mxu0 %v2940
  %v3209 = vpop.f32.mrf.mxu0
  %v3210 = vadd.f32 0.0, %v3209
  %v3211 = vpop.f32.mrf.mxu0
  %v3212 = vpop.f32.mrf.mxu0
  %v3213 = vadd.f32 0.0, %v3212
  %v3214 = vpop.f32.mrf.mxu0
  %3215 = vmatprep.mubr.bf16.mxu0 0
  %3216 = vmatmul.mubr.bf16.gmra.mxu0 %v2943
  %v3217 = vpop.f32.mrf.mxu0
  %v3218 = vadd.f32 0.0, %v3217
  %v3219 = vpop.f32.mrf.mxu0
  %v3220 = vpop.f32.mrf.mxu0
  %v3221 = vadd.f32 0.0, %v3220
  %v3222 = vpop.f32.mrf.mxu0
  %3223 = vmatprep.mubr.bf16.mxu0 0
  %3224 = vmatmul.mubr.bf16.gmra.mxu0 %v2946
  %v3225 = vpop.f32.mrf.mxu0
  %v3226 = vadd.f32 0.0, %v3225
  %v3227 = vpop.f32.mrf.mxu0
  %v3228 = vpop.f32.mrf.mxu0
  %v3229 = vadd.f32 0.0, %v3228
  %v3230 = vpop.f32.mrf.mxu0
  %3231 = vmatprep.mubr.bf16.mxu0 0
  %3232 = vmatmul.mubr.bf16.gmra.mxu0 %v2949
  %v3233 = vpop.f32.mrf.mxu0
  %v3234 = vadd.f32 0.0, %v3233
  %v3235 = vpop.f32.mrf.mxu0
  %v3236 = vpop.f32.mrf.mxu0
  %v3237 = vadd.f32 0.0, %v3236
  %v3238 = vpop.f32.mrf.mxu0
  %3239 = vdwg.mxu0
  %v3240 = vadd.f32 %v2496, %v2986
  %v3241 = vadd.f32 %v2499, %v2989
  %v3242 = vadd.f32 %v2504, %v2994
  %v3243 = vadd.f32 %v2507, %v2997
  %v3244 = vadd.f32 %v2512, %v3002
  %v3245 = vadd.f32 %v2515, %v3005
  %v3246 = vadd.f32 %v2520, %v3010
  %v3247 = vadd.f32 %v2523, %v3013
  %v3248 = vadd.f32 %v2528, %v3018
  %v3249 = vadd.f32 %v2531, %v3021
  %v3250 = vadd.f32 %v2536, %v3026
  %v3251 = vadd.f32 %v2539, %v3029
  %v3252 = vadd.f32 %v2544, %v3034
  %v3253 = vadd.f32 %v2547, %v3037
  %v3254 = vadd.f32 %v2552, %v3042
  %v3255 = vadd.f32 %v2555, %v3045
  %v3256 = vadd.f32 %v2560, %v3050
  %v3257 = vadd.f32 %v2563, %v3053
  %v3258 = vadd.f32 %v2568, %v3058
  %v3259 = vadd.f32 %v2571, %v3061
  %v3260 = vadd.f32 %v2576, %v3066
  %v3261 = vadd.f32 %v2579, %v3069
  %v3262 = vadd.f32 %v2584, %v3074
  %v3263 = vadd.f32 %v2587, %v3077
  %v3264 = vadd.f32 %v2592, %v3082
  %v3265 = vadd.f32 %v2595, %v3085
  %v3266 = vadd.f32 %v2600, %v3090
  %v3267 = vadd.f32 %v2603, %v3093
  %v3268 = vadd.f32 %v2608, %v3098
  %v3269 = vadd.f32 %v2611, %v3101
  %v3270 = vadd.f32 %v2616, %v3106
  %v3271 = vadd.f32 %v2619, %v3109
  %v3272 = vadd.f32 %v2624, %v3114
  %v3273 = vadd.f32 %v2627, %v3117
  %v3274 = vadd.f32 %v2632, %v3122
  %v3275 = vadd.f32 %v2635, %v3125
  %v3276 = vadd.f32 %v2640, %v3130
  %v3277 = vadd.f32 %v2643, %v3133
  %v3278 = vadd.f32 %v2648, %v3138
  %v3279 = vadd.f32 %v2651, %v3141
  %v3280 = vadd.f32 %v2656, %v3146
  %v3281 = vadd.f32 %v2659, %v3149
  %v3282 = vadd.f32 %v2664, %v3154
  %v3283 = vadd.f32 %v2667, %v3157
  %v3284 = vadd.f32 %v2672, %v3162
  %v3285 = vadd.f32 %v2675, %v3165
  %v3286 = vadd.f32 %v2680, %v3170
  %v3287 = vadd.f32 %v2683, %v3173
  %v3288 = vadd.f32 %v2688, %v3178
  %v3289 = vadd.f32 %v2691, %v3181
  %v3290 = vadd.f32 %v2696, %v3186
  %v3291 = vadd.f32 %v2699, %v3189
  %v3292 = vadd.f32 %v2704, %v3194
  %v3293 = vadd.f32 %v2707, %v3197
  %v3294 = vadd.f32 %v2712, %v3202
  %v3295 = vadd.f32 %v2715, %v3205
  %v3296 = vadd.f32 %v2720, %v3210
  %v3297 = vadd.f32 %v2723, %v3213
  %v3298 = vadd.f32 %v2728, %v3218
  %v3299 = vadd.f32 %v2731, %v3221
  %v3300 = vadd.f32 %v2736, %v3226
  %v3301 = vadd.f32 %v2739, %v3229
  %v3302 = vadd.f32 %v2744, %v3234
  %v3303 = vadd.f32 %v2747, %v3237
  %v3304 = vld [vmem:[%s1619] sm:$0xff]
  %v3305 = vld [vmem:[%s1619 + $0x8] sm:$0xff]
  %v3306 = vld [vmem:[%s1619 + $0x18] sm:$0xff]
  %v3307 = vld [vmem:[%s1619 + $0x20] sm:$0xff]
  %v3308 = vld [vmem:[%s1619 + $0x30] sm:$0xff]
  %v3309 = vld [vmem:[%s1619 + $0x38] sm:$0xff]
  %v3310 = vld [vmem:[%s1619 + $0x48] sm:$0xff]
  %v3311 = vld [vmem:[%s1619 + $0x50] sm:$0xff]
  %v3312 = vld [vmem:[%s1619 + $0x60] sm:$0xff]
  %v3313 = vld [vmem:[%s1619 + $0x68] sm:$0xff]
  %v3314 = vld [vmem:[%s1619 + $0x78] sm:$0xff]
  %v3315 = vld [vmem:[%s1619 + $0x80] sm:$0xff]
  %v3316 = vld [vmem:[%s1619 + $0x90] sm:$0xff]
  %v3317 = vld [vmem:[%s1619 + $0x98] sm:$0xff]
  %v3318 = vld [vmem:[%s1619 + $0xa8] sm:$0xff]
  %v3319 = vld [vmem:[%s1619 + $0xb0] sm:$0xff]
  %v3320 = vld [vmem:[%s1619 + $0xc0] sm:$0xff]
  %v3321 = vld [vmem:[%s1619 + $0xc8] sm:$0xff]
  %v3322 = vld [vmem:[%s1619 + $0xd8] sm:$0xff]
  %v3323 = vld [vmem:[%s1619 + $0xe0] sm:$0xff]
  %v3324 = vld [vmem:[%s1619 + $0xf0] sm:$0xff]
  %v3325 = vld [vmem:[%s1619 + $0xf8] sm:$0xff]
  %v3326 = vld [vmem:[%s1619 + $0x108] sm:$0xff]
  %v3327 = vld [vmem:[%s1619 + $0x110] sm:$0xff]
  %v3328 = vld [vmem:[%s1619 + $0x120] sm:$0xff]
  %v3329 = vld [vmem:[%s1619 + $0x128] sm:$0xff]
  %v3330 = vld [vmem:[%s1619 + $0x138] sm:$0xff]
  %v3331 = vld [vmem:[%s1619 + $0x140] sm:$0xff]
  %v3332 = vld [vmem:[%s1619 + $0x150] sm:$0xff]
  %v3333 = vld [vmem:[%s1619 + $0x158] sm:$0xff]
  %v3334 = vld [vmem:[%s1619 + $0x168] sm:$0xff]
  %v3335 = vld [vmem:[%s1619 + $0x170] sm:$0xff]
  %v3336 = vld [vmem:[%s1619 + $0x1b0] sm:$0xff]
  %v3337 = vld [vmem:[%s1619 + $0x1b8] sm:$0xff]
  %v3338 = vld [vmem:[%s1619 + $0x1c8] sm:$0xff]
  %v3339 = vld [vmem:[%s1619 + $0x1d0] sm:$0xff]
  %v3340 = vld [vmem:[%s1619 + $0x1e0] sm:$0xff]
  %v3341 = vld [vmem:[%s1619 + $0x1e8] sm:$0xff]
  %v3342 = vld [vmem:[%s1619 + $0x1f8] sm:$0xff]
  %v3343 = vld [vmem:[%s1619 + $0x200] sm:$0xff]
  %v3344 = vld [vmem:[%s1619 + $0x210] sm:$0xff]
  %v3345 = vld [vmem:[%s1619 + $0x218] sm:$0xff]
  %v3346 = vld [vmem:[%s1619 + $0x228] sm:$0xff]
  %v3347 = vld [vmem:[%s1619 + $0x230] sm:$0xff]
  %v3348 = vld [vmem:[%s1619 + $0x240] sm:$0xff]
  %v3349 = vld [vmem:[%s1619 + $0x248] sm:$0xff]
  %v3350 = vld [vmem:[%s1619 + $0x258] sm:$0xff]
  %v3351 = vld [vmem:[%s1619 + $0x260] sm:$0xff]
  %v3352 = vld [vmem:[%s1619 + $0x270] sm:$0xff]
  %v3353 = vld [vmem:[%s1619 + $0x278] sm:$0xff]
  %v3354 = vld [vmem:[%s1619 + $0x288] sm:$0xff]
  %v3355 = vld [vmem:[%s1619 + $0x290] sm:$0xff]
  %v3356 = vld [vmem:[%s1619 + $0x2a0] sm:$0xff]
  %v3357 = vld [vmem:[%s1619 + $0x2a8] sm:$0xff]
  %v3358 = vld [vmem:[%s1619 + $0x2b8] sm:$0xff]
  %v3359 = vld [vmem:[%s1619 + $0x2c0] sm:$0xff]
  %v3360 = vld [vmem:[%s1619 + $0x2d0] sm:$0xff]
  %v3361 = vld [vmem:[%s1619 + $0x2d8] sm:$0xff]
  %v3362 = vld [vmem:[%s1619 + $0x2e8] sm:$0xff]
  %v3363 = vld [vmem:[%s1619 + $0x2f0] sm:$0xff]
  %v3364 = vld [vmem:[%s1619 + $0x300] sm:$0xff]
  %v3365 = vld [vmem:[%s1619 + $0x308] sm:$0xff]
  %v3366 = vld [vmem:[%s1619 + $0x318] sm:$0xff]
  %v3367 = vld [vmem:[%s1619 + $0x320] sm:$0xff]
  %v3368 = vpack.c.bf16 %v3305, %v3304
  %v3369 = vpack.c.bf16 %v3307, %v3306
  %v3370 = vpack.c.bf16 %v3309, %v3308
  %v3371 = vpack.c.bf16 %v3311, %v3310
  %v3372 = vpack.c.bf16 %v3313, %v3312
  %v3373 = vpack.c.bf16 %v3315, %v3314
  %v3374 = vpack.c.bf16 %v3317, %v3316
  %v3375 = vpack.c.bf16 %v3319, %v3318
  %v3376 = vpack.c.bf16 %v3321, %v3320
  %v3377 = vpack.c.bf16 %v3323, %v3322
  %v3378 = vpack.c.bf16 %v3325, %v3324
  %v3379 = vpack.c.bf16 %v3327, %v3326
  %v3380 = vpack.c.bf16 %v3329, %v3328
  %v3381 = vpack.c.bf16 %v3331, %v3330
  %v3382 = vpack.c.bf16 %v3333, %v3332
  %v3383 = vpack.c.bf16 %v3335, %v3334
  %v3384 = vpack.c.bf16 %v3337, %v3336
  %v3385 = vpack.c.bf16 %v3339, %v3338
  %v3386 = vpack.c.bf16 %v3341, %v3340
  %v3387 = vpack.c.bf16 %v3343, %v3342
  %v3388 = vpack.c.bf16 %v3345, %v3344
  %v3389 = vpack.c.bf16 %v3347, %v3346
  %v3390 = vpack.c.bf16 %v3349, %v3348
  %v3391 = vpack.c.bf16 %v3351, %v3350
  %v3392 = vpack.c.bf16 %v3353, %v3352
  %v3393 = vpack.c.bf16 %v3355, %v3354
  %v3394 = vpack.c.bf16 %v3357, %v3356
  %v3395 = vpack.c.bf16 %v3359, %v3358
  %v3396 = vpack.c.bf16 %v3361, %v3360
  %v3397 = vpack.c.bf16 %v3363, %v3362
  %v3398 = vpack.c.bf16 %v3365, %v3364
  %v3399 = vpack.c.bf16 %v3367, %v3366
  %s3400 = scalar_lea.vmem %s8, 24
  %v3401 = vld [vmem:[%s3400] sm:$0xf]
  %v3402 = vld [vmem:[%s3400 + $0x4] sm:$0xf]
  %v3405 = vunpack.c.l.b16 %v3401
  %v3406 = vunpack.c.l.b16 %v3402
  %v3407 = vpack.c.b16 %v3406, %v3405
  %v3410 = vsel %vm1072, %v3368, 0
  %v3413 = vsel %vm1072, %v3369, 0
  %v3416 = vsel %vm1072, %v3370, 0
  %v3419 = vsel %vm1072, %v3371, 0
  %v3422 = vsel %vm1072, %v3372, 0
  %v3425 = vsel %vm1072, %v3373, 0
  %v3428 = vsel %vm1072, %v3374, 0
  %v3431 = vsel %vm1072, %v3375, 0
  %v3434 = vsel %vm1072, %v3376, 0
  %v3437 = vsel %vm1072, %v3377, 0
  %v3440 = vsel %vm1072, %v3378, 0
  %v3443 = vsel %vm1072, %v3379, 0
  %v3446 = vsel %vm1072, %v3380, 0
  %v3449 = vsel %vm1072, %v3381, 0
  %v3452 = vsel %vm1072, %v3382, 0
  %v3455 = vsel %vm1072, %v3383, 0
  %v3458 = vsel %vm1072, %v3384, 0
  %v3461 = vsel %vm1072, %v3385, 0
  %v3464 = vsel %vm1072, %v3386, 0
  %v3467 = vsel %vm1072, %v3387, 0
  %v3470 = vsel %vm1072, %v3388, 0
  %v3473 = vsel %vm1072, %v3389, 0
  %v3476 = vsel %vm1072, %v3390, 0
  %v3479 = vsel %vm1072, %v3391, 0
  %v3482 = vsel %vm1072, %v3392, 0
  %v3485 = vsel %vm1072, %v3393, 0
  %v3488 = vsel %vm1072, %v3394, 0
  %v3491 = vsel %vm1072, %v3395, 0
  %v3494 = vsel %vm1072, %v3396, 0
  %v3497 = vsel %vm1072, %v3397, 0
  %v3500 = vsel %vm1072, %v3398, 0
  %v3503 = vsel %vm1072, %v3399, 0
  %3505 = vmatprep.subr.bf16.mxu0 0
  %3506 = vmatpush1.bf16.msra.mxu0 0
  %3507 = vmatprep.subr.bf16.mxu0 0
  %3508 = vmatpush1.bf16.msra.mxu0 0
  %3509 = vmatprep.subr.bf16.mxu0 0
  %3510 = vmatpush1.bf16.msra.mxu0 0
  %3511 = vmatprep.subr.bf16.mxu0 0
  %3512 = vmatpush1.bf16.msra.mxu0 0
  %3513 = vmatprep.subr.bf16.mxu0 0
  %3514 = vmatpush1.bf16.msra.mxu0 0
  %3515 = vmatprep.subr.bf16.mxu0 0
  %3516 = vmatpush1.bf16.msra.mxu0 0
  %3517 = vmatprep.subr.bf16.mxu0 0
  %3518 = vmatpush1.bf16.msra.mxu0 0
  %3519 = vmatprep.subr.bf16.mxu0 0
  %3520 = vmatpush1.bf16.msra.mxu0 %v3407
  %3521 = vmatprep.subr.bf16.mxu0 0
  %3522 = vmatpush2.bf16.msra.mxu0 0
  %3523 = vmatprep.subr.bf16.mxu0 0
  %3524 = vmatpush2.bf16.msra.mxu0 0
  %3525 = vmatprep.subr.bf16.mxu0 0
  %3526 = vmatpush2.bf16.msra.mxu0 0
  %3527 = vmatprep.subr.bf16.mxu0 0
  %3528 = vmatpush2.bf16.msra.mxu0 0
  %3529 = vmatprep.subr.bf16.mxu0 0
  %3530 = vmatpush2.bf16.msra.mxu0 0
  %3531 = vmatprep.subr.bf16.mxu0 0
  %3532 = vmatpush2.bf16.msra.mxu0 0
  %3533 = vmatprep.subr.bf16.mxu0 0
  %3534 = vmatpush2.bf16.msra.mxu0 0
  %3535 = vmatprep.subr.bf16.mxu0 0
  %3536 = vmatpush2.bf16.msra.mxu0 0
  %3537 = vmatprep.mubr.bf16.mxu0 0
  %3538 = vmatmul.mubr.bf16.gmra.mxu0 %v3410
  %v3539 = vpop.f32.mrf.mxu0
  %v3540 = vadd.f32 0.0, %v3539
  %v3541 = vpop.f32.mrf.mxu0
  %v3542 = vpop.f32.mrf.mxu0
  %v3543 = vadd.f32 0.0, %v3542
  %v3544 = vpop.f32.mrf.mxu0
  %3545 = vmatprep.mubr.bf16.mxu0 0
  %3546 = vmatmul.mubr.bf16.gmra.mxu0 %v3413
  %v3547 = vpop.f32.mrf.mxu0
  %v3548 = vadd.f32 0.0, %v3547
  %v3549 = vpop.f32.mrf.mxu0
  %v3550 = vpop.f32.mrf.mxu0
  %v3551 = vadd.f32 0.0, %v3550
  %v3552 = vpop.f32.mrf.mxu0
  %3553 = vmatprep.mubr.bf16.mxu0 0
  %3554 = vmatmul.mubr.bf16.gmra.mxu0 %v3416
  %v3555 = vpop.f32.mrf.mxu0
  %v3556 = vadd.f32 0.0, %v3555
  %v3557 = vpop.f32.mrf.mxu0
  %v3558 = vpop.f32.mrf.mxu0
  %v3559 = vadd.f32 0.0, %v3558
  %v3560 = vpop.f32.mrf.mxu0
  %3561 = vmatprep.mubr.bf16.mxu0 0
  %3562 = vmatmul.mubr.bf16.gmra.mxu0 %v3419
  %v3563 = vpop.f32.mrf.mxu0
  %v3564 = vadd.f32 0.0, %v3563
  %v3565 = vpop.f32.mrf.mxu0
  %v3566 = vpop.f32.mrf.mxu0
  %v3567 = vadd.f32 0.0, %v3566
  %v3568 = vpop.f32.mrf.mxu0
  %3569 = vmatprep.mubr.bf16.mxu0 0
  %3570 = vmatmul.mubr.bf16.gmra.mxu0 %v3422
  %v3571 = vpop.f32.mrf.mxu0
  %v3572 = vadd.f32 0.0, %v3571
  %v3573 = vpop.f32.mrf.mxu0
  %v3574 = vpop.f32.mrf.mxu0
  %v3575 = vadd.f32 0.0, %v3574
  %v3576 = vpop.f32.mrf.mxu0
  %3577 = vmatprep.mubr.bf16.mxu0 0
  %3578 = vmatmul.mubr.bf16.gmra.mxu0 %v3425
  %v3579 = vpop.f32.mrf.mxu0
  %v3580 = vadd.f32 0.0, %v3579
  %v3581 = vpop.f32.mrf.mxu0
  %v3582 = vpop.f32.mrf.mxu0
  %v3583 = vadd.f32 0.0, %v3582
  %v3584 = vpop.f32.mrf.mxu0
  %3585 = vmatprep.mubr.bf16.mxu0 0
  %3586 = vmatmul.mubr.bf16.gmra.mxu0 %v3428
  %v3587 = vpop.f32.mrf.mxu0
  %v3588 = vadd.f32 0.0, %v3587
  %v3589 = vpop.f32.mrf.mxu0
  %v3590 = vpop.f32.mrf.mxu0
  %v3591 = vadd.f32 0.0, %v3590
  %v3592 = vpop.f32.mrf.mxu0
  %3593 = vmatprep.mubr.bf16.mxu0 0
  %3594 = vmatmul.mubr.bf16.gmra.mxu0 %v3431
  %v3595 = vpop.f32.mrf.mxu0
  %v3596 = vadd.f32 0.0, %v3595
  %v3597 = vpop.f32.mrf.mxu0
  %v3598 = vpop.f32.mrf.mxu0
  %v3599 = vadd.f32 0.0, %v3598
  %v3600 = vpop.f32.mrf.mxu0
  %3601 = vmatprep.mubr.bf16.mxu0 0
  %3602 = vmatmul.mubr.bf16.gmra.mxu0 %v3434
  %v3603 = vpop.f32.mrf.mxu0
  %v3604 = vadd.f32 0.0, %v3603
  %v3605 = vpop.f32.mrf.mxu0
  %v3606 = vpop.f32.mrf.mxu0
  %v3607 = vadd.f32 0.0, %v3606
  %v3608 = vpop.f32.mrf.mxu0
  %3609 = vmatprep.mubr.bf16.mxu0 0
  %3610 = vmatmul.mubr.bf16.gmra.mxu0 %v3437
  %v3611 = vpop.f32.mrf.mxu0
  %v3612 = vadd.f32 0.0, %v3611
  %v3613 = vpop.f32.mrf.mxu0
  %v3614 = vpop.f32.mrf.mxu0
  %v3615 = vadd.f32 0.0, %v3614
  %v3616 = vpop.f32.mrf.mxu0
  %3617 = vmatprep.mubr.bf16.mxu0 0
  %3618 = vmatmul.mubr.bf16.gmra.mxu0 %v3440
  %v3619 = vpop.f32.mrf.mxu0
  %v3620 = vadd.f32 0.0, %v3619
  %v3621 = vpop.f32.mrf.mxu0
  %v3622 = vpop.f32.mrf.mxu0
  %v3623 = vadd.f32 0.0, %v3622
  %v3624 = vpop.f32.mrf.mxu0
  %3625 = vmatprep.mubr.bf16.mxu0 0
  %3626 = vmatmul.mubr.bf16.gmra.mxu0 %v3443
  %v3627 = vpop.f32.mrf.mxu0
  %v3628 = vadd.f32 0.0, %v3627
  %v3629 = vpop.f32.mrf.mxu0
  %v3630 = vpop.f32.mrf.mxu0
  %v3631 = vadd.f32 0.0, %v3630
  %v3632 = vpop.f32.mrf.mxu0
  %3633 = vmatprep.mubr.bf16.mxu0 0
  %3634 = vmatmul.mubr.bf16.gmra.mxu0 %v3446
  %v3635 = vpop.f32.mrf.mxu0
  %v3636 = vadd.f32 0.0, %v3635
  %v3637 = vpop.f32.mrf.mxu0
  %v3638 = vpop.f32.mrf.mxu0
  %v3639 = vadd.f32 0.0, %v3638
  %v3640 = vpop.f32.mrf.mxu0
  %3641 = vmatprep.mubr.bf16.mxu0 0
  %3642 = vmatmul.mubr.bf16.gmra.mxu0 %v3449
  %v3643 = vpop.f32.mrf.mxu0
  %v3644 = vadd.f32 0.0, %v3643
  %v3645 = vpop.f32.mrf.mxu0
  %v3646 = vpop.f32.mrf.mxu0
  %v3647 = vadd.f32 0.0, %v3646
  %v3648 = vpop.f32.mrf.mxu0
  %3649 = vmatprep.mubr.bf16.mxu0 0
  %3650 = vmatmul.mubr.bf16.gmra.mxu0 %v3452
  %v3651 = vpop.f32.mrf.mxu0
  %v3652 = vadd.f32 0.0, %v3651
  %v3653 = vpop.f32.mrf.mxu0
  %v3654 = vpop.f32.mrf.mxu0
  %v3655 = vadd.f32 0.0, %v3654
  %v3656 = vpop.f32.mrf.mxu0
  %3657 = vmatprep.mubr.bf16.mxu0 0
  %3658 = vmatmul.mubr.bf16.gmra.mxu0 %v3455
  %v3659 = vpop.f32.mrf.mxu0
  %v3660 = vadd.f32 0.0, %v3659
  %v3661 = vpop.f32.mrf.mxu0
  %v3662 = vpop.f32.mrf.mxu0
  %v3663 = vadd.f32 0.0, %v3662
  %v3664 = vpop.f32.mrf.mxu0
  %3665 = vmatprep.mubr.bf16.mxu0 0
  %3666 = vmatmul.mubr.bf16.gmra.mxu0 %v3458
  %v3667 = vpop.f32.mrf.mxu0
  %v3668 = vadd.f32 0.0, %v3667
  %v3669 = vpop.f32.mrf.mxu0
  %v3670 = vpop.f32.mrf.mxu0
  %v3671 = vadd.f32 0.0, %v3670
  %v3672 = vpop.f32.mrf.mxu0
  %3673 = vmatprep.mubr.bf16.mxu0 0
  %3674 = vmatmul.mubr.bf16.gmra.mxu0 %v3461
  %v3675 = vpop.f32.mrf.mxu0
  %v3676 = vadd.f32 0.0, %v3675
  %v3677 = vpop.f32.mrf.mxu0
  %v3678 = vpop.f32.mrf.mxu0
  %v3679 = vadd.f32 0.0, %v3678
  %v3680 = vpop.f32.mrf.mxu0
  %3681 = vmatprep.mubr.bf16.mxu0 0
  %3682 = vmatmul.mubr.bf16.gmra.mxu0 %v3464
  %v3683 = vpop.f32.mrf.mxu0
  %v3684 = vadd.f32 0.0, %v3683
  %v3685 = vpop.f32.mrf.mxu0
  %v3686 = vpop.f32.mrf.mxu0
  %v3687 = vadd.f32 0.0, %v3686
  %v3688 = vpop.f32.mrf.mxu0
  %3689 = vmatprep.mubr.bf16.mxu0 0
  %3690 = vmatmul.mubr.bf16.gmra.mxu0 %v3467
  %v3691 = vpop.f32.mrf.mxu0
  %v3692 = vadd.f32 0.0, %v3691
  %v3693 = vpop.f32.mrf.mxu0
  %v3694 = vpop.f32.mrf.mxu0
  %v3695 = vadd.f32 0.0, %v3694
  %v3696 = vpop.f32.mrf.mxu0
  %3697 = vmatprep.mubr.bf16.mxu0 0
  %3698 = vmatmul.mubr.bf16.gmra.mxu0 %v3470
  %v3699 = vpop.f32.mrf.mxu0
  %v3700 = vadd.f32 0.0, %v3699
  %v3701 = vpop.f32.mrf.mxu0
  %v3702 = vpop.f32.mrf.mxu0
  %v3703 = vadd.f32 0.0, %v3702
  %v3704 = vpop.f32.mrf.mxu0
  %3705 = vmatprep.mubr.bf16.mxu0 0
  %3706 = vmatmul.mubr.bf16.gmra.mxu0 %v3473
  %v3707 = vpop.f32.mrf.mxu0
  %v3708 = vadd.f32 0.0, %v3707
  %v3709 = vpop.f32.mrf.mxu0
  %v3710 = vpop.f32.mrf.mxu0
  %v3711 = vadd.f32 0.0, %v3710
  %v3712 = vpop.f32.mrf.mxu0
  %3713 = vmatprep.mubr.bf16.mxu0 0
  %3714 = vmatmul.mubr.bf16.gmra.mxu0 %v3476
  %v3715 = vpop.f32.mrf.mxu0
  %v3716 = vadd.f32 0.0, %v3715
  %v3717 = vpop.f32.mrf.mxu0
  %v3718 = vpop.f32.mrf.mxu0
  %v3719 = vadd.f32 0.0, %v3718
  %v3720 = vpop.f32.mrf.mxu0
  %3721 = vmatprep.mubr.bf16.mxu0 0
  %3722 = vmatmul.mubr.bf16.gmra.mxu0 %v3479
  %v3723 = vpop.f32.mrf.mxu0
  %v3724 = vadd.f32 0.0, %v3723
  %v3725 = vpop.f32.mrf.mxu0
  %v3726 = vpop.f32.mrf.mxu0
  %v3727 = vadd.f32 0.0, %v3726
  %v3728 = vpop.f32.mrf.mxu0
  %3729 = vmatprep.mubr.bf16.mxu0 0
  %3730 = vmatmul.mubr.bf16.gmra.mxu0 %v3482
  %v3731 = vpop.f32.mrf.mxu0
  %v3732 = vadd.f32 0.0, %v3731
  %v3733 = vpop.f32.mrf.mxu0
  %v3734 = vpop.f32.mrf.mxu0
  %v3735 = vadd.f32 0.0, %v3734
  %v3736 = vpop.f32.mrf.mxu0
  %3737 = vmatprep.mubr.bf16.mxu0 0
  %3738 = vmatmul.mubr.bf16.gmra.mxu0 %v3485
  %v3739 = vpop.f32.mrf.mxu0
  %v3740 = vadd.f32 0.0, %v3739
  %v3741 = vpop.f32.mrf.mxu0
  %v3742 = vpop.f32.mrf.mxu0
  %v3743 = vadd.f32 0.0, %v3742
  %v3744 = vpop.f32.mrf.mxu0
  %3745 = vmatprep.mubr.bf16.mxu0 0
  %3746 = vmatmul.mubr.bf16.gmra.mxu0 %v3488
  %v3747 = vpop.f32.mrf.mxu0
  %v3748 = vadd.f32 0.0, %v3747
  %v3749 = vpop.f32.mrf.mxu0
  %v3750 = vpop.f32.mrf.mxu0
  %v3751 = vadd.f32 0.0, %v3750
  %v3752 = vpop.f32.mrf.mxu0
  %3753 = vmatprep.mubr.bf16.mxu0 0
  %3754 = vmatmul.mubr.bf16.gmra.mxu0 %v3491
  %v3755 = vpop.f32.mrf.mxu0
  %v3756 = vadd.f32 0.0, %v3755
  %v3757 = vpop.f32.mrf.mxu0
  %v3758 = vpop.f32.mrf.mxu0
  %v3759 = vadd.f32 0.0, %v3758
  %v3760 = vpop.f32.mrf.mxu0
  %3761 = vmatprep.mubr.bf16.mxu0 0
  %3762 = vmatmul.mubr.bf16.gmra.mxu0 %v3494
  %v3763 = vpop.f32.mrf.mxu0
  %v3764 = vadd.f32 0.0, %v3763
  %v3765 = vpop.f32.mrf.mxu0
  %v3766 = vpop.f32.mrf.mxu0
  %v3767 = vadd.f32 0.0, %v3766
  %v3768 = vpop.f32.mrf.mxu0
  %3769 = vmatprep.mubr.bf16.mxu0 0
  %3770 = vmatmul.mubr.bf16.gmra.mxu0 %v3497
  %v3771 = vpop.f32.mrf.mxu0
  %v3772 = vadd.f32 0.0, %v3771
  %v3773 = vpop.f32.mrf.mxu0
  %v3774 = vpop.f32.mrf.mxu0
  %v3775 = vadd.f32 0.0, %v3774
  %v3776 = vpop.f32.mrf.mxu0
  %3777 = vmatprep.mubr.bf16.mxu0 0
  %3778 = vmatmul.mubr.bf16.gmra.mxu0 %v3500
  %v3779 = vpop.f32.mrf.mxu0
  %v3780 = vadd.f32 0.0, %v3779
  %v3781 = vpop.f32.mrf.mxu0
  %v3782 = vpop.f32.mrf.mxu0
  %v3783 = vadd.f32 0.0, %v3782
  %v3784 = vpop.f32.mrf.mxu0
  %3785 = vmatprep.mubr.bf16.mxu0 0
  %3786 = vmatmul.mubr.bf16.gmra.mxu0 %v3503
  %v3787 = vpop.f32.mrf.mxu0
  %v3788 = vadd.f32 0.0, %v3787
  %v3789 = vpop.f32.mrf.mxu0
  %v3790 = vpop.f32.mrf.mxu0
  %v3791 = vadd.f32 0.0, %v3790
  %v3792 = vpop.f32.mrf.mxu0
  %3793 = vdwg.mxu0
  %v3794 = vadd.f32 %v3240, %v3540
  %v3795 = vadd.f32 %v3241, %v3543
  %v3796 = vadd.f32 %v3242, %v3548
  %v3797 = vadd.f32 %v3243, %v3551
  %v3798 = vadd.f32 %v3244, %v3556
  %v3799 = vadd.f32 %v3245, %v3559
  %v3800 = vadd.f32 %v3246, %v3564
  %v3801 = vadd.f32 %v3247, %v3567
  %v3802 = vadd.f32 %v3248, %v3572
  %v3803 = vadd.f32 %v3249, %v3575
  %v3804 = vadd.f32 %v3250, %v3580
  %v3805 = vadd.f32 %v3251, %v3583
  %v3806 = vadd.f32 %v3252, %v3588
  %v3807 = vadd.f32 %v3253, %v3591
  %v3808 = vadd.f32 %v3254, %v3596
  %v3809 = vadd.f32 %v3255, %v3599
  %v3810 = vadd.f32 %v3256, %v3604
  %v3811 = vadd.f32 %v3257, %v3607
  %v3812 = vadd.f32 %v3258, %v3612
  %v3813 = vadd.f32 %v3259, %v3615
  %v3814 = vadd.f32 %v3260, %v3620
  %v3815 = vadd.f32 %v3261, %v3623
  %v3816 = vadd.f32 %v3262, %v3628
  %v3817 = vadd.f32 %v3263, %v3631
  %v3818 = vadd.f32 %v3264, %v3636
  %v3819 = vadd.f32 %v3265, %v3639
  %v3820 = vadd.f32 %v3266, %v3644
  %v3821 = vadd.f32 %v3267, %v3647
  %v3822 = vadd.f32 %v3268, %v3652
  %v3823 = vadd.f32 %v3269, %v3655
  %v3824 = vadd.f32 %v3270, %v3660
  %v3825 = vadd.f32 %v3271, %v3663
  %v3826 = vadd.f32 %v3272, %v3668
  %v3827 = vadd.f32 %v3273, %v3671
  %v3828 = vadd.f32 %v3274, %v3676
  %v3829 = vadd.f32 %v3275, %v3679
  %v3830 = vadd.f32 %v3276, %v3684
  %v3831 = vadd.f32 %v3277, %v3687
  %v3832 = vadd.f32 %v3278, %v3692
  %v3833 = vadd.f32 %v3279, %v3695
  %v3834 = vadd.f32 %v3280, %v3700
  %v3835 = vadd.f32 %v3281, %v3703
  %v3836 = vadd.f32 %v3282, %v3708
  %v3837 = vadd.f32 %v3283, %v3711
  %v3838 = vadd.f32 %v3284, %v3716
  %v3839 = vadd.f32 %v3285, %v3719
  %v3840 = vadd.f32 %v3286, %v3724
  %v3841 = vadd.f32 %v3287, %v3727
  %v3842 = vadd.f32 %v3288, %v3732
  %v3843 = vadd.f32 %v3289, %v3735
  %v3844 = vadd.f32 %v3290, %v3740
  %v3845 = vadd.f32 %v3291, %v3743
  %v3846 = vadd.f32 %v3292, %v3748
  %v3847 = vadd.f32 %v3293, %v3751
  %v3848 = vadd.f32 %v3294, %v3756
  %v3849 = vadd.f32 %v3295, %v3759
  %v3850 = vadd.f32 %v3296, %v3764
  %v3851 = vadd.f32 %v3297, %v3767
  %v3852 = vadd.f32 %v3298, %v3772
  %v3853 = vadd.f32 %v3299, %v3775
  %v3854 = vadd.f32 %v3300, %v3780
  %v3855 = vadd.f32 %v3301, %v3783
  %v3856 = vadd.f32 %v3302, %v3788
  %v3857 = vadd.f32 %v3303, %v3791
  %v3858 = vld [vmem:[%s1619 + $0x1] sm:$0xff]
  %v3859 = vld [vmem:[%s1619 + $0x9] sm:$0xff]
  %v3860 = vld [vmem:[%s1619 + $0x19] sm:$0xff]
  %v3861 = vld [vmem:[%s1619 + $0x21] sm:$0xff]
  %v3862 = vld [vmem:[%s1619 + $0x31] sm:$0xff]
  %v3863 = vld [vmem:[%s1619 + $0x39] sm:$0xff]
  %v3864 = vld [vmem:[%s1619 + $0x49] sm:$0xff]
  %v3865 = vld [vmem:[%s1619 + $0x51] sm:$0xff]
  %v3866 = vld [vmem:[%s1619 + $0x61] sm:$0xff]
  %v3867 = vld [vmem:[%s1619 + $0x69] sm:$0xff]
  %v3868 = vld [vmem:[%s1619 + $0x79] sm:$0xff]
  %v3869 = vld [vmem:[%s1619 + $0x81] sm:$0xff]
  %v3870 = vld [vmem:[%s1619 + $0x91] sm:$0xff]
  %v3871 = vld [vmem:[%s1619 + $0x99] sm:$0xff]
  %v3872 = vld [vmem:[%s1619 + $0xa9] sm:$0xff]
  %v3873 = vld [vmem:[%s1619 + $0xb1] sm:$0xff]
  %v3874 = vld [vmem:[%s1619 + $0xc1] sm:$0xff]
  %v3875 = vld [vmem:[%s1619 + $0xc9] sm:$0xff]
  %v3876 = vld [vmem:[%s1619 + $0xd9] sm:$0xff]
  %v3877 = vld [vmem:[%s1619 + $0xe1] sm:$0xff]
  %v3878 = vld [vmem:[%s1619 + $0xf1] sm:$0xff]
  %v3879 = vld [vmem:[%s1619 + $0xf9] sm:$0xff]
  %v3880 = vld [vmem:[%s1619 + $0x109] sm:$0xff]
  %v3881 = vld [vmem:[%s1619 + $0x111] sm:$0xff]
  %v3882 = vld [vmem:[%s1619 + $0x121] sm:$0xff]
  %v3883 = vld [vmem:[%s1619 + $0x129] sm:$0xff]
  %v3884 = vld [vmem:[%s1619 + $0x139] sm:$0xff]
  %v3885 = vld [vmem:[%s1619 + $0x141] sm:$0xff]
  %v3886 = vld [vmem:[%s1619 + $0x151] sm:$0xff]
  %v3887 = vld [vmem:[%s1619 + $0x159] sm:$0xff]
  %v3888 = vld [vmem:[%s1619 + $0x169] sm:$0xff]
  %v3889 = vld [vmem:[%s1619 + $0x171] sm:$0xff]
  %v3890 = vld [vmem:[%s1619 + $0x1b1] sm:$0xff]
  %v3891 = vld [vmem:[%s1619 + $0x1b9] sm:$0xff]
  %v3892 = vld [vmem:[%s1619 + $0x1c9] sm:$0xff]
  %v3893 = vld [vmem:[%s1619 + $0x1d1] sm:$0xff]
  %v3894 = vld [vmem:[%s1619 + $0x1e1] sm:$0xff]
  %v3895 = vld [vmem:[%s1619 + $0x1e9] sm:$0xff]
  %v3896 = vld [vmem:[%s1619 + $0x1f9] sm:$0xff]
  %v3897 = vld [vmem:[%s1619 + $0x201] sm:$0xff]
  %v3898 = vld [vmem:[%s1619 + $0x211] sm:$0xff]
  %v3899 = vld [vmem:[%s1619 + $0x219] sm:$0xff]
  %v3900 = vld [vmem:[%s1619 + $0x229] sm:$0xff]
  %v3901 = vld [vmem:[%s1619 + $0x231] sm:$0xff]
  %v3902 = vld [vmem:[%s1619 + $0x241] sm:$0xff]
  %v3903 = vld [vmem:[%s1619 + $0x249] sm:$0xff]
  %v3904 = vld [vmem:[%s1619 + $0x259] sm:$0xff]
  %v3905 = vld [vmem:[%s1619 + $0x261] sm:$0xff]
  %v3906 = vld [vmem:[%s1619 + $0x271] sm:$0xff]
  %v3907 = vld [vmem:[%s1619 + $0x279] sm:$0xff]
  %v3908 = vld [vmem:[%s1619 + $0x289] sm:$0xff]
  %v3909 = vld [vmem:[%s1619 + $0x291] sm:$0xff]
  %v3910 = vld [vmem:[%s1619 + $0x2a1] sm:$0xff]
  %v3911 = vld [vmem:[%s1619 + $0x2a9] sm:$0xff]
  %v3912 = vld [vmem:[%s1619 + $0x2b9] sm:$0xff]
  %v3913 = vld [vmem:[%s1619 + $0x2c1] sm:$0xff]
  %v3914 = vld [vmem:[%s1619 + $0x2d1] sm:$0xff]
  %v3915 = vld [vmem:[%s1619 + $0x2d9] sm:$0xff]
  %v3916 = vld [vmem:[%s1619 + $0x2e9] sm:$0xff]
  %v3917 = vld [vmem:[%s1619 + $0x2f1] sm:$0xff]
  %v3918 = vld [vmem:[%s1619 + $0x301] sm:$0xff]
  %v3919 = vld [vmem:[%s1619 + $0x309] sm:$0xff]
  %v3920 = vld [vmem:[%s1619 + $0x319] sm:$0xff]
  %v3921 = vld [vmem:[%s1619 + $0x321] sm:$0xff]
  %v3922 = vpack.c.bf16 %v3859, %v3858
  %v3923 = vpack.c.bf16 %v3861, %v3860
  %v3924 = vpack.c.bf16 %v3863, %v3862
  %v3925 = vpack.c.bf16 %v3865, %v3864
  %v3926 = vpack.c.bf16 %v3867, %v3866
  %v3927 = vpack.c.bf16 %v3869, %v3868
  %v3928 = vpack.c.bf16 %v3871, %v3870
  %v3929 = vpack.c.bf16 %v3873, %v3872
  %v3930 = vpack.c.bf16 %v3875, %v3874
  %v3931 = vpack.c.bf16 %v3877, %v3876
  %v3932 = vpack.c.bf16 %v3879, %v3878
  %v3933 = vpack.c.bf16 %v3881, %v3880
  %v3934 = vpack.c.bf16 %v3883, %v3882
  %v3935 = vpack.c.bf16 %v3885, %v3884
  %v3936 = vpack.c.bf16 %v3887, %v3886
  %v3937 = vpack.c.bf16 %v3889, %v3888
  %v3938 = vpack.c.bf16 %v3891, %v3890
  %v3939 = vpack.c.bf16 %v3893, %v3892
  %v3940 = vpack.c.bf16 %v3895, %v3894
  %v3941 = vpack.c.bf16 %v3897, %v3896
  %v3942 = vpack.c.bf16 %v3899, %v3898
  %v3943 = vpack.c.bf16 %v3901, %v3900
  %v3944 = vpack.c.bf16 %v3903, %v3902
  %v3945 = vpack.c.bf16 %v3905, %v3904
  %v3946 = vpack.c.bf16 %v3907, %v3906
  %v3947 = vpack.c.bf16 %v3909, %v3908
  %v3948 = vpack.c.bf16 %v3911, %v3910
  %v3949 = vpack.c.bf16 %v3913, %v3912
  %v3950 = vpack.c.bf16 %v3915, %v3914
  %v3951 = vpack.c.bf16 %v3917, %v3916
  %v3952 = vpack.c.bf16 %v3919, %v3918
  %v3953 = vpack.c.bf16 %v3921, %v3920
  %s3954 = scalar_lea.vmem %s8, 32
  %v3955 = vld [vmem:[%s3954] sm:$0xf]
  %v3956 = vld [vmem:[%s3954 + $0x4] sm:$0xf]
  %v3959 = vunpack.c.l.b16 %v3955
  %v3960 = vunpack.c.l.b16 %v3956
  %v3961 = vpack.c.b16 %v3960, %v3959
  %v3964 = vsel %vm1072, %v3922, 0
  %v3967 = vsel %vm1072, %v3923, 0
  %v3970 = vsel %vm1072, %v3924, 0
  %v3973 = vsel %vm1072, %v3925, 0
  %v3976 = vsel %vm1072, %v3926, 0
  %v3979 = vsel %vm1072, %v3927, 0
  %v3982 = vsel %vm1072, %v3928, 0
  %v3985 = vsel %vm1072, %v3929, 0
  %v3988 = vsel %vm1072, %v3930, 0
  %v3991 = vsel %vm1072, %v3931, 0
  %v3994 = vsel %vm1072, %v3932, 0
  %v3997 = vsel %vm1072, %v3933, 0
  %v4000 = vsel %vm1072, %v3934, 0
  %v4003 = vsel %vm1072, %v3935, 0
  %v4006 = vsel %vm1072, %v3936, 0
  %v4009 = vsel %vm1072, %v3937, 0
  %v4012 = vsel %vm1072, %v3938, 0
  %v4015 = vsel %vm1072, %v3939, 0
  %v4018 = vsel %vm1072, %v3940, 0
  %v4021 = vsel %vm1072, %v3941, 0
  %v4024 = vsel %vm1072, %v3942, 0
  %v4027 = vsel %vm1072, %v3943, 0
  %v4030 = vsel %vm1072, %v3944, 0
  %v4033 = vsel %vm1072, %v3945, 0
  %v4036 = vsel %vm1072, %v3946, 0
  %v4039 = vsel %vm1072, %v3947, 0
  %v4042 = vsel %vm1072, %v3948, 0
  %v4045 = vsel %vm1072, %v3949, 0
  %v4048 = vsel %vm1072, %v3950, 0
  %v4051 = vsel %vm1072, %v3951, 0
  %v4054 = vsel %vm1072, %v3952, 0
  %v4057 = vsel %vm1072, %v3953, 0
  %4059 = vmatprep.subr.bf16.mxu0 0
  %4060 = vmatpush1.bf16.msra.mxu0 0
  %4061 = vmatprep.subr.bf16.mxu0 0
  %4062 = vmatpush1.bf16.msra.mxu0 0
  %4063 = vmatprep.subr.bf16.mxu0 0
  %4064 = vmatpush1.bf16.msra.mxu0 0
  %4065 = vmatprep.subr.bf16.mxu0 0
  %4066 = vmatpush1.bf16.msra.mxu0 0
  %4067 = vmatprep.subr.bf16.mxu0 0
  %4068 = vmatpush1.bf16.msra.mxu0 0
  %4069 = vmatprep.subr.bf16.mxu0 0
  %4070 = vmatpush1.bf16.msra.mxu0 0
  %4071 = vmatprep.subr.bf16.mxu0 0
  %4072 = vmatpush1.bf16.msra.mxu0 0
  %4073 = vmatprep.subr.bf16.mxu0 0
  %4074 = vmatpush1.bf16.msra.mxu0 %v3961
  %4075 = vmatprep.subr.bf16.mxu0 0
  %4076 = vmatpush2.bf16.msra.mxu0 0
  %4077 = vmatprep.subr.bf16.mxu0 0
  %4078 = vmatpush2.bf16.msra.mxu0 0
  %4079 = vmatprep.subr.bf16.mxu0 0
  %4080 = vmatpush2.bf16.msra.mxu0 0
  %4081 = vmatprep.subr.bf16.mxu0 0
  %4082 = vmatpush2.bf16.msra.mxu0 0
  %4083 = vmatprep.subr.bf16.mxu0 0
  %4084 = vmatpush2.bf16.msra.mxu0 0
  %4085 = vmatprep.subr.bf16.mxu0 0
  %4086 = vmatpush2.bf16.msra.mxu0 0
  %4087 = vmatprep.subr.bf16.mxu0 0
  %4088 = vmatpush2.bf16.msra.mxu0 0
  %4089 = vmatprep.subr.bf16.mxu0 0
  %4090 = vmatpush2.bf16.msra.mxu0 0
  %4091 = vmatprep.mubr.bf16.mxu0 0
  %4092 = vmatmul.mubr.bf16.gmra.mxu0 %v3964
  %v4093 = vpop.f32.mrf.mxu0
  %v4094 = vadd.f32 0.0, %v4093
  %v4095 = vpop.f32.mrf.mxu0
  %v4096 = vpop.f32.mrf.mxu0
  %v4097 = vadd.f32 0.0, %v4096
  %v4098 = vpop.f32.mrf.mxu0
  %4099 = vmatprep.mubr.bf16.mxu0 0
  %4100 = vmatmul.mubr.bf16.gmra.mxu0 %v3967
  %v4101 = vpop.f32.mrf.mxu0
  %v4102 = vadd.f32 0.0, %v4101
  %v4103 = vpop.f32.mrf.mxu0
  %v4104 = vpop.f32.mrf.mxu0
  %v4105 = vadd.f32 0.0, %v4104
  %v4106 = vpop.f32.mrf.mxu0
  %4107 = vmatprep.mubr.bf16.mxu0 0
  %4108 = vmatmul.mubr.bf16.gmra.mxu0 %v3970
  %v4109 = vpop.f32.mrf.mxu0
  %v4110 = vadd.f32 0.0, %v4109
  %v4111 = vpop.f32.mrf.mxu0
  %v4112 = vpop.f32.mrf.mxu0
  %v4113 = vadd.f32 0.0, %v4112
  %v4114 = vpop.f32.mrf.mxu0
  %4115 = vmatprep.mubr.bf16.mxu0 0
  %4116 = vmatmul.mubr.bf16.gmra.mxu0 %v3973
  %v4117 = vpop.f32.mrf.mxu0
  %v4118 = vadd.f32 0.0, %v4117
  %v4119 = vpop.f32.mrf.mxu0
  %v4120 = vpop.f32.mrf.mxu0
  %v4121 = vadd.f32 0.0, %v4120
  %v4122 = vpop.f32.mrf.mxu0
  %4123 = vmatprep.mubr.bf16.mxu0 0
  %4124 = vmatmul.mubr.bf16.gmra.mxu0 %v3976
  %v4125 = vpop.f32.mrf.mxu0
  %v4126 = vadd.f32 0.0, %v4125
  %v4127 = vpop.f32.mrf.mxu0
  %v4128 = vpop.f32.mrf.mxu0
  %v4129 = vadd.f32 0.0, %v4128
  %v4130 = vpop.f32.mrf.mxu0
  %4131 = vmatprep.mubr.bf16.mxu0 0
  %4132 = vmatmul.mubr.bf16.gmra.mxu0 %v3979
  %v4133 = vpop.f32.mrf.mxu0
  %v4134 = vadd.f32 0.0, %v4133
  %v4135 = vpop.f32.mrf.mxu0
  %v4136 = vpop.f32.mrf.mxu0
  %v4137 = vadd.f32 0.0, %v4136
  %v4138 = vpop.f32.mrf.mxu0
  %4139 = vmatprep.mubr.bf16.mxu0 0
  %4140 = vmatmul.mubr.bf16.gmra.mxu0 %v3982
  %v4141 = vpop.f32.mrf.mxu0
  %v4142 = vadd.f32 0.0, %v4141
  %v4143 = vpop.f32.mrf.mxu0
  %v4144 = vpop.f32.mrf.mxu0
  %v4145 = vadd.f32 0.0, %v4144
  %v4146 = vpop.f32.mrf.mxu0
  %4147 = vmatprep.mubr.bf16.mxu0 0
  %4148 = vmatmul.mubr.bf16.gmra.mxu0 %v3985
  %v4149 = vpop.f32.mrf.mxu0
  %v4150 = vadd.f32 0.0, %v4149
  %v4151 = vpop.f32.mrf.mxu0
  %v4152 = vpop.f32.mrf.mxu0
  %v4153 = vadd.f32 0.0, %v4152
  %v4154 = vpop.f32.mrf.mxu0
  %4155 = vmatprep.mubr.bf16.mxu0 0
  %4156 = vmatmul.mubr.bf16.gmra.mxu0 %v3988
  %v4157 = vpop.f32.mrf.mxu0
  %v4158 = vadd.f32 0.0, %v4157
  %v4159 = vpop.f32.mrf.mxu0
  %v4160 = vpop.f32.mrf.mxu0
  %v4161 = vadd.f32 0.0, %v4160
  %v4162 = vpop.f32.mrf.mxu0
  %4163 = vmatprep.mubr.bf16.mxu0 0
  %4164 = vmatmul.mubr.bf16.gmra.mxu0 %v3991
  %v4165 = vpop.f32.mrf.mxu0
  %v4166 = vadd.f32 0.0, %v4165
  %v4167 = vpop.f32.mrf.mxu0
  %v4168 = vpop.f32.mrf.mxu0
  %v4169 = vadd.f32 0.0, %v4168
  %v4170 = vpop.f32.mrf.mxu0
  %4171 = vmatprep.mubr.bf16.mxu0 0
  %4172 = vmatmul.mubr.bf16.gmra.mxu0 %v3994
  %v4173 = vpop.f32.mrf.mxu0
  %v4174 = vadd.f32 0.0, %v4173
  %v4175 = vpop.f32.mrf.mxu0
  %v4176 = vpop.f32.mrf.mxu0
  %v4177 = vadd.f32 0.0, %v4176
  %v4178 = vpop.f32.mrf.mxu0
  %4179 = vmatprep.mubr.bf16.mxu0 0
  %4180 = vmatmul.mubr.bf16.gmra.mxu0 %v3997
  %v4181 = vpop.f32.mrf.mxu0
  %v4182 = vadd.f32 0.0, %v4181
  %v4183 = vpop.f32.mrf.mxu0
  %v4184 = vpop.f32.mrf.mxu0
  %v4185 = vadd.f32 0.0, %v4184
  %v4186 = vpop.f32.mrf.mxu0
  %4187 = vmatprep.mubr.bf16.mxu0 0
  %4188 = vmatmul.mubr.bf16.gmra.mxu0 %v4000
  %v4189 = vpop.f32.mrf.mxu0
  %v4190 = vadd.f32 0.0, %v4189
  %v4191 = vpop.f32.mrf.mxu0
  %v4192 = vpop.f32.mrf.mxu0
  %v4193 = vadd.f32 0.0, %v4192
  %v4194 = vpop.f32.mrf.mxu0
  %4195 = vmatprep.mubr.bf16.mxu0 0
  %4196 = vmatmul.mubr.bf16.gmra.mxu0 %v4003
  %v4197 = vpop.f32.mrf.mxu0
  %v4198 = vadd.f32 0.0, %v4197
  %v4199 = vpop.f32.mrf.mxu0
  %v4200 = vpop.f32.mrf.mxu0
  %v4201 = vadd.f32 0.0, %v4200
  %v4202 = vpop.f32.mrf.mxu0
  %4203 = vmatprep.mubr.bf16.mxu0 0
  %4204 = vmatmul.mubr.bf16.gmra.mxu0 %v4006
  %v4205 = vpop.f32.mrf.mxu0
  %v4206 = vadd.f32 0.0, %v4205
  %v4207 = vpop.f32.mrf.mxu0
  %v4208 = vpop.f32.mrf.mxu0
  %v4209 = vadd.f32 0.0, %v4208
  %v4210 = vpop.f32.mrf.mxu0
  %4211 = vmatprep.mubr.bf16.mxu0 0
  %4212 = vmatmul.mubr.bf16.gmra.mxu0 %v4009
  %v4213 = vpop.f32.mrf.mxu0
  %v4214 = vadd.f32 0.0, %v4213
  %v4215 = vpop.f32.mrf.mxu0
  %v4216 = vpop.f32.mrf.mxu0
  %v4217 = vadd.f32 0.0, %v4216
  %v4218 = vpop.f32.mrf.mxu0
  %4219 = vmatprep.mubr.bf16.mxu0 0
  %4220 = vmatmul.mubr.bf16.gmra.mxu0 %v4012
  %v4221 = vpop.f32.mrf.mxu0
  %v4222 = vadd.f32 0.0, %v4221
  %v4223 = vpop.f32.mrf.mxu0
  %v4224 = vpop.f32.mrf.mxu0
  %v4225 = vadd.f32 0.0, %v4224
  %v4226 = vpop.f32.mrf.mxu0
  %4227 = vmatprep.mubr.bf16.mxu0 0
  %4228 = vmatmul.mubr.bf16.gmra.mxu0 %v4015
  %v4229 = vpop.f32.mrf.mxu0
  %v4230 = vadd.f32 0.0, %v4229
  %v4231 = vpop.f32.mrf.mxu0
  %v4232 = vpop.f32.mrf.mxu0
  %v4233 = vadd.f32 0.0, %v4232
  %v4234 = vpop.f32.mrf.mxu0
  %4235 = vmatprep.mubr.bf16.mxu0 0
  %4236 = vmatmul.mubr.bf16.gmra.mxu0 %v4018
  %v4237 = vpop.f32.mrf.mxu0
  %v4238 = vadd.f32 0.0, %v4237
  %v4239 = vpop.f32.mrf.mxu0
  %v4240 = vpop.f32.mrf.mxu0
  %v4241 = vadd.f32 0.0, %v4240
  %v4242 = vpop.f32.mrf.mxu0
  %4243 = vmatprep.mubr.bf16.mxu0 0
  %4244 = vmatmul.mubr.bf16.gmra.mxu0 %v4021
  %v4245 = vpop.f32.mrf.mxu0
  %v4246 = vadd.f32 0.0, %v4245
  %v4247 = vpop.f32.mrf.mxu0
  %v4248 = vpop.f32.mrf.mxu0
  %v4249 = vadd.f32 0.0, %v4248
  %v4250 = vpop.f32.mrf.mxu0
  %4251 = vmatprep.mubr.bf16.mxu0 0
  %4252 = vmatmul.mubr.bf16.gmra.mxu0 %v4024
  %v4253 = vpop.f32.mrf.mxu0
  %v4254 = vadd.f32 0.0, %v4253
  %v4255 = vpop.f32.mrf.mxu0
  %v4256 = vpop.f32.mrf.mxu0
  %v4257 = vadd.f32 0.0, %v4256
  %v4258 = vpop.f32.mrf.mxu0
  %4259 = vmatprep.mubr.bf16.mxu0 0
  %4260 = vmatmul.mubr.bf16.gmra.mxu0 %v4027
  %v4261 = vpop.f32.mrf.mxu0
  %v4262 = vadd.f32 0.0, %v4261
  %v4263 = vpop.f32.mrf.mxu0
  %v4264 = vpop.f32.mrf.mxu0
  %v4265 = vadd.f32 0.0, %v4264
  %v4266 = vpop.f32.mrf.mxu0
  %4267 = vmatprep.mubr.bf16.mxu0 0
  %4268 = vmatmul.mubr.bf16.gmra.mxu0 %v4030
  %v4269 = vpop.f32.mrf.mxu0
  %v4270 = vadd.f32 0.0, %v4269
  %v4271 = vpop.f32.mrf.mxu0
  %v4272 = vpop.f32.mrf.mxu0
  %v4273 = vadd.f32 0.0, %v4272
  %v4274 = vpop.f32.mrf.mxu0
  %4275 = vmatprep.mubr.bf16.mxu0 0
  %4276 = vmatmul.mubr.bf16.gmra.mxu0 %v4033
  %v4277 = vpop.f32.mrf.mxu0
  %v4278 = vadd.f32 0.0, %v4277
  %v4279 = vpop.f32.mrf.mxu0
  %v4280 = vpop.f32.mrf.mxu0
  %v4281 = vadd.f32 0.0, %v4280
  %v4282 = vpop.f32.mrf.mxu0
  %4283 = vmatprep.mubr.bf16.mxu0 0
  %4284 = vmatmul.mubr.bf16.gmra.mxu0 %v4036
  %v4285 = vpop.f32.mrf.mxu0
  %v4286 = vadd.f32 0.0, %v4285
  %v4287 = vpop.f32.mrf.mxu0
  %v4288 = vpop.f32.mrf.mxu0
  %v4289 = vadd.f32 0.0, %v4288
  %v4290 = vpop.f32.mrf.mxu0
  %4291 = vmatprep.mubr.bf16.mxu0 0
  %4292 = vmatmul.mubr.bf16.gmra.mxu0 %v4039
  %v4293 = vpop.f32.mrf.mxu0
  %v4294 = vadd.f32 0.0, %v4293
  %v4295 = vpop.f32.mrf.mxu0
  %v4296 = vpop.f32.mrf.mxu0
  %v4297 = vadd.f32 0.0, %v4296
  %v4298 = vpop.f32.mrf.mxu0
  %4299 = vmatprep.mubr.bf16.mxu0 0
  %4300 = vmatmul.mubr.bf16.gmra.mxu0 %v4042
  %v4301 = vpop.f32.mrf.mxu0
  %v4302 = vadd.f32 0.0, %v4301
  %v4303 = vpop.f32.mrf.mxu0
  %v4304 = vpop.f32.mrf.mxu0
  %v4305 = vadd.f32 0.0, %v4304
  %v4306 = vpop.f32.mrf.mxu0
  %4307 = vmatprep.mubr.bf16.mxu0 0
  %4308 = vmatmul.mubr.bf16.gmra.mxu0 %v4045
  %v4309 = vpop.f32.mrf.mxu0
  %v4310 = vadd.f32 0.0, %v4309
  %v4311 = vpop.f32.mrf.mxu0
  %v4312 = vpop.f32.mrf.mxu0
  %v4313 = vadd.f32 0.0, %v4312
  %v4314 = vpop.f32.mrf.mxu0
  %4315 = vmatprep.mubr.bf16.mxu0 0
  %4316 = vmatmul.mubr.bf16.gmra.mxu0 %v4048
  %v4317 = vpop.f32.mrf.mxu0
  %v4318 = vadd.f32 0.0, %v4317
  %v4319 = vpop.f32.mrf.mxu0
  %v4320 = vpop.f32.mrf.mxu0
  %v4321 = vadd.f32 0.0, %v4320
  %v4322 = vpop.f32.mrf.mxu0
  %4323 = vmatprep.mubr.bf16.mxu0 0
  %4324 = vmatmul.mubr.bf16.gmra.mxu0 %v4051
  %v4325 = vpop.f32.mrf.mxu0
  %v4326 = vadd.f32 0.0, %v4325
  %v4327 = vpop.f32.mrf.mxu0
  %v4328 = vpop.f32.mrf.mxu0
  %v4329 = vadd.f32 0.0, %v4328
  %v4330 = vpop.f32.mrf.mxu0
  %4331 = vmatprep.mubr.bf16.mxu0 0
  %4332 = vmatmul.mubr.bf16.gmra.mxu0 %v4054
  %v4333 = vpop.f32.mrf.mxu0
  %v4334 = vadd.f32 0.0, %v4333
  %v4335 = vpop.f32.mrf.mxu0
  %v4336 = vpop.f32.mrf.mxu0
  %v4337 = vadd.f32 0.0, %v4336
  %v4338 = vpop.f32.mrf.mxu0
  %4339 = vmatprep.mubr.bf16.mxu0 0
  %4340 = vmatmul.mubr.bf16.gmra.mxu0 %v4057
  %v4341 = vpop.f32.mrf.mxu0
  %v4342 = vadd.f32 0.0, %v4341
  %v4343 = vpop.f32.mrf.mxu0
  %v4344 = vpop.f32.mrf.mxu0
  %v4345 = vadd.f32 0.0, %v4344
  %v4346 = vpop.f32.mrf.mxu0
  %4347 = vdwg.mxu0
  %v4348 = vadd.f32 %v3794, %v4094
  %v4349 = vadd.f32 %v3795, %v4097
  %v4350 = vadd.f32 %v3796, %v4102
  %v4351 = vadd.f32 %v3797, %v4105
  %v4352 = vadd.f32 %v3798, %v4110
  %v4353 = vadd.f32 %v3799, %v4113
  %v4354 = vadd.f32 %v3800, %v4118
  %v4355 = vadd.f32 %v3801, %v4121
  %v4356 = vadd.f32 %v3802, %v4126
  %v4357 = vadd.f32 %v3803, %v4129
  %v4358 = vadd.f32 %v3804, %v4134
  %v4359 = vadd.f32 %v3805, %v4137
  %v4360 = vadd.f32 %v3806, %v4142
  %v4361 = vadd.f32 %v3807, %v4145
  %v4362 = vadd.f32 %v3808, %v4150
  %v4363 = vadd.f32 %v3809, %v4153
  %v4364 = vadd.f32 %v3810, %v4158
  %v4365 = vadd.f32 %v3811, %v4161
  %v4366 = vadd.f32 %v3812, %v4166
  %v4367 = vadd.f32 %v3813, %v4169
  %v4368 = vadd.f32 %v3814, %v4174
  %v4369 = vadd.f32 %v3815, %v4177
  %v4370 = vadd.f32 %v3816, %v4182
  %v4371 = vadd.f32 %v3817, %v4185
  %v4372 = vadd.f32 %v3818, %v4190
  %v4373 = vadd.f32 %v3819, %v4193
  %v4374 = vadd.f32 %v3820, %v4198
  %v4375 = vadd.f32 %v3821, %v4201
  %v4376 = vadd.f32 %v3822, %v4206
  %v4377 = vadd.f32 %v3823, %v4209
  %v4378 = vadd.f32 %v3824, %v4214
  %v4379 = vadd.f32 %v3825, %v4217
  %v4380 = vadd.f32 %v3826, %v4222
  %v4381 = vadd.f32 %v3827, %v4225
  %v4382 = vadd.f32 %v3828, %v4230
  %v4383 = vadd.f32 %v3829, %v4233
  %v4384 = vadd.f32 %v3830, %v4238
  %v4385 = vadd.f32 %v3831, %v4241
  %v4386 = vadd.f32 %v3832, %v4246
  %v4387 = vadd.f32 %v3833, %v4249
  %v4388 = vadd.f32 %v3834, %v4254
  %v4389 = vadd.f32 %v3835, %v4257
  %v4390 = vadd.f32 %v3836, %v4262
  %v4391 = vadd.f32 %v3837, %v4265
  %v4392 = vadd.f32 %v3838, %v4270
  %v4393 = vadd.f32 %v3839, %v4273
  %v4394 = vadd.f32 %v3840, %v4278
  %v4395 = vadd.f32 %v3841, %v4281
  %v4396 = vadd.f32 %v3842, %v4286
  %v4397 = vadd.f32 %v3843, %v4289
  %v4398 = vadd.f32 %v3844, %v4294
  %v4399 = vadd.f32 %v3845, %v4297
  %v4400 = vadd.f32 %v3846, %v4302
  %v4401 = vadd.f32 %v3847, %v4305
  %v4402 = vadd.f32 %v3848, %v4310
  %v4403 = vadd.f32 %v3849, %v4313
  %v4404 = vadd.f32 %v3850, %v4318
  %v4405 = vadd.f32 %v3851, %v4321
  %v4406 = vadd.f32 %v3852, %v4326
  %v4407 = vadd.f32 %v3853, %v4329
  %v4408 = vadd.f32 %v3854, %v4334
  %v4409 = vadd.f32 %v3855, %v4337
  %v4410 = vadd.f32 %v3856, %v4342
  %v4411 = vadd.f32 %v3857, %v4345
  %v4412 = vld [vmem:[%s1619 + $0x2] sm:$0xff]
  %v4413 = vld [vmem:[%s1619 + $0xa] sm:$0xff]
  %v4414 = vld [vmem:[%s1619 + $0x1a] sm:$0xff]
  %v4415 = vld [vmem:[%s1619 + $0x22] sm:$0xff]
  %v4416 = vld [vmem:[%s1619 + $0x32] sm:$0xff]
  %v4417 = vld [vmem:[%s1619 + $0x3a] sm:$0xff]
  %v4418 = vld [vmem:[%s1619 + $0x4a] sm:$0xff]
  %v4419 = vld [vmem:[%s1619 + $0x52] sm:$0xff]
  %v4420 = vld [vmem:[%s1619 + $0x62] sm:$0xff]
  %v4421 = vld [vmem:[%s1619 + $0x6a] sm:$0xff]
  %v4422 = vld [vmem:[%s1619 + $0x7a] sm:$0xff]
  %v4423 = vld [vmem:[%s1619 + $0x82] sm:$0xff]
  %v4424 = vld [vmem:[%s1619 + $0x92] sm:$0xff]
  %v4425 = vld [vmem:[%s1619 + $0x9a] sm:$0xff]
  %v4426 = vld [vmem:[%s1619 + $0xaa] sm:$0xff]
  %v4427 = vld [vmem:[%s1619 + $0xb2] sm:$0xff]
  %v4428 = vld [vmem:[%s1619 + $0xc2] sm:$0xff]
  %v4429 = vld [vmem:[%s1619 + $0xca] sm:$0xff]
  %v4430 = vld [vmem:[%s1619 + $0xda] sm:$0xff]
  %v4431 = vld [vmem:[%s1619 + $0xe2] sm:$0xff]
  %v4432 = vld [vmem:[%s1619 + $0xf2] sm:$0xff]
  %v4433 = vld [vmem:[%s1619 + $0xfa] sm:$0xff]
  %v4434 = vld [vmem:[%s1619 + $0x10a] sm:$0xff]
  %v4435 = vld [vmem:[%s1619 + $0x112] sm:$0xff]
  %v4436 = vld [vmem:[%s1619 + $0x122] sm:$0xff]
  %v4437 = vld [vmem:[%s1619 + $0x12a] sm:$0xff]
  %v4438 = vld [vmem:[%s1619 + $0x13a] sm:$0xff]
  %v4439 = vld [vmem:[%s1619 + $0x142] sm:$0xff]
  %v4440 = vld [vmem:[%s1619 + $0x152] sm:$0xff]
  %v4441 = vld [vmem:[%s1619 + $0x15a] sm:$0xff]
  %v4442 = vld [vmem:[%s1619 + $0x16a] sm:$0xff]
  %v4443 = vld [vmem:[%s1619 + $0x172] sm:$0xff]
  %v4444 = vld [vmem:[%s1619 + $0x1b2] sm:$0xff]
  %v4445 = vld [vmem:[%s1619 + $0x1ba] sm:$0xff]
  %v4446 = vld [vmem:[%s1619 + $0x1ca] sm:$0xff]
  %v4447 = vld [vmem:[%s1619 + $0x1d2] sm:$0xff]
  %v4448 = vld [vmem:[%s1619 + $0x1e2] sm:$0xff]
  %v4449 = vld [vmem:[%s1619 + $0x1ea] sm:$0xff]
  %v4450 = vld [vmem:[%s1619 + $0x1fa] sm:$0xff]
  %v4451 = vld [vmem:[%s1619 + $0x202] sm:$0xff]
  %v4452 = vld [vmem:[%s1619 + $0x212] sm:$0xff]
  %v4453 = vld [vmem:[%s1619 + $0x21a] sm:$0xff]
  %v4454 = vld [vmem:[%s1619 + $0x22a] sm:$0xff]
  %v4455 = vld [vmem:[%s1619 + $0x232] sm:$0xff]
  %v4456 = vld [vmem:[%s1619 + $0x242] sm:$0xff]
  %v4457 = vld [vmem:[%s1619 + $0x24a] sm:$0xff]
  %v4458 = vld [vmem:[%s1619 + $0x25a] sm:$0xff]
  %v4459 = vld [vmem:[%s1619 + $0x262] sm:$0xff]
  %v4460 = vld [vmem:[%s1619 + $0x272] sm:$0xff]
  %v4461 = vld [vmem:[%s1619 + $0x27a] sm:$0xff]
  %v4462 = vld [vmem:[%s1619 + $0x28a] sm:$0xff]
  %v4463 = vld [vmem:[%s1619 + $0x292] sm:$0xff]
  %v4464 = vld [vmem:[%s1619 + $0x2a2] sm:$0xff]
  %v4465 = vld [vmem:[%s1619 + $0x2aa] sm:$0xff]
  %v4466 = vld [vmem:[%s1619 + $0x2ba] sm:$0xff]
  %v4467 = vld [vmem:[%s1619 + $0x2c2] sm:$0xff]
  %v4468 = vld [vmem:[%s1619 + $0x2d2] sm:$0xff]
  %v4469 = vld [vmem:[%s1619 + $0x2da] sm:$0xff]
  %v4470 = vld [vmem:[%s1619 + $0x2ea] sm:$0xff]
  %v4471 = vld [vmem:[%s1619 + $0x2f2] sm:$0xff]
  %v4472 = vld [vmem:[%s1619 + $0x302] sm:$0xff]
  %v4473 = vld [vmem:[%s1619 + $0x30a] sm:$0xff]
  %v4474 = vld [vmem:[%s1619 + $0x31a] sm:$0xff]
  %v4475 = vld [vmem:[%s1619 + $0x322] sm:$0xff]
  %v4476 = vpack.c.bf16 %v4413, %v4412
  %v4477 = vpack.c.bf16 %v4415, %v4414
  %v4478 = vpack.c.bf16 %v4417, %v4416
  %v4479 = vpack.c.bf16 %v4419, %v4418
  %v4480 = vpack.c.bf16 %v4421, %v4420
  %v4481 = vpack.c.bf16 %v4423, %v4422
  %v4482 = vpack.c.bf16 %v4425, %v4424
  %v4483 = vpack.c.bf16 %v4427, %v4426
  %v4484 = vpack.c.bf16 %v4429, %v4428
  %v4485 = vpack.c.bf16 %v4431, %v4430
  %v4486 = vpack.c.bf16 %v4433, %v4432
  %v4487 = vpack.c.bf16 %v4435, %v4434
  %v4488 = vpack.c.bf16 %v4437, %v4436
  %v4489 = vpack.c.bf16 %v4439, %v4438
  %v4490 = vpack.c.bf16 %v4441, %v4440
  %v4491 = vpack.c.bf16 %v4443, %v4442
  %v4492 = vpack.c.bf16 %v4445, %v4444
  %v4493 = vpack.c.bf16 %v4447, %v4446
  %v4494 = vpack.c.bf16 %v4449, %v4448
  %v4495 = vpack.c.bf16 %v4451, %v4450
  %v4496 = vpack.c.bf16 %v4453, %v4452
  %v4497 = vpack.c.bf16 %v4455, %v4454
  %v4498 = vpack.c.bf16 %v4457, %v4456
  %v4499 = vpack.c.bf16 %v4459, %v4458
  %v4500 = vpack.c.bf16 %v4461, %v4460
  %v4501 = vpack.c.bf16 %v4463, %v4462
  %v4502 = vpack.c.bf16 %v4465, %v4464
  %v4503 = vpack.c.bf16 %v4467, %v4466
  %v4504 = vpack.c.bf16 %v4469, %v4468
  %v4505 = vpack.c.bf16 %v4471, %v4470
  %v4506 = vpack.c.bf16 %v4473, %v4472
  %v4507 = vpack.c.bf16 %v4475, %v4474
  %s4508 = scalar_lea.vmem %s8, 40
  %v4509 = vld [vmem:[%s4508] sm:$0xf]
  %v4510 = vld [vmem:[%s4508 + $0x4] sm:$0xf]
  %v4513 = vunpack.c.l.b16 %v4509
  %v4514 = vunpack.c.l.b16 %v4510
  %v4515 = vpack.c.b16 %v4514, %v4513
  %v4518 = vsel %vm1072, %v4476, 0
  %v4521 = vsel %vm1072, %v4477, 0
  %v4524 = vsel %vm1072, %v4478, 0
  %v4527 = vsel %vm1072, %v4479, 0
  %v4530 = vsel %vm1072, %v4480, 0
  %v4533 = vsel %vm1072, %v4481, 0
  %v4536 = vsel %vm1072, %v4482, 0
  %v4539 = vsel %vm1072, %v4483, 0
  %v4542 = vsel %vm1072, %v4484, 0
  %v4545 = vsel %vm1072, %v4485, 0
  %v4548 = vsel %vm1072, %v4486, 0
  %v4551 = vsel %vm1072, %v4487, 0
  %v4554 = vsel %vm1072, %v4488, 0
  %v4557 = vsel %vm1072, %v4489, 0
  %v4560 = vsel %vm1072, %v4490, 0
  %v4563 = vsel %vm1072, %v4491, 0
  %v4566 = vsel %vm1072, %v4492, 0
  %v4569 = vsel %vm1072, %v4493, 0
  %v4572 = vsel %vm1072, %v4494, 0
  %v4575 = vsel %vm1072, %v4495, 0
  %v4578 = vsel %vm1072, %v4496, 0
  %v4581 = vsel %vm1072, %v4497, 0
  %v4584 = vsel %vm1072, %v4498, 0
  %v4587 = vsel %vm1072, %v4499, 0
  %v4590 = vsel %vm1072, %v4500, 0
  %v4593 = vsel %vm1072, %v4501, 0
  %v4596 = vsel %vm1072, %v4502, 0
  %v4599 = vsel %vm1072, %v4503, 0
  %v4602 = vsel %vm1072, %v4504, 0
  %v4605 = vsel %vm1072, %v4505, 0
  %v4608 = vsel %vm1072, %v4506, 0
  %v4611 = vsel %vm1072, %v4507, 0
  %4613 = vmatprep.subr.bf16.mxu0 0
  %4614 = vmatpush1.bf16.msra.mxu0 0
  %4615 = vmatprep.subr.bf16.mxu0 0
  %4616 = vmatpush1.bf16.msra.mxu0 0
  %4617 = vmatprep.subr.bf16.mxu0 0
  %4618 = vmatpush1.bf16.msra.mxu0 0
  %4619 = vmatprep.subr.bf16.mxu0 0
  %4620 = vmatpush1.bf16.msra.mxu0 0
  %4621 = vmatprep.subr.bf16.mxu0 0
  %4622 = vmatpush1.bf16.msra.mxu0 0
  %4623 = vmatprep.subr.bf16.mxu0 0
  %4624 = vmatpush1.bf16.msra.mxu0 0
  %4625 = vmatprep.subr.bf16.mxu0 0
  %4626 = vmatpush1.bf16.msra.mxu0 0
  %4627 = vmatprep.subr.bf16.mxu0 0
  %4628 = vmatpush1.bf16.msra.mxu0 %v4515
  %4629 = vmatprep.subr.bf16.mxu0 0
  %4630 = vmatpush2.bf16.msra.mxu0 0
  %4631 = vmatprep.subr.bf16.mxu0 0
  %4632 = vmatpush2.bf16.msra.mxu0 0
  %4633 = vmatprep.subr.bf16.mxu0 0
  %4634 = vmatpush2.bf16.msra.mxu0 0
  %4635 = vmatprep.subr.bf16.mxu0 0
  %4636 = vmatpush2.bf16.msra.mxu0 0
  %4637 = vmatprep.subr.bf16.mxu0 0
  %4638 = vmatpush2.bf16.msra.mxu0 0
  %4639 = vmatprep.subr.bf16.mxu0 0
  %4640 = vmatpush2.bf16.msra.mxu0 0
  %4641 = vmatprep.subr.bf16.mxu0 0
  %4642 = vmatpush2.bf16.msra.mxu0 0
  %4643 = vmatprep.subr.bf16.mxu0 0
  %4644 = vmatpush2.bf16.msra.mxu0 0
  %4645 = vmatprep.mubr.bf16.mxu0 0
  %4646 = vmatmul.mubr.bf16.gmra.mxu0 %v4518
  %v4647 = vpop.f32.mrf.mxu0
  %v4648 = vadd.f32 0.0, %v4647
  %v4649 = vpop.f32.mrf.mxu0
  %v4650 = vpop.f32.mrf.mxu0
  %v4651 = vadd.f32 0.0, %v4650
  %v4652 = vpop.f32.mrf.mxu0
  %4653 = vmatprep.mubr.bf16.mxu0 0
  %4654 = vmatmul.mubr.bf16.gmra.mxu0 %v4521
  %v4655 = vpop.f32.mrf.mxu0
  %v4656 = vadd.f32 0.0, %v4655
  %v4657 = vpop.f32.mrf.mxu0
  %v4658 = vpop.f32.mrf.mxu0
  %v4659 = vadd.f32 0.0, %v4658
  %v4660 = vpop.f32.mrf.mxu0
  %4661 = vmatprep.mubr.bf16.mxu0 0
  %4662 = vmatmul.mubr.bf16.gmra.mxu0 %v4524
  %v4663 = vpop.f32.mrf.mxu0
  %v4664 = vadd.f32 0.0, %v4663
  %v4665 = vpop.f32.mrf.mxu0
  %v4666 = vpop.f32.mrf.mxu0
  %v4667 = vadd.f32 0.0, %v4666
  %v4668 = vpop.f32.mrf.mxu0
  %4669 = vmatprep.mubr.bf16.mxu0 0
  %4670 = vmatmul.mubr.bf16.gmra.mxu0 %v4527
  %v4671 = vpop.f32.mrf.mxu0
  %v4672 = vadd.f32 0.0, %v4671
  %v4673 = vpop.f32.mrf.mxu0
  %v4674 = vpop.f32.mrf.mxu0
  %v4675 = vadd.f32 0.0, %v4674
  %v4676 = vpop.f32.mrf.mxu0
  %4677 = vmatprep.mubr.bf16.mxu0 0
  %4678 = vmatmul.mubr.bf16.gmra.mxu0 %v4530
  %v4679 = vpop.f32.mrf.mxu0
  %v4680 = vadd.f32 0.0, %v4679
  %v4681 = vpop.f32.mrf.mxu0
  %v4682 = vpop.f32.mrf.mxu0
  %v4683 = vadd.f32 0.0, %v4682
  %v4684 = vpop.f32.mrf.mxu0
  %4685 = vmatprep.mubr.bf16.mxu0 0
  %4686 = vmatmul.mubr.bf16.gmra.mxu0 %v4533
  %v4687 = vpop.f32.mrf.mxu0
  %v4688 = vadd.f32 0.0, %v4687
  %v4689 = vpop.f32.mrf.mxu0
  %v4690 = vpop.f32.mrf.mxu0
  %v4691 = vadd.f32 0.0, %v4690
  %v4692 = vpop.f32.mrf.mxu0
  %4693 = vmatprep.mubr.bf16.mxu0 0
  %4694 = vmatmul.mubr.bf16.gmra.mxu0 %v4536
  %v4695 = vpop.f32.mrf.mxu0
  %v4696 = vadd.f32 0.0, %v4695
  %v4697 = vpop.f32.mrf.mxu0
  %v4698 = vpop.f32.mrf.mxu0
  %v4699 = vadd.f32 0.0, %v4698
  %v4700 = vpop.f32.mrf.mxu0
  %4701 = vmatprep.mubr.bf16.mxu0 0
  %4702 = vmatmul.mubr.bf16.gmra.mxu0 %v4539
  %v4703 = vpop.f32.mrf.mxu0
  %v4704 = vadd.f32 0.0, %v4703
  %v4705 = vpop.f32.mrf.mxu0
  %v4706 = vpop.f32.mrf.mxu0
  %v4707 = vadd.f32 0.0, %v4706
  %v4708 = vpop.f32.mrf.mxu0
  %4709 = vmatprep.mubr.bf16.mxu0 0
  %4710 = vmatmul.mubr.bf16.gmra.mxu0 %v4542
  %v4711 = vpop.f32.mrf.mxu0
  %v4712 = vadd.f32 0.0, %v4711
  %v4713 = vpop.f32.mrf.mxu0
  %v4714 = vpop.f32.mrf.mxu0
  %v4715 = vadd.f32 0.0, %v4714
  %v4716 = vpop.f32.mrf.mxu0
  %4717 = vmatprep.mubr.bf16.mxu0 0
  %4718 = vmatmul.mubr.bf16.gmra.mxu0 %v4545
  %v4719 = vpop.f32.mrf.mxu0
  %v4720 = vadd.f32 0.0, %v4719
  %v4721 = vpop.f32.mrf.mxu0
  %v4722 = vpop.f32.mrf.mxu0
  %v4723 = vadd.f32 0.0, %v4722
  %v4724 = vpop.f32.mrf.mxu0
  %4725 = vmatprep.mubr.bf16.mxu0 0
  %4726 = vmatmul.mubr.bf16.gmra.mxu0 %v4548
  %v4727 = vpop.f32.mrf.mxu0
  %v4728 = vadd.f32 0.0, %v4727
  %v4729 = vpop.f32.mrf.mxu0
  %v4730 = vpop.f32.mrf.mxu0
  %v4731 = vadd.f32 0.0, %v4730
  %v4732 = vpop.f32.mrf.mxu0
  %4733 = vmatprep.mubr.bf16.mxu0 0
  %4734 = vmatmul.mubr.bf16.gmra.mxu0 %v4551
  %v4735 = vpop.f32.mrf.mxu0
  %v4736 = vadd.f32 0.0, %v4735
  %v4737 = vpop.f32.mrf.mxu0
  %v4738 = vpop.f32.mrf.mxu0
  %v4739 = vadd.f32 0.0, %v4738
  %v4740 = vpop.f32.mrf.mxu0
  %4741 = vmatprep.mubr.bf16.mxu0 0
  %4742 = vmatmul.mubr.bf16.gmra.mxu0 %v4554
  %v4743 = vpop.f32.mrf.mxu0
  %v4744 = vadd.f32 0.0, %v4743
  %v4745 = vpop.f32.mrf.mxu0
  %v4746 = vpop.f32.mrf.mxu0
  %v4747 = vadd.f32 0.0, %v4746
  %v4748 = vpop.f32.mrf.mxu0
  %4749 = vmatprep.mubr.bf16.mxu0 0
  %4750 = vmatmul.mubr.bf16.gmra.mxu0 %v4557
  %v4751 = vpop.f32.mrf.mxu0
  %v4752 = vadd.f32 0.0, %v4751
  %v4753 = vpop.f32.mrf.mxu0
  %v4754 = vpop.f32.mrf.mxu0
  %v4755 = vadd.f32 0.0, %v4754
  %v4756 = vpop.f32.mrf.mxu0
  %4757 = vmatprep.mubr.bf16.mxu0 0
  %4758 = vmatmul.mubr.bf16.gmra.mxu0 %v4560
  %v4759 = vpop.f32.mrf.mxu0
  %v4760 = vadd.f32 0.0, %v4759
  %v4761 = vpop.f32.mrf.mxu0
  %v4762 = vpop.f32.mrf.mxu0
  %v4763 = vadd.f32 0.0, %v4762
  %v4764 = vpop.f32.mrf.mxu0
  %4765 = vmatprep.mubr.bf16.mxu0 0
  %4766 = vmatmul.mubr.bf16.gmra.mxu0 %v4563
  %v4767 = vpop.f32.mrf.mxu0
  %v4768 = vadd.f32 0.0, %v4767
  %v4769 = vpop.f32.mrf.mxu0
  %v4770 = vpop.f32.mrf.mxu0
  %v4771 = vadd.f32 0.0, %v4770
  %v4772 = vpop.f32.mrf.mxu0
  %4773 = vmatprep.mubr.bf16.mxu0 0
  %4774 = vmatmul.mubr.bf16.gmra.mxu0 %v4566
  %v4775 = vpop.f32.mrf.mxu0
  %v4776 = vadd.f32 0.0, %v4775
  %v4777 = vpop.f32.mrf.mxu0
  %v4778 = vpop.f32.mrf.mxu0
  %v4779 = vadd.f32 0.0, %v4778
  %v4780 = vpop.f32.mrf.mxu0
  %4781 = vmatprep.mubr.bf16.mxu0 0
  %4782 = vmatmul.mubr.bf16.gmra.mxu0 %v4569
  %v4783 = vpop.f32.mrf.mxu0
  %v4784 = vadd.f32 0.0, %v4783
  %v4785 = vpop.f32.mrf.mxu0
  %v4786 = vpop.f32.mrf.mxu0
  %v4787 = vadd.f32 0.0, %v4786
  %v4788 = vpop.f32.mrf.mxu0
  %4789 = vmatprep.mubr.bf16.mxu0 0
  %4790 = vmatmul.mubr.bf16.gmra.mxu0 %v4572
  %v4791 = vpop.f32.mrf.mxu0
  %v4792 = vadd.f32 0.0, %v4791
  %v4793 = vpop.f32.mrf.mxu0
  %v4794 = vpop.f32.mrf.mxu0
  %v4795 = vadd.f32 0.0, %v4794
  %v4796 = vpop.f32.mrf.mxu0
  %4797 = vmatprep.mubr.bf16.mxu0 0
  %4798 = vmatmul.mubr.bf16.gmra.mxu0 %v4575
  %v4799 = vpop.f32.mrf.mxu0
  %v4800 = vadd.f32 0.0, %v4799
  %v4801 = vpop.f32.mrf.mxu0
  %v4802 = vpop.f32.mrf.mxu0
  %v4803 = vadd.f32 0.0, %v4802
  %v4804 = vpop.f32.mrf.mxu0
  %4805 = vmatprep.mubr.bf16.mxu0 0
  %4806 = vmatmul.mubr.bf16.gmra.mxu0 %v4578
  %v4807 = vpop.f32.mrf.mxu0
  %v4808 = vadd.f32 0.0, %v4807
  %v4809 = vpop.f32.mrf.mxu0
  %v4810 = vpop.f32.mrf.mxu0
  %v4811 = vadd.f32 0.0, %v4810
  %v4812 = vpop.f32.mrf.mxu0
  %4813 = vmatprep.mubr.bf16.mxu0 0
  %4814 = vmatmul.mubr.bf16.gmra.mxu0 %v4581
  %v4815 = vpop.f32.mrf.mxu0
  %v4816 = vadd.f32 0.0, %v4815
  %v4817 = vpop.f32.mrf.mxu0
  %v4818 = vpop.f32.mrf.mxu0
  %v4819 = vadd.f32 0.0, %v4818
  %v4820 = vpop.f32.mrf.mxu0
  %4821 = vmatprep.mubr.bf16.mxu0 0
  %4822 = vmatmul.mubr.bf16.gmra.mxu0 %v4584
  %v4823 = vpop.f32.mrf.mxu0
  %v4824 = vadd.f32 0.0, %v4823
  %v4825 = vpop.f32.mrf.mxu0
  %v4826 = vpop.f32.mrf.mxu0
  %v4827 = vadd.f32 0.0, %v4826
  %v4828 = vpop.f32.mrf.mxu0
  %4829 = vmatprep.mubr.bf16.mxu0 0
  %4830 = vmatmul.mubr.bf16.gmra.mxu0 %v4587
  %v4831 = vpop.f32.mrf.mxu0
  %v4832 = vadd.f32 0.0, %v4831
  %v4833 = vpop.f32.mrf.mxu0
  %v4834 = vpop.f32.mrf.mxu0
  %v4835 = vadd.f32 0.0, %v4834
  %v4836 = vpop.f32.mrf.mxu0
  %4837 = vmatprep.mubr.bf16.mxu0 0
  %4838 = vmatmul.mubr.bf16.gmra.mxu0 %v4590
  %v4839 = vpop.f32.mrf.mxu0
  %v4840 = vadd.f32 0.0, %v4839
  %v4841 = vpop.f32.mrf.mxu0
  %v4842 = vpop.f32.mrf.mxu0
  %v4843 = vadd.f32 0.0, %v4842
  %v4844 = vpop.f32.mrf.mxu0
  %4845 = vmatprep.mubr.bf16.mxu0 0
  %4846 = vmatmul.mubr.bf16.gmra.mxu0 %v4593
  %v4847 = vpop.f32.mrf.mxu0
  %v4848 = vadd.f32 0.0, %v4847
  %v4849 = vpop.f32.mrf.mxu0
  %v4850 = vpop.f32.mrf.mxu0
  %v4851 = vadd.f32 0.0, %v4850
  %v4852 = vpop.f32.mrf.mxu0
  %4853 = vmatprep.mubr.bf16.mxu0 0
  %4854 = vmatmul.mubr.bf16.gmra.mxu0 %v4596
  %v4855 = vpop.f32.mrf.mxu0
  %v4856 = vadd.f32 0.0, %v4855
  %v4857 = vpop.f32.mrf.mxu0
  %v4858 = vpop.f32.mrf.mxu0
  %v4859 = vadd.f32 0.0, %v4858
  %v4860 = vpop.f32.mrf.mxu0
  %4861 = vmatprep.mubr.bf16.mxu0 0
  %4862 = vmatmul.mubr.bf16.gmra.mxu0 %v4599
  %v4863 = vpop.f32.mrf.mxu0
  %v4864 = vadd.f32 0.0, %v4863
  %v4865 = vpop.f32.mrf.mxu0
  %v4866 = vpop.f32.mrf.mxu0
  %v4867 = vadd.f32 0.0, %v4866
  %v4868 = vpop.f32.mrf.mxu0
  %4869 = vmatprep.mubr.bf16.mxu0 0
  %4870 = vmatmul.mubr.bf16.gmra.mxu0 %v4602
  %v4871 = vpop.f32.mrf.mxu0
  %v4872 = vadd.f32 0.0, %v4871
  %v4873 = vpop.f32.mrf.mxu0
  %v4874 = vpop.f32.mrf.mxu0
  %v4875 = vadd.f32 0.0, %v4874
  %v4876 = vpop.f32.mrf.mxu0
  %4877 = vmatprep.mubr.bf16.mxu0 0
  %4878 = vmatmul.mubr.bf16.gmra.mxu0 %v4605
  %v4879 = vpop.f32.mrf.mxu0
  %v4880 = vadd.f32 0.0, %v4879
  %v4881 = vpop.f32.mrf.mxu0
  %v4882 = vpop.f32.mrf.mxu0
  %v4883 = vadd.f32 0.0, %v4882
  %v4884 = vpop.f32.mrf.mxu0
  %4885 = vmatprep.mubr.bf16.mxu0 0
  %4886 = vmatmul.mubr.bf16.gmra.mxu0 %v4608
  %v4887 = vpop.f32.mrf.mxu0
  %v4888 = vadd.f32 0.0, %v4887
  %v4889 = vpop.f32.mrf.mxu0
  %v4890 = vpop.f32.mrf.mxu0
  %v4891 = vadd.f32 0.0, %v4890
  %v4892 = vpop.f32.mrf.mxu0
  %4893 = vmatprep.mubr.bf16.mxu0 0
  %4894 = vmatmul.mubr.bf16.gmra.mxu0 %v4611
  %v4895 = vpop.f32.mrf.mxu0
  %v4896 = vadd.f32 0.0, %v4895
  %v4897 = vpop.f32.mrf.mxu0
  %v4898 = vpop.f32.mrf.mxu0
  %v4899 = vadd.f32 0.0, %v4898
  %v4900 = vpop.f32.mrf.mxu0
  %4901 = vdwg.mxu0
  %v4902 = vadd.f32 %v4348, %v4648
  %v4903 = vadd.f32 %v4349, %v4651
  %v4904 = vadd.f32 %v4350, %v4656
  %v4905 = vadd.f32 %v4351, %v4659
  %v4906 = vadd.f32 %v4352, %v4664
  %v4907 = vadd.f32 %v4353, %v4667
  %v4908 = vadd.f32 %v4354, %v4672
  %v4909 = vadd.f32 %v4355, %v4675
  %v4910 = vadd.f32 %v4356, %v4680
  %v4911 = vadd.f32 %v4357, %v4683
  %v4912 = vadd.f32 %v4358, %v4688
  %v4913 = vadd.f32 %v4359, %v4691
  %v4914 = vadd.f32 %v4360, %v4696
  %v4915 = vadd.f32 %v4361, %v4699
  %v4916 = vadd.f32 %v4362, %v4704
  %v4917 = vadd.f32 %v4363, %v4707
  %v4918 = vadd.f32 %v4364, %v4712
  %v4919 = vadd.f32 %v4365, %v4715
  %v4920 = vadd.f32 %v4366, %v4720
  %v4921 = vadd.f32 %v4367, %v4723
  %v4922 = vadd.f32 %v4368, %v4728
  %v4923 = vadd.f32 %v4369, %v4731
  %v4924 = vadd.f32 %v4370, %v4736
  %v4925 = vadd.f32 %v4371, %v4739
  %v4926 = vadd.f32 %v4372, %v4744
  %v4927 = vadd.f32 %v4373, %v4747
  %v4928 = vadd.f32 %v4374, %v4752
  %v4929 = vadd.f32 %v4375, %v4755
  %v4930 = vadd.f32 %v4376, %v4760
  %v4931 = vadd.f32 %v4377, %v4763
  %v4932 = vadd.f32 %v4378, %v4768
  %v4933 = vadd.f32 %v4379, %v4771
  %v4934 = vadd.f32 %v4380, %v4776
  %v4935 = vadd.f32 %v4381, %v4779
  %v4936 = vadd.f32 %v4382, %v4784
  %v4937 = vadd.f32 %v4383, %v4787
  %v4938 = vadd.f32 %v4384, %v4792
  %v4939 = vadd.f32 %v4385, %v4795
  %v4940 = vadd.f32 %v4386, %v4800
  %v4941 = vadd.f32 %v4387, %v4803
  %v4942 = vadd.f32 %v4388, %v4808
  %v4943 = vadd.f32 %v4389, %v4811
  %v4944 = vadd.f32 %v4390, %v4816
  %v4945 = vadd.f32 %v4391, %v4819
  %v4946 = vadd.f32 %v4392, %v4824
  %v4947 = vadd.f32 %v4393, %v4827
  %v4948 = vadd.f32 %v4394, %v4832
  %v4949 = vadd.f32 %v4395, %v4835
  %v4950 = vadd.f32 %v4396, %v4840
  %v4951 = vadd.f32 %v4397, %v4843
  %v4952 = vadd.f32 %v4398, %v4848
  %v4953 = vadd.f32 %v4399, %v4851
  %v4954 = vadd.f32 %v4400, %v4856
  %v4955 = vadd.f32 %v4401, %v4859
  %v4956 = vadd.f32 %v4402, %v4864
  %v4957 = vadd.f32 %v4403, %v4867
  %v4958 = vadd.f32 %v4404, %v4872
  %v4959 = vadd.f32 %v4405, %v4875
  %v4960 = vadd.f32 %v4406, %v4880
  %v4961 = vadd.f32 %v4407, %v4883
  %v4962 = vadd.f32 %v4408, %v4888
  %v4963 = vadd.f32 %v4409, %v4891
  %v4964 = vadd.f32 %v4410, %v4896
  %v4965 = vadd.f32 %v4411, %v4899
  %s4966 = scalar_lea.vmem [#allocation2], 48
  %v4967 = vld [vmem:[%s4966] sm:$0xff]
  %v4968 = vld [vmem:[%s4966 + $0x8] sm:$0xff]
  %v4969 = vld [vmem:[%s4966 + $0x18] sm:$0xff]
  %v4970 = vld [vmem:[%s4966 + $0x20] sm:$0xff]
  %v4971 = vld [vmem:[%s4966 + $0x30] sm:$0xff]
  %v4972 = vld [vmem:[%s4966 + $0x38] sm:$0xff]
  %v4973 = vld [vmem:[%s4966 + $0x48] sm:$0xff]
  %v4974 = vld [vmem:[%s4966 + $0x50] sm:$0xff]
  %v4975 = vld [vmem:[%s4966 + $0x60] sm:$0xff]
  %v4976 = vld [vmem:[%s4966 + $0x68] sm:$0xff]
  %v4977 = vld [vmem:[%s4966 + $0x78] sm:$0xff]
  %v4978 = vld [vmem:[%s4966 + $0x80] sm:$0xff]
  %v4979 = vld [vmem:[%s4966 + $0x90] sm:$0xff]
  %v4980 = vld [vmem:[%s4966 + $0x98] sm:$0xff]
  %v4981 = vld [vmem:[%s4966 + $0xa8] sm:$0xff]
  %v4982 = vld [vmem:[%s4966 + $0xb0] sm:$0xff]
  %v4983 = vld [vmem:[%s4966 + $0xc0] sm:$0xff]
  %v4984 = vld [vmem:[%s4966 + $0xc8] sm:$0xff]
  %v4985 = vld [vmem:[%s4966 + $0xd8] sm:$0xff]
  %v4986 = vld [vmem:[%s4966 + $0xe0] sm:$0xff]
  %v4987 = vld [vmem:[%s4966 + $0xf0] sm:$0xff]
  %v4988 = vld [vmem:[%s4966 + $0xf8] sm:$0xff]
  %v4989 = vld [vmem:[%s4966 + $0x108] sm:$0xff]
  %v4990 = vld [vmem:[%s4966 + $0x110] sm:$0xff]
  %v4991 = vld [vmem:[%s4966 + $0x120] sm:$0xff]
  %v4992 = vld [vmem:[%s4966 + $0x128] sm:$0xff]
  %v4993 = vld [vmem:[%s4966 + $0x138] sm:$0xff]
  %v4994 = vld [vmem:[%s4966 + $0x140] sm:$0xff]
  %v4995 = vld [vmem:[%s4966 + $0x150] sm:$0xff]
  %v4996 = vld [vmem:[%s4966 + $0x158] sm:$0xff]
  %v4997 = vld [vmem:[%s4966 + $0x168] sm:$0xff]
  %v4998 = vld [vmem:[%s4966 + $0x170] sm:$0xff]
  %v4999 = vld [vmem:[%s4966 + $0x1b0] sm:$0xff]
  %v5000 = vld [vmem:[%s4966 + $0x1b8] sm:$0xff]
  %v5001 = vld [vmem:[%s4966 + $0x1c8] sm:$0xff]
  %v5002 = vld [vmem:[%s4966 + $0x1d0] sm:$0xff]
  %v5003 = vld [vmem:[%s4966 + $0x1e0] sm:$0xff]
  %v5004 = vld [vmem:[%s4966 + $0x1e8] sm:$0xff]
  %v5005 = vld [vmem:[%s4966 + $0x1f8] sm:$0xff]
  %v5006 = vld [vmem:[%s4966 + $0x200] sm:$0xff]
  %v5007 = vld [vmem:[%s4966 + $0x210] sm:$0xff]
  %v5008 = vld [vmem:[%s4966 + $0x218] sm:$0xff]
  %v5009 = vld [vmem:[%s4966 + $0x228] sm:$0xff]
  %v5010 = vld [vmem:[%s4966 + $0x230] sm:$0xff]
  %v5011 = vld [vmem:[%s4966 + $0x240] sm:$0xff]
  %v5012 = vld [vmem:[%s4966 + $0x248] sm:$0xff]
  %v5013 = vld [vmem:[%s4966 + $0x258] sm:$0xff]
  %v5014 = vld [vmem:[%s4966 + $0x260] sm:$0xff]
  %v5015 = vld [vmem:[%s4966 + $0x270] sm:$0xff]
  %v5016 = vld [vmem:[%s4966 + $0x278] sm:$0xff]
  %v5017 = vld [vmem:[%s4966 + $0x288] sm:$0xff]
  %v5018 = vld [vmem:[%s4966 + $0x290] sm:$0xff]
  %v5019 = vld [vmem:[%s4966 + $0x2a0] sm:$0xff]
  %v5020 = vld [vmem:[%s4966 + $0x2a8] sm:$0xff]
  %v5021 = vld [vmem:[%s4966 + $0x2b8] sm:$0xff]
  %v5022 = vld [vmem:[%s4966 + $0x2c0] sm:$0xff]
  %v5023 = vld [vmem:[%s4966 + $0x2d0] sm:$0xff]
  %v5024 = vld [vmem:[%s4966 + $0x2d8] sm:$0xff]
  %v5025 = vld [vmem:[%s4966 + $0x2e8] sm:$0xff]
  %v5026 = vld [vmem:[%s4966 + $0x2f0] sm:$0xff]
  %v5027 = vld [vmem:[%s4966 + $0x300] sm:$0xff]
  %v5028 = vld [vmem:[%s4966 + $0x308] sm:$0xff]
  %v5029 = vld [vmem:[%s4966 + $0x318] sm:$0xff]
  %v5030 = vld [vmem:[%s4966 + $0x320] sm:$0xff]
  %v5031 = vpack.c.bf16 %v4968, %v4967
  %v5032 = vpack.c.bf16 %v4970, %v4969
  %v5033 = vpack.c.bf16 %v4972, %v4971
  %v5034 = vpack.c.bf16 %v4974, %v4973
  %v5035 = vpack.c.bf16 %v4976, %v4975
  %v5036 = vpack.c.bf16 %v4978, %v4977
  %v5037 = vpack.c.bf16 %v4980, %v4979
  %v5038 = vpack.c.bf16 %v4982, %v4981
  %v5039 = vpack.c.bf16 %v4984, %v4983
  %v5040 = vpack.c.bf16 %v4986, %v4985
  %v5041 = vpack.c.bf16 %v4988, %v4987
  %v5042 = vpack.c.bf16 %v4990, %v4989
  %v5043 = vpack.c.bf16 %v4992, %v4991
  %v5044 = vpack.c.bf16 %v4994, %v4993
  %v5045 = vpack.c.bf16 %v4996, %v4995
  %v5046 = vpack.c.bf16 %v4998, %v4997
  %v5047 = vpack.c.bf16 %v5000, %v4999
  %v5048 = vpack.c.bf16 %v5002, %v5001
  %v5049 = vpack.c.bf16 %v5004, %v5003
  %v5050 = vpack.c.bf16 %v5006, %v5005
  %v5051 = vpack.c.bf16 %v5008, %v5007
  %v5052 = vpack.c.bf16 %v5010, %v5009
  %v5053 = vpack.c.bf16 %v5012, %v5011
  %v5054 = vpack.c.bf16 %v5014, %v5013
  %v5055 = vpack.c.bf16 %v5016, %v5015
  %v5056 = vpack.c.bf16 %v5018, %v5017
  %v5057 = vpack.c.bf16 %v5020, %v5019
  %v5058 = vpack.c.bf16 %v5022, %v5021
  %v5059 = vpack.c.bf16 %v5024, %v5023
  %v5060 = vpack.c.bf16 %v5026, %v5025
  %v5061 = vpack.c.bf16 %v5028, %v5027
  %v5062 = vpack.c.bf16 %v5030, %v5029
  %s5063 = scalar_lea.vmem %s8, 48
  %v5064 = vld [vmem:[%s5063] sm:$0xf]
  %v5065 = vld [vmem:[%s5063 + $0x4] sm:$0xf]
  %v5068 = vunpack.c.l.b16 %v5064
  %v5069 = vunpack.c.l.b16 %v5065
  %v5070 = vpack.c.b16 %v5069, %v5068
  %v5073 = vsel %vm1072, %v5031, 0
  %v5076 = vsel %vm1072, %v5032, 0
  %v5079 = vsel %vm1072, %v5033, 0
  %v5082 = vsel %vm1072, %v5034, 0
  %v5085 = vsel %vm1072, %v5035, 0
  %v5088 = vsel %vm1072, %v5036, 0
  %v5091 = vsel %vm1072, %v5037, 0
  %v5094 = vsel %vm1072, %v5038, 0
  %v5097 = vsel %vm1072, %v5039, 0
  %v5100 = vsel %vm1072, %v5040, 0
  %v5103 = vsel %vm1072, %v5041, 0
  %v5106 = vsel %vm1072, %v5042, 0
  %v5109 = vsel %vm1072, %v5043, 0
  %v5112 = vsel %vm1072, %v5044, 0
  %v5115 = vsel %vm1072, %v5045, 0
  %v5118 = vsel %vm1072, %v5046, 0
  %v5121 = vsel %vm1072, %v5047, 0
  %v5124 = vsel %vm1072, %v5048, 0
  %v5127 = vsel %vm1072, %v5049, 0
  %v5130 = vsel %vm1072, %v5050, 0
  %v5133 = vsel %vm1072, %v5051, 0
  %v5136 = vsel %vm1072, %v5052, 0
  %v5139 = vsel %vm1072, %v5053, 0
  %v5142 = vsel %vm1072, %v5054, 0
  %v5145 = vsel %vm1072, %v5055, 0
  %v5148 = vsel %vm1072, %v5056, 0
  %v5151 = vsel %vm1072, %v5057, 0
  %v5154 = vsel %vm1072, %v5058, 0
  %v5157 = vsel %vm1072, %v5059, 0
  %v5160 = vsel %vm1072, %v5060, 0
  %v5163 = vsel %vm1072, %v5061, 0
  %v5166 = vsel %vm1072, %v5062, 0
  %5168 = vmatprep.subr.bf16.mxu0 0
  %5169 = vmatpush1.bf16.msra.mxu0 0
  %5170 = vmatprep.subr.bf16.mxu0 0
  %5171 = vmatpush1.bf16.msra.mxu0 0
  %5172 = vmatprep.subr.bf16.mxu0 0
  %5173 = vmatpush1.bf16.msra.mxu0 0
  %5174 = vmatprep.subr.bf16.mxu0 0
  %5175 = vmatpush1.bf16.msra.mxu0 0
  %5176 = vmatprep.subr.bf16.mxu0 0
  %5177 = vmatpush1.bf16.msra.mxu0 0
  %5178 = vmatprep.subr.bf16.mxu0 0
  %5179 = vmatpush1.bf16.msra.mxu0 0
  %5180 = vmatprep.subr.bf16.mxu0 0
  %5181 = vmatpush1.bf16.msra.mxu0 0
  %5182 = vmatprep.subr.bf16.mxu0 0
  %5183 = vmatpush1.bf16.msra.mxu0 %v5070
  %5184 = vmatprep.subr.bf16.mxu0 0
  %5185 = vmatpush2.bf16.msra.mxu0 0
  %5186 = vmatprep.subr.bf16.mxu0 0
  %5187 = vmatpush2.bf16.msra.mxu0 0
  %5188 = vmatprep.subr.bf16.mxu0 0
  %5189 = vmatpush2.bf16.msra.mxu0 0
  %5190 = vmatprep.subr.bf16.mxu0 0
  %5191 = vmatpush2.bf16.msra.mxu0 0
  %5192 = vmatprep.subr.bf16.mxu0 0
  %5193 = vmatpush2.bf16.msra.mxu0 0
  %5194 = vmatprep.subr.bf16.mxu0 0
  %5195 = vmatpush2.bf16.msra.mxu0 0
  %5196 = vmatprep.subr.bf16.mxu0 0
  %5197 = vmatpush2.bf16.msra.mxu0 0
  %5198 = vmatprep.subr.bf16.mxu0 0
  %5199 = vmatpush2.bf16.msra.mxu0 0
  %5200 = vmatprep.mubr.bf16.mxu0 0
  %5201 = vmatmul.mubr.bf16.gmra.mxu0 %v5073
  %v5202 = vpop.f32.mrf.mxu0
  %v5203 = vadd.f32 0.0, %v5202
  %v5204 = vpop.f32.mrf.mxu0
  %v5205 = vpop.f32.mrf.mxu0
  %v5206 = vadd.f32 0.0, %v5205
  %v5207 = vpop.f32.mrf.mxu0
  %5208 = vmatprep.mubr.bf16.mxu0 0
  %5209 = vmatmul.mubr.bf16.gmra.mxu0 %v5076
  %v5210 = vpop.f32.mrf.mxu0
  %v5211 = vadd.f32 0.0, %v5210
  %v5212 = vpop.f32.mrf.mxu0
  %v5213 = vpop.f32.mrf.mxu0
  %v5214 = vadd.f32 0.0, %v5213
  %v5215 = vpop.f32.mrf.mxu0
  %5216 = vmatprep.mubr.bf16.mxu0 0
  %5217 = vmatmul.mubr.bf16.gmra.mxu0 %v5079
  %v5218 = vpop.f32.mrf.mxu0
  %v5219 = vadd.f32 0.0, %v5218
  %v5220 = vpop.f32.mrf.mxu0
  %v5221 = vpop.f32.mrf.mxu0
  %v5222 = vadd.f32 0.0, %v5221
  %v5223 = vpop.f32.mrf.mxu0
  %5224 = vmatprep.mubr.bf16.mxu0 0
  %5225 = vmatmul.mubr.bf16.gmra.mxu0 %v5082
  %v5226 = vpop.f32.mrf.mxu0
  %v5227 = vadd.f32 0.0, %v5226
  %v5228 = vpop.f32.mrf.mxu0
  %v5229 = vpop.f32.mrf.mxu0
  %v5230 = vadd.f32 0.0, %v5229
  %v5231 = vpop.f32.mrf.mxu0
  %5232 = vmatprep.mubr.bf16.mxu0 0
  %5233 = vmatmul.mubr.bf16.gmra.mxu0 %v5085
  %v5234 = vpop.f32.mrf.mxu0
  %v5235 = vadd.f32 0.0, %v5234
  %v5236 = vpop.f32.mrf.mxu0
  %v5237 = vpop.f32.mrf.mxu0
  %v5238 = vadd.f32 0.0, %v5237
  %v5239 = vpop.f32.mrf.mxu0
  %5240 = vmatprep.mubr.bf16.mxu0 0
  %5241 = vmatmul.mubr.bf16.gmra.mxu0 %v5088
  %v5242 = vpop.f32.mrf.mxu0
  %v5243 = vadd.f32 0.0, %v5242
  %v5244 = vpop.f32.mrf.mxu0
  %v5245 = vpop.f32.mrf.mxu0
  %v5246 = vadd.f32 0.0, %v5245
  %v5247 = vpop.f32.mrf.mxu0
  %5248 = vmatprep.mubr.bf16.mxu0 0
  %5249 = vmatmul.mubr.bf16.gmra.mxu0 %v5091
  %v5250 = vpop.f32.mrf.mxu0
  %v5251 = vadd.f32 0.0, %v5250
  %v5252 = vpop.f32.mrf.mxu0
  %v5253 = vpop.f32.mrf.mxu0
  %v5254 = vadd.f32 0.0, %v5253
  %v5255 = vpop.f32.mrf.mxu0
  %5256 = vmatprep.mubr.bf16.mxu0 0
  %5257 = vmatmul.mubr.bf16.gmra.mxu0 %v5094
  %v5258 = vpop.f32.mrf.mxu0
  %v5259 = vadd.f32 0.0, %v5258
  %v5260 = vpop.f32.mrf.mxu0
  %v5261 = vpop.f32.mrf.mxu0
  %v5262 = vadd.f32 0.0, %v5261
  %v5263 = vpop.f32.mrf.mxu0
  %5264 = vmatprep.mubr.bf16.mxu0 0
  %5265 = vmatmul.mubr.bf16.gmra.mxu0 %v5097
  %v5266 = vpop.f32.mrf.mxu0
  %v5267 = vadd.f32 0.0, %v5266
  %v5268 = vpop.f32.mrf.mxu0
  %v5269 = vpop.f32.mrf.mxu0
  %v5270 = vadd.f32 0.0, %v5269
  %v5271 = vpop.f32.mrf.mxu0
  %5272 = vmatprep.mubr.bf16.mxu0 0
  %5273 = vmatmul.mubr.bf16.gmra.mxu0 %v5100
  %v5274 = vpop.f32.mrf.mxu0
  %v5275 = vadd.f32 0.0, %v5274
  %v5276 = vpop.f32.mrf.mxu0
  %v5277 = vpop.f32.mrf.mxu0
  %v5278 = vadd.f32 0.0, %v5277
  %v5279 = vpop.f32.mrf.mxu0
  %5280 = vmatprep.mubr.bf16.mxu0 0
  %5281 = vmatmul.mubr.bf16.gmra.mxu0 %v5103
  %v5282 = vpop.f32.mrf.mxu0
  %v5283 = vadd.f32 0.0, %v5282
  %v5284 = vpop.f32.mrf.mxu0
  %v5285 = vpop.f32.mrf.mxu0
  %v5286 = vadd.f32 0.0, %v5285
  %v5287 = vpop.f32.mrf.mxu0
  %5288 = vmatprep.mubr.bf16.mxu0 0
  %5289 = vmatmul.mubr.bf16.gmra.mxu0 %v5106
  %v5290 = vpop.f32.mrf.mxu0
  %v5291 = vadd.f32 0.0, %v5290
  %v5292 = vpop.f32.mrf.mxu0
  %v5293 = vpop.f32.mrf.mxu0
  %v5294 = vadd.f32 0.0, %v5293
  %v5295 = vpop.f32.mrf.mxu0
  %5296 = vmatprep.mubr.bf16.mxu0 0
  %5297 = vmatmul.mubr.bf16.gmra.mxu0 %v5109
  %v5298 = vpop.f32.mrf.mxu0
  %v5299 = vadd.f32 0.0, %v5298
  %v5300 = vpop.f32.mrf.mxu0
  %v5301 = vpop.f32.mrf.mxu0
  %v5302 = vadd.f32 0.0, %v5301
  %v5303 = vpop.f32.mrf.mxu0
  %5304 = vmatprep.mubr.bf16.mxu0 0
  %5305 = vmatmul.mubr.bf16.gmra.mxu0 %v5112
  %v5306 = vpop.f32.mrf.mxu0
  %v5307 = vadd.f32 0.0, %v5306
  %v5308 = vpop.f32.mrf.mxu0
  %v5309 = vpop.f32.mrf.mxu0
  %v5310 = vadd.f32 0.0, %v5309
  %v5311 = vpop.f32.mrf.mxu0
  %5312 = vmatprep.mubr.bf16.mxu0 0
  %5313 = vmatmul.mubr.bf16.gmra.mxu0 %v5115
  %v5314 = vpop.f32.mrf.mxu0
  %v5315 = vadd.f32 0.0, %v5314
  %v5316 = vpop.f32.mrf.mxu0
  %v5317 = vpop.f32.mrf.mxu0
  %v5318 = vadd.f32 0.0, %v5317
  %v5319 = vpop.f32.mrf.mxu0
  %5320 = vmatprep.mubr.bf16.mxu0 0
  %5321 = vmatmul.mubr.bf16.gmra.mxu0 %v5118
  %v5322 = vpop.f32.mrf.mxu0
  %v5323 = vadd.f32 0.0, %v5322
  %v5324 = vpop.f32.mrf.mxu0
  %v5325 = vpop.f32.mrf.mxu0
  %v5326 = vadd.f32 0.0, %v5325
  %v5327 = vpop.f32.mrf.mxu0
  %5328 = vmatprep.mubr.bf16.mxu0 0
  %5329 = vmatmul.mubr.bf16.gmra.mxu0 %v5121
  %v5330 = vpop.f32.mrf.mxu0
  %v5331 = vadd.f32 0.0, %v5330
  %v5332 = vpop.f32.mrf.mxu0
  %v5333 = vpop.f32.mrf.mxu0
  %v5334 = vadd.f32 0.0, %v5333
  %v5335 = vpop.f32.mrf.mxu0
  %5336 = vmatprep.mubr.bf16.mxu0 0
  %5337 = vmatmul.mubr.bf16.gmra.mxu0 %v5124
  %v5338 = vpop.f32.mrf.mxu0
  %v5339 = vadd.f32 0.0, %v5338
  %v5340 = vpop.f32.mrf.mxu0
  %v5341 = vpop.f32.mrf.mxu0
  %v5342 = vadd.f32 0.0, %v5341
  %v5343 = vpop.f32.mrf.mxu0
  %5344 = vmatprep.mubr.bf16.mxu0 0
  %5345 = vmatmul.mubr.bf16.gmra.mxu0 %v5127
  %v5346 = vpop.f32.mrf.mxu0
  %v5347 = vadd.f32 0.0, %v5346
  %v5348 = vpop.f32.mrf.mxu0
  %v5349 = vpop.f32.mrf.mxu0
  %v5350 = vadd.f32 0.0, %v5349
  %v5351 = vpop.f32.mrf.mxu0
  %5352 = vmatprep.mubr.bf16.mxu0 0
  %5353 = vmatmul.mubr.bf16.gmra.mxu0 %v5130
  %v5354 = vpop.f32.mrf.mxu0
  %v5355 = vadd.f32 0.0, %v5354
  %v5356 = vpop.f32.mrf.mxu0
  %v5357 = vpop.f32.mrf.mxu0
  %v5358 = vadd.f32 0.0, %v5357
  %v5359 = vpop.f32.mrf.mxu0
  %5360 = vmatprep.mubr.bf16.mxu0 0
  %5361 = vmatmul.mubr.bf16.gmra.mxu0 %v5133
  %v5362 = vpop.f32.mrf.mxu0
  %v5363 = vadd.f32 0.0, %v5362
  %v5364 = vpop.f32.mrf.mxu0
  %v5365 = vpop.f32.mrf.mxu0
  %v5366 = vadd.f32 0.0, %v5365
  %v5367 = vpop.f32.mrf.mxu0
  %5368 = vmatprep.mubr.bf16.mxu0 0
  %5369 = vmatmul.mubr.bf16.gmra.mxu0 %v5136
  %v5370 = vpop.f32.mrf.mxu0
  %v5371 = vadd.f32 0.0, %v5370
  %v5372 = vpop.f32.mrf.mxu0
  %v5373 = vpop.f32.mrf.mxu0
  %v5374 = vadd.f32 0.0, %v5373
  %v5375 = vpop.f32.mrf.mxu0
  %5376 = vmatprep.mubr.bf16.mxu0 0
  %5377 = vmatmul.mubr.bf16.gmra.mxu0 %v5139
  %v5378 = vpop.f32.mrf.mxu0
  %v5379 = vadd.f32 0.0, %v5378
  %v5380 = vpop.f32.mrf.mxu0
  %v5381 = vpop.f32.mrf.mxu0
  %v5382 = vadd.f32 0.0, %v5381
  %v5383 = vpop.f32.mrf.mxu0
  %5384 = vmatprep.mubr.bf16.mxu0 0
  %5385 = vmatmul.mubr.bf16.gmra.mxu0 %v5142
  %v5386 = vpop.f32.mrf.mxu0
  %v5387 = vadd.f32 0.0, %v5386
  %v5388 = vpop.f32.mrf.mxu0
  %v5389 = vpop.f32.mrf.mxu0
  %v5390 = vadd.f32 0.0, %v5389
  %v5391 = vpop.f32.mrf.mxu0
  %5392 = vmatprep.mubr.bf16.mxu0 0
  %5393 = vmatmul.mubr.bf16.gmra.mxu0 %v5145
  %v5394 = vpop.f32.mrf.mxu0
  %v5395 = vadd.f32 0.0, %v5394
  %v5396 = vpop.f32.mrf.mxu0
  %v5397 = vpop.f32.mrf.mxu0
  %v5398 = vadd.f32 0.0, %v5397
  %v5399 = vpop.f32.mrf.mxu0
  %5400 = vmatprep.mubr.bf16.mxu0 0
  %5401 = vmatmul.mubr.bf16.gmra.mxu0 %v5148
  %v5402 = vpop.f32.mrf.mxu0
  %v5403 = vadd.f32 0.0, %v5402
  %v5404 = vpop.f32.mrf.mxu0
  %v5405 = vpop.f32.mrf.mxu0
  %v5406 = vadd.f32 0.0, %v5405
  %v5407 = vpop.f32.mrf.mxu0
  %5408 = vmatprep.mubr.bf16.mxu0 0
  %5409 = vmatmul.mubr.bf16.gmra.mxu0 %v5151
  %v5410 = vpop.f32.mrf.mxu0
  %v5411 = vadd.f32 0.0, %v5410
  %v5412 = vpop.f32.mrf.mxu0
  %v5413 = vpop.f32.mrf.mxu0
  %v5414 = vadd.f32 0.0, %v5413
  %v5415 = vpop.f32.mrf.mxu0
  %5416 = vmatprep.mubr.bf16.mxu0 0
  %5417 = vmatmul.mubr.bf16.gmra.mxu0 %v5154
  %v5418 = vpop.f32.mrf.mxu0
  %v5419 = vadd.f32 0.0, %v5418
  %v5420 = vpop.f32.mrf.mxu0
  %v5421 = vpop.f32.mrf.mxu0
  %v5422 = vadd.f32 0.0, %v5421
  %v5423 = vpop.f32.mrf.mxu0
  %5424 = vmatprep.mubr.bf16.mxu0 0
  %5425 = vmatmul.mubr.bf16.gmra.mxu0 %v5157
  %v5426 = vpop.f32.mrf.mxu0
  %v5427 = vadd.f32 0.0, %v5426
  %v5428 = vpop.f32.mrf.mxu0
  %v5429 = vpop.f32.mrf.mxu0
  %v5430 = vadd.f32 0.0, %v5429
  %v5431 = vpop.f32.mrf.mxu0
  %5432 = vmatprep.mubr.bf16.mxu0 0
  %5433 = vmatmul.mubr.bf16.gmra.mxu0 %v5160
  %v5434 = vpop.f32.mrf.mxu0
  %v5435 = vadd.f32 0.0, %v5434
  %v5436 = vpop.f32.mrf.mxu0
  %v5437 = vpop.f32.mrf.mxu0
  %v5438 = vadd.f32 0.0, %v5437
  %v5439 = vpop.f32.mrf.mxu0
  %5440 = vmatprep.mubr.bf16.mxu0 0
  %5441 = vmatmul.mubr.bf16.gmra.mxu0 %v5163
  %v5442 = vpop.f32.mrf.mxu0
  %v5443 = vadd.f32 0.0, %v5442
  %v5444 = vpop.f32.mrf.mxu0
  %v5445 = vpop.f32.mrf.mxu0
  %v5446 = vadd.f32 0.0, %v5445
  %v5447 = vpop.f32.mrf.mxu0
  %5448 = vmatprep.mubr.bf16.mxu0 0
  %5449 = vmatmul.mubr.bf16.gmra.mxu0 %v5166
  %v5450 = vpop.f32.mrf.mxu0
  %v5451 = vadd.f32 0.0, %v5450
  %v5452 = vpop.f32.mrf.mxu0
  %v5453 = vpop.f32.mrf.mxu0
  %v5454 = vadd.f32 0.0, %v5453
  %v5455 = vpop.f32.mrf.mxu0
  %5456 = vdwg.mxu0
  %v5457 = vadd.f32 %v4902, %v5203
  %v5458 = vadd.f32 %v4903, %v5206
  %v5459 = vadd.f32 %v4904, %v5211
  %v5460 = vadd.f32 %v4905, %v5214
  %v5461 = vadd.f32 %v4906, %v5219
  %v5462 = vadd.f32 %v4907, %v5222
  %v5463 = vadd.f32 %v4908, %v5227
  %v5464 = vadd.f32 %v4909, %v5230
  %v5465 = vadd.f32 %v4910, %v5235
  %v5466 = vadd.f32 %v4911, %v5238
  %v5467 = vadd.f32 %v4912, %v5243
  %v5468 = vadd.f32 %v4913, %v5246
  %v5469 = vadd.f32 %v4914, %v5251
  %v5470 = vadd.f32 %v4915, %v5254
  %v5471 = vadd.f32 %v4916, %v5259
  %v5472 = vadd.f32 %v4917, %v5262
  %v5473 = vadd.f32 %v4918, %v5267
  %v5474 = vadd.f32 %v4919, %v5270
  %v5475 = vadd.f32 %v4920, %v5275
  %v5476 = vadd.f32 %v4921, %v5278
  %v5477 = vadd.f32 %v4922, %v5283
  %v5478 = vadd.f32 %v4923, %v5286
  %v5479 = vadd.f32 %v4924, %v5291
  %v5480 = vadd.f32 %v4925, %v5294
  %v5481 = vadd.f32 %v4926, %v5299
  %v5482 = vadd.f32 %v4927, %v5302
  %v5483 = vadd.f32 %v4928, %v5307
  %v5484 = vadd.f32 %v4929, %v5310
  %v5485 = vadd.f32 %v4930, %v5315
  %v5486 = vadd.f32 %v4931, %v5318
  %v5487 = vadd.f32 %v4932, %v5323
  %v5488 = vadd.f32 %v4933, %v5326
  %v5489 = vadd.f32 %v4934, %v5331
  %v5490 = vadd.f32 %v4935, %v5334
  %v5491 = vadd.f32 %v4936, %v5339
  %v5492 = vadd.f32 %v4937, %v5342
  %v5493 = vadd.f32 %v4938, %v5347
  %v5494 = vadd.f32 %v4939, %v5350
  %v5495 = vadd.f32 %v4940, %v5355
  %v5496 = vadd.f32 %v4941, %v5358
  %v5497 = vadd.f32 %v4942, %v5363
  %v5498 = vadd.f32 %v4943, %v5366
  %v5499 = vadd.f32 %v4944, %v5371
  %v5500 = vadd.f32 %v4945, %v5374
  %v5501 = vadd.f32 %v4946, %v5379
  %v5502 = vadd.f32 %v4947, %v5382
  %v5503 = vadd.f32 %v4948, %v5387
  %v5504 = vadd.f32 %v4949, %v5390
  %v5505 = vadd.f32 %v4950, %v5395
  %v5506 = vadd.f32 %v4951, %v5398
  %v5507 = vadd.f32 %v4952, %v5403
  %v5508 = vadd.f32 %v4953, %v5406
  %v5509 = vadd.f32 %v4954, %v5411
  %v5510 = vadd.f32 %v4955, %v5414
  %v5511 = vadd.f32 %v4956, %v5419
  %v5512 = vadd.f32 %v4957, %v5422
  %v5513 = vadd.f32 %v4958, %v5427
  %v5514 = vadd.f32 %v4959, %v5430
  %v5515 = vadd.f32 %v4960, %v5435
  %v5516 = vadd.f32 %v4961, %v5438
  %v5517 = vadd.f32 %v4962, %v5443
  %v5518 = vadd.f32 %v4963, %v5446
  %v5519 = vadd.f32 %v4964, %v5451
  %v5520 = vadd.f32 %v4965, %v5454
  %v5521 = vld [vmem:[%s4966 + $0x1] sm:$0xff]
  %v5522 = vld [vmem:[%s4966 + $0x9] sm:$0xff]
  %v5523 = vld [vmem:[%s4966 + $0x19] sm:$0xff]
  %v5524 = vld [vmem:[%s4966 + $0x21] sm:$0xff]
  %v5525 = vld [vmem:[%s4966 + $0x31] sm:$0xff]
  %v5526 = vld [vmem:[%s4966 + $0x39] sm:$0xff]
  %v5527 = vld [vmem:[%s4966 + $0x49] sm:$0xff]
  %v5528 = vld [vmem:[%s4966 + $0x51] sm:$0xff]
  %v5529 = vld [vmem:[%s4966 + $0x61] sm:$0xff]
  %v5530 = vld [vmem:[%s4966 + $0x69] sm:$0xff]
  %v5531 = vld [vmem:[%s4966 + $0x79] sm:$0xff]
  %v5532 = vld [vmem:[%s4966 + $0x81] sm:$0xff]
  %v5533 = vld [vmem:[%s4966 + $0x91] sm:$0xff]
  %v5534 = vld [vmem:[%s4966 + $0x99] sm:$0xff]
  %v5535 = vld [vmem:[%s4966 + $0xa9] sm:$0xff]
  %v5536 = vld [vmem:[%s4966 + $0xb1] sm:$0xff]
  %v5537 = vld [vmem:[%s4966 + $0xc1] sm:$0xff]
  %v5538 = vld [vmem:[%s4966 + $0xc9] sm:$0xff]
  %v5539 = vld [vmem:[%s4966 + $0xd9] sm:$0xff]
  %v5540 = vld [vmem:[%s4966 + $0xe1] sm:$0xff]
  %v5541 = vld [vmem:[%s4966 + $0xf1] sm:$0xff]
  %v5542 = vld [vmem:[%s4966 + $0xf9] sm:$0xff]
  %v5543 = vld [vmem:[%s4966 + $0x109] sm:$0xff]
  %v5544 = vld [vmem:[%s4966 + $0x111] sm:$0xff]
  %v5545 = vld [vmem:[%s4966 + $0x121] sm:$0xff]
  %v5546 = vld [vmem:[%s4966 + $0x129] sm:$0xff]
  %v5547 = vld [vmem:[%s4966 + $0x139] sm:$0xff]
  %v5548 = vld [vmem:[%s4966 + $0x141] sm:$0xff]
  %v5549 = vld [vmem:[%s4966 + $0x151] sm:$0xff]
  %v5550 = vld [vmem:[%s4966 + $0x159] sm:$0xff]
  %v5551 = vld [vmem:[%s4966 + $0x169] sm:$0xff]
  %v5552 = vld [vmem:[%s4966 + $0x171] sm:$0xff]
  %v5553 = vld [vmem:[%s4966 + $0x1b1] sm:$0xff]
  %v5554 = vld [vmem:[%s4966 + $0x1b9] sm:$0xff]
  %v5555 = vld [vmem:[%s4966 + $0x1c9] sm:$0xff]
  %v5556 = vld [vmem:[%s4966 + $0x1d1] sm:$0xff]
  %v5557 = vld [vmem:[%s4966 + $0x1e1] sm:$0xff]
  %v5558 = vld [vmem:[%s4966 + $0x1e9] sm:$0xff]
  %v5559 = vld [vmem:[%s4966 + $0x1f9] sm:$0xff]
  %v5560 = vld [vmem:[%s4966 + $0x201] sm:$0xff]
  %v5561 = vld [vmem:[%s4966 + $0x211] sm:$0xff]
  %v5562 = vld [vmem:[%s4966 + $0x219] sm:$0xff]
  %v5563 = vld [vmem:[%s4966 + $0x229] sm:$0xff]
  %v5564 = vld [vmem:[%s4966 + $0x231] sm:$0xff]
  %v5565 = vld [vmem:[%s4966 + $0x241] sm:$0xff]
  %v5566 = vld [vmem:[%s4966 + $0x249] sm:$0xff]
  %v5567 = vld [vmem:[%s4966 + $0x259] sm:$0xff]
  %v5568 = vld [vmem:[%s4966 + $0x261] sm:$0xff]
  %v5569 = vld [vmem:[%s4966 + $0x271] sm:$0xff]
  %v5570 = vld [vmem:[%s4966 + $0x279] sm:$0xff]
  %v5571 = vld [vmem:[%s4966 + $0x289] sm:$0xff]
  %v5572 = vld [vmem:[%s4966 + $0x291] sm:$0xff]
  %v5573 = vld [vmem:[%s4966 + $0x2a1] sm:$0xff]
  %v5574 = vld [vmem:[%s4966 + $0x2a9] sm:$0xff]
  %v5575 = vld [vmem:[%s4966 + $0x2b9] sm:$0xff]
  %v5576 = vld [vmem:[%s4966 + $0x2c1] sm:$0xff]
  %v5577 = vld [vmem:[%s4966 + $0x2d1] sm:$0xff]
  %v5578 = vld [vmem:[%s4966 + $0x2d9] sm:$0xff]
  %v5579 = vld [vmem:[%s4966 + $0x2e9] sm:$0xff]
  %v5580 = vld [vmem:[%s4966 + $0x2f1] sm:$0xff]
  %v5581 = vld [vmem:[%s4966 + $0x301] sm:$0xff]
  %v5582 = vld [vmem:[%s4966 + $0x309] sm:$0xff]
  %v5583 = vld [vmem:[%s4966 + $0x319] sm:$0xff]
  %v5584 = vld [vmem:[%s4966 + $0x321] sm:$0xff]
  %v5585 = vpack.c.bf16 %v5522, %v5521
  %v5586 = vpack.c.bf16 %v5524, %v5523
  %v5587 = vpack.c.bf16 %v5526, %v5525
  %v5588 = vpack.c.bf16 %v5528, %v5527
  %v5589 = vpack.c.bf16 %v5530, %v5529
  %v5590 = vpack.c.bf16 %v5532, %v5531
  %v5591 = vpack.c.bf16 %v5534, %v5533
  %v5592 = vpack.c.bf16 %v5536, %v5535
  %v5593 = vpack.c.bf16 %v5538, %v5537
  %v5594 = vpack.c.bf16 %v5540, %v5539
  %v5595 = vpack.c.bf16 %v5542, %v5541
  %v5596 = vpack.c.bf16 %v5544, %v5543
  %v5597 = vpack.c.bf16 %v5546, %v5545
  %v5598 = vpack.c.bf16 %v5548, %v5547
  %v5599 = vpack.c.bf16 %v5550, %v5549
  %v5600 = vpack.c.bf16 %v5552, %v5551
  %v5601 = vpack.c.bf16 %v5554, %v5553
  %v5602 = vpack.c.bf16 %v5556, %v5555
  %v5603 = vpack.c.bf16 %v5558, %v5557
  %v5604 = vpack.c.bf16 %v5560, %v5559
  %v5605 = vpack.c.bf16 %v5562, %v5561
  %v5606 = vpack.c.bf16 %v5564, %v5563
  %v5607 = vpack.c.bf16 %v5566, %v5565
  %v5608 = vpack.c.bf16 %v5568, %v5567
  %v5609 = vpack.c.bf16 %v5570, %v5569
  %v5610 = vpack.c.bf16 %v5572, %v5571
  %v5611 = vpack.c.bf16 %v5574, %v5573
  %v5612 = vpack.c.bf16 %v5576, %v5575
  %v5613 = vpack.c.bf16 %v5578, %v5577
  %v5614 = vpack.c.bf16 %v5580, %v5579
  %v5615 = vpack.c.bf16 %v5582, %v5581
  %v5616 = vpack.c.bf16 %v5584, %v5583
  %s5617 = scalar_lea.vmem %s8, 56
  %v5618 = vld [vmem:[%s5617] sm:$0xf]
  %v5619 = vld [vmem:[%s5617 + $0x4] sm:$0xf]
  %v5622 = vunpack.c.l.b16 %v5618
  %v5623 = vunpack.c.l.b16 %v5619
  %v5624 = vpack.c.b16 %v5623, %v5622
  %v5627 = vsel %vm1072, %v5585, 0
  %v5630 = vsel %vm1072, %v5586, 0
  %v5633 = vsel %vm1072, %v5587, 0
  %v5636 = vsel %vm1072, %v5588, 0
  %v5639 = vsel %vm1072, %v5589, 0
  %v5642 = vsel %vm1072, %v5590, 0
  %v5645 = vsel %vm1072, %v5591, 0
  %v5648 = vsel %vm1072, %v5592, 0
  %v5651 = vsel %vm1072, %v5593, 0
  %v5654 = vsel %vm1072, %v5594, 0
  %v5657 = vsel %vm1072, %v5595, 0
  %v5660 = vsel %vm1072, %v5596, 0
  %v5663 = vsel %vm1072, %v5597, 0
  %v5666 = vsel %vm1072, %v5598, 0
  %v5669 = vsel %vm1072, %v5599, 0
  %v5672 = vsel %vm1072, %v5600, 0
  %v5675 = vsel %vm1072, %v5601, 0
  %v5678 = vsel %vm1072, %v5602, 0
  %v5681 = vsel %vm1072, %v5603, 0
  %v5684 = vsel %vm1072, %v5604, 0
  %v5687 = vsel %vm1072, %v5605, 0
  %v5690 = vsel %vm1072, %v5606, 0
  %v5693 = vsel %vm1072, %v5607, 0
  %v5696 = vsel %vm1072, %v5608, 0
  %v5699 = vsel %vm1072, %v5609, 0
  %v5702 = vsel %vm1072, %v5610, 0
  %v5705 = vsel %vm1072, %v5611, 0
  %v5708 = vsel %vm1072, %v5612, 0
  %v5711 = vsel %vm1072, %v5613, 0
  %v5714 = vsel %vm1072, %v5614, 0
  %v5717 = vsel %vm1072, %v5615, 0
  %v5720 = vsel %vm1072, %v5616, 0
  %5722 = vmatprep.subr.bf16.mxu0 0
  %5723 = vmatpush1.bf16.msra.mxu0 0
  %5724 = vmatprep.subr.bf16.mxu0 0
  %5725 = vmatpush1.bf16.msra.mxu0 0
  %5726 = vmatprep.subr.bf16.mxu0 0
  %5727 = vmatpush1.bf16.msra.mxu0 0
  %5728 = vmatprep.subr.bf16.mxu0 0
  %5729 = vmatpush1.bf16.msra.mxu0 0
  %5730 = vmatprep.subr.bf16.mxu0 0
  %5731 = vmatpush1.bf16.msra.mxu0 0
  %5732 = vmatprep.subr.bf16.mxu0 0
  %5733 = vmatpush1.bf16.msra.mxu0 0
  %5734 = vmatprep.subr.bf16.mxu0 0
  %5735 = vmatpush1.bf16.msra.mxu0 0
  %5736 = vmatprep.subr.bf16.mxu0 0
  %5737 = vmatpush1.bf16.msra.mxu0 %v5624
  %5738 = vmatprep.subr.bf16.mxu0 0
  %5739 = vmatpush2.bf16.msra.mxu0 0
  %5740 = vmatprep.subr.bf16.mxu0 0
  %5741 = vmatpush2.bf16.msra.mxu0 0
  %5742 = vmatprep.subr.bf16.mxu0 0
  %5743 = vmatpush2.bf16.msra.mxu0 0
  %5744 = vmatprep.subr.bf16.mxu0 0
  %5745 = vmatpush2.bf16.msra.mxu0 0
  %5746 = vmatprep.subr.bf16.mxu0 0
  %5747 = vmatpush2.bf16.msra.mxu0 0
  %5748 = vmatprep.subr.bf16.mxu0 0
  %5749 = vmatpush2.bf16.msra.mxu0 0
  %5750 = vmatprep.subr.bf16.mxu0 0
  %5751 = vmatpush2.bf16.msra.mxu0 0
  %5752 = vmatprep.subr.bf16.mxu0 0
  %5753 = vmatpush2.bf16.msra.mxu0 0
  %5754 = vmatprep.mubr.bf16.mxu0 0
  %5755 = vmatmul.mubr.bf16.gmra.mxu0 %v5627
  %v5756 = vpop.f32.mrf.mxu0
  %v5757 = vadd.f32 0.0, %v5756
  %v5758 = vpop.f32.mrf.mxu0
  %v5759 = vpop.f32.mrf.mxu0
  %v5760 = vadd.f32 0.0, %v5759
  %v5761 = vpop.f32.mrf.mxu0
  %5762 = vmatprep.mubr.bf16.mxu0 0
  %5763 = vmatmul.mubr.bf16.gmra.mxu0 %v5630
  %v5764 = vpop.f32.mrf.mxu0
  %v5765 = vadd.f32 0.0, %v5764
  %v5766 = vpop.f32.mrf.mxu0
  %v5767 = vpop.f32.mrf.mxu0
  %v5768 = vadd.f32 0.0, %v5767
  %v5769 = vpop.f32.mrf.mxu0
  %5770 = vmatprep.mubr.bf16.mxu0 0
  %5771 = vmatmul.mubr.bf16.gmra.mxu0 %v5633
  %v5772 = vpop.f32.mrf.mxu0
  %v5773 = vadd.f32 0.0, %v5772
  %v5774 = vpop.f32.mrf.mxu0
  %v5775 = vpop.f32.mrf.mxu0
  %v5776 = vadd.f32 0.0, %v5775
  %v5777 = vpop.f32.mrf.mxu0
  %5778 = vmatprep.mubr.bf16.mxu0 0
  %5779 = vmatmul.mubr.bf16.gmra.mxu0 %v5636
  %v5780 = vpop.f32.mrf.mxu0
  %v5781 = vadd.f32 0.0, %v5780
  %v5782 = vpop.f32.mrf.mxu0
  %v5783 = vpop.f32.mrf.mxu0
  %v5784 = vadd.f32 0.0, %v5783
  %v5785 = vpop.f32.mrf.mxu0
  %5786 = vmatprep.mubr.bf16.mxu0 0
  %5787 = vmatmul.mubr.bf16.gmra.mxu0 %v5639
  %v5788 = vpop.f32.mrf.mxu0
  %v5789 = vadd.f32 0.0, %v5788
  %v5790 = vpop.f32.mrf.mxu0
  %v5791 = vpop.f32.mrf.mxu0
  %v5792 = vadd.f32 0.0, %v5791
  %v5793 = vpop.f32.mrf.mxu0
  %5794 = vmatprep.mubr.bf16.mxu0 0
  %5795 = vmatmul.mubr.bf16.gmra.mxu0 %v5642
  %v5796 = vpop.f32.mrf.mxu0
  %v5797 = vadd.f32 0.0, %v5796
  %v5798 = vpop.f32.mrf.mxu0
  %v5799 = vpop.f32.mrf.mxu0
  %v5800 = vadd.f32 0.0, %v5799
  %v5801 = vpop.f32.mrf.mxu0
  %5802 = vmatprep.mubr.bf16.mxu0 0
  %5803 = vmatmul.mubr.bf16.gmra.mxu0 %v5645
  %v5804 = vpop.f32.mrf.mxu0
  %v5805 = vadd.f32 0.0, %v5804
  %v5806 = vpop.f32.mrf.mxu0
  %v5807 = vpop.f32.mrf.mxu0
  %v5808 = vadd.f32 0.0, %v5807
  %v5809 = vpop.f32.mrf.mxu0
  %5810 = vmatprep.mubr.bf16.mxu0 0
  %5811 = vmatmul.mubr.bf16.gmra.mxu0 %v5648
  %v5812 = vpop.f32.mrf.mxu0
  %v5813 = vadd.f32 0.0, %v5812
  %v5814 = vpop.f32.mrf.mxu0
  %v5815 = vpop.f32.mrf.mxu0
  %v5816 = vadd.f32 0.0, %v5815
  %v5817 = vpop.f32.mrf.mxu0
  %5818 = vmatprep.mubr.bf16.mxu0 0
  %5819 = vmatmul.mubr.bf16.gmra.mxu0 %v5651
  %v5820 = vpop.f32.mrf.mxu0
  %v5821 = vadd.f32 0.0, %v5820
  %v5822 = vpop.f32.mrf.mxu0
  %v5823 = vpop.f32.mrf.mxu0
  %v5824 = vadd.f32 0.0, %v5823
  %v5825 = vpop.f32.mrf.mxu0
  %5826 = vmatprep.mubr.bf16.mxu0 0
  %5827 = vmatmul.mubr.bf16.gmra.mxu0 %v5654
  %v5828 = vpop.f32.mrf.mxu0
  %v5829 = vadd.f32 0.0, %v5828
  %v5830 = vpop.f32.mrf.mxu0
  %v5831 = vpop.f32.mrf.mxu0
  %v5832 = vadd.f32 0.0, %v5831
  %v5833 = vpop.f32.mrf.mxu0
  %5834 = vmatprep.mubr.bf16.mxu0 0
  %5835 = vmatmul.mubr.bf16.gmra.mxu0 %v5657
  %v5836 = vpop.f32.mrf.mxu0
  %v5837 = vadd.f32 0.0, %v5836
  %v5838 = vpop.f32.mrf.mxu0
  %v5839 = vpop.f32.mrf.mxu0
  %v5840 = vadd.f32 0.0, %v5839
  %v5841 = vpop.f32.mrf.mxu0
  %5842 = vmatprep.mubr.bf16.mxu0 0
  %5843 = vmatmul.mubr.bf16.gmra.mxu0 %v5660
  %v5844 = vpop.f32.mrf.mxu0
  %v5845 = vadd.f32 0.0, %v5844
  %v5846 = vpop.f32.mrf.mxu0
  %v5847 = vpop.f32.mrf.mxu0
  %v5848 = vadd.f32 0.0, %v5847
  %v5849 = vpop.f32.mrf.mxu0
  %5850 = vmatprep.mubr.bf16.mxu0 0
  %5851 = vmatmul.mubr.bf16.gmra.mxu0 %v5663
  %v5852 = vpop.f32.mrf.mxu0
  %v5853 = vadd.f32 0.0, %v5852
  %v5854 = vpop.f32.mrf.mxu0
  %v5855 = vpop.f32.mrf.mxu0
  %v5856 = vadd.f32 0.0, %v5855
  %v5857 = vpop.f32.mrf.mxu0
  %5858 = vmatprep.mubr.bf16.mxu0 0
  %5859 = vmatmul.mubr.bf16.gmra.mxu0 %v5666
  %v5860 = vpop.f32.mrf.mxu0
  %v5861 = vadd.f32 0.0, %v5860
  %v5862 = vpop.f32.mrf.mxu0
  %v5863 = vpop.f32.mrf.mxu0
  %v5864 = vadd.f32 0.0, %v5863
  %v5865 = vpop.f32.mrf.mxu0
  %5866 = vmatprep.mubr.bf16.mxu0 0
  %5867 = vmatmul.mubr.bf16.gmra.mxu0 %v5669
  %v5868 = vpop.f32.mrf.mxu0
  %v5869 = vadd.f32 0.0, %v5868
  %v5870 = vpop.f32.mrf.mxu0
  %v5871 = vpop.f32.mrf.mxu0
  %v5872 = vadd.f32 0.0, %v5871
  %v5873 = vpop.f32.mrf.mxu0
  %5874 = vmatprep.mubr.bf16.mxu0 0
  %5875 = vmatmul.mubr.bf16.gmra.mxu0 %v5672
  %v5876 = vpop.f32.mrf.mxu0
  %v5877 = vadd.f32 0.0, %v5876
  %v5878 = vpop.f32.mrf.mxu0
  %v5879 = vpop.f32.mrf.mxu0
  %v5880 = vadd.f32 0.0, %v5879
  %v5881 = vpop.f32.mrf.mxu0
  %5882 = vmatprep.mubr.bf16.mxu0 0
  %5883 = vmatmul.mubr.bf16.gmra.mxu0 %v5675
  %v5884 = vpop.f32.mrf.mxu0
  %v5885 = vadd.f32 0.0, %v5884
  %v5886 = vpop.f32.mrf.mxu0
  %v5887 = vpop.f32.mrf.mxu0
  %v5888 = vadd.f32 0.0, %v5887
  %v5889 = vpop.f32.mrf.mxu0
  %5890 = vmatprep.mubr.bf16.mxu0 0
  %5891 = vmatmul.mubr.bf16.gmra.mxu0 %v5678
  %v5892 = vpop.f32.mrf.mxu0
  %v5893 = vadd.f32 0.0, %v5892
  %v5894 = vpop.f32.mrf.mxu0
  %v5895 = vpop.f32.mrf.mxu0
  %v5896 = vadd.f32 0.0, %v5895
  %v5897 = vpop.f32.mrf.mxu0
  %5898 = vmatprep.mubr.bf16.mxu0 0
  %5899 = vmatmul.mubr.bf16.gmra.mxu0 %v5681
  %v5900 = vpop.f32.mrf.mxu0
  %v5901 = vadd.f32 0.0, %v5900
  %v5902 = vpop.f32.mrf.mxu0
  %v5903 = vpop.f32.mrf.mxu0
  %v5904 = vadd.f32 0.0, %v5903
  %v5905 = vpop.f32.mrf.mxu0
  %5906 = vmatprep.mubr.bf16.mxu0 0
  %5907 = vmatmul.mubr.bf16.gmra.mxu0 %v5684
  %v5908 = vpop.f32.mrf.mxu0
  %v5909 = vadd.f32 0.0, %v5908
  %v5910 = vpop.f32.mrf.mxu0
  %v5911 = vpop.f32.mrf.mxu0
  %v5912 = vadd.f32 0.0, %v5911
  %v5913 = vpop.f32.mrf.mxu0
  %5914 = vmatprep.mubr.bf16.mxu0 0
  %5915 = vmatmul.mubr.bf16.gmra.mxu0 %v5687
  %v5916 = vpop.f32.mrf.mxu0
  %v5917 = vadd.f32 0.0, %v5916
  %v5918 = vpop.f32.mrf.mxu0
  %v5919 = vpop.f32.mrf.mxu0
  %v5920 = vadd.f32 0.0, %v5919
  %v5921 = vpop.f32.mrf.mxu0
  %5922 = vmatprep.mubr.bf16.mxu0 0
  %5923 = vmatmul.mubr.bf16.gmra.mxu0 %v5690
  %v5924 = vpop.f32.mrf.mxu0
  %v5925 = vadd.f32 0.0, %v5924
  %v5926 = vpop.f32.mrf.mxu0
  %v5927 = vpop.f32.mrf.mxu0
  %v5928 = vadd.f32 0.0, %v5927
  %v5929 = vpop.f32.mrf.mxu0
  %5930 = vmatprep.mubr.bf16.mxu0 0
  %5931 = vmatmul.mubr.bf16.gmra.mxu0 %v5693
  %v5932 = vpop.f32.mrf.mxu0
  %v5933 = vadd.f32 0.0, %v5932
  %v5934 = vpop.f32.mrf.mxu0
  %v5935 = vpop.f32.mrf.mxu0
  %v5936 = vadd.f32 0.0, %v5935
  %v5937 = vpop.f32.mrf.mxu0
  %5938 = vmatprep.mubr.bf16.mxu0 0
  %5939 = vmatmul.mubr.bf16.gmra.mxu0 %v5696
  %v5940 = vpop.f32.mrf.mxu0
  %v5941 = vadd.f32 0.0, %v5940
  %v5942 = vpop.f32.mrf.mxu0
  %v5943 = vpop.f32.mrf.mxu0
  %v5944 = vadd.f32 0.0, %v5943
  %v5945 = vpop.f32.mrf.mxu0
  %5946 = vmatprep.mubr.bf16.mxu0 0
  %5947 = vmatmul.mubr.bf16.gmra.mxu0 %v5699
  %v5948 = vpop.f32.mrf.mxu0
  %v5949 = vadd.f32 0.0, %v5948
  %v5950 = vpop.f32.mrf.mxu0
  %v5951 = vpop.f32.mrf.mxu0
  %v5952 = vadd.f32 0.0, %v5951
  %v5953 = vpop.f32.mrf.mxu0
  %5954 = vmatprep.mubr.bf16.mxu0 0
  %5955 = vmatmul.mubr.bf16.gmra.mxu0 %v5702
  %v5956 = vpop.f32.mrf.mxu0
  %v5957 = vadd.f32 0.0, %v5956
  %v5958 = vpop.f32.mrf.mxu0
  %v5959 = vpop.f32.mrf.mxu0
  %v5960 = vadd.f32 0.0, %v5959
  %v5961 = vpop.f32.mrf.mxu0
  %5962 = vmatprep.mubr.bf16.mxu0 0
  %5963 = vmatmul.mubr.bf16.gmra.mxu0 %v5705
  %v5964 = vpop.f32.mrf.mxu0
  %v5965 = vadd.f32 0.0, %v5964
  %v5966 = vpop.f32.mrf.mxu0
  %v5967 = vpop.f32.mrf.mxu0
  %v5968 = vadd.f32 0.0, %v5967
  %v5969 = vpop.f32.mrf.mxu0
  %5970 = vmatprep.mubr.bf16.mxu0 0
  %5971 = vmatmul.mubr.bf16.gmra.mxu0 %v5708
  %v5972 = vpop.f32.mrf.mxu0
  %v5973 = vadd.f32 0.0, %v5972
  %v5974 = vpop.f32.mrf.mxu0
  %v5975 = vpop.f32.mrf.mxu0
  %v5976 = vadd.f32 0.0, %v5975
  %v5977 = vpop.f32.mrf.mxu0
  %5978 = vmatprep.mubr.bf16.mxu0 0
  %5979 = vmatmul.mubr.bf16.gmra.mxu0 %v5711
  %v5980 = vpop.f32.mrf.mxu0
  %v5981 = vadd.f32 0.0, %v5980
  %v5982 = vpop.f32.mrf.mxu0
  %v5983 = vpop.f32.mrf.mxu0
  %v5984 = vadd.f32 0.0, %v5983
  %v5985 = vpop.f32.mrf.mxu0
  %5986 = vmatprep.mubr.bf16.mxu0 0
  %5987 = vmatmul.mubr.bf16.gmra.mxu0 %v5714
  %v5988 = vpop.f32.mrf.mxu0
  %v5989 = vadd.f32 0.0, %v5988
  %v5990 = vpop.f32.mrf.mxu0
  %v5991 = vpop.f32.mrf.mxu0
  %v5992 = vadd.f32 0.0, %v5991
  %v5993 = vpop.f32.mrf.mxu0
  %5994 = vmatprep.mubr.bf16.mxu0 0
  %5995 = vmatmul.mubr.bf16.gmra.mxu0 %v5717
  %v5996 = vpop.f32.mrf.mxu0
  %v5997 = vadd.f32 0.0, %v5996
  %v5998 = vpop.f32.mrf.mxu0
  %v5999 = vpop.f32.mrf.mxu0
  %v6000 = vadd.f32 0.0, %v5999
  %v6001 = vpop.f32.mrf.mxu0
  %6002 = vmatprep.mubr.bf16.mxu0 0
  %6003 = vmatmul.mubr.bf16.gmra.mxu0 %v5720
  %v6004 = vpop.f32.mrf.mxu0
  %v6005 = vadd.f32 0.0, %v6004
  %v6006 = vpop.f32.mrf.mxu0
  %v6007 = vpop.f32.mrf.mxu0
  %v6008 = vadd.f32 0.0, %v6007
  %v6009 = vpop.f32.mrf.mxu0
  %6010 = vdwg.mxu0
  %v6011 = vadd.f32 %v5457, %v5757
  %v6012 = vadd.f32 %v5458, %v5760
  %v6013 = vadd.f32 %v5459, %v5765
  %v6014 = vadd.f32 %v5460, %v5768
  %v6015 = vadd.f32 %v5461, %v5773
  %v6016 = vadd.f32 %v5462, %v5776
  %v6017 = vadd.f32 %v5463, %v5781
  %v6018 = vadd.f32 %v5464, %v5784
  %v6019 = vadd.f32 %v5465, %v5789
  %v6020 = vadd.f32 %v5466, %v5792
  %v6021 = vadd.f32 %v5467, %v5797
  %v6022 = vadd.f32 %v5468, %v5800
  %v6023 = vadd.f32 %v5469, %v5805
  %v6024 = vadd.f32 %v5470, %v5808
  %v6025 = vadd.f32 %v5471, %v5813
  %v6026 = vadd.f32 %v5472, %v5816
  %v6027 = vadd.f32 %v5473, %v5821
  %v6028 = vadd.f32 %v5474, %v5824
  %v6029 = vadd.f32 %v5475, %v5829
  %v6030 = vadd.f32 %v5476, %v5832
  %v6031 = vadd.f32 %v5477, %v5837
  %v6032 = vadd.f32 %v5478, %v5840
  %v6033 = vadd.f32 %v5479, %v5845
  %v6034 = vadd.f32 %v5480, %v5848
  %v6035 = vadd.f32 %v5481, %v5853
  %v6036 = vadd.f32 %v5482, %v5856
  %v6037 = vadd.f32 %v5483, %v5861
  %v6038 = vadd.f32 %v5484, %v5864
  %v6039 = vadd.f32 %v5485, %v5869
  %v6040 = vadd.f32 %v5486, %v5872
  %v6041 = vadd.f32 %v5487, %v5877
  %v6042 = vadd.f32 %v5488, %v5880
  %v6043 = vadd.f32 %v5489, %v5885
  %v6044 = vadd.f32 %v5490, %v5888
  %v6045 = vadd.f32 %v5491, %v5893
  %v6046 = vadd.f32 %v5492, %v5896
  %v6047 = vadd.f32 %v5493, %v5901
  %v6048 = vadd.f32 %v5494, %v5904
  %v6049 = vadd.f32 %v5495, %v5909
  %v6050 = vadd.f32 %v5496, %v5912
  %v6051 = vadd.f32 %v5497, %v5917
  %v6052 = vadd.f32 %v5498, %v5920
  %v6053 = vadd.f32 %v5499, %v5925
  %v6054 = vadd.f32 %v5500, %v5928
  %v6055 = vadd.f32 %v5501, %v5933
  %v6056 = vadd.f32 %v5502, %v5936
  %v6057 = vadd.f32 %v5503, %v5941
  %v6058 = vadd.f32 %v5504, %v5944
  %v6059 = vadd.f32 %v5505, %v5949
  %v6060 = vadd.f32 %v5506, %v5952
  %v6061 = vadd.f32 %v5507, %v5957
  %v6062 = vadd.f32 %v5508, %v5960
  %v6063 = vadd.f32 %v5509, %v5965
  %v6064 = vadd.f32 %v5510, %v5968
  %v6065 = vadd.f32 %v5511, %v5973
  %v6066 = vadd.f32 %v5512, %v5976
  %v6067 = vadd.f32 %v5513, %v5981
  %v6068 = vadd.f32 %v5514, %v5984
  %v6069 = vadd.f32 %v5515, %v5989
  %v6070 = vadd.f32 %v5516, %v5992
  %v6071 = vadd.f32 %v5517, %v5997
  %v6072 = vadd.f32 %v5518, %v6000
  %v6073 = vadd.f32 %v5519, %v6005
  %v6074 = vadd.f32 %v5520, %v6008
  %v6075 = vld [vmem:[%s4966 + $0x2] sm:$0xff]
  %v6076 = vld [vmem:[%s4966 + $0xa] sm:$0xff]
  %v6077 = vld [vmem:[%s4966 + $0x1a] sm:$0xff]
  %v6078 = vld [vmem:[%s4966 + $0x22] sm:$0xff]
  %v6079 = vld [vmem:[%s4966 + $0x32] sm:$0xff]
  %v6080 = vld [vmem:[%s4966 + $0x3a] sm:$0xff]
  %v6081 = vld [vmem:[%s4966 + $0x4a] sm:$0xff]
  %v6082 = vld [vmem:[%s4966 + $0x52] sm:$0xff]
  %v6083 = vld [vmem:[%s4966 + $0x62] sm:$0xff]
  %v6084 = vld [vmem:[%s4966 + $0x6a] sm:$0xff]
  %v6085 = vld [vmem:[%s4966 + $0x7a] sm:$0xff]
  %v6086 = vld [vmem:[%s4966 + $0x82] sm:$0xff]
  %v6087 = vld [vmem:[%s4966 + $0x92] sm:$0xff]
  %v6088 = vld [vmem:[%s4966 + $0x9a] sm:$0xff]
  %v6089 = vld [vmem:[%s4966 + $0xaa] sm:$0xff]
  %v6090 = vld [vmem:[%s4966 + $0xb2] sm:$0xff]
  %v6091 = vld [vmem:[%s4966 + $0xc2] sm:$0xff]
  %v6092 = vld [vmem:[%s4966 + $0xca] sm:$0xff]
  %v6093 = vld [vmem:[%s4966 + $0xda] sm:$0xff]
  %v6094 = vld [vmem:[%s4966 + $0xe2] sm:$0xff]
  %v6095 = vld [vmem:[%s4966 + $0xf2] sm:$0xff]
  %v6096 = vld [vmem:[%s4966 + $0xfa] sm:$0xff]
  %v6097 = vld [vmem:[%s4966 + $0x10a] sm:$0xff]
  %v6098 = vld [vmem:[%s4966 + $0x112] sm:$0xff]
  %v6099 = vld [vmem:[%s4966 + $0x122] sm:$0xff]
  %v6100 = vld [vmem:[%s4966 + $0x12a] sm:$0xff]
  %v6101 = vld [vmem:[%s4966 + $0x13a] sm:$0xff]
  %v6102 = vld [vmem:[%s4966 + $0x142] sm:$0xff]
  %v6103 = vld [vmem:[%s4966 + $0x152] sm:$0xff]
  %v6104 = vld [vmem:[%s4966 + $0x15a] sm:$0xff]
  %v6105 = vld [vmem:[%s4966 + $0x16a] sm:$0xff]
  %v6106 = vld [vmem:[%s4966 + $0x172] sm:$0xff]
  %v6107 = vld [vmem:[%s4966 + $0x1b2] sm:$0xff]
  %v6108 = vld [vmem:[%s4966 + $0x1ba] sm:$0xff]
  %v6109 = vld [vmem:[%s4966 + $0x1ca] sm:$0xff]
  %v6110 = vld [vmem:[%s4966 + $0x1d2] sm:$0xff]
  %v6111 = vld [vmem:[%s4966 + $0x1e2] sm:$0xff]
  %v6112 = vld [vmem:[%s4966 + $0x1ea] sm:$0xff]
  %v6113 = vld [vmem:[%s4966 + $0x1fa] sm:$0xff]
  %v6114 = vld [vmem:[%s4966 + $0x202] sm:$0xff]
  %v6115 = vld [vmem:[%s4966 + $0x212] sm:$0xff]
  %v6116 = vld [vmem:[%s4966 + $0x21a] sm:$0xff]
  %v6117 = vld [vmem:[%s4966 + $0x22a] sm:$0xff]
  %v6118 = vld [vmem:[%s4966 + $0x232] sm:$0xff]
  %v6119 = vld [vmem:[%s4966 + $0x242] sm:$0xff]
  %v6120 = vld [vmem:[%s4966 + $0x24a] sm:$0xff]
  %v6121 = vld [vmem:[%s4966 + $0x25a] sm:$0xff]
  %v6122 = vld [vmem:[%s4966 + $0x262] sm:$0xff]
  %v6123 = vld [vmem:[%s4966 + $0x272] sm:$0xff]
  %v6124 = vld [vmem:[%s4966 + $0x27a] sm:$0xff]
  %v6125 = vld [vmem:[%s4966 + $0x28a] sm:$0xff]
  %v6126 = vld [vmem:[%s4966 + $0x292] sm:$0xff]
  %v6127 = vld [vmem:[%s4966 + $0x2a2] sm:$0xff]
  %v6128 = vld [vmem:[%s4966 + $0x2aa] sm:$0xff]
  %v6129 = vld [vmem:[%s4966 + $0x2ba] sm:$0xff]
  %v6130 = vld [vmem:[%s4966 + $0x2c2] sm:$0xff]
  %v6131 = vld [vmem:[%s4966 + $0x2d2] sm:$0xff]
  %v6132 = vld [vmem:[%s4966 + $0x2da] sm:$0xff]
  %v6133 = vld [vmem:[%s4966 + $0x2ea] sm:$0xff]
  %v6134 = vld [vmem:[%s4966 + $0x2f2] sm:$0xff]
  %v6135 = vld [vmem:[%s4966 + $0x302] sm:$0xff]
  %v6136 = vld [vmem:[%s4966 + $0x30a] sm:$0xff]
  %v6137 = vld [vmem:[%s4966 + $0x31a] sm:$0xff]
  %v6138 = vld [vmem:[%s4966 + $0x322] sm:$0xff]
  %v6139 = vpack.c.bf16 %v6076, %v6075
  %v6140 = vpack.c.bf16 %v6078, %v6077
  %v6141 = vpack.c.bf16 %v6080, %v6079
  %v6142 = vpack.c.bf16 %v6082, %v6081
  %v6143 = vpack.c.bf16 %v6084, %v6083
  %v6144 = vpack.c.bf16 %v6086, %v6085
  %v6145 = vpack.c.bf16 %v6088, %v6087
  %v6146 = vpack.c.bf16 %v6090, %v6089
  %v6147 = vpack.c.bf16 %v6092, %v6091
  %v6148 = vpack.c.bf16 %v6094, %v6093
  %v6149 = vpack.c.bf16 %v6096, %v6095
  %v6150 = vpack.c.bf16 %v6098, %v6097
  %v6151 = vpack.c.bf16 %v6100, %v6099
  %v6152 = vpack.c.bf16 %v6102, %v6101
  %v6153 = vpack.c.bf16 %v6104, %v6103
  %v6154 = vpack.c.bf16 %v6106, %v6105
  %v6155 = vpack.c.bf16 %v6108, %v6107
  %v6156 = vpack.c.bf16 %v6110, %v6109
  %v6157 = vpack.c.bf16 %v6112, %v6111
  %v6158 = vpack.c.bf16 %v6114, %v6113
  %v6159 = vpack.c.bf16 %v6116, %v6115
  %v6160 = vpack.c.bf16 %v6118, %v6117
  %v6161 = vpack.c.bf16 %v6120, %v6119
  %v6162 = vpack.c.bf16 %v6122, %v6121
  %v6163 = vpack.c.bf16 %v6124, %v6123
  %v6164 = vpack.c.bf16 %v6126, %v6125
  %v6165 = vpack.c.bf16 %v6128, %v6127
  %v6166 = vpack.c.bf16 %v6130, %v6129
  %v6167 = vpack.c.bf16 %v6132, %v6131
  %v6168 = vpack.c.bf16 %v6134, %v6133
  %v6169 = vpack.c.bf16 %v6136, %v6135
  %v6170 = vpack.c.bf16 %v6138, %v6137
  %s6171 = scalar_lea.vmem %s8, 64
  %v6172 = vld [vmem:[%s6171] sm:$0xf]
  %v6173 = vld [vmem:[%s6171 + $0x4] sm:$0xf]
  %v6176 = vunpack.c.l.b16 %v6172
  %v6177 = vunpack.c.l.b16 %v6173
  %v6178 = vpack.c.b16 %v6177, %v6176
  %v6181 = vsel %vm1072, %v6139, 0
  %v6184 = vsel %vm1072, %v6140, 0
  %v6187 = vsel %vm1072, %v6141, 0
  %v6190 = vsel %vm1072, %v6142, 0
  %v6193 = vsel %vm1072, %v6143, 0
  %v6196 = vsel %vm1072, %v6144, 0
  %v6199 = vsel %vm1072, %v6145, 0
  %v6202 = vsel %vm1072, %v6146, 0
  %v6205 = vsel %vm1072, %v6147, 0
  %v6208 = vsel %vm1072, %v6148, 0
  %v6211 = vsel %vm1072, %v6149, 0
  %v6214 = vsel %vm1072, %v6150, 0
  %v6217 = vsel %vm1072, %v6151, 0
  %v6220 = vsel %vm1072, %v6152, 0
  %v6223 = vsel %vm1072, %v6153, 0
  %v6226 = vsel %vm1072, %v6154, 0
  %v6229 = vsel %vm1072, %v6155, 0
  %v6232 = vsel %vm1072, %v6156, 0
  %v6235 = vsel %vm1072, %v6157, 0
  %v6238 = vsel %vm1072, %v6158, 0
  %v6241 = vsel %vm1072, %v6159, 0
  %v6244 = vsel %vm1072, %v6160, 0
  %v6247 = vsel %vm1072, %v6161, 0
  %v6250 = vsel %vm1072, %v6162, 0
  %v6253 = vsel %vm1072, %v6163, 0
  %v6256 = vsel %vm1072, %v6164, 0
  %v6259 = vsel %vm1072, %v6165, 0
  %v6262 = vsel %vm1072, %v6166, 0
  %v6265 = vsel %vm1072, %v6167, 0
  %v6268 = vsel %vm1072, %v6168, 0
  %v6271 = vsel %vm1072, %v6169, 0
  %v6274 = vsel %vm1072, %v6170, 0
  %6276 = vmatprep.subr.bf16.mxu0 0
  %6277 = vmatpush1.bf16.msra.mxu0 0
  %6278 = vmatprep.subr.bf16.mxu0 0
  %6279 = vmatpush1.bf16.msra.mxu0 0
  %6280 = vmatprep.subr.bf16.mxu0 0
  %6281 = vmatpush1.bf16.msra.mxu0 0
  %6282 = vmatprep.subr.bf16.mxu0 0
  %6283 = vmatpush1.bf16.msra.mxu0 0
  %6284 = vmatprep.subr.bf16.mxu0 0
  %6285 = vmatpush1.bf16.msra.mxu0 0
  %6286 = vmatprep.subr.bf16.mxu0 0
  %6287 = vmatpush1.bf16.msra.mxu0 0
  %6288 = vmatprep.subr.bf16.mxu0 0
  %6289 = vmatpush1.bf16.msra.mxu0 0
  %6290 = vmatprep.subr.bf16.mxu0 0
  %6291 = vmatpush1.bf16.msra.mxu0 %v6178
  %6292 = vmatprep.subr.bf16.mxu0 0
  %6293 = vmatpush2.bf16.msra.mxu0 0
  %6294 = vmatprep.subr.bf16.mxu0 0
  %6295 = vmatpush2.bf16.msra.mxu0 0
  %6296 = vmatprep.subr.bf16.mxu0 0
  %6297 = vmatpush2.bf16.msra.mxu0 0
  %6298 = vmatprep.subr.bf16.mxu0 0
  %6299 = vmatpush2.bf16.msra.mxu0 0
  %6300 = vmatprep.subr.bf16.mxu0 0
  %6301 = vmatpush2.bf16.msra.mxu0 0
  %6302 = vmatprep.subr.bf16.mxu0 0
  %6303 = vmatpush2.bf16.msra.mxu0 0
  %6304 = vmatprep.subr.bf16.mxu0 0
  %6305 = vmatpush2.bf16.msra.mxu0 0
  %6306 = vmatprep.subr.bf16.mxu0 0
  %6307 = vmatpush2.bf16.msra.mxu0 0
  %6308 = vmatprep.mubr.bf16.mxu0 0
  %6309 = vmatmul.mubr.bf16.gmra.mxu0 %v6181
  %v6310 = vpop.f32.mrf.mxu0
  %v6311 = vadd.f32 0.0, %v6310
  %v6312 = vpop.f32.mrf.mxu0
  %v6313 = vpop.f32.mrf.mxu0
  %v6314 = vadd.f32 0.0, %v6313
  %v6315 = vpop.f32.mrf.mxu0
  %6316 = vmatprep.mubr.bf16.mxu0 0
  %6317 = vmatmul.mubr.bf16.gmra.mxu0 %v6184
  %v6318 = vpop.f32.mrf.mxu0
  %v6319 = vadd.f32 0.0, %v6318
  %v6320 = vpop.f32.mrf.mxu0
  %v6321 = vpop.f32.mrf.mxu0
  %v6322 = vadd.f32 0.0, %v6321
  %v6323 = vpop.f32.mrf.mxu0
  %6324 = vmatprep.mubr.bf16.mxu0 0
  %6325 = vmatmul.mubr.bf16.gmra.mxu0 %v6187
  %v6326 = vpop.f32.mrf.mxu0
  %v6327 = vadd.f32 0.0, %v6326
  %v6328 = vpop.f32.mrf.mxu0
  %v6329 = vpop.f32.mrf.mxu0
  %v6330 = vadd.f32 0.0, %v6329
  %v6331 = vpop.f32.mrf.mxu0
  %6332 = vmatprep.mubr.bf16.mxu0 0
  %6333 = vmatmul.mubr.bf16.gmra.mxu0 %v6190
  %v6334 = vpop.f32.mrf.mxu0
  %v6335 = vadd.f32 0.0, %v6334
  %v6336 = vpop.f32.mrf.mxu0
  %v6337 = vpop.f32.mrf.mxu0
  %v6338 = vadd.f32 0.0, %v6337
  %v6339 = vpop.f32.mrf.mxu0
  %6340 = vmatprep.mubr.bf16.mxu0 0
  %6341 = vmatmul.mubr.bf16.gmra.mxu0 %v6193
  %v6342 = vpop.f32.mrf.mxu0
  %v6343 = vadd.f32 0.0, %v6342
  %v6344 = vpop.f32.mrf.mxu0
  %v6345 = vpop.f32.mrf.mxu0
  %v6346 = vadd.f32 0.0, %v6345
  %v6347 = vpop.f32.mrf.mxu0
  %6348 = vmatprep.mubr.bf16.mxu0 0
  %6349 = vmatmul.mubr.bf16.gmra.mxu0 %v6196
  %v6350 = vpop.f32.mrf.mxu0
  %v6351 = vadd.f32 0.0, %v6350
  %v6352 = vpop.f32.mrf.mxu0
  %v6353 = vpop.f32.mrf.mxu0
  %v6354 = vadd.f32 0.0, %v6353
  %v6355 = vpop.f32.mrf.mxu0
  %6356 = vmatprep.mubr.bf16.mxu0 0
  %6357 = vmatmul.mubr.bf16.gmra.mxu0 %v6199
  %v6358 = vpop.f32.mrf.mxu0
  %v6359 = vadd.f32 0.0, %v6358
  %v6360 = vpop.f32.mrf.mxu0
  %v6361 = vpop.f32.mrf.mxu0
  %v6362 = vadd.f32 0.0, %v6361
  %v6363 = vpop.f32.mrf.mxu0
  %6364 = vmatprep.mubr.bf16.mxu0 0
  %6365 = vmatmul.mubr.bf16.gmra.mxu0 %v6202
  %v6366 = vpop.f32.mrf.mxu0
  %v6367 = vadd.f32 0.0, %v6366
  %v6368 = vpop.f32.mrf.mxu0
  %v6369 = vpop.f32.mrf.mxu0
  %v6370 = vadd.f32 0.0, %v6369
  %v6371 = vpop.f32.mrf.mxu0
  %6372 = vmatprep.mubr.bf16.mxu0 0
  %6373 = vmatmul.mubr.bf16.gmra.mxu0 %v6205
  %v6374 = vpop.f32.mrf.mxu0
  %v6375 = vadd.f32 0.0, %v6374
  %v6376 = vpop.f32.mrf.mxu0
  %v6377 = vpop.f32.mrf.mxu0
  %v6378 = vadd.f32 0.0, %v6377
  %v6379 = vpop.f32.mrf.mxu0
  %6380 = vmatprep.mubr.bf16.mxu0 0
  %6381 = vmatmul.mubr.bf16.gmra.mxu0 %v6208
  %v6382 = vpop.f32.mrf.mxu0
  %v6383 = vadd.f32 0.0, %v6382
  %v6384 = vpop.f32.mrf.mxu0
  %v6385 = vpop.f32.mrf.mxu0
  %v6386 = vadd.f32 0.0, %v6385
  %v6387 = vpop.f32.mrf.mxu0
  %6388 = vmatprep.mubr.bf16.mxu0 0
  %6389 = vmatmul.mubr.bf16.gmra.mxu0 %v6211
  %v6390 = vpop.f32.mrf.mxu0
  %v6391 = vadd.f32 0.0, %v6390
  %v6392 = vpop.f32.mrf.mxu0
  %v6393 = vpop.f32.mrf.mxu0
  %v6394 = vadd.f32 0.0, %v6393
  %v6395 = vpop.f32.mrf.mxu0
  %6396 = vmatprep.mubr.bf16.mxu0 0
  %6397 = vmatmul.mubr.bf16.gmra.mxu0 %v6214
  %v6398 = vpop.f32.mrf.mxu0
  %v6399 = vadd.f32 0.0, %v6398
  %v6400 = vpop.f32.mrf.mxu0
  %v6401 = vpop.f32.mrf.mxu0
  %v6402 = vadd.f32 0.0, %v6401
  %v6403 = vpop.f32.mrf.mxu0
  %6404 = vmatprep.mubr.bf16.mxu0 0
  %6405 = vmatmul.mubr.bf16.gmra.mxu0 %v6217
  %v6406 = vpop.f32.mrf.mxu0
  %v6407 = vadd.f32 0.0, %v6406
  %v6408 = vpop.f32.mrf.mxu0
  %v6409 = vpop.f32.mrf.mxu0
  %v6410 = vadd.f32 0.0, %v6409
  %v6411 = vpop.f32.mrf.mxu0
  %6412 = vmatprep.mubr.bf16.mxu0 0
  %6413 = vmatmul.mubr.bf16.gmra.mxu0 %v6220
  %v6414 = vpop.f32.mrf.mxu0
  %v6415 = vadd.f32 0.0, %v6414
  %v6416 = vpop.f32.mrf.mxu0
  %v6417 = vpop.f32.mrf.mxu0
  %v6418 = vadd.f32 0.0, %v6417
  %v6419 = vpop.f32.mrf.mxu0
  %6420 = vmatprep.mubr.bf16.mxu0 0
  %6421 = vmatmul.mubr.bf16.gmra.mxu0 %v6223
  %v6422 = vpop.f32.mrf.mxu0
  %v6423 = vadd.f32 0.0, %v6422
  %v6424 = vpop.f32.mrf.mxu0
  %v6425 = vpop.f32.mrf.mxu0
  %v6426 = vadd.f32 0.0, %v6425
  %v6427 = vpop.f32.mrf.mxu0
  %6428 = vmatprep.mubr.bf16.mxu0 0
  %6429 = vmatmul.mubr.bf16.gmra.mxu0 %v6226
  %v6430 = vpop.f32.mrf.mxu0
  %v6431 = vadd.f32 0.0, %v6430
  %v6432 = vpop.f32.mrf.mxu0
  %v6433 = vpop.f32.mrf.mxu0
  %v6434 = vadd.f32 0.0, %v6433
  %v6435 = vpop.f32.mrf.mxu0
  %6436 = vmatprep.mubr.bf16.mxu0 0
  %6437 = vmatmul.mubr.bf16.gmra.mxu0 %v6229
  %v6438 = vpop.f32.mrf.mxu0
  %v6439 = vadd.f32 0.0, %v6438
  %v6440 = vpop.f32.mrf.mxu0
  %v6441 = vpop.f32.mrf.mxu0
  %v6442 = vadd.f32 0.0, %v6441
  %v6443 = vpop.f32.mrf.mxu0
  %6444 = vmatprep.mubr.bf16.mxu0 0
  %6445 = vmatmul.mubr.bf16.gmra.mxu0 %v6232
  %v6446 = vpop.f32.mrf.mxu0
  %v6447 = vadd.f32 0.0, %v6446
  %v6448 = vpop.f32.mrf.mxu0
  %v6449 = vpop.f32.mrf.mxu0
  %v6450 = vadd.f32 0.0, %v6449
  %v6451 = vpop.f32.mrf.mxu0
  %6452 = vmatprep.mubr.bf16.mxu0 0
  %6453 = vmatmul.mubr.bf16.gmra.mxu0 %v6235
  %v6454 = vpop.f32.mrf.mxu0
  %v6455 = vadd.f32 0.0, %v6454
  %v6456 = vpop.f32.mrf.mxu0
  %v6457 = vpop.f32.mrf.mxu0
  %v6458 = vadd.f32 0.0, %v6457
  %v6459 = vpop.f32.mrf.mxu0
  %6460 = vmatprep.mubr.bf16.mxu0 0
  %6461 = vmatmul.mubr.bf16.gmra.mxu0 %v6238
  %v6462 = vpop.f32.mrf.mxu0
  %v6463 = vadd.f32 0.0, %v6462
  %v6464 = vpop.f32.mrf.mxu0
  %v6465 = vpop.f32.mrf.mxu0
  %v6466 = vadd.f32 0.0, %v6465
  %v6467 = vpop.f32.mrf.mxu0
  %6468 = vmatprep.mubr.bf16.mxu0 0
  %6469 = vmatmul.mubr.bf16.gmra.mxu0 %v6241
  %v6470 = vpop.f32.mrf.mxu0
  %v6471 = vadd.f32 0.0, %v6470
  %v6472 = vpop.f32.mrf.mxu0
  %v6473 = vpop.f32.mrf.mxu0
  %v6474 = vadd.f32 0.0, %v6473
  %v6475 = vpop.f32.mrf.mxu0
  %6476 = vmatprep.mubr.bf16.mxu0 0
  %6477 = vmatmul.mubr.bf16.gmra.mxu0 %v6244
  %v6478 = vpop.f32.mrf.mxu0
  %v6479 = vadd.f32 0.0, %v6478
  %v6480 = vpop.f32.mrf.mxu0
  %v6481 = vpop.f32.mrf.mxu0
  %v6482 = vadd.f32 0.0, %v6481
  %v6483 = vpop.f32.mrf.mxu0
  %6484 = vmatprep.mubr.bf16.mxu0 0
  %6485 = vmatmul.mubr.bf16.gmra.mxu0 %v6247
  %v6486 = vpop.f32.mrf.mxu0
  %v6487 = vadd.f32 0.0, %v6486
  %v6488 = vpop.f32.mrf.mxu0
  %v6489 = vpop.f32.mrf.mxu0
  %v6490 = vadd.f32 0.0, %v6489
  %v6491 = vpop.f32.mrf.mxu0
  %6492 = vmatprep.mubr.bf16.mxu0 0
  %6493 = vmatmul.mubr.bf16.gmra.mxu0 %v6250
  %v6494 = vpop.f32.mrf.mxu0
  %v6495 = vadd.f32 0.0, %v6494
  %v6496 = vpop.f32.mrf.mxu0
  %v6497 = vpop.f32.mrf.mxu0
  %v6498 = vadd.f32 0.0, %v6497
  %v6499 = vpop.f32.mrf.mxu0
  %6500 = vmatprep.mubr.bf16.mxu0 0
  %6501 = vmatmul.mubr.bf16.gmra.mxu0 %v6253
  %v6502 = vpop.f32.mrf.mxu0
  %v6503 = vadd.f32 0.0, %v6502
  %v6504 = vpop.f32.mrf.mxu0
  %v6505 = vpop.f32.mrf.mxu0
  %v6506 = vadd.f32 0.0, %v6505
  %v6507 = vpop.f32.mrf.mxu0
  %6508 = vmatprep.mubr.bf16.mxu0 0
  %6509 = vmatmul.mubr.bf16.gmra.mxu0 %v6256
  %v6510 = vpop.f32.mrf.mxu0
  %v6511 = vadd.f32 0.0, %v6510
  %v6512 = vpop.f32.mrf.mxu0
  %v6513 = vpop.f32.mrf.mxu0
  %v6514 = vadd.f32 0.0, %v6513
  %v6515 = vpop.f32.mrf.mxu0
  %6516 = vmatprep.mubr.bf16.mxu0 0
  %6517 = vmatmul.mubr.bf16.gmra.mxu0 %v6259
  %v6518 = vpop.f32.mrf.mxu0
  %v6519 = vadd.f32 0.0, %v6518
  %v6520 = vpop.f32.mrf.mxu0
  %v6521 = vpop.f32.mrf.mxu0
  %v6522 = vadd.f32 0.0, %v6521
  %v6523 = vpop.f32.mrf.mxu0
  %6524 = vmatprep.mubr.bf16.mxu0 0
  %6525 = vmatmul.mubr.bf16.gmra.mxu0 %v6262
  %v6526 = vpop.f32.mrf.mxu0
  %v6527 = vadd.f32 0.0, %v6526
  %v6528 = vpop.f32.mrf.mxu0
  %v6529 = vpop.f32.mrf.mxu0
  %v6530 = vadd.f32 0.0, %v6529
  %v6531 = vpop.f32.mrf.mxu0
  %6532 = vmatprep.mubr.bf16.mxu0 0
  %6533 = vmatmul.mubr.bf16.gmra.mxu0 %v6265
  %v6534 = vpop.f32.mrf.mxu0
  %v6535 = vadd.f32 0.0, %v6534
  %v6536 = vpop.f32.mrf.mxu0
  %v6537 = vpop.f32.mrf.mxu0
  %v6538 = vadd.f32 0.0, %v6537
  %v6539 = vpop.f32.mrf.mxu0
  %6540 = vmatprep.mubr.bf16.mxu0 0
  %6541 = vmatmul.mubr.bf16.gmra.mxu0 %v6268
  %v6542 = vpop.f32.mrf.mxu0
  %v6543 = vadd.f32 0.0, %v6542
  %v6544 = vpop.f32.mrf.mxu0
  %v6545 = vpop.f32.mrf.mxu0
  %v6546 = vadd.f32 0.0, %v6545
  %v6547 = vpop.f32.mrf.mxu0
  %6548 = vmatprep.mubr.bf16.mxu0 0
  %6549 = vmatmul.mubr.bf16.gmra.mxu0 %v6271
  %v6550 = vpop.f32.mrf.mxu0
  %v6551 = vadd.f32 0.0, %v6550
  %v6552 = vpop.f32.mrf.mxu0
  %v6553 = vpop.f32.mrf.mxu0
  %v6554 = vadd.f32 0.0, %v6553
  %v6555 = vpop.f32.mrf.mxu0
  %6556 = vmatprep.mubr.bf16.mxu0 0
  %6557 = vmatmul.mubr.bf16.gmra.mxu0 %v6274
  %v6558 = vpop.f32.mrf.mxu0
  %v6559 = vadd.f32 0.0, %v6558
  %v6560 = vpop.f32.mrf.mxu0
  %v6561 = vpop.f32.mrf.mxu0
  %v6562 = vadd.f32 0.0, %v6561
  %v6563 = vpop.f32.mrf.mxu0
  %6564 = vdwg.mxu0
  %v6565 = vadd.f32 %v6011, %v6311
  %v6566 = vadd.f32 %v6012, %v6314
  %v6567 = vadd.f32 %v6013, %v6319
  %v6568 = vadd.f32 %v6014, %v6322
  %v6569 = vadd.f32 %v6015, %v6327
  %v6570 = vadd.f32 %v6016, %v6330
  %v6571 = vadd.f32 %v6017, %v6335
  %v6572 = vadd.f32 %v6018, %v6338
  %v6573 = vadd.f32 %v6019, %v6343
  %v6574 = vadd.f32 %v6020, %v6346
  %v6575 = vadd.f32 %v6021, %v6351
  %v6576 = vadd.f32 %v6022, %v6354
  %v6577 = vadd.f32 %v6023, %v6359
  %v6578 = vadd.f32 %v6024, %v6362
  %v6579 = vadd.f32 %v6025, %v6367
  %v6580 = vadd.f32 %v6026, %v6370
  %v6581 = vadd.f32 %v6027, %v6375
  %v6582 = vadd.f32 %v6028, %v6378
  %v6583 = vadd.f32 %v6029, %v6383
  %v6584 = vadd.f32 %v6030, %v6386
  %v6585 = vadd.f32 %v6031, %v6391
  %v6586 = vadd.f32 %v6032, %v6394
  %v6587 = vadd.f32 %v6033, %v6399
  %v6588 = vadd.f32 %v6034, %v6402
  %v6589 = vadd.f32 %v6035, %v6407
  %v6590 = vadd.f32 %v6036, %v6410
  %v6591 = vadd.f32 %v6037, %v6415
  %v6592 = vadd.f32 %v6038, %v6418
  %v6593 = vadd.f32 %v6039, %v6423
  %v6594 = vadd.f32 %v6040, %v6426
  %v6595 = vadd.f32 %v6041, %v6431
  %v6596 = vadd.f32 %v6042, %v6434
  %v6597 = vadd.f32 %v6043, %v6439
  %v6598 = vadd.f32 %v6044, %v6442
  %v6599 = vadd.f32 %v6045, %v6447
  %v6600 = vadd.f32 %v6046, %v6450
  %v6601 = vadd.f32 %v6047, %v6455
  %v6602 = vadd.f32 %v6048, %v6458
  %v6603 = vadd.f32 %v6049, %v6463
  %v6604 = vadd.f32 %v6050, %v6466
  %v6605 = vadd.f32 %v6051, %v6471
  %v6606 = vadd.f32 %v6052, %v6474
  %v6607 = vadd.f32 %v6053, %v6479
  %v6608 = vadd.f32 %v6054, %v6482
  %v6609 = vadd.f32 %v6055, %v6487
  %v6610 = vadd.f32 %v6056, %v6490
  %v6611 = vadd.f32 %v6057, %v6495
  %v6612 = vadd.f32 %v6058, %v6498
  %v6613 = vadd.f32 %v6059, %v6503
  %v6614 = vadd.f32 %v6060, %v6506
  %v6615 = vadd.f32 %v6061, %v6511
  %v6616 = vadd.f32 %v6062, %v6514
  %v6617 = vadd.f32 %v6063, %v6519
  %v6618 = vadd.f32 %v6064, %v6522
  %v6619 = vadd.f32 %v6065, %v6527
  %v6620 = vadd.f32 %v6066, %v6530
  %v6621 = vadd.f32 %v6067, %v6535
  %v6622 = vadd.f32 %v6068, %v6538
  %v6623 = vadd.f32 %v6069, %v6543
  %v6624 = vadd.f32 %v6070, %v6546
  %v6625 = vadd.f32 %v6071, %v6551
  %v6626 = vadd.f32 %v6072, %v6554
  %v6627 = vadd.f32 %v6073, %v6559
  %v6628 = vadd.f32 %v6074, %v6562
  %vm6629 = vcmask 31744
  %v6630 = vsel %vm6629, %v6565, 0.0
  %v6631 = vsel %vm6629, %v6566, 0.0
  %v6632 = vadd.f32 %v6630, %v6631
  %v6633 = vsel %vm6629, %v6567, 0.0
  %v6634 = vadd.f32 %v6632, %v6633
  %v6635 = vsel %vm6629, %v6568, 0.0
  %v6636 = vadd.f32 %v6634, %v6635
  %v6637 = vsel %vm6629, %v6569, 0.0
  %v6638 = vadd.f32 %v6636, %v6637
  %v6639 = vsel %vm6629, %v6570, 0.0
  %v6640 = vadd.f32 %v6638, %v6639
  %v6641 = vsel %vm6629, %v6571, 0.0
  %v6642 = vadd.f32 %v6640, %v6641
  %v6643 = vsel %vm6629, %v6572, 0.0
  %v6644 = vadd.f32 %v6642, %v6643
  %v6645 = vsel %vm6629, %v6573, 0.0
  %v6646 = vadd.f32 %v6644, %v6645
  %v6647 = vsel %vm6629, %v6574, 0.0
  %v6648 = vadd.f32 %v6646, %v6647
  %v6649 = vsel %vm6629, %v6575, 0.0
  %v6650 = vadd.f32 %v6648, %v6649
  %v6651 = vsel %vm6629, %v6576, 0.0
  %v6652 = vadd.f32 %v6650, %v6651
  %v6653 = vsel %vm6629, %v6577, 0.0
  %v6654 = vadd.f32 %v6652, %v6653
  %v6655 = vsel %vm6629, %v6578, 0.0
  %v6656 = vadd.f32 %v6654, %v6655
  %v6657 = vsel %vm6629, %v6579, 0.0
  %v6658 = vadd.f32 %v6656, %v6657
  %v6659 = vsel %vm6629, %v6580, 0.0
  %v6660 = vadd.f32 %v6658, %v6659
  %v6661 = vsel %vm6629, %v6581, 0.0
  %v6662 = vadd.f32 %v6660, %v6661
  %v6663 = vsel %vm6629, %v6582, 0.0
  %v6664 = vadd.f32 %v6662, %v6663
  %v6665 = vsel %vm6629, %v6583, 0.0
  %v6666 = vadd.f32 %v6664, %v6665
  %v6667 = vsel %vm6629, %v6584, 0.0
  %v6668 = vadd.f32 %v6666, %v6667
  %v6669 = vsel %vm6629, %v6585, 0.0
  %v6670 = vadd.f32 %v6668, %v6669
  %v6671 = vsel %vm6629, %v6586, 0.0
  %v6672 = vadd.f32 %v6670, %v6671
  %v6673 = vsel %vm6629, %v6587, 0.0
  %v6674 = vadd.f32 %v6672, %v6673
  %v6675 = vsel %vm6629, %v6588, 0.0
  %v6676 = vadd.f32 %v6674, %v6675
  %v6677 = vsel %vm6629, %v6589, 0.0
  %v6678 = vadd.f32 %v6676, %v6677
  %v6679 = vsel %vm6629, %v6590, 0.0
  %v6680 = vadd.f32 %v6678, %v6679
  %v6681 = vsel %vm6629, %v6591, 0.0
  %v6682 = vadd.f32 %v6680, %v6681
  %v6683 = vsel %vm6629, %v6592, 0.0
  %v6684 = vadd.f32 %v6682, %v6683
  %v6685 = vsel %vm6629, %v6593, 0.0
  %v6686 = vadd.f32 %v6684, %v6685
  %v6687 = vsel %vm6629, %v6594, 0.0
  %v6688 = vadd.f32 %v6686, %v6687
  %v6689 = vsel %vm6629, %v6595, 0.0
  %v6690 = vadd.f32 %v6688, %v6689
  %v6691 = vsel %vm6629, %v6596, 0.0
  %v6692 = vadd.f32 %v6690, %v6691
  %v6693 = vsel %vm6629, %v6597, 0.0
  %v6694 = vadd.f32 %v6692, %v6693
  %v6695 = vsel %vm6629, %v6598, 0.0
  %v6696 = vadd.f32 %v6694, %v6695
  %v6697 = vsel %vm6629, %v6599, 0.0
  %v6698 = vadd.f32 %v6696, %v6697
  %v6699 = vsel %vm6629, %v6600, 0.0
  %v6700 = vadd.f32 %v6698, %v6699
  %v6701 = vsel %vm6629, %v6601, 0.0
  %v6702 = vadd.f32 %v6700, %v6701
  %v6703 = vsel %vm6629, %v6602, 0.0
  %v6704 = vadd.f32 %v6702, %v6703
  %v6705 = vsel %vm6629, %v6603, 0.0
  %v6706 = vadd.f32 %v6704, %v6705
  %v6707 = vsel %vm6629, %v6604, 0.0
  %v6708 = vadd.f32 %v6706, %v6707
  %v6709 = vsel %vm6629, %v6605, 0.0
  %v6710 = vadd.f32 %v6708, %v6709
  %v6711 = vsel %vm6629, %v6606, 0.0
  %v6712 = vadd.f32 %v6710, %v6711
  %v6713 = vsel %vm6629, %v6607, 0.0
  %v6714 = vadd.f32 %v6712, %v6713
  %v6715 = vsel %vm6629, %v6608, 0.0
  %v6716 = vadd.f32 %v6714, %v6715
  %v6717 = vsel %vm6629, %v6609, 0.0
  %v6718 = vadd.f32 %v6716, %v6717
  %v6719 = vsel %vm6629, %v6610, 0.0
  %v6720 = vadd.f32 %v6718, %v6719
  %v6721 = vsel %vm6629, %v6611, 0.0
  %v6722 = vadd.f32 %v6720, %v6721
  %v6723 = vsel %vm6629, %v6612, 0.0
  %v6724 = vadd.f32 %v6722, %v6723
  %v6725 = vsel %vm6629, %v6613, 0.0
  %v6726 = vadd.f32 %v6724, %v6725
  %v6727 = vsel %vm6629, %v6614, 0.0
  %v6728 = vadd.f32 %v6726, %v6727
  %v6729 = vsel %vm6629, %v6615, 0.0
  %v6730 = vadd.f32 %v6728, %v6729
  %v6731 = vsel %vm6629, %v6616, 0.0
  %v6732 = vadd.f32 %v6730, %v6731
  %v6733 = vsel %vm6629, %v6617, 0.0
  %v6734 = vadd.f32 %v6732, %v6733
  %v6735 = vsel %vm6629, %v6618, 0.0
  %v6736 = vadd.f32 %v6734, %v6735
  %v6737 = vsel %vm6629, %v6619, 0.0
  %v6738 = vadd.f32 %v6736, %v6737
  %v6739 = vsel %vm6629, %v6620, 0.0
  %v6740 = vadd.f32 %v6738, %v6739
  %v6741 = vsel %vm6629, %v6621, 0.0
  %v6742 = vadd.f32 %v6740, %v6741
  %v6743 = vsel %vm6629, %v6622, 0.0
  %v6744 = vadd.f32 %v6742, %v6743
  %v6745 = vsel %vm6629, %v6623, 0.0
  %v6746 = vadd.f32 %v6744, %v6745
  %v6747 = vsel %vm6629, %v6624, 0.0
  %v6748 = vadd.f32 %v6746, %v6747
  %v6749 = vsel %vm6629, %v6625, 0.0
  %v6750 = vadd.f32 %v6748, %v6749
  %v6751 = vsel %vm6629, %v6626, 0.0
  %v6752 = vadd.f32 %v6750, %v6751
  %v6753 = vsel %vm6629, %v6627, 0.0
  %v6754 = vadd.f32 %v6752, %v6753
  %v6755 = vsel %vm6629, %v6628, 0.0
  %v6756 = vadd.f32 %v6754, %v6755
  %v6757 = vrot.slane %v6756, 4
  %v6758 = vadd.f32 %v6756, %v6757
  %v6759 = vrot.slane %v6758, 2
  %v6760 = vadd.f32 %v6758, %v6759
  %v6761 = vrot.slane %v6760, 1
  %v6762 = vadd.f32 %v6760, %v6761
  %v6763 = vmul.f32 %v6762, 0.001953125
  %v6764 = vmul.f32 %v6565, %v6565
  %v6765 = vmul.f32 %v6566, %v6566
  %v6766 = vmul.f32 %v6567, %v6567
  %v6767 = vmul.f32 %v6568, %v6568
  %v6768 = vmul.f32 %v6569, %v6569
  %v6769 = vmul.f32 %v6570, %v6570
  %v6770 = vmul.f32 %v6571, %v6571
  %v6771 = vmul.f32 %v6572, %v6572
  %v6772 = vmul.f32 %v6573, %v6573
  %v6773 = vmul.f32 %v6574, %v6574
  %v6774 = vmul.f32 %v6575, %v6575
  %v6775 = vmul.f32 %v6576, %v6576
  %v6776 = vmul.f32 %v6577, %v6577
  %v6777 = vmul.f32 %v6578, %v6578
  %v6778 = vmul.f32 %v6579, %v6579
  %v6779 = vmul.f32 %v6580, %v6580
  %v6780 = vmul.f32 %v6581, %v6581
  %v6781 = vmul.f32 %v6582, %v6582
  %v6782 = vmul.f32 %v6583, %v6583
  %v6783 = vmul.f32 %v6584, %v6584
  %v6784 = vmul.f32 %v6585, %v6585
  %v6785 = vmul.f32 %v6586, %v6586
  %v6786 = vmul.f32 %v6587, %v6587
  %v6787 = vmul.f32 %v6588, %v6588
  %v6788 = vmul.f32 %v6589, %v6589
  %v6789 = vmul.f32 %v6590, %v6590
  %v6790 = vmul.f32 %v6591, %v6591
  %v6791 = vmul.f32 %v6592, %v6592
  %v6792 = vmul.f32 %v6593, %v6593
  %v6793 = vmul.f32 %v6594, %v6594
  %v6794 = vmul.f32 %v6595, %v6595
  %v6795 = vmul.f32 %v6596, %v6596
  %v6796 = vmul.f32 %v6597, %v6597
  %v6797 = vmul.f32 %v6598, %v6598
  %v6798 = vmul.f32 %v6599, %v6599
  %v6799 = vmul.f32 %v6600, %v6600
  %v6800 = vmul.f32 %v6601, %v6601
  %v6801 = vmul.f32 %v6602, %v6602
  %v6802 = vmul.f32 %v6603, %v6603
  %v6803 = vmul.f32 %v6604, %v6604
  %v6804 = vmul.f32 %v6605, %v6605
  %v6805 = vmul.f32 %v6606, %v6606
  %v6806 = vmul.f32 %v6607, %v6607
  %v6807 = vmul.f32 %v6608, %v6608
  %v6808 = vmul.f32 %v6609, %v6609
  %v6809 = vmul.f32 %v6610, %v6610
  %v6810 = vmul.f32 %v6611, %v6611
  %v6811 = vmul.f32 %v6612, %v6612
  %v6812 = vmul.f32 %v6613, %v6613
  %v6813 = vmul.f32 %v6614, %v6614
  %v6814 = vmul.f32 %v6615, %v6615
  %v6815 = vmul.f32 %v6616, %v6616
  %v6816 = vmul.f32 %v6617, %v6617
  %v6817 = vmul.f32 %v6618, %v6618
  %v6818 = vmul.f32 %v6619, %v6619
  %v6819 = vmul.f32 %v6620, %v6620
  %v6820 = vmul.f32 %v6621, %v6621
  %v6821 = vmul.f32 %v6622, %v6622
  %v6822 = vmul.f32 %v6623, %v6623
  %v6823 = vmul.f32 %v6624, %v6624
  %v6824 = vmul.f32 %v6625, %v6625
  %v6825 = vmul.f32 %v6626, %v6626
  %v6826 = vmul.f32 %v6627, %v6627
  %v6827 = vmul.f32 %v6628, %v6628
  %v6828 = vsel %vm6629, %v6764, 0.0
  %v6829 = vsel %vm6629, %v6765, 0.0
  %v6830 = vadd.f32 %v6828, %v6829
  %v6831 = vsel %vm6629, %v6766, 0.0
  %v6832 = vadd.f32 %v6830, %v6831
  %v6833 = vsel %vm6629, %v6767, 0.0
  %v6834 = vadd.f32 %v6832, %v6833
  %v6835 = vsel %vm6629, %v6768, 0.0
  %v6836 = vadd.f32 %v6834, %v6835
  %v6837 = vsel %vm6629, %v6769, 0.0
  %v6838 = vadd.f32 %v6836, %v6837
  %v6839 = vsel %vm6629, %v6770, 0.0
  %v6840 = vadd.f32 %v6838, %v6839
  %v6841 = vsel %vm6629, %v6771, 0.0
  %v6842 = vadd.f32 %v6840, %v6841
  %v6843 = vsel %vm6629, %v6772, 0.0
  %v6844 = vadd.f32 %v6842, %v6843
  %v6845 = vsel %vm6629, %v6773, 0.0
  %v6846 = vadd.f32 %v6844, %v6845
  %v6847 = vsel %vm6629, %v6774, 0.0
  %v6848 = vadd.f32 %v6846, %v6847
  %v6849 = vsel %vm6629, %v6775, 0.0
  %v6850 = vadd.f32 %v6848, %v6849
  %v6851 = vsel %vm6629, %v6776, 0.0
  %v6852 = vadd.f32 %v6850, %v6851
  %v6853 = vsel %vm6629, %v6777, 0.0
  %v6854 = vadd.f32 %v6852, %v6853
  %v6855 = vsel %vm6629, %v6778, 0.0
  %v6856 = vadd.f32 %v6854, %v6855
  %v6857 = vsel %vm6629, %v6779, 0.0
  %v6858 = vadd.f32 %v6856, %v6857
  %v6859 = vsel %vm6629, %v6780, 0.0
  %v6860 = vadd.f32 %v6858, %v6859
  %v6861 = vsel %vm6629, %v6781, 0.0
  %v6862 = vadd.f32 %v6860, %v6861
  %v6863 = vsel %vm6629, %v6782, 0.0
  %v6864 = vadd.f32 %v6862, %v6863
  %v6865 = vsel %vm6629, %v6783, 0.0
  %v6866 = vadd.f32 %v6864, %v6865
  %v6867 = vsel %vm6629, %v6784, 0.0
  %v6868 = vadd.f32 %v6866, %v6867
  %v6869 = vsel %vm6629, %v6785, 0.0
  %v6870 = vadd.f32 %v6868, %v6869
  %v6871 = vsel %vm6629, %v6786, 0.0
  %v6872 = vadd.f32 %v6870, %v6871
  %v6873 = vsel %vm6629, %v6787, 0.0
  %v6874 = vadd.f32 %v6872, %v6873
  %v6875 = vsel %vm6629, %v6788, 0.0
  %v6876 = vadd.f32 %v6874, %v6875
  %v6877 = vsel %vm6629, %v6789, 0.0
  %v6878 = vadd.f32 %v6876, %v6877
  %v6879 = vsel %vm6629, %v6790, 0.0
  %v6880 = vadd.f32 %v6878, %v6879
  %v6881 = vsel %vm6629, %v6791, 0.0
  %v6882 = vadd.f32 %v6880, %v6881
  %v6883 = vsel %vm6629, %v6792, 0.0
  %v6884 = vadd.f32 %v6882, %v6883
  %v6885 = vsel %vm6629, %v6793, 0.0
  %v6886 = vadd.f32 %v6884, %v6885
  %v6887 = vsel %vm6629, %v6794, 0.0
  %v6888 = vadd.f32 %v6886, %v6887
  %v6889 = vsel %vm6629, %v6795, 0.0
  %v6890 = vadd.f32 %v6888, %v6889
  %v6891 = vsel %vm6629, %v6796, 0.0
  %v6892 = vadd.f32 %v6890, %v6891
  %v6893 = vsel %vm6629, %v6797, 0.0
  %v6894 = vadd.f32 %v6892, %v6893
  %v6895 = vsel %vm6629, %v6798, 0.0
  %v6896 = vadd.f32 %v6894, %v6895
  %v6897 = vsel %vm6629, %v6799, 0.0
  %v6898 = vadd.f32 %v6896, %v6897
  %v6899 = vsel %vm6629, %v6800, 0.0
  %v6900 = vadd.f32 %v6898, %v6899
  %v6901 = vsel %vm6629, %v6801, 0.0
  %v6902 = vadd.f32 %v6900, %v6901
  %v6903 = vsel %vm6629, %v6802, 0.0
  %v6904 = vadd.f32 %v6902, %v6903
  %v6905 = vsel %vm6629, %v6803, 0.0
  %v6906 = vadd.f32 %v6904, %v6905
  %v6907 = vsel %vm6629, %v6804, 0.0
  %v6908 = vadd.f32 %v6906, %v6907
  %v6909 = vsel %vm6629, %v6805, 0.0
  %v6910 = vadd.f32 %v6908, %v6909
  %v6911 = vsel %vm6629, %v6806, 0.0
  %v6912 = vadd.f32 %v6910, %v6911
  %v6913 = vsel %vm6629, %v6807, 0.0
  %v6914 = vadd.f32 %v6912, %v6913
  %v6915 = vsel %vm6629, %v6808, 0.0
  %v6916 = vadd.f32 %v6914, %v6915
  %v6917 = vsel %vm6629, %v6809, 0.0
  %v6918 = vadd.f32 %v6916, %v6917
  %v6919 = vsel %vm6629, %v6810, 0.0
  %v6920 = vadd.f32 %v6918, %v6919
  %v6921 = vsel %vm6629, %v6811, 0.0
  %v6922 = vadd.f32 %v6920, %v6921
  %v6923 = vsel %vm6629, %v6812, 0.0
  %v6924 = vadd.f32 %v6922, %v6923
  %v6925 = vsel %vm6629, %v6813, 0.0
  %v6926 = vadd.f32 %v6924, %v6925
  %v6927 = vsel %vm6629, %v6814, 0.0
  %v6928 = vadd.f32 %v6926, %v6927
  %v6929 = vsel %vm6629, %v6815, 0.0
  %v6930 = vadd.f32 %v6928, %v6929
  %v6931 = vsel %vm6629, %v6816, 0.0
  %v6932 = vadd.f32 %v6930, %v6931
  %v6933 = vsel %vm6629, %v6817, 0.0
  %v6934 = vadd.f32 %v6932, %v6933
  %v6935 = vsel %vm6629, %v6818, 0.0
  %v6936 = vadd.f32 %v6934, %v6935
  %v6937 = vsel %vm6629, %v6819, 0.0
  %v6938 = vadd.f32 %v6936, %v6937
  %v6939 = vsel %vm6629, %v6820, 0.0
  %v6940 = vadd.f32 %v6938, %v6939
  %v6941 = vsel %vm6629, %v6821, 0.0
  %v6942 = vadd.f32 %v6940, %v6941
  %v6943 = vsel %vm6629, %v6822, 0.0
  %v6944 = vadd.f32 %v6942, %v6943
  %v6945 = vsel %vm6629, %v6823, 0.0
  %v6946 = vadd.f32 %v6944, %v6945
  %v6947 = vsel %vm6629, %v6824, 0.0
  %v6948 = vadd.f32 %v6946, %v6947
  %v6949 = vsel %vm6629, %v6825, 0.0
  %v6950 = vadd.f32 %v6948, %v6949
  %v6951 = vsel %vm6629, %v6826, 0.0
  %v6952 = vadd.f32 %v6950, %v6951
  %v6953 = vsel %vm6629, %v6827, 0.0
  %v6954 = vadd.f32 %v6952, %v6953
  %v6955 = vrot.slane %v6954, 4
  %v6956 = vadd.f32 %v6954, %v6955
  %v6957 = vrot.slane %v6956, 2
  %v6958 = vadd.f32 %v6956, %v6957
  %v6959 = vrot.slane %v6958, 1
  %v6960 = vadd.f32 %v6958, %v6959
  %v6961 = vmul.f32 %v6960, 0.001953125
  %v6962 = vmul.f32 %v6763, %v6763
  %v6963 = vsub.f32 %v6961, %v6962
  %v6964 = vmax.f32 %v6963, 0.0
  %v6965 = vld [vmem:[%s5] sm:$0x1]
  %v6966 = vadd.f32 %v6964, 1e-05
  %v6967 = vrsqrt.pop %v6966
  %v6968 = vmul.f32 %v6965, %v6967
  %v6969 = vld [vmem:[%s6] sm:$0x1]
  %v6970 = vmul.f32 %v6763, %v6968
  %v6971 = vsub.f32 %v6969, %v6970
  %v6973 = vlaneseq
  %v6974 = vshrl.u32 %v6973, 7
  %v6975 = vsub.s32 0, %v6974
  %v6976 = vrot.slane %v6968, %v6975
  %v6978 = vmul.f32 %v6565, %v6976
  %v6979 = vmul.f32 %v6566, %v6976
  %v6980 = vmul.f32 %v6567, %v6976
  %v6981 = vmul.f32 %v6568, %v6976
  %v6982 = vmul.f32 %v6569, %v6976
  %v6983 = vmul.f32 %v6570, %v6976
  %v6984 = vmul.f32 %v6571, %v6976
  %v6985 = vmul.f32 %v6572, %v6976
  %v6986 = vmul.f32 %v6573, %v6976
  %v6987 = vmul.f32 %v6574, %v6976
  %v6988 = vmul.f32 %v6575, %v6976
  %v6989 = vmul.f32 %v6576, %v6976
  %v6990 = vmul.f32 %v6577, %v6976
  %v6991 = vmul.f32 %v6578, %v6976
  %v6992 = vmul.f32 %v6579, %v6976
  %v6993 = vmul.f32 %v6580, %v6976
  %v6994 = vmul.f32 %v6581, %v6976
  %v6995 = vmul.f32 %v6582, %v6976
  %v6996 = vmul.f32 %v6583, %v6976
  %v6997 = vmul.f32 %v6584, %v6976
  %v6998 = vmul.f32 %v6585, %v6976
  %v6999 = vmul.f32 %v6586, %v6976
  %v7000 = vmul.f32 %v6587, %v6976
  %v7001 = vmul.f32 %v6588, %v6976
  %v7002 = vmul.f32 %v6589, %v6976
  %v7003 = vmul.f32 %v6590, %v6976
  %v7004 = vmul.f32 %v6591, %v6976
  %v7005 = vmul.f32 %v6592, %v6976
  %v7006 = vmul.f32 %v6593, %v6976
  %v7007 = vmul.f32 %v6594, %v6976
  %v7008 = vmul.f32 %v6595, %v6976
  %v7009 = vmul.f32 %v6596, %v6976
  %v7010 = vmul.f32 %v6597, %v6976
  %v7011 = vmul.f32 %v6598, %v6976
  %v7012 = vmul.f32 %v6599, %v6976
  %v7013 = vmul.f32 %v6600, %v6976
  %v7014 = vmul.f32 %v6601, %v6976
  %v7015 = vmul.f32 %v6602, %v6976
  %v7016 = vmul.f32 %v6603, %v6976
  %v7017 = vmul.f32 %v6604, %v6976
  %v7018 = vmul.f32 %v6605, %v6976
  %v7019 = vmul.f32 %v6606, %v6976
  %v7020 = vmul.f32 %v6607, %v6976
  %v7021 = vmul.f32 %v6608, %v6976
  %v7022 = vmul.f32 %v6609, %v6976
  %v7023 = vmul.f32 %v6610, %v6976
  %v7024 = vmul.f32 %v6611, %v6976
  %v7025 = vmul.f32 %v6612, %v6976
  %v7026 = vmul.f32 %v6613, %v6976
  %v7027 = vmul.f32 %v6614, %v6976
  %v7028 = vmul.f32 %v6615, %v6976
  %v7029 = vmul.f32 %v6616, %v6976
  %v7030 = vmul.f32 %v6617, %v6976
  %v7031 = vmul.f32 %v6618, %v6976
  %v7032 = vmul.f32 %v6619, %v6976
  %v7033 = vmul.f32 %v6620, %v6976
  %v7034 = vmul.f32 %v6621, %v6976
  %v7035 = vmul.f32 %v6622, %v6976
  %v7036 = vmul.f32 %v6623, %v6976
  %v7037 = vmul.f32 %v6624, %v6976
  %v7038 = vmul.f32 %v6625, %v6976
  %v7039 = vmul.f32 %v6626, %v6976
  %v7040 = vmul.f32 %v6627, %v6976
  %v7041 = vmul.f32 %v6628, %v6976
  %v7043 = vlaneseq
  %v7044 = vshrl.u32 %v7043, 7
  %v7045 = vsub.s32 0, %v7044
  %v7046 = vrot.slane %v6971, %v7045
  %v7048 = vadd.f32 %v6978, %v7046
  %v7049 = vadd.f32 %v6979, %v7046
  %v7050 = vadd.f32 %v6980, %v7046
  %v7051 = vadd.f32 %v6981, %v7046
  %v7052 = vadd.f32 %v6982, %v7046
  %v7053 = vadd.f32 %v6983, %v7046
  %v7054 = vadd.f32 %v6984, %v7046
  %v7055 = vadd.f32 %v6985, %v7046
  %v7056 = vadd.f32 %v6986, %v7046
  %v7057 = vadd.f32 %v6987, %v7046
  %v7058 = vadd.f32 %v6988, %v7046
  %v7059 = vadd.f32 %v6989, %v7046
  %v7060 = vadd.f32 %v6990, %v7046
  %v7061 = vadd.f32 %v6991, %v7046
  %v7062 = vadd.f32 %v6992, %v7046
  %v7063 = vadd.f32 %v6993, %v7046
  %v7064 = vadd.f32 %v6994, %v7046
  %v7065 = vadd.f32 %v6995, %v7046
  %v7066 = vadd.f32 %v6996, %v7046
  %v7067 = vadd.f32 %v6997, %v7046
  %v7068 = vadd.f32 %v6998, %v7046
  %v7069 = vadd.f32 %v6999, %v7046
  %v7070 = vadd.f32 %v7000, %v7046
  %v7071 = vadd.f32 %v7001, %v7046
  %v7072 = vadd.f32 %v7002, %v7046
  %v7073 = vadd.f32 %v7003, %v7046
  %v7074 = vadd.f32 %v7004, %v7046
  %v7075 = vadd.f32 %v7005, %v7046
  %v7076 = vadd.f32 %v7006, %v7046
  %v7077 = vadd.f32 %v7007, %v7046
  %v7078 = vadd.f32 %v7008, %v7046
  %v7079 = vadd.f32 %v7009, %v7046
  %v7080 = vadd.f32 %v7010, %v7046
  %v7081 = vadd.f32 %v7011, %v7046
  %v7082 = vadd.f32 %v7012, %v7046
  %v7083 = vadd.f32 %v7013, %v7046
  %v7084 = vadd.f32 %v7014, %v7046
  %v7085 = vadd.f32 %v7015, %v7046
  %v7086 = vadd.f32 %v7016, %v7046
  %v7087 = vadd.f32 %v7017, %v7046
  %v7088 = vadd.f32 %v7018, %v7046
  %v7089 = vadd.f32 %v7019, %v7046
  %v7090 = vadd.f32 %v7020, %v7046
  %v7091 = vadd.f32 %v7021, %v7046
  %v7092 = vadd.f32 %v7022, %v7046
  %v7093 = vadd.f32 %v7023, %v7046
  %v7094 = vadd.f32 %v7024, %v7046
  %v7095 = vadd.f32 %v7025, %v7046
  %v7096 = vadd.f32 %v7026, %v7046
  %v7097 = vadd.f32 %v7027, %v7046
  %v7098 = vadd.f32 %v7028, %v7046
  %v7099 = vadd.f32 %v7029, %v7046
  %v7100 = vadd.f32 %v7030, %v7046
  %v7101 = vadd.f32 %v7031, %v7046
  %v7102 = vadd.f32 %v7032, %v7046
  %v7103 = vadd.f32 %v7033, %v7046
  %v7104 = vadd.f32 %v7034, %v7046
  %v7105 = vadd.f32 %v7035, %v7046
  %v7106 = vadd.f32 %v7036, %v7046
  %v7107 = vadd.f32 %v7037, %v7046
  %v7108 = vadd.f32 %v7038, %v7046
  %v7109 = vadd.f32 %v7039, %v7046
  %v7110 = vadd.f32 %v7040, %v7046
  %v7111 = vadd.f32 %v7041, %v7046
  %v7112 = vmax.f32 %v7048, 0.0
  %v7113 = vmax.f32 %v7049, 0.0
  %v7114 = vmax.f32 %v7050, 0.0
  %v7115 = vmax.f32 %v7051, 0.0
  %v7116 = vmax.f32 %v7052, 0.0
  %v7117 = vmax.f32 %v7053, 0.0
  %v7118 = vmax.f32 %v7054, 0.0
  %v7119 = vmax.f32 %v7055, 0.0
  %v7120 = vmax.f32 %v7056, 0.0
  %v7121 = vmax.f32 %v7057, 0.0
  %v7122 = vmax.f32 %v7058, 0.0
  %v7123 = vmax.f32 %v7059, 0.0
  %v7124 = vmax.f32 %v7060, 0.0
  %v7125 = vmax.f32 %v7061, 0.0
  %v7126 = vmax.f32 %v7062, 0.0
  %v7127 = vmax.f32 %v7063, 0.0
  %v7128 = vmax.f32 %v7064, 0.0
  %v7129 = vmax.f32 %v7065, 0.0
  %v7130 = vmax.f32 %v7066, 0.0
  %v7131 = vmax.f32 %v7067, 0.0
  %v7132 = vmax.f32 %v7068, 0.0
  %v7133 = vmax.f32 %v7069, 0.0
  %v7134 = vmax.f32 %v7070, 0.0
  %v7135 = vmax.f32 %v7071, 0.0
  %v7136 = vmax.f32 %v7072, 0.0
  %v7137 = vmax.f32 %v7073, 0.0
  %v7138 = vmax.f32 %v7074, 0.0
  %v7139 = vmax.f32 %v7075, 0.0
  %v7140 = vmax.f32 %v7076, 0.0
  %v7141 = vmax.f32 %v7077, 0.0
  %v7142 = vmax.f32 %v7078, 0.0
  %v7143 = vmax.f32 %v7079, 0.0
  %v7144 = vmax.f32 %v7080, 0.0
  %v7145 = vmax.f32 %v7081, 0.0
  %v7146 = vmax.f32 %v7082, 0.0
  %v7147 = vmax.f32 %v7083, 0.0
  %v7148 = vmax.f32 %v7084, 0.0
  %v7149 = vmax.f32 %v7085, 0.0
  %v7150 = vmax.f32 %v7086, 0.0
  %v7151 = vmax.f32 %v7087, 0.0
  %v7152 = vmax.f32 %v7088, 0.0
  %v7153 = vmax.f32 %v7089, 0.0
  %v7154 = vmax.f32 %v7090, 0.0
  %v7155 = vmax.f32 %v7091, 0.0
  %v7156 = vmax.f32 %v7092, 0.0
  %v7157 = vmax.f32 %v7093, 0.0
  %v7158 = vmax.f32 %v7094, 0.0
  %v7159 = vmax.f32 %v7095, 0.0
  %v7160 = vmax.f32 %v7096, 0.0
  %v7161 = vmax.f32 %v7097, 0.0
  %v7162 = vmax.f32 %v7098, 0.0
  %v7163 = vmax.f32 %v7099, 0.0
  %v7164 = vmax.f32 %v7100, 0.0
  %v7165 = vmax.f32 %v7101, 0.0
  %v7166 = vmax.f32 %v7102, 0.0
  %v7167 = vmax.f32 %v7103, 0.0
  %v7168 = vmax.f32 %v7104, 0.0
  %v7169 = vmax.f32 %v7105, 0.0
  %v7170 = vmax.f32 %v7106, 0.0
  %v7171 = vmax.f32 %v7107, 0.0
  %v7172 = vmax.f32 %v7108, 0.0
  %v7173 = vmax.f32 %v7109, 0.0
  %v7174 = vmax.f32 %v7110, 0.0
  %v7175 = vmax.f32 %v7111, 0.0
  %s7176 = scalar_lea.vmem [#allocation3], 24
  %7177 = vst.msk [vmem:[%s7176 + $0x1] sm:$0xff] %vm6629, %v7112
  %7178 = vst.msk [vmem:[%s7176 + $0x9] sm:$0xff] %vm6629, %v7113
  %7179 = vst.msk [vmem:[%s7176 + $0x19] sm:$0xff] %vm6629, %v7114
  %7180 = vst.msk [vmem:[%s7176 + $0x21] sm:$0xff] %vm6629, %v7115
  %7181 = vst.msk [vmem:[%s7176 + $0x31] sm:$0xff] %vm6629, %v7116
  %7182 = vst.msk [vmem:[%s7176 + $0x39] sm:$0xff] %vm6629, %v7117
  %7183 = vst.msk [vmem:[%s7176 + $0x49] sm:$0xff] %vm6629, %v7118
  %7184 = vst.msk [vmem:[%s7176 + $0x51] sm:$0xff] %vm6629, %v7119
  %7185 = vst.msk [vmem:[%s7176 + $0x61] sm:$0xff] %vm6629, %v7120
  %7186 = vst.msk [vmem:[%s7176 + $0x69] sm:$0xff] %vm6629, %v7121
  %7187 = vst.msk [vmem:[%s7176 + $0x79] sm:$0xff] %vm6629, %v7122
  %7188 = vst.msk [vmem:[%s7176 + $0x81] sm:$0xff] %vm6629, %v7123
  %7189 = vst.msk [vmem:[%s7176 + $0x91] sm:$0xff] %vm6629, %v7124
  %7190 = vst.msk [vmem:[%s7176 + $0x99] sm:$0xff] %vm6629, %v7125
  %7191 = vst.msk [vmem:[%s7176 + $0xa9] sm:$0xff] %vm6629, %v7126
  %7192 = vst.msk [vmem:[%s7176 + $0xb1] sm:$0xff] %vm6629, %v7127
  %7193 = vst.msk [vmem:[%s7176 + $0xc1] sm:$0xff] %vm6629, %v7128
  %7194 = vst.msk [vmem:[%s7176 + $0xc9] sm:$0xff] %vm6629, %v7129
  %7195 = vst.msk [vmem:[%s7176 + $0xd9] sm:$0xff] %vm6629, %v7130
  %7196 = vst.msk [vmem:[%s7176 + $0xe1] sm:$0xff] %vm6629, %v7131
  %7197 = vst.msk [vmem:[%s7176 + $0xf1] sm:$0xff] %vm6629, %v7132
  %7198 = vst.msk [vmem:[%s7176 + $0xf9] sm:$0xff] %vm6629, %v7133
  %7199 = vst.msk [vmem:[%s7176 + $0x109] sm:$0xff] %vm6629, %v7134
  %7200 = vst.msk [vmem:[%s7176 + $0x111] sm:$0xff] %vm6629, %v7135
  %7201 = vst.msk [vmem:[%s7176 + $0x121] sm:$0xff] %vm6629, %v7136
  %7202 = vst.msk [vmem:[%s7176 + $0x129] sm:$0xff] %vm6629, %v7137
  %7203 = vst.msk [vmem:[%s7176 + $0x139] sm:$0xff] %vm6629, %v7138
  %7204 = vst.msk [vmem:[%s7176 + $0x141] sm:$0xff] %vm6629, %v7139
  %7205 = vst.msk [vmem:[%s7176 + $0x151] sm:$0xff] %vm6629, %v7140
  %7206 = vst.msk [vmem:[%s7176 + $0x159] sm:$0xff] %vm6629, %v7141
  %7207 = vst.msk [vmem:[%s7176 + $0x169] sm:$0xff] %vm6629, %v7142
  %7208 = vst.msk [vmem:[%s7176 + $0x171] sm:$0xff] %vm6629, %v7143
  %7209 = vst.msk [vmem:[%s7176 + $0x1b1] sm:$0xff] %vm6629, %v7144
  %7210 = vst.msk [vmem:[%s7176 + $0x1b9] sm:$0xff] %vm6629, %v7145
  %7211 = vst.msk [vmem:[%s7176 + $0x1c9] sm:$0xff] %vm6629, %v7146
  %7212 = vst.msk [vmem:[%s7176 + $0x1d1] sm:$0xff] %vm6629, %v7147
  %7213 = vst.msk [vmem:[%s7176 + $0x1e1] sm:$0xff] %vm6629, %v7148
  %7214 = vst.msk [vmem:[%s7176 + $0x1e9] sm:$0xff] %vm6629, %v7149
  %7215 = vst.msk [vmem:[%s7176 + $0x1f9] sm:$0xff] %vm6629, %v7150
  %7216 = vst.msk [vmem:[%s7176 + $0x201] sm:$0xff] %vm6629, %v7151
  %7217 = vst.msk [vmem:[%s7176 + $0x211] sm:$0xff] %vm6629, %v7152
  %7218 = vst.msk [vmem:[%s7176 + $0x219] sm:$0xff] %vm6629, %v7153
  %7219 = vst.msk [vmem:[%s7176 + $0x229] sm:$0xff] %vm6629, %v7154
  %7220 = vst.msk [vmem:[%s7176 + $0x231] sm:$0xff] %vm6629, %v7155
  %7221 = vst.msk [vmem:[%s7176 + $0x241] sm:$0xff] %vm6629, %v7156
  %7222 = vst.msk [vmem:[%s7176 + $0x249] sm:$0xff] %vm6629, %v7157
  %7223 = vst.msk [vmem:[%s7176 + $0x259] sm:$0xff] %vm6629, %v7158
  %7224 = vst.msk [vmem:[%s7176 + $0x261] sm:$0xff] %vm6629, %v7159
  %7225 = vst.msk [vmem:[%s7176 + $0x271] sm:$0xff] %vm6629, %v7160
  %7226 = vst.msk [vmem:[%s7176 + $0x279] sm:$0xff] %vm6629, %v7161
  %7227 = vst.msk [vmem:[%s7176 + $0x289] sm:$0xff] %vm6629, %v7162
  %7228 = vst.msk [vmem:[%s7176 + $0x291] sm:$0xff] %vm6629, %v7163
  %7229 = vst.msk [vmem:[%s7176 + $0x2a1] sm:$0xff] %vm6629, %v7164
  %7230 = vst.msk [vmem:[%s7176 + $0x2a9] sm:$0xff] %vm6629, %v7165
  %7231 = vst.msk [vmem:[%s7176 + $0x2b9] sm:$0xff] %vm6629, %v7166
  %7232 = vst.msk [vmem:[%s7176 + $0x2c1] sm:$0xff] %vm6629, %v7167
  %7233 = vst.msk [vmem:[%s7176 + $0x2d1] sm:$0xff] %vm6629, %v7168
  %7234 = vst.msk [vmem:[%s7176 + $0x2d9] sm:$0xff] %vm6629, %v7169
  %7235 = vst.msk [vmem:[%s7176 + $0x2e9] sm:$0xff] %vm6629, %v7170
  %7236 = vst.msk [vmem:[%s7176 + $0x2f1] sm:$0xff] %vm6629, %v7171
  %7237 = vst.msk [vmem:[%s7176 + $0x301] sm:$0xff] %vm6629, %v7172
  %7238 = vst.msk [vmem:[%s7176 + $0x309] sm:$0xff] %vm6629, %v7173
  %7239 = vst.msk [vmem:[%s7176 + $0x319] sm:$0xff] %vm6629, %v7174
  %7240 = vst.msk [vmem:[%s7176 + $0x321] sm:$0xff] %vm6629, %v7175
  %7241 = vst.msk [vmem:[#allocation3] sm:$0xff] %vm6629, 0.0
  %7242 = vst.msk [vmem:[#allocation3 + $0x8] sm:$0xff] %vm6629, 0.0
  %vm7243 = vcmask 25600
  %7244 = vst.msk [vmem:[#allocation3 + $0x10] sm:$0x3] %vm7243, 0.0
  %7245 = vst.msk [vmem:[#allocation3 + $0x1b0] sm:$0xff] %vm6629, 0.0
  %7246 = vst.msk [vmem:[#allocation3 + $0x1b8] sm:$0xff] %vm6629, 0.0
  %7247 = vst.msk [vmem:[#allocation3 + $0x1c0] sm:$0x3] %vm7243, 0.0
  %s7248 = scalar_lea.vmem [#allocation3], 408
  %7249 = vst.msk [vmem:[%s7248] sm:$0xff] %vm6629, 0.0
  %7250 = vst.msk [vmem:[%s7248 + $0x8] sm:$0xff] %vm6629, 0.0
  %7251 = vst.msk [vmem:[%s7248 + $0x10] sm:$0x3] %vm7243, 0.0
  %7252 = vst.msk [vmem:[%s7248 + $0x1b0] sm:$0xff] %vm6629, 0.0
  %7253 = vst.msk [vmem:[%s7248 + $0x1b8] sm:$0xff] %vm6629, 0.0
  %7254 = vst.msk [vmem:[%s7248 + $0x1c0] sm:$0x3] %vm7243, 0.0
  %vm7255 = vcmask 24576
  %7256 = vst.msk [vmem:[#allocation3] sm:$0x1] %vm7255, 0.0
  %7257 = vst.msk [vmem:[#allocation3 + $0x18] sm:$0x1] %vm7255, 0.0
  %7258 = vst.msk [vmem:[#allocation3 + $0x30] sm:$0x1] %vm7255, 0.0
  %7259 = vst.msk [vmem:[#allocation3 + $0x48] sm:$0x1] %vm7255, 0.0
  %7260 = vst.msk [vmem:[#allocation3 + $0x60] sm:$0x1] %vm7255, 0.0
  %7261 = vst.msk [vmem:[#allocation3 + $0x78] sm:$0x1] %vm7255, 0.0
  %7262 = vst.msk [vmem:[#allocation3 + $0x90] sm:$0x1] %vm7255, 0.0
  %7263 = vst.msk [vmem:[#allocation3 + $0xa8] sm:$0x1] %vm7255, 0.0
  %7264 = vst.msk [vmem:[#allocation3 + $0xc0] sm:$0x1] %vm7255, 0.0
  %7265 = vst.msk [vmem:[#allocation3 + $0xd8] sm:$0x1] %vm7255, 0.0
  %7266 = vst.msk [vmem:[#allocation3 + $0xf0] sm:$0x1] %vm7255, 0.0
  %7267 = vst.msk [vmem:[#allocation3 + $0x108] sm:$0x1] %vm7255, 0.0
  %7268 = vst.msk [vmem:[#allocation3 + $0x120] sm:$0x1] %vm7255, 0.0
  %7269 = vst.msk [vmem:[#allocation3 + $0x138] sm:$0x1] %vm7255, 0.0
  %7270 = vst.msk [vmem:[#allocation3 + $0x150] sm:$0x1] %vm7255, 0.0
  %7271 = vst.msk [vmem:[#allocation3 + $0x168] sm:$0x1] %vm7255, 0.0
  %7272 = vst.msk [vmem:[#allocation3 + $0x180] sm:$0x1] %vm7255, 0.0
  %7273 = vst.msk [vmem:[#allocation3 + $0x198] sm:$0x1] %vm7255, 0.0
  %7274 = vst.msk [vmem:[#allocation3 + $0x1b0] sm:$0x1] %vm7255, 0.0
  %7275 = vst.msk [vmem:[#allocation3 + $0x1c8] sm:$0x1] %vm7255, 0.0
  %7276 = vst.msk [vmem:[#allocation3 + $0x1e0] sm:$0x1] %vm7255, 0.0
  %7277 = vst.msk [vmem:[#allocation3 + $0x1f8] sm:$0x1] %vm7255, 0.0
  %7278 = vst.msk [vmem:[#allocation3 + $0x210] sm:$0x1] %vm7255, 0.0
  %7279 = vst.msk [vmem:[#allocation3 + $0x228] sm:$0x1] %vm7255, 0.0
  %7280 = vst.msk [vmem:[#allocation3 + $0x240] sm:$0x1] %vm7255, 0.0
  %7281 = vst.msk [vmem:[#allocation3 + $0x258] sm:$0x1] %vm7255, 0.0
  %7282 = vst.msk [vmem:[#allocation3 + $0x270] sm:$0x1] %vm7255, 0.0
  %7283 = vst.msk [vmem:[#allocation3 + $0x288] sm:$0x1] %vm7255, 0.0
  %7284 = vst.msk [vmem:[#allocation3 + $0x2a0] sm:$0x1] %vm7255, 0.0
  %7285 = vst.msk [vmem:[#allocation3 + $0x2b8] sm:$0x1] %vm7255, 0.0
  %7286 = vst.msk [vmem:[#allocation3 + $0x2d0] sm:$0x1] %vm7255, 0.0
  %7287 = vst.msk [vmem:[#allocation3 + $0x2e8] sm:$0x1] %vm7255, 0.0
  %7288 = vst.msk [vmem:[#allocation3 + $0x300] sm:$0x1] %vm7255, 0.0
  %7289 = vst.msk [vmem:[#allocation3 + $0x318] sm:$0x1] %vm7255, 0.0
  %7290 = vst.msk [vmem:[#allocation3 + $0x330] sm:$0x1] %vm7255, 0.0
  %7291 = vst.msk [vmem:[#allocation3 + $0x348] sm:$0x1] %vm7255, 0.0
  %7292 = vst.msk [vmem:[#allocation3 + $0x11] sm:$0x1] %vm7255, 0.0
  %7293 = vst.msk [vmem:[#allocation3 + $0x29] sm:$0x1] %vm7255, 0.0
  %7294 = vst.msk [vmem:[#allocation3 + $0x41] sm:$0x1] %vm7255, 0.0
  %7295 = vst.msk [vmem:[#allocation3 + $0x59] sm:$0x1] %vm7255, 0.0
  %7296 = vst.msk [vmem:[#allocation3 + $0x71] sm:$0x1] %vm7255, 0.0
  %7297 = vst.msk [vmem:[#allocation3 + $0x89] sm:$0x1] %vm7255, 0.0
  %7298 = vst.msk [vmem:[#allocation3 + $0xa1] sm:$0x1] %vm7255, 0.0
  %7299 = vst.msk [vmem:[#allocation3 + $0xb9] sm:$0x1] %vm7255, 0.0
  %7300 = vst.msk [vmem:[#allocation3 + $0xd1] sm:$0x1] %vm7255, 0.0
  %7301 = vst.msk [vmem:[#allocation3 + $0xe9] sm:$0x1] %vm7255, 0.0
  %7302 = vst.msk [vmem:[#allocation3 + $0x101] sm:$0x1] %vm7255, 0.0
  %7303 = vst.msk [vmem:[#allocation3 + $0x119] sm:$0x1] %vm7255, 0.0
  %7304 = vst.msk [vmem:[#allocation3 + $0x131] sm:$0x1] %vm7255, 0.0
  %7305 = vst.msk [vmem:[#allocation3 + $0x149] sm:$0x1] %vm7255, 0.0
  %7306 = vst.msk [vmem:[#allocation3 + $0x161] sm:$0x1] %vm7255, 0.0
  %7307 = vst.msk [vmem:[#allocation3 + $0x179] sm:$0x1] %vm7255, 0.0
  %7308 = vst.msk [vmem:[#allocation3 + $0x191] sm:$0x1] %vm7255, 0.0
  %7309 = vst.msk [vmem:[#allocation3 + $0x1a9] sm:$0x1] %vm7255, 0.0
  %7310 = vst.msk [vmem:[#allocation3 + $0x1c1] sm:$0x1] %vm7255, 0.0
  %7311 = vst.msk [vmem:[#allocation3 + $0x1d9] sm:$0x1] %vm7255, 0.0
  %7312 = vst.msk [vmem:[#allocation3 + $0x1f1] sm:$0x1] %vm7255, 0.0
  %7313 = vst.msk [vmem:[#allocation3 + $0x209] sm:$0x1] %vm7255, 0.0
  %7314 = vst.msk [vmem:[#allocation3 + $0x221] sm:$0x1] %vm7255, 0.0
  %7315 = vst.msk [vmem:[#allocation3 + $0x239] sm:$0x1] %vm7255, 0.0
  %7316 = vst.msk [vmem:[#allocation3 + $0x251] sm:$0x1] %vm7255, 0.0
  %7317 = vst.msk [vmem:[#allocation3 + $0x269] sm:$0x1] %vm7255, 0.0
  %7318 = vst.msk [vmem:[#allocation3 + $0x281] sm:$0x1] %vm7255, 0.0
  %7319 = vst.msk [vmem:[#allocation3 + $0x299] sm:$0x1] %vm7255, 0.0
  %7320 = vst.msk [vmem:[#allocation3 + $0x2b1] sm:$0x1] %vm7255, 0.0
  %7321 = vst.msk [vmem:[#allocation3 + $0x2c9] sm:$0x1] %vm7255, 0.0
  %7322 = vst.msk [vmem:[#allocation3 + $0x2e1] sm:$0x1] %vm7255, 0.0
  %7323 = vst.msk [vmem:[#allocation3 + $0x2f9] sm:$0x1] %vm7255, 0.0
  %7324 = vst.msk [vmem:[#allocation3 + $0x311] sm:$0x1] %vm7255, 0.0
  %7325 = vst.msk [vmem:[#allocation3 + $0x329] sm:$0x1] %vm7255, 0.0
  %7326 = vst.msk [vmem:[#allocation3 + $0x341] sm:$0x1] %vm7255, 0.0
  %7327 = vst.msk [vmem:[#allocation3 + $0x359] sm:$0x1] %vm7255, 0.0
  %v7328 = vld [vmem:[#allocation3] sm:$0xff]
  %v7329 = vld [vmem:[#allocation3 + $0x8] sm:$0xff]
  %v7330 = vld [vmem:[#allocation3 + $0x18] sm:$0xff]
  %v7331 = vld [vmem:[#allocation3 + $0x20] sm:$0xff]
  %v7332 = vld [vmem:[#allocation3 + $0x30] sm:$0xff]
  %v7333 = vld [vmem:[#allocation3 + $0x38] sm:$0xff]
  %v7334 = vld [vmem:[#allocation3 + $0x48] sm:$0xff]
  %v7335 = vld [vmem:[#allocation3 + $0x50] sm:$0xff]
  %v7336 = vld [vmem:[#allocation3 + $0x60] sm:$0xff]
  %v7337 = vld [vmem:[#allocation3 + $0x68] sm:$0xff]
  %v7338 = vld [vmem:[#allocation3 + $0x78] sm:$0xff]
  %v7339 = vld [vmem:[#allocation3 + $0x80] sm:$0xff]
  %v7340 = vld [vmem:[#allocation3 + $0x90] sm:$0xff]
  %v7341 = vld [vmem:[#allocation3 + $0x98] sm:$0xff]
  %v7342 = vld [vmem:[#allocation3 + $0xa8] sm:$0xff]
  %v7343 = vld [vmem:[#allocation3 + $0xb0] sm:$0xff]
  %v7344 = vld [vmem:[#allocation3 + $0xc0] sm:$0xff]
  %v7345 = vld [vmem:[#allocation3 + $0xc8] sm:$0xff]
  %v7346 = vld [vmem:[#allocation3 + $0xd8] sm:$0xff]
  %v7347 = vld [vmem:[#allocation3 + $0xe0] sm:$0xff]
  %v7348 = vld [vmem:[#allocation3 + $0xf0] sm:$0xff]
  %v7349 = vld [vmem:[#allocation3 + $0xf8] sm:$0xff]
  %v7350 = vld [vmem:[#allocation3 + $0x108] sm:$0xff]
  %v7351 = vld [vmem:[#allocation3 + $0x110] sm:$0xff]
  %v7352 = vld [vmem:[#allocation3 + $0x120] sm:$0xff]
  %v7353 = vld [vmem:[#allocation3 + $0x128] sm:$0xff]
  %v7354 = vld [vmem:[#allocation3 + $0x138] sm:$0xff]
  %v7355 = vld [vmem:[#allocation3 + $0x140] sm:$0xff]
  %v7356 = vld [vmem:[#allocation3 + $0x150] sm:$0xff]
  %v7357 = vld [vmem:[#allocation3 + $0x158] sm:$0xff]
  %v7358 = vld [vmem:[#allocation3 + $0x168] sm:$0xff]
  %v7359 = vld [vmem:[#allocation3 + $0x170] sm:$0xff]
  %v7360 = vld [vmem:[#allocation3 + $0x1b0] sm:$0xff]
  %v7361 = vld [vmem:[#allocation3 + $0x1b8] sm:$0xff]
  %v7362 = vld [vmem:[#allocation3 + $0x1c8] sm:$0xff]
  %v7363 = vld [vmem:[#allocation3 + $0x1d0] sm:$0xff]
  %v7364 = vld [vmem:[#allocation3 + $0x1e0] sm:$0xff]
  %v7365 = vld [vmem:[#allocation3 + $0x1e8] sm:$0xff]
  %v7366 = vld [vmem:[#allocation3 + $0x1f8] sm:$0xff]
  %v7367 = vld [vmem:[#allocation3 + $0x200] sm:$0xff]
  %v7368 = vld [vmem:[#allocation3 + $0x210] sm:$0xff]
  %v7369 = vld [vmem:[#allocation3 + $0x218] sm:$0xff]
  %v7370 = vld [vmem:[#allocation3 + $0x228] sm:$0xff]
  %v7371 = vld [vmem:[#allocation3 + $0x230] sm:$0xff]
  %v7372 = vld [vmem:[#allocation3 + $0x240] sm:$0xff]
  %v7373 = vld [vmem:[#allocation3 + $0x248] sm:$0xff]
  %v7374 = vld [vmem:[#allocation3 + $0x258] sm:$0xff]
  %v7375 = vld [vmem:[#allocation3 + $0x260] sm:$0xff]
  %v7376 = vld [vmem:[#allocation3 + $0x270] sm:$0xff]
  %v7377 = vld [vmem:[#allocation3 + $0x278] sm:$0xff]
  %v7378 = vld [vmem:[#allocation3 + $0x288] sm:$0xff]
  %v7379 = vld [vmem:[#allocation3 + $0x290] sm:$0xff]
  %v7380 = vld [vmem:[#allocation3 + $0x2a0] sm:$0xff]
  %v7381 = vld [vmem:[#allocation3 + $0x2a8] sm:$0xff]
  %v7382 = vld [vmem:[#allocation3 + $0x2b8] sm:$0xff]
  %v7383 = vld [vmem:[#allocation3 + $0x2c0] sm:$0xff]
  %v7384 = vld [vmem:[#allocation3 + $0x2d0] sm:$0xff]
  %v7385 = vld [vmem:[#allocation3 + $0x2d8] sm:$0xff]
  %v7386 = vld [vmem:[#allocation3 + $0x2e8] sm:$0xff]
  %v7387 = vld [vmem:[#allocation3 + $0x2f0] sm:$0xff]
  %v7388 = vld [vmem:[#allocation3 + $0x300] sm:$0xff]
  %v7389 = vld [vmem:[#allocation3 + $0x308] sm:$0xff]
  %v7390 = vld [vmem:[#allocation3 + $0x318] sm:$0xff]
  %v7391 = vld [vmem:[#allocation3 + $0x320] sm:$0xff]
  %v7392 = vld [vmem:[%s9] sm:$0x1]
  %v7394 = vlaneseq
  %v7395 = vshrl.u32 %v7394, 7
  %v7396 = vsub.s32 0, %v7395
  %v7397 = vrot.slane %v7392, %v7396
  %v7399 = vmul.f32 %v7328, %v7397
  %v7400 = vmul.f32 %v7329, %v7397
  %v7401 = vmul.f32 %v7330, %v7397
  %v7402 = vmul.f32 %v7331, %v7397
  %v7403 = vmul.f32 %v7332, %v7397
  %v7404 = vmul.f32 %v7333, %v7397
  %v7405 = vmul.f32 %v7334, %v7397
  %v7406 = vmul.f32 %v7335, %v7397
  %v7407 = vmul.f32 %v7336, %v7397
  %v7408 = vmul.f32 %v7337, %v7397
  %v7409 = vmul.f32 %v7338, %v7397
  %v7410 = vmul.f32 %v7339, %v7397
  %v7411 = vmul.f32 %v7340, %v7397
  %v7412 = vmul.f32 %v7341, %v7397
  %v7413 = vmul.f32 %v7342, %v7397
  %v7414 = vmul.f32 %v7343, %v7397
  %v7415 = vmul.f32 %v7344, %v7397
  %v7416 = vmul.f32 %v7345, %v7397
  %v7417 = vmul.f32 %v7346, %v7397
  %v7418 = vmul.f32 %v7347, %v7397
  %v7419 = vmul.f32 %v7348, %v7397
  %v7420 = vmul.f32 %v7349, %v7397
  %v7421 = vmul.f32 %v7350, %v7397
  %v7422 = vmul.f32 %v7351, %v7397
  %v7423 = vmul.f32 %v7352, %v7397
  %v7424 = vmul.f32 %v7353, %v7397
  %v7425 = vmul.f32 %v7354, %v7397
  %v7426 = vmul.f32 %v7355, %v7397
  %v7427 = vmul.f32 %v7356, %v7397
  %v7428 = vmul.f32 %v7357, %v7397
  %v7429 = vmul.f32 %v7358, %v7397
  %v7430 = vmul.f32 %v7359, %v7397
  %v7431 = vmul.f32 %v7360, %v7397
  %v7432 = vmul.f32 %v7361, %v7397
  %v7433 = vmul.f32 %v7362, %v7397
  %v7434 = vmul.f32 %v7363, %v7397
  %v7435 = vmul.f32 %v7364, %v7397
  %v7436 = vmul.f32 %v7365, %v7397
  %v7437 = vmul.f32 %v7366, %v7397
  %v7438 = vmul.f32 %v7367, %v7397
  %v7439 = vmul.f32 %v7368, %v7397
  %v7440 = vmul.f32 %v7369, %v7397
  %v7441 = vmul.f32 %v7370, %v7397
  %v7442 = vmul.f32 %v7371, %v7397
  %v7443 = vmul.f32 %v7372, %v7397
  %v7444 = vmul.f32 %v7373, %v7397
  %v7445 = vmul.f32 %v7374, %v7397
  %v7446 = vmul.f32 %v7375, %v7397
  %v7447 = vmul.f32 %v7376, %v7397
  %v7448 = vmul.f32 %v7377, %v7397
  %v7449 = vmul.f32 %v7378, %v7397
  %v7450 = vmul.f32 %v7379, %v7397
  %v7451 = vmul.f32 %v7380, %v7397
  %v7452 = vmul.f32 %v7381, %v7397
  %v7453 = vmul.f32 %v7382, %v7397
  %v7454 = vmul.f32 %v7383, %v7397
  %v7455 = vmul.f32 %v7384, %v7397
  %v7456 = vmul.f32 %v7385, %v7397
  %v7457 = vmul.f32 %v7386, %v7397
  %v7458 = vmul.f32 %v7387, %v7397
  %v7459 = vmul.f32 %v7388, %v7397
  %v7460 = vmul.f32 %v7389, %v7397
  %v7461 = vmul.f32 %v7390, %v7397
  %v7462 = vmul.f32 %v7391, %v7397
  %v7463 = vadd.f32 %v7399, 0.0
  %v7464 = vadd.f32 %v7400, 0.0
  %v7465 = vadd.f32 %v7401, 0.0
  %v7466 = vadd.f32 %v7402, 0.0
  %v7467 = vadd.f32 %v7403, 0.0
  %v7468 = vadd.f32 %v7404, 0.0
  %v7469 = vadd.f32 %v7405, 0.0
  %v7470 = vadd.f32 %v7406, 0.0
  %v7471 = vadd.f32 %v7407, 0.0
  %v7472 = vadd.f32 %v7408, 0.0
  %v7473 = vadd.f32 %v7409, 0.0
  %v7474 = vadd.f32 %v7410, 0.0
  %v7475 = vadd.f32 %v7411, 0.0
  %v7476 = vadd.f32 %v7412, 0.0
  %v7477 = vadd.f32 %v7413, 0.0
  %v7478 = vadd.f32 %v7414, 0.0
  %v7479 = vadd.f32 %v7415, 0.0
  %v7480 = vadd.f32 %v7416, 0.0
  %v7481 = vadd.f32 %v7417, 0.0
  %v7482 = vadd.f32 %v7418, 0.0
  %v7483 = vadd.f32 %v7419, 0.0
  %v7484 = vadd.f32 %v7420, 0.0
  %v7485 = vadd.f32 %v7421, 0.0
  %v7486 = vadd.f32 %v7422, 0.0
  %v7487 = vadd.f32 %v7423, 0.0
  %v7488 = vadd.f32 %v7424, 0.0
  %v7489 = vadd.f32 %v7425, 0.0
  %v7490 = vadd.f32 %v7426, 0.0
  %v7491 = vadd.f32 %v7427, 0.0
  %v7492 = vadd.f32 %v7428, 0.0
  %v7493 = vadd.f32 %v7429, 0.0
  %v7494 = vadd.f32 %v7430, 0.0
  %v7495 = vadd.f32 %v7431, 0.0
  %v7496 = vadd.f32 %v7432, 0.0
  %v7497 = vadd.f32 %v7433, 0.0
  %v7498 = vadd.f32 %v7434, 0.0
  %v7499 = vadd.f32 %v7435, 0.0
  %v7500 = vadd.f32 %v7436, 0.0
  %v7501 = vadd.f32 %v7437, 0.0
  %v7502 = vadd.f32 %v7438, 0.0
  %v7503 = vadd.f32 %v7439, 0.0
  %v7504 = vadd.f32 %v7440, 0.0
  %v7505 = vadd.f32 %v7441, 0.0
  %v7506 = vadd.f32 %v7442, 0.0
  %v7507 = vadd.f32 %v7443, 0.0
  %v7508 = vadd.f32 %v7444, 0.0
  %v7509 = vadd.f32 %v7445, 0.0
  %v7510 = vadd.f32 %v7446, 0.0
  %v7511 = vadd.f32 %v7447, 0.0
  %v7512 = vadd.f32 %v7448, 0.0
  %v7513 = vadd.f32 %v7449, 0.0
  %v7514 = vadd.f32 %v7450, 0.0
  %v7515 = vadd.f32 %v7451, 0.0
  %v7516 = vadd.f32 %v7452, 0.0
  %v7517 = vadd.f32 %v7453, 0.0
  %v7518 = vadd.f32 %v7454, 0.0
  %v7519 = vadd.f32 %v7455, 0.0
  %v7520 = vadd.f32 %v7456, 0.0
  %v7521 = vadd.f32 %v7457, 0.0
  %v7522 = vadd.f32 %v7458, 0.0
  %v7523 = vadd.f32 %v7459, 0.0
  %v7524 = vadd.f32 %v7460, 0.0
  %v7525 = vadd.f32 %v7461, 0.0
  %v7526 = vadd.f32 %v7462, 0.0
  %v7527 = vld [vmem:[#allocation3 + $0x1] sm:$0xff]
  %v7528 = vld [vmem:[#allocation3 + $0x9] sm:$0xff]
  %v7529 = vld [vmem:[#allocation3 + $0x19] sm:$0xff]
  %v7530 = vld [vmem:[#allocation3 + $0x21] sm:$0xff]
  %v7531 = vld [vmem:[#allocation3 + $0x31] sm:$0xff]
  %v7532 = vld [vmem:[#allocation3 + $0x39] sm:$0xff]
  %v7533 = vld [vmem:[#allocation3 + $0x49] sm:$0xff]
  %v7534 = vld [vmem:[#allocation3 + $0x51] sm:$0xff]
  %v7535 = vld [vmem:[#allocation3 + $0x61] sm:$0xff]
  %v7536 = vld [vmem:[#allocation3 + $0x69] sm:$0xff]
  %v7537 = vld [vmem:[#allocation3 + $0x79] sm:$0xff]
  %v7538 = vld [vmem:[#allocation3 + $0x81] sm:$0xff]
  %v7539 = vld [vmem:[#allocation3 + $0x91] sm:$0xff]
  %v7540 = vld [vmem:[#allocation3 + $0x99] sm:$0xff]
  %v7541 = vld [vmem:[#allocation3 + $0xa9] sm:$0xff]
  %v7542 = vld [vmem:[#allocation3 + $0xb1] sm:$0xff]
  %v7543 = vld [vmem:[#allocation3 + $0xc1] sm:$0xff]
  %v7544 = vld [vmem:[#allocation3 + $0xc9] sm:$0xff]
  %v7545 = vld [vmem:[#allocation3 + $0xd9] sm:$0xff]
  %v7546 = vld [vmem:[#allocation3 + $0xe1] sm:$0xff]
  %v7547 = vld [vmem:[#allocation3 + $0xf1] sm:$0xff]
  %v7548 = vld [vmem:[#allocation3 + $0xf9] sm:$0xff]
  %v7549 = vld [vmem:[#allocation3 + $0x109] sm:$0xff]
  %v7550 = vld [vmem:[#allocation3 + $0x111] sm:$0xff]
  %v7551 = vld [vmem:[#allocation3 + $0x121] sm:$0xff]
  %v7552 = vld [vmem:[#allocation3 + $0x129] sm:$0xff]
  %v7553 = vld [vmem:[#allocation3 + $0x139] sm:$0xff]
  %v7554 = vld [vmem:[#allocation3 + $0x141] sm:$0xff]
  %v7555 = vld [vmem:[#allocation3 + $0x151] sm:$0xff]
  %v7556 = vld [vmem:[#allocation3 + $0x159] sm:$0xff]
  %v7557 = vld [vmem:[#allocation3 + $0x169] sm:$0xff]
  %v7558 = vld [vmem:[#allocation3 + $0x171] sm:$0xff]
  %v7559 = vld [vmem:[#allocation3 + $0x1b1] sm:$0xff]
  %v7560 = vld [vmem:[#allocation3 + $0x1b9] sm:$0xff]
  %v7561 = vld [vmem:[#allocation3 + $0x1c9] sm:$0xff]
  %v7562 = vld [vmem:[#allocation3 + $0x1d1] sm:$0xff]
  %v7563 = vld [vmem:[#allocation3 + $0x1e1] sm:$0xff]
  %v7564 = vld [vmem:[#allocation3 + $0x1e9] sm:$0xff]
  %v7565 = vld [vmem:[#allocation3 + $0x1f9] sm:$0xff]
  %v7566 = vld [vmem:[#allocation3 + $0x201] sm:$0xff]
  %v7567 = vld [vmem:[#allocation3 + $0x211] sm:$0xff]
  %v7568 = vld [vmem:[#allocation3 + $0x219] sm:$0xff]
  %v7569 = vld [vmem:[#allocation3 + $0x229] sm:$0xff]
  %v7570 = vld [vmem:[#allocation3 + $0x231] sm:$0xff]
  %v7571 = vld [vmem:[#allocation3 + $0x241] sm:$0xff]
  %v7572 = vld [vmem:[#allocation3 + $0x249] sm:$0xff]
  %v7573 = vld [vmem:[#allocation3 + $0x259] sm:$0xff]
  %v7574 = vld [vmem:[#allocation3 + $0x261] sm:$0xff]
  %v7575 = vld [vmem:[#allocation3 + $0x271] sm:$0xff]
  %v7576 = vld [vmem:[#allocation3 + $0x279] sm:$0xff]
  %v7577 = vld [vmem:[#allocation3 + $0x289] sm:$0xff]
  %v7578 = vld [vmem:[#allocation3 + $0x291] sm:$0xff]
  %v7579 = vld [vmem:[#allocation3 + $0x2a1] sm:$0xff]
  %v7580 = vld [vmem:[#allocation3 + $0x2a9] sm:$0xff]
  %v7581 = vld [vmem:[#allocation3 + $0x2b9] sm:$0xff]
  %v7582 = vld [vmem:[#allocation3 + $0x2c1] sm:$0xff]
  %v7583 = vld [vmem:[#allocation3 + $0x2d1] sm:$0xff]
  %v7584 = vld [vmem:[#allocation3 + $0x2d9] sm:$0xff]
  %v7585 = vld [vmem:[#allocation3 + $0x2e9] sm:$0xff]
  %v7586 = vld [vmem:[#allocation3 + $0x2f1] sm:$0xff]
  %v7587 = vld [vmem:[#allocation3 + $0x301] sm:$0xff]
  %v7588 = vld [vmem:[#allocation3 + $0x309] sm:$0xff]
  %v7589 = vld [vmem:[#allocation3 + $0x319] sm:$0xff]
  %v7590 = vld [vmem:[#allocation3 + $0x321] sm:$0xff]
  %s7591 = scalar_lea.vmem %s9, 1
  %v7592 = vld [vmem:[%s7591] sm:$0x1]
  %v7594 = vlaneseq
  %v7595 = vshrl.u32 %v7594, 7
  %v7596 = vsub.s32 0, %v7595
  %v7597 = vrot.slane %v7592, %v7596
  %v7599 = vmul.f32 %v7527, %v7597
  %v7600 = vmul.f32 %v7528, %v7597
  %v7601 = vmul.f32 %v7529, %v7597
  %v7602 = vmul.f32 %v7530, %v7597
  %v7603 = vmul.f32 %v7531, %v7597
  %v7604 = vmul.f32 %v7532, %v7597
  %v7605 = vmul.f32 %v7533, %v7597
  %v7606 = vmul.f32 %v7534, %v7597
  %v7607 = vmul.f32 %v7535, %v7597
  %v7608 = vmul.f32 %v7536, %v7597
  %v7609 = vmul.f32 %v7537, %v7597
  %v7610 = vmul.f32 %v7538, %v7597
  %v7611 = vmul.f32 %v7539, %v7597
  %v7612 = vmul.f32 %v7540, %v7597
  %v7613 = vmul.f32 %v7541, %v7597
  %v7614 = vmul.f32 %v7542, %v7597
  %v7615 = vmul.f32 %v7543, %v7597
  %v7616 = vmul.f32 %v7544, %v7597
  %v7617 = vmul.f32 %v7545, %v7597
  %v7618 = vmul.f32 %v7546, %v7597
  %v7619 = vmul.f32 %v7547, %v7597
  %v7620 = vmul.f32 %v7548, %v7597
  %v7621 = vmul.f32 %v7549, %v7597
  %v7622 = vmul.f32 %v7550, %v7597
  %v7623 = vmul.f32 %v7551, %v7597
  %v7624 = vmul.f32 %v7552, %v7597
  %v7625 = vmul.f32 %v7553, %v7597
  %v7626 = vmul.f32 %v7554, %v7597
  %v7627 = vmul.f32 %v7555, %v7597
  %v7628 = vmul.f32 %v7556, %v7597
  %v7629 = vmul.f32 %v7557, %v7597
  %v7630 = vmul.f32 %v7558, %v7597
  %v7631 = vmul.f32 %v7559, %v7597
  %v7632 = vmul.f32 %v7560, %v7597
  %v7633 = vmul.f32 %v7561, %v7597
  %v7634 = vmul.f32 %v7562, %v7597
  %v7635 = vmul.f32 %v7563, %v7597
  %v7636 = vmul.f32 %v7564, %v7597
  %v7637 = vmul.f32 %v7565, %v7597
  %v7638 = vmul.f32 %v7566, %v7597
  %v7639 = vmul.f32 %v7567, %v7597
  %v7640 = vmul.f32 %v7568, %v7597
  %v7641 = vmul.f32 %v7569, %v7597
  %v7642 = vmul.f32 %v7570, %v7597
  %v7643 = vmul.f32 %v7571, %v7597
  %v7644 = vmul.f32 %v7572, %v7597
  %v7645 = vmul.f32 %v7573, %v7597
  %v7646 = vmul.f32 %v7574, %v7597
  %v7647 = vmul.f32 %v7575, %v7597
  %v7648 = vmul.f32 %v7576, %v7597
  %v7649 = vmul.f32 %v7577, %v7597
  %v7650 = vmul.f32 %v7578, %v7597
  %v7651 = vmul.f32 %v7579, %v7597
  %v7652 = vmul.f32 %v7580, %v7597
  %v7653 = vmul.f32 %v7581, %v7597
  %v7654 = vmul.f32 %v7582, %v7597
  %v7655 = vmul.f32 %v7583, %v7597
  %v7656 = vmul.f32 %v7584, %v7597
  %v7657 = vmul.f32 %v7585, %v7597
  %v7658 = vmul.f32 %v7586, %v7597
  %v7659 = vmul.f32 %v7587, %v7597
  %v7660 = vmul.f32 %v7588, %v7597
  %v7661 = vmul.f32 %v7589, %v7597
  %v7662 = vmul.f32 %v7590, %v7597
  %v7663 = vadd.f32 %v7463, %v7599
  %v7664 = vadd.f32 %v7464, %v7600
  %v7665 = vadd.f32 %v7465, %v7601
  %v7666 = vadd.f32 %v7466, %v7602
  %v7667 = vadd.f32 %v7467, %v7603
  %v7668 = vadd.f32 %v7468, %v7604
  %v7669 = vadd.f32 %v7469, %v7605
  %v7670 = vadd.f32 %v7470, %v7606
  %v7671 = vadd.f32 %v7471, %v7607
  %v7672 = vadd.f32 %v7472, %v7608
  %v7673 = vadd.f32 %v7473, %v7609
  %v7674 = vadd.f32 %v7474, %v7610
  %v7675 = vadd.f32 %v7475, %v7611
  %v7676 = vadd.f32 %v7476, %v7612
  %v7677 = vadd.f32 %v7477, %v7613
  %v7678 = vadd.f32 %v7478, %v7614
  %v7679 = vadd.f32 %v7479, %v7615
  %v7680 = vadd.f32 %v7480, %v7616
  %v7681 = vadd.f32 %v7481, %v7617
  %v7682 = vadd.f32 %v7482, %v7618
  %v7683 = vadd.f32 %v7483, %v7619
  %v7684 = vadd.f32 %v7484, %v7620
  %v7685 = vadd.f32 %v7485, %v7621
  %v7686 = vadd.f32 %v7486, %v7622
  %v7687 = vadd.f32 %v7487, %v7623
  %v7688 = vadd.f32 %v7488, %v7624
  %v7689 = vadd.f32 %v7489, %v7625
  %v7690 = vadd.f32 %v7490, %v7626
  %v7691 = vadd.f32 %v7491, %v7627
  %v7692 = vadd.f32 %v7492, %v7628
  %v7693 = vadd.f32 %v7493, %v7629
  %v7694 = vadd.f32 %v7494, %v7630
  %v7695 = vadd.f32 %v7495, %v7631
  %v7696 = vadd.f32 %v7496, %v7632
  %v7697 = vadd.f32 %v7497, %v7633
  %v7698 = vadd.f32 %v7498, %v7634
  %v7699 = vadd.f32 %v7499, %v7635
  %v7700 = vadd.f32 %v7500, %v7636
  %v7701 = vadd.f32 %v7501, %v7637
  %v7702 = vadd.f32 %v7502, %v7638
  %v7703 = vadd.f32 %v7503, %v7639
  %v7704 = vadd.f32 %v7504, %v7640
  %v7705 = vadd.f32 %v7505, %v7641
  %v7706 = vadd.f32 %v7506, %v7642
  %v7707 = vadd.f32 %v7507, %v7643
  %v7708 = vadd.f32 %v7508, %v7644
  %v7709 = vadd.f32 %v7509, %v7645
  %v7710 = vadd.f32 %v7510, %v7646
  %v7711 = vadd.f32 %v7511, %v7647
  %v7712 = vadd.f32 %v7512, %v7648
  %v7713 = vadd.f32 %v7513, %v7649
  %v7714 = vadd.f32 %v7514, %v7650
  %v7715 = vadd.f32 %v7515, %v7651
  %v7716 = vadd.f32 %v7516, %v7652
  %v7717 = vadd.f32 %v7517, %v7653
  %v7718 = vadd.f32 %v7518, %v7654
  %v7719 = vadd.f32 %v7519, %v7655
  %v7720 = vadd.f32 %v7520, %v7656
  %v7721 = vadd.f32 %v7521, %v7657
  %v7722 = vadd.f32 %v7522, %v7658
  %v7723 = vadd.f32 %v7523, %v7659
  %v7724 = vadd.f32 %v7524, %v7660
  %v7725 = vadd.f32 %v7525, %v7661
  %v7726 = vadd.f32 %v7526, %v7662
  %v7727 = vld [vmem:[#allocation3 + $0x2] sm:$0xff]
  %v7728 = vld [vmem:[#allocation3 + $0xa] sm:$0xff]
  %v7729 = vld [vmem:[#allocation3 + $0x1a] sm:$0xff]
  %v7730 = vld [vmem:[#allocation3 + $0x22] sm:$0xff]
  %v7731 = vld [vmem:[#allocation3 + $0x32] sm:$0xff]
  %v7732 = vld [vmem:[#allocation3 + $0x3a] sm:$0xff]
  %v7733 = vld [vmem:[#allocation3 + $0x4a] sm:$0xff]
  %v7734 = vld [vmem:[#allocation3 + $0x52] sm:$0xff]
  %v7735 = vld [vmem:[#allocation3 + $0x62] sm:$0xff]
  %v7736 = vld [vmem:[#allocation3 + $0x6a] sm:$0xff]
  %v7737 = vld [vmem:[#allocation3 + $0x7a] sm:$0xff]
  %v7738 = vld [vmem:[#allocation3 + $0x82] sm:$0xff]
  %v7739 = vld [vmem:[#allocation3 + $0x92] sm:$0xff]
  %v7740 = vld [vmem:[#allocation3 + $0x9a] sm:$0xff]
  %v7741 = vld [vmem:[#allocation3 + $0xaa] sm:$0xff]
  %v7742 = vld [vmem:[#allocation3 + $0xb2] sm:$0xff]
  %v7743 = vld [vmem:[#allocation3 + $0xc2] sm:$0xff]
  %v7744 = vld [vmem:[#allocation3 + $0xca] sm:$0xff]
  %v7745 = vld [vmem:[#allocation3 + $0xda] sm:$0xff]
  %v7746 = vld [vmem:[#allocation3 + $0xe2] sm:$0xff]
  %v7747 = vld [vmem:[#allocation3 + $0xf2] sm:$0xff]
  %v7748 = vld [vmem:[#allocation3 + $0xfa] sm:$0xff]
  %v7749 = vld [vmem:[#allocation3 + $0x10a] sm:$0xff]
  %v7750 = vld [vmem:[#allocation3 + $0x112] sm:$0xff]
  %v7751 = vld [vmem:[#allocation3 + $0x122] sm:$0xff]
  %v7752 = vld [vmem:[#allocation3 + $0x12a] sm:$0xff]
  %v7753 = vld [vmem:[#allocation3 + $0x13a] sm:$0xff]
  %v7754 = vld [vmem:[#allocation3 + $0x142] sm:$0xff]
  %v7755 = vld [vmem:[#allocation3 + $0x152] sm:$0xff]
  %v7756 = vld [vmem:[#allocation3 + $0x15a] sm:$0xff]
  %v7757 = vld [vmem:[#allocation3 + $0x16a] sm:$0xff]
  %v7758 = vld [vmem:[#allocation3 + $0x172] sm:$0xff]
  %v7759 = vld [vmem:[#allocation3 + $0x1b2] sm:$0xff]
  %v7760 = vld [vmem:[#allocation3 + $0x1ba] sm:$0xff]
  %v7761 = vld [vmem:[#allocation3 + $0x1ca] sm:$0xff]
  %v7762 = vld [vmem:[#allocation3 + $0x1d2] sm:$0xff]
  %v7763 = vld [vmem:[#allocation3 + $0x1e2] sm:$0xff]
  %v7764 = vld [vmem:[#allocation3 + $0x1ea] sm:$0xff]
  %v7765 = vld [vmem:[#allocation3 + $0x1fa] sm:$0xff]
  %v7766 = vld [vmem:[#allocation3 + $0x202] sm:$0xff]
  %v7767 = vld [vmem:[#allocation3 + $0x212] sm:$0xff]
  %v7768 = vld [vmem:[#allocation3 + $0x21a] sm:$0xff]
  %v7769 = vld [vmem:[#allocation3 + $0x22a] sm:$0xff]
  %v7770 = vld [vmem:[#allocation3 + $0x232] sm:$0xff]
  %v7771 = vld [vmem:[#allocation3 + $0x242] sm:$0xff]
  %v7772 = vld [vmem:[#allocation3 + $0x24a] sm:$0xff]
  %v7773 = vld [vmem:[#allocation3 + $0x25a] sm:$0xff]
  %v7774 = vld [vmem:[#allocation3 + $0x262] sm:$0xff]
  %v7775 = vld [vmem:[#allocation3 + $0x272] sm:$0xff]
  %v7776 = vld [vmem:[#allocation3 + $0x27a] sm:$0xff]
  %v7777 = vld [vmem:[#allocation3 + $0x28a] sm:$0xff]
  %v7778 = vld [vmem:[#allocation3 + $0x292] sm:$0xff]
  %v7779 = vld [vmem:[#allocation3 + $0x2a2] sm:$0xff]
  %v7780 = vld [vmem:[#allocation3 + $0x2aa] sm:$0xff]
  %v7781 = vld [vmem:[#allocation3 + $0x2ba] sm:$0xff]
  %v7782 = vld [vmem:[#allocation3 + $0x2c2] sm:$0xff]
  %v7783 = vld [vmem:[#allocation3 + $0x2d2] sm:$0xff]
  %v7784 = vld [vmem:[#allocation3 + $0x2da] sm:$0xff]
  %v7785 = vld [vmem:[#allocation3 + $0x2ea] sm:$0xff]
  %v7786 = vld [vmem:[#allocation3 + $0x2f2] sm:$0xff]
  %v7787 = vld [vmem:[#allocation3 + $0x302] sm:$0xff]
  %v7788 = vld [vmem:[#allocation3 + $0x30a] sm:$0xff]
  %v7789 = vld [vmem:[#allocation3 + $0x31a] sm:$0xff]
  %v7790 = vld [vmem:[#allocation3 + $0x322] sm:$0xff]
  %s7791 = scalar_lea.vmem %s9, 2
  %v7792 = vld [vmem:[%s7791] sm:$0x1]
  %v7794 = vlaneseq
  %v7795 = vshrl.u32 %v7794, 7
  %v7796 = vsub.s32 0, %v7795
  %v7797 = vrot.slane %v7792, %v7796
  %v7799 = vmul.f32 %v7727, %v7797
  %v7800 = vmul.f32 %v7728, %v7797
  %v7801 = vmul.f32 %v7729, %v7797
  %v7802 = vmul.f32 %v7730, %v7797
  %v7803 = vmul.f32 %v7731, %v7797
  %v7804 = vmul.f32 %v7732, %v7797
  %v7805 = vmul.f32 %v7733, %v7797
  %v7806 = vmul.f32 %v7734, %v7797
  %v7807 = vmul.f32 %v7735, %v7797
  %v7808 = vmul.f32 %v7736, %v7797
  %v7809 = vmul.f32 %v7737, %v7797
  %v7810 = vmul.f32 %v7738, %v7797
  %v7811 = vmul.f32 %v7739, %v7797
  %v7812 = vmul.f32 %v7740, %v7797
  %v7813 = vmul.f32 %v7741, %v7797
  %v7814 = vmul.f32 %v7742, %v7797
  %v7815 = vmul.f32 %v7743, %v7797
  %v7816 = vmul.f32 %v7744, %v7797
  %v7817 = vmul.f32 %v7745, %v7797
  %v7818 = vmul.f32 %v7746, %v7797
  %v7819 = vmul.f32 %v7747, %v7797
  %v7820 = vmul.f32 %v7748, %v7797
  %v7821 = vmul.f32 %v7749, %v7797
  %v7822 = vmul.f32 %v7750, %v7797
  %v7823 = vmul.f32 %v7751, %v7797
  %v7824 = vmul.f32 %v7752, %v7797
  %v7825 = vmul.f32 %v7753, %v7797
  %v7826 = vmul.f32 %v7754, %v7797
  %v7827 = vmul.f32 %v7755, %v7797
  %v7828 = vmul.f32 %v7756, %v7797
  %v7829 = vmul.f32 %v7757, %v7797
  %v7830 = vmul.f32 %v7758, %v7797
  %v7831 = vmul.f32 %v7759, %v7797
  %v7832 = vmul.f32 %v7760, %v7797
  %v7833 = vmul.f32 %v7761, %v7797
  %v7834 = vmul.f32 %v7762, %v7797
  %v7835 = vmul.f32 %v7763, %v7797
  %v7836 = vmul.f32 %v7764, %v7797
  %v7837 = vmul.f32 %v7765, %v7797
  %v7838 = vmul.f32 %v7766, %v7797
  %v7839 = vmul.f32 %v7767, %v7797
  %v7840 = vmul.f32 %v7768, %v7797
  %v7841 = vmul.f32 %v7769, %v7797
  %v7842 = vmul.f32 %v7770, %v7797
  %v7843 = vmul.f32 %v7771, %v7797
  %v7844 = vmul.f32 %v7772, %v7797
  %v7845 = vmul.f32 %v7773, %v7797
  %v7846 = vmul.f32 %v7774, %v7797
  %v7847 = vmul.f32 %v7775, %v7797
  %v7848 = vmul.f32 %v7776, %v7797
  %v7849 = vmul.f32 %v7777, %v7797
  %v7850 = vmul.f32 %v7778, %v7797
  %v7851 = vmul.f32 %v7779, %v7797
  %v7852 = vmul.f32 %v7780, %v7797
  %v7853 = vmul.f32 %v7781, %v7797
  %v7854 = vmul.f32 %v7782, %v7797
  %v7855 = vmul.f32 %v7783, %v7797
  %v7856 = vmul.f32 %v7784, %v7797
  %v7857 = vmul.f32 %v7785, %v7797
  %v7858 = vmul.f32 %v7786, %v7797
  %v7859 = vmul.f32 %v7787, %v7797
  %v7860 = vmul.f32 %v7788, %v7797
  %v7861 = vmul.f32 %v7789, %v7797
  %v7862 = vmul.f32 %v7790, %v7797
  %v7863 = vadd.f32 %v7663, %v7799
  %v7864 = vadd.f32 %v7664, %v7800
  %v7865 = vadd.f32 %v7665, %v7801
  %v7866 = vadd.f32 %v7666, %v7802
  %v7867 = vadd.f32 %v7667, %v7803
  %v7868 = vadd.f32 %v7668, %v7804
  %v7869 = vadd.f32 %v7669, %v7805
  %v7870 = vadd.f32 %v7670, %v7806
  %v7871 = vadd.f32 %v7671, %v7807
  %v7872 = vadd.f32 %v7672, %v7808
  %v7873 = vadd.f32 %v7673, %v7809
  %v7874 = vadd.f32 %v7674, %v7810
  %v7875 = vadd.f32 %v7675, %v7811
  %v7876 = vadd.f32 %v7676, %v7812
  %v7877 = vadd.f32 %v7677, %v7813
  %v7878 = vadd.f32 %v7678, %v7814
  %v7879 = vadd.f32 %v7679, %v7815
  %v7880 = vadd.f32 %v7680, %v7816
  %v7881 = vadd.f32 %v7681, %v7817
  %v7882 = vadd.f32 %v7682, %v7818
  %v7883 = vadd.f32 %v7683, %v7819
  %v7884 = vadd.f32 %v7684, %v7820
  %v7885 = vadd.f32 %v7685, %v7821
  %v7886 = vadd.f32 %v7686, %v7822
  %v7887 = vadd.f32 %v7687, %v7823
  %v7888 = vadd.f32 %v7688, %v7824
  %v7889 = vadd.f32 %v7689, %v7825
  %v7890 = vadd.f32 %v7690, %v7826
  %v7891 = vadd.f32 %v7691, %v7827
  %v7892 = vadd.f32 %v7692, %v7828
  %v7893 = vadd.f32 %v7693, %v7829
  %v7894 = vadd.f32 %v7694, %v7830
  %v7895 = vadd.f32 %v7695, %v7831
  %v7896 = vadd.f32 %v7696, %v7832
  %v7897 = vadd.f32 %v7697, %v7833
  %v7898 = vadd.f32 %v7698, %v7834
  %v7899 = vadd.f32 %v7699, %v7835
  %v7900 = vadd.f32 %v7700, %v7836
  %v7901 = vadd.f32 %v7701, %v7837
  %v7902 = vadd.f32 %v7702, %v7838
  %v7903 = vadd.f32 %v7703, %v7839
  %v7904 = vadd.f32 %v7704, %v7840
  %v7905 = vadd.f32 %v7705, %v7841
  %v7906 = vadd.f32 %v7706, %v7842
  %v7907 = vadd.f32 %v7707, %v7843
  %v7908 = vadd.f32 %v7708, %v7844
  %v7909 = vadd.f32 %v7709, %v7845
  %v7910 = vadd.f32 %v7710, %v7846
  %v7911 = vadd.f32 %v7711, %v7847
  %v7912 = vadd.f32 %v7712, %v7848
  %v7913 = vadd.f32 %v7713, %v7849
  %v7914 = vadd.f32 %v7714, %v7850
  %v7915 = vadd.f32 %v7715, %v7851
  %v7916 = vadd.f32 %v7716, %v7852
  %v7917 = vadd.f32 %v7717, %v7853
  %v7918 = vadd.f32 %v7718, %v7854
  %v7919 = vadd.f32 %v7719, %v7855
  %v7920 = vadd.f32 %v7720, %v7856
  %v7921 = vadd.f32 %v7721, %v7857
  %v7922 = vadd.f32 %v7722, %v7858
  %v7923 = vadd.f32 %v7723, %v7859
  %v7924 = vadd.f32 %v7724, %v7860
  %v7925 = vadd.f32 %v7725, %v7861
  %v7926 = vadd.f32 %v7726, %v7862
  %v7927 = vld [vmem:[%s7176] sm:$0xff]
  %v7928 = vld [vmem:[%s7176 + $0x8] sm:$0xff]
  %v7929 = vld [vmem:[%s7176 + $0x18] sm:$0xff]
  %v7930 = vld [vmem:[%s7176 + $0x20] sm:$0xff]
  %v7931 = vld [vmem:[%s7176 + $0x30] sm:$0xff]
  %v7932 = vld [vmem:[%s7176 + $0x38] sm:$0xff]
  %v7933 = vld [vmem:[%s7176 + $0x48] sm:$0xff]
  %v7934 = vld [vmem:[%s7176 + $0x50] sm:$0xff]
  %v7935 = vld [vmem:[%s7176 + $0x60] sm:$0xff]
  %v7936 = vld [vmem:[%s7176 + $0x68] sm:$0xff]
  %v7937 = vld [vmem:[%s7176 + $0x78] sm:$0xff]
  %v7938 = vld [vmem:[%s7176 + $0x80] sm:$0xff]
  %v7939 = vld [vmem:[%s7176 + $0x90] sm:$0xff]
  %v7940 = vld [vmem:[%s7176 + $0x98] sm:$0xff]
  %v7941 = vld [vmem:[%s7176 + $0xa8] sm:$0xff]
  %v7942 = vld [vmem:[%s7176 + $0xb0] sm:$0xff]
  %v7943 = vld [vmem:[%s7176 + $0xc0] sm:$0xff]
  %v7944 = vld [vmem:[%s7176 + $0xc8] sm:$0xff]
  %v7945 = vld [vmem:[%s7176 + $0xd8] sm:$0xff]
  %v7946 = vld [vmem:[%s7176 + $0xe0] sm:$0xff]
  %v7947 = vld [vmem:[%s7176 + $0xf0] sm:$0xff]
  %v7948 = vld [vmem:[%s7176 + $0xf8] sm:$0xff]
  %v7949 = vld [vmem:[%s7176 + $0x108] sm:$0xff]
  %v7950 = vld [vmem:[%s7176 + $0x110] sm:$0xff]
  %v7951 = vld [vmem:[%s7176 + $0x120] sm:$0xff]
  %v7952 = vld [vmem:[%s7176 + $0x128] sm:$0xff]
  %v7953 = vld [vmem:[%s7176 + $0x138] sm:$0xff]
  %v7954 = vld [vmem:[%s7176 + $0x140] sm:$0xff]
  %v7955 = vld [vmem:[%s7176 + $0x150] sm:$0xff]
  %v7956 = vld [vmem:[%s7176 + $0x158] sm:$0xff]
  %v7957 = vld [vmem:[%s7176 + $0x168] sm:$0xff]
  %v7958 = vld [vmem:[%s7176 + $0x170] sm:$0xff]
  %v7959 = vld [vmem:[%s7176 + $0x1b0] sm:$0xff]
  %v7960 = vld [vmem:[%s7176 + $0x1b8] sm:$0xff]
  %v7961 = vld [vmem:[%s7176 + $0x1c8] sm:$0xff]
  %v7962 = vld [vmem:[%s7176 + $0x1d0] sm:$0xff]
  %v7963 = vld [vmem:[%s7176 + $0x1e0] sm:$0xff]
  %v7964 = vld [vmem:[%s7176 + $0x1e8] sm:$0xff]
  %v7965 = vld [vmem:[%s7176 + $0x1f8] sm:$0xff]
  %v7966 = vld [vmem:[%s7176 + $0x200] sm:$0xff]
  %v7967 = vld [vmem:[%s7176 + $0x210] sm:$0xff]
  %v7968 = vld [vmem:[%s7176 + $0x218] sm:$0xff]
  %v7969 = vld [vmem:[%s7176 + $0x228] sm:$0xff]
  %v7970 = vld [vmem:[%s7176 + $0x230] sm:$0xff]
  %v7971 = vld [vmem:[%s7176 + $0x240] sm:$0xff]
  %v7972 = vld [vmem:[%s7176 + $0x248] sm:$0xff]
  %v7973 = vld [vmem:[%s7176 + $0x258] sm:$0xff]
  %v7974 = vld [vmem:[%s7176 + $0x260] sm:$0xff]
  %v7975 = vld [vmem:[%s7176 + $0x270] sm:$0xff]
  %v7976 = vld [vmem:[%s7176 + $0x278] sm:$0xff]
  %v7977 = vld [vmem:[%s7176 + $0x288] sm:$0xff]
  %v7978 = vld [vmem:[%s7176 + $0x290] sm:$0xff]
  %v7979 = vld [vmem:[%s7176 + $0x2a0] sm:$0xff]
  %v7980 = vld [vmem:[%s7176 + $0x2a8] sm:$0xff]
  %v7981 = vld [vmem:[%s7176 + $0x2b8] sm:$0xff]
  %v7982 = vld [vmem:[%s7176 + $0x2c0] sm:$0xff]
  %v7983 = vld [vmem:[%s7176 + $0x2d0] sm:$0xff]
  %v7984 = vld [vmem:[%s7176 + $0x2d8] sm:$0xff]
  %v7985 = vld [vmem:[%s7176 + $0x2e8] sm:$0xff]
  %v7986 = vld [vmem:[%s7176 + $0x2f0] sm:$0xff]
  %v7987 = vld [vmem:[%s7176 + $0x300] sm:$0xff]
  %v7988 = vld [vmem:[%s7176 + $0x308] sm:$0xff]
  %v7989 = vld [vmem:[%s7176 + $0x318] sm:$0xff]
  %v7990 = vld [vmem:[%s7176 + $0x320] sm:$0xff]
  %s7991 = scalar_lea.vmem %s9, 3
  %v7992 = vld [vmem:[%s7991] sm:$0x1]
  %v7994 = vlaneseq
  %v7995 = vshrl.u32 %v7994, 7
  %v7996 = vsub.s32 0, %v7995
  %v7997 = vrot.slane %v7992, %v7996
  %v7999 = vmul.f32 %v7927, %v7997
  %v8000 = vmul.f32 %v7928, %v7997
  %v8001 = vmul.f32 %v7929, %v7997
  %v8002 = vmul.f32 %v7930, %v7997
  %v8003 = vmul.f32 %v7931, %v7997
  %v8004 = vmul.f32 %v7932, %v7997
  %v8005 = vmul.f32 %v7933, %v7997
  %v8006 = vmul.f32 %v7934, %v7997
  %v8007 = vmul.f32 %v7935, %v7997
  %v8008 = vmul.f32 %v7936, %v7997
  %v8009 = vmul.f32 %v7937, %v7997
  %v8010 = vmul.f32 %v7938, %v7997
  %v8011 = vmul.f32 %v7939, %v7997
  %v8012 = vmul.f32 %v7940, %v7997
  %v8013 = vmul.f32 %v7941, %v7997
  %v8014 = vmul.f32 %v7942, %v7997
  %v8015 = vmul.f32 %v7943, %v7997
  %v8016 = vmul.f32 %v7944, %v7997
  %v8017 = vmul.f32 %v7945, %v7997
  %v8018 = vmul.f32 %v7946, %v7997
  %v8019 = vmul.f32 %v7947, %v7997
  %v8020 = vmul.f32 %v7948, %v7997
  %v8021 = vmul.f32 %v7949, %v7997
  %v8022 = vmul.f32 %v7950, %v7997
  %v8023 = vmul.f32 %v7951, %v7997
  %v8024 = vmul.f32 %v7952, %v7997
  %v8025 = vmul.f32 %v7953, %v7997
  %v8026 = vmul.f32 %v7954, %v7997
  %v8027 = vmul.f32 %v7955, %v7997
  %v8028 = vmul.f32 %v7956, %v7997
  %v8029 = vmul.f32 %v7957, %v7997
  %v8030 = vmul.f32 %v7958, %v7997
  %v8031 = vmul.f32 %v7959, %v7997
  %v8032 = vmul.f32 %v7960, %v7997
  %v8033 = vmul.f32 %v7961, %v7997
  %v8034 = vmul.f32 %v7962, %v7997
  %v8035 = vmul.f32 %v7963, %v7997
  %v8036 = vmul.f32 %v7964, %v7997
  %v8037 = vmul.f32 %v7965, %v7997
  %v8038 = vmul.f32 %v7966, %v7997
  %v8039 = vmul.f32 %v7967, %v7997
  %v8040 = vmul.f32 %v7968, %v7997
  %v8041 = vmul.f32 %v7969, %v7997
  %v8042 = vmul.f32 %v7970, %v7997
  %v8043 = vmul.f32 %v7971, %v7997
  %v8044 = vmul.f32 %v7972, %v7997
  %v8045 = vmul.f32 %v7973, %v7997
  %v8046 = vmul.f32 %v7974, %v7997
  %v8047 = vmul.f32 %v7975, %v7997
  %v8048 = vmul.f32 %v7976, %v7997
  %v8049 = vmul.f32 %v7977, %v7997
  %v8050 = vmul.f32 %v7978, %v7997
  %v8051 = vmul.f32 %v7979, %v7997
  %v8052 = vmul.f32 %v7980, %v7997
  %v8053 = vmul.f32 %v7981, %v7997
  %v8054 = vmul.f32 %v7982, %v7997
  %v8055 = vmul.f32 %v7983, %v7997
  %v8056 = vmul.f32 %v7984, %v7997
  %v8057 = vmul.f32 %v7985, %v7997
  %v8058 = vmul.f32 %v7986, %v7997
  %v8059 = vmul.f32 %v7987, %v7997
  %v8060 = vmul.f32 %v7988, %v7997
  %v8061 = vmul.f32 %v7989, %v7997
  %v8062 = vmul.f32 %v7990, %v7997
  %v8063 = vadd.f32 %v7863, %v7999
  %v8064 = vadd.f32 %v7864, %v8000
  %v8065 = vadd.f32 %v7865, %v8001
  %v8066 = vadd.f32 %v7866, %v8002
  %v8067 = vadd.f32 %v7867, %v8003
  %v8068 = vadd.f32 %v7868, %v8004
  %v8069 = vadd.f32 %v7869, %v8005
  %v8070 = vadd.f32 %v7870, %v8006
  %v8071 = vadd.f32 %v7871, %v8007
  %v8072 = vadd.f32 %v7872, %v8008
  %v8073 = vadd.f32 %v7873, %v8009
  %v8074 = vadd.f32 %v7874, %v8010
  %v8075 = vadd.f32 %v7875, %v8011
  %v8076 = vadd.f32 %v7876, %v8012
  %v8077 = vadd.f32 %v7877, %v8013
  %v8078 = vadd.f32 %v7878, %v8014
  %v8079 = vadd.f32 %v7879, %v8015
  %v8080 = vadd.f32 %v7880, %v8016
  %v8081 = vadd.f32 %v7881, %v8017
  %v8082 = vadd.f32 %v7882, %v8018
  %v8083 = vadd.f32 %v7883, %v8019
  %v8084 = vadd.f32 %v7884, %v8020
  %v8085 = vadd.f32 %v7885, %v8021
  %v8086 = vadd.f32 %v7886, %v8022
  %v8087 = vadd.f32 %v7887, %v8023
  %v8088 = vadd.f32 %v7888, %v8024
  %v8089 = vadd.f32 %v7889, %v8025
  %v8090 = vadd.f32 %v7890, %v8026
  %v8091 = vadd.f32 %v7891, %v8027
  %v8092 = vadd.f32 %v7892, %v8028
  %v8093 = vadd.f32 %v7893, %v8029
  %v8094 = vadd.f32 %v7894, %v8030
  %v8095 = vadd.f32 %v7895, %v8031
  %v8096 = vadd.f32 %v7896, %v8032
  %v8097 = vadd.f32 %v7897, %v8033
  %v8098 = vadd.f32 %v7898, %v8034
  %v8099 = vadd.f32 %v7899, %v8035
  %v8100 = vadd.f32 %v7900, %v8036
  %v8101 = vadd.f32 %v7901, %v8037
  %v8102 = vadd.f32 %v7902, %v8038
  %v8103 = vadd.f32 %v7903, %v8039
  %v8104 = vadd.f32 %v7904, %v8040
  %v8105 = vadd.f32 %v7905, %v8041
  %v8106 = vadd.f32 %v7906, %v8042
  %v8107 = vadd.f32 %v7907, %v8043
  %v8108 = vadd.f32 %v7908, %v8044
  %v8109 = vadd.f32 %v7909, %v8045
  %v8110 = vadd.f32 %v7910, %v8046
  %v8111 = vadd.f32 %v7911, %v8047
  %v8112 = vadd.f32 %v7912, %v8048
  %v8113 = vadd.f32 %v7913, %v8049
  %v8114 = vadd.f32 %v7914, %v8050
  %v8115 = vadd.f32 %v7915, %v8051
  %v8116 = vadd.f32 %v7916, %v8052
  %v8117 = vadd.f32 %v7917, %v8053
  %v8118 = vadd.f32 %v7918, %v8054
  %v8119 = vadd.f32 %v7919, %v8055
  %v8120 = vadd.f32 %v7920, %v8056
  %v8121 = vadd.f32 %v7921, %v8057
  %v8122 = vadd.f32 %v7922, %v8058
  %v8123 = vadd.f32 %v7923, %v8059
  %v8124 = vadd.f32 %v7924, %v8060
  %v8125 = vadd.f32 %v7925, %v8061
  %v8126 = vadd.f32 %v7926, %v8062
  %v8127 = vld [vmem:[%s7176 + $0x1] sm:$0xff]
  %v8128 = vld [vmem:[%s7176 + $0x9] sm:$0xff]
  %v8129 = vld [vmem:[%s7176 + $0x19] sm:$0xff]
  %v8130 = vld [vmem:[%s7176 + $0x21] sm:$0xff]
  %v8131 = vld [vmem:[%s7176 + $0x31] sm:$0xff]
  %v8132 = vld [vmem:[%s7176 + $0x39] sm:$0xff]
  %v8133 = vld [vmem:[%s7176 + $0x49] sm:$0xff]
  %v8134 = vld [vmem:[%s7176 + $0x51] sm:$0xff]
  %v8135 = vld [vmem:[%s7176 + $0x61] sm:$0xff]
  %v8136 = vld [vmem:[%s7176 + $0x69] sm:$0xff]
  %v8137 = vld [vmem:[%s7176 + $0x79] sm:$0xff]
  %v8138 = vld [vmem:[%s7176 + $0x81] sm:$0xff]
  %v8139 = vld [vmem:[%s7176 + $0x91] sm:$0xff]
  %v8140 = vld [vmem:[%s7176 + $0x99] sm:$0xff]
  %v8141 = vld [vmem:[%s7176 + $0xa9] sm:$0xff]
  %v8142 = vld [vmem:[%s7176 + $0xb1] sm:$0xff]
  %v8143 = vld [vmem:[%s7176 + $0xc1] sm:$0xff]
  %v8144 = vld [vmem:[%s7176 + $0xc9] sm:$0xff]
  %v8145 = vld [vmem:[%s7176 + $0xd9] sm:$0xff]
  %v8146 = vld [vmem:[%s7176 + $0xe1] sm:$0xff]
  %v8147 = vld [vmem:[%s7176 + $0xf1] sm:$0xff]
  %v8148 = vld [vmem:[%s7176 + $0xf9] sm:$0xff]
  %v8149 = vld [vmem:[%s7176 + $0x109] sm:$0xff]
  %v8150 = vld [vmem:[%s7176 + $0x111] sm:$0xff]
  %v8151 = vld [vmem:[%s7176 + $0x121] sm:$0xff]
  %v8152 = vld [vmem:[%s7176 + $0x129] sm:$0xff]
  %v8153 = vld [vmem:[%s7176 + $0x139] sm:$0xff]
  %v8154 = vld [vmem:[%s7176 + $0x141] sm:$0xff]
  %v8155 = vld [vmem:[%s7176 + $0x151] sm:$0xff]
  %v8156 = vld [vmem:[%s7176 + $0x159] sm:$0xff]
  %v8157 = vld [vmem:[%s7176 + $0x169] sm:$0xff]
  %v8158 = vld [vmem:[%s7176 + $0x171] sm:$0xff]
  %v8159 = vld [vmem:[%s7176 + $0x1b1] sm:$0xff]
  %v8160 = vld [vmem:[%s7176 + $0x1b9] sm:$0xff]
  %v8161 = vld [vmem:[%s7176 + $0x1c9] sm:$0xff]
  %v8162 = vld [vmem:[%s7176 + $0x1d1] sm:$0xff]
  %v8163 = vld [vmem:[%s7176 + $0x1e1] sm:$0xff]
  %v8164 = vld [vmem:[%s7176 + $0x1e9] sm:$0xff]
  %v8165 = vld [vmem:[%s7176 + $0x1f9] sm:$0xff]
  %v8166 = vld [vmem:[%s7176 + $0x201] sm:$0xff]
  %v8167 = vld [vmem:[%s7176 + $0x211] sm:$0xff]
  %v8168 = vld [vmem:[%s7176 + $0x219] sm:$0xff]
  %v8169 = vld [vmem:[%s7176 + $0x229] sm:$0xff]
  %v8170 = vld [vmem:[%s7176 + $0x231] sm:$0xff]
  %v8171 = vld [vmem:[%s7176 + $0x241] sm:$0xff]
  %v8172 = vld [vmem:[%s7176 + $0x249] sm:$0xff]
  %v8173 = vld [vmem:[%s7176 + $0x259] sm:$0xff]
  %v8174 = vld [vmem:[%s7176 + $0x261] sm:$0xff]
  %v8175 = vld [vmem:[%s7176 + $0x271] sm:$0xff]
  %v8176 = vld [vmem:[%s7176 + $0x279] sm:$0xff]
  %v8177 = vld [vmem:[%s7176 + $0x289] sm:$0xff]
  %v8178 = vld [vmem:[%s7176 + $0x291] sm:$0xff]
  %v8179 = vld [vmem:[%s7176 + $0x2a1] sm:$0xff]
  %v8180 = vld [vmem:[%s7176 + $0x2a9] sm:$0xff]
  %v8181 = vld [vmem:[%s7176 + $0x2b9] sm:$0xff]
  %v8182 = vld [vmem:[%s7176 + $0x2c1] sm:$0xff]
  %v8183 = vld [vmem:[%s7176 + $0x2d1] sm:$0xff]
  %v8184 = vld [vmem:[%s7176 + $0x2d9] sm:$0xff]
  %v8185 = vld [vmem:[%s7176 + $0x2e9] sm:$0xff]
  %v8186 = vld [vmem:[%s7176 + $0x2f1] sm:$0xff]
  %v8187 = vld [vmem:[%s7176 + $0x301] sm:$0xff]
  %v8188 = vld [vmem:[%s7176 + $0x309] sm:$0xff]
  %v8189 = vld [vmem:[%s7176 + $0x319] sm:$0xff]
  %v8190 = vld [vmem:[%s7176 + $0x321] sm:$0xff]
  %s8191 = scalar_lea.vmem %s9, 4
  %v8192 = vld [vmem:[%s8191] sm:$0x1]
  %v8194 = vlaneseq
  %v8195 = vshrl.u32 %v8194, 7
  %v8196 = vsub.s32 0, %v8195
  %v8197 = vrot.slane %v8192, %v8196
  %v8199 = vmul.f32 %v8127, %v8197
  %v8200 = vmul.f32 %v8128, %v8197
  %v8201 = vmul.f32 %v8129, %v8197
  %v8202 = vmul.f32 %v8130, %v8197
  %v8203 = vmul.f32 %v8131, %v8197
  %v8204 = vmul.f32 %v8132, %v8197
  %v8205 = vmul.f32 %v8133, %v8197
  %v8206 = vmul.f32 %v8134, %v8197
  %v8207 = vmul.f32 %v8135, %v8197
  %v8208 = vmul.f32 %v8136, %v8197
  %v8209 = vmul.f32 %v8137, %v8197
  %v8210 = vmul.f32 %v8138, %v8197
  %v8211 = vmul.f32 %v8139, %v8197
  %v8212 = vmul.f32 %v8140, %v8197
  %v8213 = vmul.f32 %v8141, %v8197
  %v8214 = vmul.f32 %v8142, %v8197
  %v8215 = vmul.f32 %v8143, %v8197
  %v8216 = vmul.f32 %v8144, %v8197
  %v8217 = vmul.f32 %v8145, %v8197
  %v8218 = vmul.f32 %v8146, %v8197
  %v8219 = vmul.f32 %v8147, %v8197
  %v8220 = vmul.f32 %v8148, %v8197
  %v8221 = vmul.f32 %v8149, %v8197
  %v8222 = vmul.f32 %v8150, %v8197
  %v8223 = vmul.f32 %v8151, %v8197
  %v8224 = vmul.f32 %v8152, %v8197
  %v8225 = vmul.f32 %v8153, %v8197
  %v8226 = vmul.f32 %v8154, %v8197
  %v8227 = vmul.f32 %v8155, %v8197
  %v8228 = vmul.f32 %v8156, %v8197
  %v8229 = vmul.f32 %v8157, %v8197
  %v8230 = vmul.f32 %v8158, %v8197
  %v8231 = vmul.f32 %v8159, %v8197
  %v8232 = vmul.f32 %v8160, %v8197
  %v8233 = vmul.f32 %v8161, %v8197
  %v8234 = vmul.f32 %v8162, %v8197
  %v8235 = vmul.f32 %v8163, %v8197
  %v8236 = vmul.f32 %v8164, %v8197
  %v8237 = vmul.f32 %v8165, %v8197
  %v8238 = vmul.f32 %v8166, %v8197
  %v8239 = vmul.f32 %v8167, %v8197
  %v8240 = vmul.f32 %v8168, %v8197
  %v8241 = vmul.f32 %v8169, %v8197
  %v8242 = vmul.f32 %v8170, %v8197
  %v8243 = vmul.f32 %v8171, %v8197
  %v8244 = vmul.f32 %v8172, %v8197
  %v8245 = vmul.f32 %v8173, %v8197
  %v8246 = vmul.f32 %v8174, %v8197
  %v8247 = vmul.f32 %v8175, %v8197
  %v8248 = vmul.f32 %v8176, %v8197
  %v8249 = vmul.f32 %v8177, %v8197
  %v8250 = vmul.f32 %v8178, %v8197
  %v8251 = vmul.f32 %v8179, %v8197
  %v8252 = vmul.f32 %v8180, %v8197
  %v8253 = vmul.f32 %v8181, %v8197
  %v8254 = vmul.f32 %v8182, %v8197
  %v8255 = vmul.f32 %v8183, %v8197
  %v8256 = vmul.f32 %v8184, %v8197
  %v8257 = vmul.f32 %v8185, %v8197
  %v8258 = vmul.f32 %v8186, %v8197
  %v8259 = vmul.f32 %v8187, %v8197
  %v8260 = vmul.f32 %v8188, %v8197
  %v8261 = vmul.f32 %v8189, %v8197
  %v8262 = vmul.f32 %v8190, %v8197
  %v8263 = vadd.f32 %v8063, %v8199
  %v8264 = vadd.f32 %v8064, %v8200
  %v8265 = vadd.f32 %v8065, %v8201
  %v8266 = vadd.f32 %v8066, %v8202
  %v8267 = vadd.f32 %v8067, %v8203
  %v8268 = vadd.f32 %v8068, %v8204
  %v8269 = vadd.f32 %v8069, %v8205
  %v8270 = vadd.f32 %v8070, %v8206
  %v8271 = vadd.f32 %v8071, %v8207
  %v8272 = vadd.f32 %v8072, %v8208
  %v8273 = vadd.f32 %v8073, %v8209
  %v8274 = vadd.f32 %v8074, %v8210
  %v8275 = vadd.f32 %v8075, %v8211
  %v8276 = vadd.f32 %v8076, %v8212
  %v8277 = vadd.f32 %v8077, %v8213
  %v8278 = vadd.f32 %v8078, %v8214
  %v8279 = vadd.f32 %v8079, %v8215
  %v8280 = vadd.f32 %v8080, %v8216
  %v8281 = vadd.f32 %v8081, %v8217
  %v8282 = vadd.f32 %v8082, %v8218
  %v8283 = vadd.f32 %v8083, %v8219
  %v8284 = vadd.f32 %v8084, %v8220
  %v8285 = vadd.f32 %v8085, %v8221
  %v8286 = vadd.f32 %v8086, %v8222
  %v8287 = vadd.f32 %v8087, %v8223
  %v8288 = vadd.f32 %v8088, %v8224
  %v8289 = vadd.f32 %v8089, %v8225
  %v8290 = vadd.f32 %v8090, %v8226
  %v8291 = vadd.f32 %v8091, %v8227
  %v8292 = vadd.f32 %v8092, %v8228
  %v8293 = vadd.f32 %v8093, %v8229
  %v8294 = vadd.f32 %v8094, %v8230
  %v8295 = vadd.f32 %v8095, %v8231
  %v8296 = vadd.f32 %v8096, %v8232
  %v8297 = vadd.f32 %v8097, %v8233
  %v8298 = vadd.f32 %v8098, %v8234
  %v8299 = vadd.f32 %v8099, %v8235
  %v8300 = vadd.f32 %v8100, %v8236
  %v8301 = vadd.f32 %v8101, %v8237
  %v8302 = vadd.f32 %v8102, %v8238
  %v8303 = vadd.f32 %v8103, %v8239
  %v8304 = vadd.f32 %v8104, %v8240
  %v8305 = vadd.f32 %v8105, %v8241
  %v8306 = vadd.f32 %v8106, %v8242
  %v8307 = vadd.f32 %v8107, %v8243
  %v8308 = vadd.f32 %v8108, %v8244
  %v8309 = vadd.f32 %v8109, %v8245
  %v8310 = vadd.f32 %v8110, %v8246
  %v8311 = vadd.f32 %v8111, %v8247
  %v8312 = vadd.f32 %v8112, %v8248
  %v8313 = vadd.f32 %v8113, %v8249
  %v8314 = vadd.f32 %v8114, %v8250
  %v8315 = vadd.f32 %v8115, %v8251
  %v8316 = vadd.f32 %v8116, %v8252
  %v8317 = vadd.f32 %v8117, %v8253
  %v8318 = vadd.f32 %v8118, %v8254
  %v8319 = vadd.f32 %v8119, %v8255
  %v8320 = vadd.f32 %v8120, %v8256
  %v8321 = vadd.f32 %v8121, %v8257
  %v8322 = vadd.f32 %v8122, %v8258
  %v8323 = vadd.f32 %v8123, %v8259
  %v8324 = vadd.f32 %v8124, %v8260
  %v8325 = vadd.f32 %v8125, %v8261
  %v8326 = vadd.f32 %v8126, %v8262
  %v8327 = vld [vmem:[%s7176 + $0x2] sm:$0xff]
  %v8328 = vld [vmem:[%s7176 + $0xa] sm:$0xff]
  %v8329 = vld [vmem:[%s7176 + $0x1a] sm:$0xff]
  %v8330 = vld [vmem:[%s7176 + $0x22] sm:$0xff]
  %v8331 = vld [vmem:[%s7176 + $0x32] sm:$0xff]
  %v8332 = vld [vmem:[%s7176 + $0x3a] sm:$0xff]
  %v8333 = vld [vmem:[%s7176 + $0x4a] sm:$0xff]
  %v8334 = vld [vmem:[%s7176 + $0x52] sm:$0xff]
  %v8335 = vld [vmem:[%s7176 + $0x62] sm:$0xff]
  %v8336 = vld [vmem:[%s7176 + $0x6a] sm:$0xff]
  %v8337 = vld [vmem:[%s7176 + $0x7a] sm:$0xff]
  %v8338 = vld [vmem:[%s7176 + $0x82] sm:$0xff]
  %v8339 = vld [vmem:[%s7176 + $0x92] sm:$0xff]
  %v8340 = vld [vmem:[%s7176 + $0x9a] sm:$0xff]
  %v8341 = vld [vmem:[%s7176 + $0xaa] sm:$0xff]
  %v8342 = vld [vmem:[%s7176 + $0xb2] sm:$0xff]
  %v8343 = vld [vmem:[%s7176 + $0xc2] sm:$0xff]
  %v8344 = vld [vmem:[%s7176 + $0xca] sm:$0xff]
  %v8345 = vld [vmem:[%s7176 + $0xda] sm:$0xff]
  %v8346 = vld [vmem:[%s7176 + $0xe2] sm:$0xff]
  %v8347 = vld [vmem:[%s7176 + $0xf2] sm:$0xff]
  %v8348 = vld [vmem:[%s7176 + $0xfa] sm:$0xff]
  %v8349 = vld [vmem:[%s7176 + $0x10a] sm:$0xff]
  %v8350 = vld [vmem:[%s7176 + $0x112] sm:$0xff]
  %v8351 = vld [vmem:[%s7176 + $0x122] sm:$0xff]
  %v8352 = vld [vmem:[%s7176 + $0x12a] sm:$0xff]
  %v8353 = vld [vmem:[%s7176 + $0x13a] sm:$0xff]
  %v8354 = vld [vmem:[%s7176 + $0x142] sm:$0xff]
  %v8355 = vld [vmem:[%s7176 + $0x152] sm:$0xff]
  %v8356 = vld [vmem:[%s7176 + $0x15a] sm:$0xff]
  %v8357 = vld [vmem:[%s7176 + $0x16a] sm:$0xff]
  %v8358 = vld [vmem:[%s7176 + $0x172] sm:$0xff]
  %v8359 = vld [vmem:[%s7176 + $0x1b2] sm:$0xff]
  %v8360 = vld [vmem:[%s7176 + $0x1ba] sm:$0xff]
  %v8361 = vld [vmem:[%s7176 + $0x1ca] sm:$0xff]
  %v8362 = vld [vmem:[%s7176 + $0x1d2] sm:$0xff]
  %v8363 = vld [vmem:[%s7176 + $0x1e2] sm:$0xff]
  %v8364 = vld [vmem:[%s7176 + $0x1ea] sm:$0xff]
  %v8365 = vld [vmem:[%s7176 + $0x1fa] sm:$0xff]
  %v8366 = vld [vmem:[%s7176 + $0x202] sm:$0xff]
  %v8367 = vld [vmem:[%s7176 + $0x212] sm:$0xff]
  %v8368 = vld [vmem:[%s7176 + $0x21a] sm:$0xff]
  %v8369 = vld [vmem:[%s7176 + $0x22a] sm:$0xff]
  %v8370 = vld [vmem:[%s7176 + $0x232] sm:$0xff]
  %v8371 = vld [vmem:[%s7176 + $0x242] sm:$0xff]
  %v8372 = vld [vmem:[%s7176 + $0x24a] sm:$0xff]
  %v8373 = vld [vmem:[%s7176 + $0x25a] sm:$0xff]
  %v8374 = vld [vmem:[%s7176 + $0x262] sm:$0xff]
  %v8375 = vld [vmem:[%s7176 + $0x272] sm:$0xff]
  %v8376 = vld [vmem:[%s7176 + $0x27a] sm:$0xff]
  %v8377 = vld [vmem:[%s7176 + $0x28a] sm:$0xff]
  %v8378 = vld [vmem:[%s7176 + $0x292] sm:$0xff]
  %v8379 = vld [vmem:[%s7176 + $0x2a2] sm:$0xff]
  %v8380 = vld [vmem:[%s7176 + $0x2aa] sm:$0xff]
  %v8381 = vld [vmem:[%s7176 + $0x2ba] sm:$0xff]
  %v8382 = vld [vmem:[%s7176 + $0x2c2] sm:$0xff]
  %v8383 = vld [vmem:[%s7176 + $0x2d2] sm:$0xff]
  %v8384 = vld [vmem:[%s7176 + $0x2da] sm:$0xff]
  %v8385 = vld [vmem:[%s7176 + $0x2ea] sm:$0xff]
  %v8386 = vld [vmem:[%s7176 + $0x2f2] sm:$0xff]
  %v8387 = vld [vmem:[%s7176 + $0x302] sm:$0xff]
  %v8388 = vld [vmem:[%s7176 + $0x30a] sm:$0xff]
  %v8389 = vld [vmem:[%s7176 + $0x31a] sm:$0xff]
  %v8390 = vld [vmem:[%s7176 + $0x322] sm:$0xff]
  %s8391 = scalar_lea.vmem %s9, 5
  %v8392 = vld [vmem:[%s8391] sm:$0x1]
  %v8394 = vlaneseq
  %v8395 = vshrl.u32 %v8394, 7
  %v8396 = vsub.s32 0, %v8395
  %v8397 = vrot.slane %v8392, %v8396
  %v8399 = vmul.f32 %v8327, %v8397
  %v8400 = vmul.f32 %v8328, %v8397
  %v8401 = vmul.f32 %v8329, %v8397
  %v8402 = vmul.f32 %v8330, %v8397
  %v8403 = vmul.f32 %v8331, %v8397
  %v8404 = vmul.f32 %v8332, %v8397
  %v8405 = vmul.f32 %v8333, %v8397
  %v8406 = vmul.f32 %v8334, %v8397
  %v8407 = vmul.f32 %v8335, %v8397
  %v8408 = vmul.f32 %v8336, %v8397
  %v8409 = vmul.f32 %v8337, %v8397
  %v8410 = vmul.f32 %v8338, %v8397
  %v8411 = vmul.f32 %v8339, %v8397
  %v8412 = vmul.f32 %v8340, %v8397
  %v8413 = vmul.f32 %v8341, %v8397
  %v8414 = vmul.f32 %v8342, %v8397
  %v8415 = vmul.f32 %v8343, %v8397
  %v8416 = vmul.f32 %v8344, %v8397
  %v8417 = vmul.f32 %v8345, %v8397
  %v8418 = vmul.f32 %v8346, %v8397
  %v8419 = vmul.f32 %v8347, %v8397
  %v8420 = vmul.f32 %v8348, %v8397
  %v8421 = vmul.f32 %v8349, %v8397
  %v8422 = vmul.f32 %v8350, %v8397
  %v8423 = vmul.f32 %v8351, %v8397
  %v8424 = vmul.f32 %v8352, %v8397
  %v8425 = vmul.f32 %v8353, %v8397
  %v8426 = vmul.f32 %v8354, %v8397
  %v8427 = vmul.f32 %v8355, %v8397
  %v8428 = vmul.f32 %v8356, %v8397
  %v8429 = vmul.f32 %v8357, %v8397
  %v8430 = vmul.f32 %v8358, %v8397
  %v8431 = vmul.f32 %v8359, %v8397
  %v8432 = vmul.f32 %v8360, %v8397
  %v8433 = vmul.f32 %v8361, %v8397
  %v8434 = vmul.f32 %v8362, %v8397
  %v8435 = vmul.f32 %v8363, %v8397
  %v8436 = vmul.f32 %v8364, %v8397
  %v8437 = vmul.f32 %v8365, %v8397
  %v8438 = vmul.f32 %v8366, %v8397
  %v8439 = vmul.f32 %v8367, %v8397
  %v8440 = vmul.f32 %v8368, %v8397
  %v8441 = vmul.f32 %v8369, %v8397
  %v8442 = vmul.f32 %v8370, %v8397
  %v8443 = vmul.f32 %v8371, %v8397
  %v8444 = vmul.f32 %v8372, %v8397
  %v8445 = vmul.f32 %v8373, %v8397
  %v8446 = vmul.f32 %v8374, %v8397
  %v8447 = vmul.f32 %v8375, %v8397
  %v8448 = vmul.f32 %v8376, %v8397
  %v8449 = vmul.f32 %v8377, %v8397
  %v8450 = vmul.f32 %v8378, %v8397
  %v8451 = vmul.f32 %v8379, %v8397
  %v8452 = vmul.f32 %v8380, %v8397
  %v8453 = vmul.f32 %v8381, %v8397
  %v8454 = vmul.f32 %v8382, %v8397
  %v8455 = vmul.f32 %v8383, %v8397
  %v8456 = vmul.f32 %v8384, %v8397
  %v8457 = vmul.f32 %v8385, %v8397
  %v8458 = vmul.f32 %v8386, %v8397
  %v8459 = vmul.f32 %v8387, %v8397
  %v8460 = vmul.f32 %v8388, %v8397
  %v8461 = vmul.f32 %v8389, %v8397
  %v8462 = vmul.f32 %v8390, %v8397
  %v8463 = vadd.f32 %v8263, %v8399
  %v8464 = vadd.f32 %v8264, %v8400
  %v8465 = vadd.f32 %v8265, %v8401
  %v8466 = vadd.f32 %v8266, %v8402
  %v8467 = vadd.f32 %v8267, %v8403
  %v8468 = vadd.f32 %v8268, %v8404
  %v8469 = vadd.f32 %v8269, %v8405
  %v8470 = vadd.f32 %v8270, %v8406
  %v8471 = vadd.f32 %v8271, %v8407
  %v8472 = vadd.f32 %v8272, %v8408
  %v8473 = vadd.f32 %v8273, %v8409
  %v8474 = vadd.f32 %v8274, %v8410
  %v8475 = vadd.f32 %v8275, %v8411
  %v8476 = vadd.f32 %v8276, %v8412
  %v8477 = vadd.f32 %v8277, %v8413
  %v8478 = vadd.f32 %v8278, %v8414
  %v8479 = vadd.f32 %v8279, %v8415
  %v8480 = vadd.f32 %v8280, %v8416
  %v8481 = vadd.f32 %v8281, %v8417
  %v8482 = vadd.f32 %v8282, %v8418
  %v8483 = vadd.f32 %v8283, %v8419
  %v8484 = vadd.f32 %v8284, %v8420
  %v8485 = vadd.f32 %v8285, %v8421
  %v8486 = vadd.f32 %v8286, %v8422
  %v8487 = vadd.f32 %v8287, %v8423
  %v8488 = vadd.f32 %v8288, %v8424
  %v8489 = vadd.f32 %v8289, %v8425
  %v8490 = vadd.f32 %v8290, %v8426
  %v8491 = vadd.f32 %v8291, %v8427
  %v8492 = vadd.f32 %v8292, %v8428
  %v8493 = vadd.f32 %v8293, %v8429
  %v8494 = vadd.f32 %v8294, %v8430
  %v8495 = vadd.f32 %v8295, %v8431
  %v8496 = vadd.f32 %v8296, %v8432
  %v8497 = vadd.f32 %v8297, %v8433
  %v8498 = vadd.f32 %v8298, %v8434
  %v8499 = vadd.f32 %v8299, %v8435
  %v8500 = vadd.f32 %v8300, %v8436
  %v8501 = vadd.f32 %v8301, %v8437
  %v8502 = vadd.f32 %v8302, %v8438
  %v8503 = vadd.f32 %v8303, %v8439
  %v8504 = vadd.f32 %v8304, %v8440
  %v8505 = vadd.f32 %v8305, %v8441
  %v8506 = vadd.f32 %v8306, %v8442
  %v8507 = vadd.f32 %v8307, %v8443
  %v8508 = vadd.f32 %v8308, %v8444
  %v8509 = vadd.f32 %v8309, %v8445
  %v8510 = vadd.f32 %v8310, %v8446
  %v8511 = vadd.f32 %v8311, %v8447
  %v8512 = vadd.f32 %v8312, %v8448
  %v8513 = vadd.f32 %v8313, %v8449
  %v8514 = vadd.f32 %v8314, %v8450
  %v8515 = vadd.f32 %v8315, %v8451
  %v8516 = vadd.f32 %v8316, %v8452
  %v8517 = vadd.f32 %v8317, %v8453
  %v8518 = vadd.f32 %v8318, %v8454
  %v8519 = vadd.f32 %v8319, %v8455
  %v8520 = vadd.f32 %v8320, %v8456
  %v8521 = vadd.f32 %v8321, %v8457
  %v8522 = vadd.f32 %v8322, %v8458
  %v8523 = vadd.f32 %v8323, %v8459
  %v8524 = vadd.f32 %v8324, %v8460
  %v8525 = vadd.f32 %v8325, %v8461
  %v8526 = vadd.f32 %v8326, %v8462
  %s8527 = scalar_lea.vmem [#allocation3], 48
  %v8528 = vld [vmem:[%s8527] sm:$0xff]
  %v8529 = vld [vmem:[%s8527 + $0x8] sm:$0xff]
  %v8530 = vld [vmem:[%s8527 + $0x18] sm:$0xff]
  %v8531 = vld [vmem:[%s8527 + $0x20] sm:$0xff]
  %v8532 = vld [vmem:[%s8527 + $0x30] sm:$0xff]
  %v8533 = vld [vmem:[%s8527 + $0x38] sm:$0xff]
  %v8534 = vld [vmem:[%s8527 + $0x48] sm:$0xff]
  %v8535 = vld [vmem:[%s8527 + $0x50] sm:$0xff]
  %v8536 = vld [vmem:[%s8527 + $0x60] sm:$0xff]
  %v8537 = vld [vmem:[%s8527 + $0x68] sm:$0xff]
  %v8538 = vld [vmem:[%s8527 + $0x78] sm:$0xff]
  %v8539 = vld [vmem:[%s8527 + $0x80] sm:$0xff]
  %v8540 = vld [vmem:[%s8527 + $0x90] sm:$0xff]
  %v8541 = vld [vmem:[%s8527 + $0x98] sm:$0xff]
  %v8542 = vld [vmem:[%s8527 + $0xa8] sm:$0xff]
  %v8543 = vld [vmem:[%s8527 + $0xb0] sm:$0xff]
  %v8544 = vld [vmem:[%s8527 + $0xc0] sm:$0xff]
  %v8545 = vld [vmem:[%s8527 + $0xc8] sm:$0xff]
  %v8546 = vld [vmem:[%s8527 + $0xd8] sm:$0xff]
  %v8547 = vld [vmem:[%s8527 + $0xe0] sm:$0xff]
  %v8548 = vld [vmem:[%s8527 + $0xf0] sm:$0xff]
  %v8549 = vld [vmem:[%s8527 + $0xf8] sm:$0xff]
  %v8550 = vld [vmem:[%s8527 + $0x108] sm:$0xff]
  %v8551 = vld [vmem:[%s8527 + $0x110] sm:$0xff]
  %v8552 = vld [vmem:[%s8527 + $0x120] sm:$0xff]
  %v8553 = vld [vmem:[%s8527 + $0x128] sm:$0xff]
  %v8554 = vld [vmem:[%s8527 + $0x138] sm:$0xff]
  %v8555 = vld [vmem:[%s8527 + $0x140] sm:$0xff]
  %v8556 = vld [vmem:[%s8527 + $0x150] sm:$0xff]
  %v8557 = vld [vmem:[%s8527 + $0x158] sm:$0xff]
  %v8558 = vld [vmem:[%s8527 + $0x168] sm:$0xff]
  %v8559 = vld [vmem:[%s8527 + $0x170] sm:$0xff]
  %v8560 = vld [vmem:[%s8527 + $0x1b0] sm:$0xff]
  %v8561 = vld [vmem:[%s8527 + $0x1b8] sm:$0xff]
  %v8562 = vld [vmem:[%s8527 + $0x1c8] sm:$0xff]
  %v8563 = vld [vmem:[%s8527 + $0x1d0] sm:$0xff]
  %v8564 = vld [vmem:[%s8527 + $0x1e0] sm:$0xff]
  %v8565 = vld [vmem:[%s8527 + $0x1e8] sm:$0xff]
  %v8566 = vld [vmem:[%s8527 + $0x1f8] sm:$0xff]
  %v8567 = vld [vmem:[%s8527 + $0x200] sm:$0xff]
  %v8568 = vld [vmem:[%s8527 + $0x210] sm:$0xff]
  %v8569 = vld [vmem:[%s8527 + $0x218] sm:$0xff]
  %v8570 = vld [vmem:[%s8527 + $0x228] sm:$0xff]
  %v8571 = vld [vmem:[%s8527 + $0x230] sm:$0xff]
  %v8572 = vld [vmem:[%s8527 + $0x240] sm:$0xff]
  %v8573 = vld [vmem:[%s8527 + $0x248] sm:$0xff]
  %v8574 = vld [vmem:[%s8527 + $0x258] sm:$0xff]
  %v8575 = vld [vmem:[%s8527 + $0x260] sm:$0xff]
  %v8576 = vld [vmem:[%s8527 + $0x270] sm:$0xff]
  %v8577 = vld [vmem:[%s8527 + $0x278] sm:$0xff]
  %v8578 = vld [vmem:[%s8527 + $0x288] sm:$0xff]
  %v8579 = vld [vmem:[%s8527 + $0x290] sm:$0xff]
  %v8580 = vld [vmem:[%s8527 + $0x2a0] sm:$0xff]
  %v8581 = vld [vmem:[%s8527 + $0x2a8] sm:$0xff]
  %v8582 = vld [vmem:[%s8527 + $0x2b8] sm:$0xff]
  %v8583 = vld [vmem:[%s8527 + $0x2c0] sm:$0xff]
  %v8584 = vld [vmem:[%s8527 + $0x2d0] sm:$0xff]
  %v8585 = vld [vmem:[%s8527 + $0x2d8] sm:$0xff]
  %v8586 = vld [vmem:[%s8527 + $0x2e8] sm:$0xff]
  %v8587 = vld [vmem:[%s8527 + $0x2f0] sm:$0xff]
  %v8588 = vld [vmem:[%s8527 + $0x300] sm:$0xff]
  %v8589 = vld [vmem:[%s8527 + $0x308] sm:$0xff]
  %v8590 = vld [vmem:[%s8527 + $0x318] sm:$0xff]
  %v8591 = vld [vmem:[%s8527 + $0x320] sm:$0xff]
  %s8592 = scalar_lea.vmem %s9, 6
  %v8593 = vld [vmem:[%s8592] sm:$0x1]
  %v8595 = vlaneseq
  %v8596 = vshrl.u32 %v8595, 7
  %v8597 = vsub.s32 0, %v8596
  %v8598 = vrot.slane %v8593, %v8597
  %v8600 = vmul.f32 %v8528, %v8598
  %v8601 = vmul.f32 %v8529, %v8598
  %v8602 = vmul.f32 %v8530, %v8598
  %v8603 = vmul.f32 %v8531, %v8598
  %v8604 = vmul.f32 %v8532, %v8598
  %v8605 = vmul.f32 %v8533, %v8598
  %v8606 = vmul.f32 %v8534, %v8598
  %v8607 = vmul.f32 %v8535, %v8598
  %v8608 = vmul.f32 %v8536, %v8598
  %v8609 = vmul.f32 %v8537, %v8598
  %v8610 = vmul.f32 %v8538, %v8598
  %v8611 = vmul.f32 %v8539, %v8598
  %v8612 = vmul.f32 %v8540, %v8598
  %v8613 = vmul.f32 %v8541, %v8598
  %v8614 = vmul.f32 %v8542, %v8598
  %v8615 = vmul.f32 %v8543, %v8598
  %v8616 = vmul.f32 %v8544, %v8598
  %v8617 = vmul.f32 %v8545, %v8598
  %v8618 = vmul.f32 %v8546, %v8598
  %v8619 = vmul.f32 %v8547, %v8598
  %v8620 = vmul.f32 %v8548, %v8598
  %v8621 = vmul.f32 %v8549, %v8598
  %v8622 = vmul.f32 %v8550, %v8598
  %v8623 = vmul.f32 %v8551, %v8598
  %v8624 = vmul.f32 %v8552, %v8598
  %v8625 = vmul.f32 %v8553, %v8598
  %v8626 = vmul.f32 %v8554, %v8598
  %v8627 = vmul.f32 %v8555, %v8598
  %v8628 = vmul.f32 %v8556, %v8598
  %v8629 = vmul.f32 %v8557, %v8598
  %v8630 = vmul.f32 %v8558, %v8598
  %v8631 = vmul.f32 %v8559, %v8598
  %v8632 = vmul.f32 %v8560, %v8598
  %v8633 = vmul.f32 %v8561, %v8598
  %v8634 = vmul.f32 %v8562, %v8598
  %v8635 = vmul.f32 %v8563, %v8598
  %v8636 = vmul.f32 %v8564, %v8598
  %v8637 = vmul.f32 %v8565, %v8598
  %v8638 = vmul.f32 %v8566, %v8598
  %v8639 = vmul.f32 %v8567, %v8598
  %v8640 = vmul.f32 %v8568, %v8598
  %v8641 = vmul.f32 %v8569, %v8598
  %v8642 = vmul.f32 %v8570, %v8598
  %v8643 = vmul.f32 %v8571, %v8598
  %v8644 = vmul.f32 %v8572, %v8598
  %v8645 = vmul.f32 %v8573, %v8598
  %v8646 = vmul.f32 %v8574, %v8598
  %v8647 = vmul.f32 %v8575, %v8598
  %v8648 = vmul.f32 %v8576, %v8598
  %v8649 = vmul.f32 %v8577, %v8598
  %v8650 = vmul.f32 %v8578, %v8598
  %v8651 = vmul.f32 %v8579, %v8598
  %v8652 = vmul.f32 %v8580, %v8598
  %v8653 = vmul.f32 %v8581, %v8598
  %v8654 = vmul.f32 %v8582, %v8598
  %v8655 = vmul.f32 %v8583, %v8598
  %v8656 = vmul.f32 %v8584, %v8598
  %v8657 = vmul.f32 %v8585, %v8598
  %v8658 = vmul.f32 %v8586, %v8598
  %v8659 = vmul.f32 %v8587, %v8598
  %v8660 = vmul.f32 %v8588, %v8598
  %v8661 = vmul.f32 %v8589, %v8598
  %v8662 = vmul.f32 %v8590, %v8598
  %v8663 = vmul.f32 %v8591, %v8598
  %v8664 = vadd.f32 %v8463, %v8600
  %v8665 = vadd.f32 %v8464, %v8601
  %v8666 = vadd.f32 %v8465, %v8602
  %v8667 = vadd.f32 %v8466, %v8603
  %v8668 = vadd.f32 %v8467, %v8604
  %v8669 = vadd.f32 %v8468, %v8605
  %v8670 = vadd.f32 %v8469, %v8606
  %v8671 = vadd.f32 %v8470, %v8607
  %v8672 = vadd.f32 %v8471, %v8608
  %v8673 = vadd.f32 %v8472, %v8609
  %v8674 = vadd.f32 %v8473, %v8610
  %v8675 = vadd.f32 %v8474, %v8611
  %v8676 = vadd.f32 %v8475, %v8612
  %v8677 = vadd.f32 %v8476, %v8613
  %v8678 = vadd.f32 %v8477, %v8614
  %v8679 = vadd.f32 %v8478, %v8615
  %v8680 = vadd.f32 %v8479, %v8616
  %v8681 = vadd.f32 %v8480, %v8617
  %v8682 = vadd.f32 %v8481, %v8618
  %v8683 = vadd.f32 %v8482, %v8619
  %v8684 = vadd.f32 %v8483, %v8620
  %v8685 = vadd.f32 %v8484, %v8621
  %v8686 = vadd.f32 %v8485, %v8622
  %v8687 = vadd.f32 %v8486, %v8623
  %v8688 = vadd.f32 %v8487, %v8624
  %v8689 = vadd.f32 %v8488, %v8625
  %v8690 = vadd.f32 %v8489, %v8626
  %v8691 = vadd.f32 %v8490, %v8627
  %v8692 = vadd.f32 %v8491, %v8628
  %v8693 = vadd.f32 %v8492, %v8629
  %v8694 = vadd.f32 %v8493, %v8630
  %v8695 = vadd.f32 %v8494, %v8631
  %v8696 = vadd.f32 %v8495, %v8632
  %v8697 = vadd.f32 %v8496, %v8633
  %v8698 = vadd.f32 %v8497, %v8634
  %v8699 = vadd.f32 %v8498, %v8635
  %v8700 = vadd.f32 %v8499, %v8636
  %v8701 = vadd.f32 %v8500, %v8637
  %v8702 = vadd.f32 %v8501, %v8638
  %v8703 = vadd.f32 %v8502, %v8639
  %v8704 = vadd.f32 %v8503, %v8640
  %v8705 = vadd.f32 %v8504, %v8641
  %v8706 = vadd.f32 %v8505, %v8642
  %v8707 = vadd.f32 %v8506, %v8643
  %v8708 = vadd.f32 %v8507, %v8644
  %v8709 = vadd.f32 %v8508, %v8645
  %v8710 = vadd.f32 %v8509, %v8646
  %v8711 = vadd.f32 %v8510, %v8647
  %v8712 = vadd.f32 %v8511, %v8648
  %v8713 = vadd.f32 %v8512, %v8649
  %v8714 = vadd.f32 %v8513, %v8650
  %v8715 = vadd.f32 %v8514, %v8651
  %v8716 = vadd.f32 %v8515, %v8652
  %v8717 = vadd.f32 %v8516, %v8653
  %v8718 = vadd.f32 %v8517, %v8654
  %v8719 = vadd.f32 %v8518, %v8655
  %v8720 = vadd.f32 %v8519, %v8656
  %v8721 = vadd.f32 %v8520, %v8657
  %v8722 = vadd.f32 %v8521, %v8658
  %v8723 = vadd.f32 %v8522, %v8659
  %v8724 = vadd.f32 %v8523, %v8660
  %v8725 = vadd.f32 %v8524, %v8661
  %v8726 = vadd.f32 %v8525, %v8662
  %v8727 = vadd.f32 %v8526, %v8663
  %v8728 = vld [vmem:[%s8527 + $0x1] sm:$0xff]
  %v8729 = vld [vmem:[%s8527 + $0x9] sm:$0xff]
  %v8730 = vld [vmem:[%s8527 + $0x19] sm:$0xff]
  %v8731 = vld [vmem:[%s8527 + $0x21] sm:$0xff]
  %v8732 = vld [vmem:[%s8527 + $0x31] sm:$0xff]
  %v8733 = vld [vmem:[%s8527 + $0x39] sm:$0xff]
  %v8734 = vld [vmem:[%s8527 + $0x49] sm:$0xff]
  %v8735 = vld [vmem:[%s8527 + $0x51] sm:$0xff]
  %v8736 = vld [vmem:[%s8527 + $0x61] sm:$0xff]
  %v8737 = vld [vmem:[%s8527 + $0x69] sm:$0xff]
  %v8738 = vld [vmem:[%s8527 + $0x79] sm:$0xff]
  %v8739 = vld [vmem:[%s8527 + $0x81] sm:$0xff]
  %v8740 = vld [vmem:[%s8527 + $0x91] sm:$0xff]
  %v8741 = vld [vmem:[%s8527 + $0x99] sm:$0xff]
  %v8742 = vld [vmem:[%s8527 + $0xa9] sm:$0xff]
  %v8743 = vld [vmem:[%s8527 + $0xb1] sm:$0xff]
  %v8744 = vld [vmem:[%s8527 + $0xc1] sm:$0xff]
  %v8745 = vld [vmem:[%s8527 + $0xc9] sm:$0xff]
  %v8746 = vld [vmem:[%s8527 + $0xd9] sm:$0xff]
  %v8747 = vld [vmem:[%s8527 + $0xe1] sm:$0xff]
  %v8748 = vld [vmem:[%s8527 + $0xf1] sm:$0xff]
  %v8749 = vld [vmem:[%s8527 + $0xf9] sm:$0xff]
  %v8750 = vld [vmem:[%s8527 + $0x109] sm:$0xff]
  %v8751 = vld [vmem:[%s8527 + $0x111] sm:$0xff]
  %v8752 = vld [vmem:[%s8527 + $0x121] sm:$0xff]
  %v8753 = vld [vmem:[%s8527 + $0x129] sm:$0xff]
  %v8754 = vld [vmem:[%s8527 + $0x139] sm:$0xff]
  %v8755 = vld [vmem:[%s8527 + $0x141] sm:$0xff]
  %v8756 = vld [vmem:[%s8527 + $0x151] sm:$0xff]
  %v8757 = vld [vmem:[%s8527 + $0x159] sm:$0xff]
  %v8758 = vld [vmem:[%s8527 + $0x169] sm:$0xff]
  %v8759 = vld [vmem:[%s8527 + $0x171] sm:$0xff]
  %v8760 = vld [vmem:[%s8527 + $0x1b1] sm:$0xff]
  %v8761 = vld [vmem:[%s8527 + $0x1b9] sm:$0xff]
  %v8762 = vld [vmem:[%s8527 + $0x1c9] sm:$0xff]
  %v8763 = vld [vmem:[%s8527 + $0x1d1] sm:$0xff]
  %v8764 = vld [vmem:[%s8527 + $0x1e1] sm:$0xff]
  %v8765 = vld [vmem:[%s8527 + $0x1e9] sm:$0xff]
  %v8766 = vld [vmem:[%s8527 + $0x1f9] sm:$0xff]
  %v8767 = vld [vmem:[%s8527 + $0x201] sm:$0xff]
  %v8768 = vld [vmem:[%s8527 + $0x211] sm:$0xff]
  %v8769 = vld [vmem:[%s8527 + $0x219] sm:$0xff]
  %v8770 = vld [vmem:[%s8527 + $0x229] sm:$0xff]
  %v8771 = vld [vmem:[%s8527 + $0x231] sm:$0xff]
  %v8772 = vld [vmem:[%s8527 + $0x241] sm:$0xff]
  %v8773 = vld [vmem:[%s8527 + $0x249] sm:$0xff]
  %v8774 = vld [vmem:[%s8527 + $0x259] sm:$0xff]
  %v8775 = vld [vmem:[%s8527 + $0x261] sm:$0xff]
  %v8776 = vld [vmem:[%s8527 + $0x271] sm:$0xff]
  %v8777 = vld [vmem:[%s8527 + $0x279] sm:$0xff]
  %v8778 = vld [vmem:[%s8527 + $0x289] sm:$0xff]
  %v8779 = vld [vmem:[%s8527 + $0x291] sm:$0xff]
  %v8780 = vld [vmem:[%s8527 + $0x2a1] sm:$0xff]
  %v8781 = vld [vmem:[%s8527 + $0x2a9] sm:$0xff]
  %v8782 = vld [vmem:[%s8527 + $0x2b9] sm:$0xff]
  %v8783 = vld [vmem:[%s8527 + $0x2c1] sm:$0xff]
  %v8784 = vld [vmem:[%s8527 + $0x2d1] sm:$0xff]
  %v8785 = vld [vmem:[%s8527 + $0x2d9] sm:$0xff]
  %v8786 = vld [vmem:[%s8527 + $0x2e9] sm:$0xff]
  %v8787 = vld [vmem:[%s8527 + $0x2f1] sm:$0xff]
  %v8788 = vld [vmem:[%s8527 + $0x301] sm:$0xff]
  %v8789 = vld [vmem:[%s8527 + $0x309] sm:$0xff]
  %v8790 = vld [vmem:[%s8527 + $0x319] sm:$0xff]
  %v8791 = vld [vmem:[%s8527 + $0x321] sm:$0xff]
  %s8792 = scalar_lea.vmem %s9, 7
  %v8793 = vld [vmem:[%s8792] sm:$0x1]
  %v8795 = vlaneseq
  %v8796 = vshrl.u32 %v8795, 7
  %v8797 = vsub.s32 0, %v8796
  %v8798 = vrot.slane %v8793, %v8797
  %v8800 = vmul.f32 %v8728, %v8798
  %v8801 = vmul.f32 %v8729, %v8798
  %v8802 = vmul.f32 %v8730, %v8798
  %v8803 = vmul.f32 %v8731, %v8798
  %v8804 = vmul.f32 %v8732, %v8798
  %v8805 = vmul.f32 %v8733, %v8798
  %v8806 = vmul.f32 %v8734, %v8798
  %v8807 = vmul.f32 %v8735, %v8798
  %v8808 = vmul.f32 %v8736, %v8798
  %v8809 = vmul.f32 %v8737, %v8798
  %v8810 = vmul.f32 %v8738, %v8798
  %v8811 = vmul.f32 %v8739, %v8798
  %v8812 = vmul.f32 %v8740, %v8798
  %v8813 = vmul.f32 %v8741, %v8798
  %v8814 = vmul.f32 %v8742, %v8798
  %v8815 = vmul.f32 %v8743, %v8798
  %v8816 = vmul.f32 %v8744, %v8798
  %v8817 = vmul.f32 %v8745, %v8798
  %v8818 = vmul.f32 %v8746, %v8798
  %v8819 = vmul.f32 %v8747, %v8798
  %v8820 = vmul.f32 %v8748, %v8798
  %v8821 = vmul.f32 %v8749, %v8798
  %v8822 = vmul.f32 %v8750, %v8798
  %v8823 = vmul.f32 %v8751, %v8798
  %v8824 = vmul.f32 %v8752, %v8798
  %v8825 = vmul.f32 %v8753, %v8798
  %v8826 = vmul.f32 %v8754, %v8798
  %v8827 = vmul.f32 %v8755, %v8798
  %v8828 = vmul.f32 %v8756, %v8798
  %v8829 = vmul.f32 %v8757, %v8798
  %v8830 = vmul.f32 %v8758, %v8798
  %v8831 = vmul.f32 %v8759, %v8798
  %v8832 = vmul.f32 %v8760, %v8798
  %v8833 = vmul.f32 %v8761, %v8798
  %v8834 = vmul.f32 %v8762, %v8798
  %v8835 = vmul.f32 %v8763, %v8798
  %v8836 = vmul.f32 %v8764, %v8798
  %v8837 = vmul.f32 %v8765, %v8798
  %v8838 = vmul.f32 %v8766, %v8798
  %v8839 = vmul.f32 %v8767, %v8798
  %v8840 = vmul.f32 %v8768, %v8798
  %v8841 = vmul.f32 %v8769, %v8798
  %v8842 = vmul.f32 %v8770, %v8798
  %v8843 = vmul.f32 %v8771, %v8798
  %v8844 = vmul.f32 %v8772, %v8798
  %v8845 = vmul.f32 %v8773, %v8798
  %v8846 = vmul.f32 %v8774, %v8798
  %v8847 = vmul.f32 %v8775, %v8798
  %v8848 = vmul.f32 %v8776, %v8798
  %v8849 = vmul.f32 %v8777, %v8798
  %v8850 = vmul.f32 %v8778, %v8798
  %v8851 = vmul.f32 %v8779, %v8798
  %v8852 = vmul.f32 %v8780, %v8798
  %v8853 = vmul.f32 %v8781, %v8798
  %v8854 = vmul.f32 %v8782, %v8798
  %v8855 = vmul.f32 %v8783, %v8798
  %v8856 = vmul.f32 %v8784, %v8798
  %v8857 = vmul.f32 %v8785, %v8798
  %v8858 = vmul.f32 %v8786, %v8798
  %v8859 = vmul.f32 %v8787, %v8798
  %v8860 = vmul.f32 %v8788, %v8798
  %v8861 = vmul.f32 %v8789, %v8798
  %v8862 = vmul.f32 %v8790, %v8798
  %v8863 = vmul.f32 %v8791, %v8798
  %v8864 = vadd.f32 %v8664, %v8800
  %v8865 = vadd.f32 %v8665, %v8801
  %v8866 = vadd.f32 %v8666, %v8802
  %v8867 = vadd.f32 %v8667, %v8803
  %v8868 = vadd.f32 %v8668, %v8804
  %v8869 = vadd.f32 %v8669, %v8805
  %v8870 = vadd.f32 %v8670, %v8806
  %v8871 = vadd.f32 %v8671, %v8807
  %v8872 = vadd.f32 %v8672, %v8808
  %v8873 = vadd.f32 %v8673, %v8809
  %v8874 = vadd.f32 %v8674, %v8810
  %v8875 = vadd.f32 %v8675, %v8811
  %v8876 = vadd.f32 %v8676, %v8812
  %v8877 = vadd.f32 %v8677, %v8813
  %v8878 = vadd.f32 %v8678, %v8814
  %v8879 = vadd.f32 %v8679, %v8815
  %v8880 = vadd.f32 %v8680, %v8816
  %v8881 = vadd.f32 %v8681, %v8817
  %v8882 = vadd.f32 %v8682, %v8818
  %v8883 = vadd.f32 %v8683, %v8819
  %v8884 = vadd.f32 %v8684, %v8820
  %v8885 = vadd.f32 %v8685, %v8821
  %v8886 = vadd.f32 %v8686, %v8822
  %v8887 = vadd.f32 %v8687, %v8823
  %v8888 = vadd.f32 %v8688, %v8824
  %v8889 = vadd.f32 %v8689, %v8825
  %v8890 = vadd.f32 %v8690, %v8826
  %v8891 = vadd.f32 %v8691, %v8827
  %v8892 = vadd.f32 %v8692, %v8828
  %v8893 = vadd.f32 %v8693, %v8829
  %v8894 = vadd.f32 %v8694, %v8830
  %v8895 = vadd.f32 %v8695, %v8831
  %v8896 = vadd.f32 %v8696, %v8832
  %v8897 = vadd.f32 %v8697, %v8833
  %v8898 = vadd.f32 %v8698, %v8834
  %v8899 = vadd.f32 %v8699, %v8835
  %v8900 = vadd.f32 %v8700, %v8836
  %v8901 = vadd.f32 %v8701, %v8837
  %v8902 = vadd.f32 %v8702, %v8838
  %v8903 = vadd.f32 %v8703, %v8839
  %v8904 = vadd.f32 %v8704, %v8840
  %v8905 = vadd.f32 %v8705, %v8841
  %v8906 = vadd.f32 %v8706, %v8842
  %v8907 = vadd.f32 %v8707, %v8843
  %v8908 = vadd.f32 %v8708, %v8844
  %v8909 = vadd.f32 %v8709, %v8845
  %v8910 = vadd.f32 %v8710, %v8846
  %v8911 = vadd.f32 %v8711, %v8847
  %v8912 = vadd.f32 %v8712, %v8848
  %v8913 = vadd.f32 %v8713, %v8849
  %v8914 = vadd.f32 %v8714, %v8850
  %v8915 = vadd.f32 %v8715, %v8851
  %v8916 = vadd.f32 %v8716, %v8852
  %v8917 = vadd.f32 %v8717, %v8853
  %v8918 = vadd.f32 %v8718, %v8854
  %v8919 = vadd.f32 %v8719, %v8855
  %v8920 = vadd.f32 %v8720, %v8856
  %v8921 = vadd.f32 %v8721, %v8857
  %v8922 = vadd.f32 %v8722, %v8858
  %v8923 = vadd.f32 %v8723, %v8859
  %v8924 = vadd.f32 %v8724, %v8860
  %v8925 = vadd.f32 %v8725, %v8861
  %v8926 = vadd.f32 %v8726, %v8862
  %v8927 = vadd.f32 %v8727, %v8863
  %v8928 = vld [vmem:[%s8527 + $0x2] sm:$0xff]
  %v8929 = vld [vmem:[%s8527 + $0xa] sm:$0xff]
  %v8930 = vld [vmem:[%s8527 + $0x1a] sm:$0xff]
  %v8931 = vld [vmem:[%s8527 + $0x22] sm:$0xff]
  %v8932 = vld [vmem:[%s8527 + $0x32] sm:$0xff]
  %v8933 = vld [vmem:[%s8527 + $0x3a] sm:$0xff]
  %v8934 = vld [vmem:[%s8527 + $0x4a] sm:$0xff]
  %v8935 = vld [vmem:[%s8527 + $0x52] sm:$0xff]
  %v8936 = vld [vmem:[%s8527 + $0x62] sm:$0xff]
  %v8937 = vld [vmem:[%s8527 + $0x6a] sm:$0xff]
  %v8938 = vld [vmem:[%s8527 + $0x7a] sm:$0xff]
  %v8939 = vld [vmem:[%s8527 + $0x82] sm:$0xff]
  %v8940 = vld [vmem:[%s8527 + $0x92] sm:$0xff]
  %v8941 = vld [vmem:[%s8527 + $0x9a] sm:$0xff]
  %v8942 = vld [vmem:[%s8527 + $0xaa] sm:$0xff]
  %v8943 = vld [vmem:[%s8527 + $0xb2] sm:$0xff]
  %v8944 = vld [vmem:[%s8527 + $0xc2] sm:$0xff]
  %v8945 = vld [vmem:[%s8527 + $0xca] sm:$0xff]
  %v8946 = vld [vmem:[%s8527 + $0xda] sm:$0xff]
  %v8947 = vld [vmem:[%s8527 + $0xe2] sm:$0xff]
  %v8948 = vld [vmem:[%s8527 + $0xf2] sm:$0xff]
  %v8949 = vld [vmem:[%s8527 + $0xfa] sm:$0xff]
  %v8950 = vld [vmem:[%s8527 + $0x10a] sm:$0xff]
  %v8951 = vld [vmem:[%s8527 + $0x112] sm:$0xff]
  %v8952 = vld [vmem:[%s8527 + $0x122] sm:$0xff]
  %v8953 = vld [vmem:[%s8527 + $0x12a] sm:$0xff]
  %v8954 = vld [vmem:[%s8527 + $0x13a] sm:$0xff]
  %v8955 = vld [vmem:[%s8527 + $0x142] sm:$0xff]
  %v8956 = vld [vmem:[%s8527 + $0x152] sm:$0xff]
  %v8957 = vld [vmem:[%s8527 + $0x15a] sm:$0xff]
  %v8958 = vld [vmem:[%s8527 + $0x16a] sm:$0xff]
  %v8959 = vld [vmem:[%s8527 + $0x172] sm:$0xff]
  %v8960 = vld [vmem:[%s8527 + $0x1b2] sm:$0xff]
  %v8961 = vld [vmem:[%s8527 + $0x1ba] sm:$0xff]
  %v8962 = vld [vmem:[%s8527 + $0x1ca] sm:$0xff]
  %v8963 = vld [vmem:[%s8527 + $0x1d2] sm:$0xff]
  %v8964 = vld [vmem:[%s8527 + $0x1e2] sm:$0xff]
  %v8965 = vld [vmem:[%s8527 + $0x1ea] sm:$0xff]
  %v8966 = vld [vmem:[%s8527 + $0x1fa] sm:$0xff]
  %v8967 = vld [vmem:[%s8527 + $0x202] sm:$0xff]
  %v8968 = vld [vmem:[%s8527 + $0x212] sm:$0xff]
  %v8969 = vld [vmem:[%s8527 + $0x21a] sm:$0xff]
  %v8970 = vld [vmem:[%s8527 + $0x22a] sm:$0xff]
  %v8971 = vld [vmem:[%s8527 + $0x232] sm:$0xff]
  %v8972 = vld [vmem:[%s8527 + $0x242] sm:$0xff]
  %v8973 = vld [vmem:[%s8527 + $0x24a] sm:$0xff]
  %v8974 = vld [vmem:[%s8527 + $0x25a] sm:$0xff]
  %v8975 = vld [vmem:[%s8527 + $0x262] sm:$0xff]
  %v8976 = vld [vmem:[%s8527 + $0x272] sm:$0xff]
  %v8977 = vld [vmem:[%s8527 + $0x27a] sm:$0xff]
  %v8978 = vld [vmem:[%s8527 + $0x28a] sm:$0xff]
  %v8979 = vld [vmem:[%s8527 + $0x292] sm:$0xff]
  %v8980 = vld [vmem:[%s8527 + $0x2a2] sm:$0xff]
  %v8981 = vld [vmem:[%s8527 + $0x2aa] sm:$0xff]
  %v8982 = vld [vmem:[%s8527 + $0x2ba] sm:$0xff]
  %v8983 = vld [vmem:[%s8527 + $0x2c2] sm:$0xff]
  %v8984 = vld [vmem:[%s8527 + $0x2d2] sm:$0xff]
  %v8985 = vld [vmem:[%s8527 + $0x2da] sm:$0xff]
  %v8986 = vld [vmem:[%s8527 + $0x2ea] sm:$0xff]
  %v8987 = vld [vmem:[%s8527 + $0x2f2] sm:$0xff]
  %v8988 = vld [vmem:[%s8527 + $0x302] sm:$0xff]
  %v8989 = vld [vmem:[%s8527 + $0x30a] sm:$0xff]
  %v8990 = vld [vmem:[%s8527 + $0x31a] sm:$0xff]
  %v8991 = vld [vmem:[%s8527 + $0x322] sm:$0xff]
  %s8992 = scalar_lea.vmem %s9, 8
  %v8993 = vld [vmem:[%s8992] sm:$0x1]
  %v8995 = vlaneseq
  %v8996 = vshrl.u32 %v8995, 7
  %v8997 = vsub.s32 0, %v8996
  %v8998 = vrot.slane %v8993, %v8997
  %v9000 = vmul.f32 %v8928, %v8998
  %v9001 = vmul.f32 %v8929, %v8998
  %v9002 = vmul.f32 %v8930, %v8998
  %v9003 = vmul.f32 %v8931, %v8998
  %v9004 = vmul.f32 %v8932, %v8998
  %v9005 = vmul.f32 %v8933, %v8998
  %v9006 = vmul.f32 %v8934, %v8998
  %v9007 = vmul.f32 %v8935, %v8998
  %v9008 = vmul.f32 %v8936, %v8998
  %v9009 = vmul.f32 %v8937, %v8998
  %v9010 = vmul.f32 %v8938, %v8998
  %v9011 = vmul.f32 %v8939, %v8998
  %v9012 = vmul.f32 %v8940, %v8998
  %v9013 = vmul.f32 %v8941, %v8998
  %v9014 = vmul.f32 %v8942, %v8998
  %v9015 = vmul.f32 %v8943, %v8998
  %v9016 = vmul.f32 %v8944, %v8998
  %v9017 = vmul.f32 %v8945, %v8998
  %v9018 = vmul.f32 %v8946, %v8998
  %v9019 = vmul.f32 %v8947, %v8998
  %v9020 = vmul.f32 %v8948, %v8998
  %v9021 = vmul.f32 %v8949, %v8998
  %v9022 = vmul.f32 %v8950, %v8998
  %v9023 = vmul.f32 %v8951, %v8998
  %v9024 = vmul.f32 %v8952, %v8998
  %v9025 = vmul.f32 %v8953, %v8998
  %v9026 = vmul.f32 %v8954, %v8998
  %v9027 = vmul.f32 %v8955, %v8998
  %v9028 = vmul.f32 %v8956, %v8998
  %v9029 = vmul.f32 %v8957, %v8998
  %v9030 = vmul.f32 %v8958, %v8998
  %v9031 = vmul.f32 %v8959, %v8998
  %v9032 = vmul.f32 %v8960, %v8998
  %v9033 = vmul.f32 %v8961, %v8998
  %v9034 = vmul.f32 %v8962, %v8998
  %v9035 = vmul.f32 %v8963, %v8998
  %v9036 = vmul.f32 %v8964, %v8998
  %v9037 = vmul.f32 %v8965, %v8998
  %v9038 = vmul.f32 %v8966, %v8998
  %v9039 = vmul.f32 %v8967, %v8998
  %v9040 = vmul.f32 %v8968, %v8998
  %v9041 = vmul.f32 %v8969, %v8998
  %v9042 = vmul.f32 %v8970, %v8998
  %v9043 = vmul.f32 %v8971, %v8998
  %v9044 = vmul.f32 %v8972, %v8998
  %v9045 = vmul.f32 %v8973, %v8998
  %v9046 = vmul.f32 %v8974, %v8998
  %v9047 = vmul.f32 %v8975, %v8998
  %v9048 = vmul.f32 %v8976, %v8998
  %v9049 = vmul.f32 %v8977, %v8998
  %v9050 = vmul.f32 %v8978, %v8998
  %v9051 = vmul.f32 %v8979, %v8998
  %v9052 = vmul.f32 %v8980, %v8998
  %v9053 = vmul.f32 %v8981, %v8998
  %v9054 = vmul.f32 %v8982, %v8998
  %v9055 = vmul.f32 %v8983, %v8998
  %v9056 = vmul.f32 %v8984, %v8998
  %v9057 = vmul.f32 %v8985, %v8998
  %v9058 = vmul.f32 %v8986, %v8998
  %v9059 = vmul.f32 %v8987, %v8998
  %v9060 = vmul.f32 %v8988, %v8998
  %v9061 = vmul.f32 %v8989, %v8998
  %v9062 = vmul.f32 %v8990, %v8998
  %v9063 = vmul.f32 %v8991, %v8998
  %v9064 = vadd.f32 %v8864, %v9000
  %v9065 = vadd.f32 %v8865, %v9001
  %v9066 = vadd.f32 %v8866, %v9002
  %v9067 = vadd.f32 %v8867, %v9003
  %v9068 = vadd.f32 %v8868, %v9004
  %v9069 = vadd.f32 %v8869, %v9005
  %v9070 = vadd.f32 %v8870, %v9006
  %v9071 = vadd.f32 %v8871, %v9007
  %v9072 = vadd.f32 %v8872, %v9008
  %v9073 = vadd.f32 %v8873, %v9009
  %v9074 = vadd.f32 %v8874, %v9010
  %v9075 = vadd.f32 %v8875, %v9011
  %v9076 = vadd.f32 %v8876, %v9012
  %v9077 = vadd.f32 %v8877, %v9013
  %v9078 = vadd.f32 %v8878, %v9014
  %v9079 = vadd.f32 %v8879, %v9015
  %v9080 = vadd.f32 %v8880, %v9016
  %v9081 = vadd.f32 %v8881, %v9017
  %v9082 = vadd.f32 %v8882, %v9018
  %v9083 = vadd.f32 %v8883, %v9019
  %v9084 = vadd.f32 %v8884, %v9020
  %v9085 = vadd.f32 %v8885, %v9021
  %v9086 = vadd.f32 %v8886, %v9022
  %v9087 = vadd.f32 %v8887, %v9023
  %v9088 = vadd.f32 %v8888, %v9024
  %v9089 = vadd.f32 %v8889, %v9025
  %v9090 = vadd.f32 %v8890, %v9026
  %v9091 = vadd.f32 %v8891, %v9027
  %v9092 = vadd.f32 %v8892, %v9028
  %v9093 = vadd.f32 %v8893, %v9029
  %v9094 = vadd.f32 %v8894, %v9030
  %v9095 = vadd.f32 %v8895, %v9031
  %v9096 = vadd.f32 %v8896, %v9032
  %v9097 = vadd.f32 %v8897, %v9033
  %v9098 = vadd.f32 %v8898, %v9034
  %v9099 = vadd.f32 %v8899, %v9035
  %v9100 = vadd.f32 %v8900, %v9036
  %v9101 = vadd.f32 %v8901, %v9037
  %v9102 = vadd.f32 %v8902, %v9038
  %v9103 = vadd.f32 %v8903, %v9039
  %v9104 = vadd.f32 %v8904, %v9040
  %v9105 = vadd.f32 %v8905, %v9041
  %v9106 = vadd.f32 %v8906, %v9042
  %v9107 = vadd.f32 %v8907, %v9043
  %v9108 = vadd.f32 %v8908, %v9044
  %v9109 = vadd.f32 %v8909, %v9045
  %v9110 = vadd.f32 %v8910, %v9046
  %v9111 = vadd.f32 %v8911, %v9047
  %v9112 = vadd.f32 %v8912, %v9048
  %v9113 = vadd.f32 %v8913, %v9049
  %v9114 = vadd.f32 %v8914, %v9050
  %v9115 = vadd.f32 %v8915, %v9051
  %v9116 = vadd.f32 %v8916, %v9052
  %v9117 = vadd.f32 %v8917, %v9053
  %v9118 = vadd.f32 %v8918, %v9054
  %v9119 = vadd.f32 %v8919, %v9055
  %v9120 = vadd.f32 %v8920, %v9056
  %v9121 = vadd.f32 %v8921, %v9057
  %v9122 = vadd.f32 %v8922, %v9058
  %v9123 = vadd.f32 %v8923, %v9059
  %v9124 = vadd.f32 %v8924, %v9060
  %v9125 = vadd.f32 %v8925, %v9061
  %v9126 = vadd.f32 %v8926, %v9062
  %v9127 = vadd.f32 %v8927, %v9063
  %v9128 = vld [vmem:[%s10] sm:$0xf]
  %v9130 = vsel %vm6629, %v9064, 0
  %v9133 = vsel %vm6629, %v9065, 0
  %v9136 = vsel %vm6629, %v9066, 0
  %v9139 = vsel %vm6629, %v9067, 0
  %v9142 = vsel %vm6629, %v9068, 0
  %v9145 = vsel %vm6629, %v9069, 0
  %v9148 = vsel %vm6629, %v9070, 0
  %v9151 = vsel %vm6629, %v9071, 0
  %v9154 = vsel %vm6629, %v9072, 0
  %v9157 = vsel %vm6629, %v9073, 0
  %v9160 = vsel %vm6629, %v9074, 0
  %v9163 = vsel %vm6629, %v9075, 0
  %v9166 = vsel %vm6629, %v9076, 0
  %v9169 = vsel %vm6629, %v9077, 0
  %v9172 = vsel %vm6629, %v9078, 0
  %v9175 = vsel %vm6629, %v9079, 0
  %v9178 = vsel %vm6629, %v9080, 0
  %v9181 = vsel %vm6629, %v9081, 0
  %v9184 = vsel %vm6629, %v9082, 0
  %v9187 = vsel %vm6629, %v9083, 0
  %v9190 = vsel %vm6629, %v9084, 0
  %v9193 = vsel %vm6629, %v9085, 0
  %v9196 = vsel %vm6629, %v9086, 0
  %v9199 = vsel %vm6629, %v9087, 0
  %v9202 = vsel %vm6629, %v9088, 0
  %v9205 = vsel %vm6629, %v9089, 0
  %v9208 = vsel %vm6629, %v9090, 0
  %v9211 = vsel %vm6629, %v9091, 0
  %v9214 = vsel %vm6629, %v9092, 0
  %v9217 = vsel %vm6629, %v9093, 0
  %v9220 = vsel %vm6629, %v9094, 0
  %v9223 = vsel %vm6629, %v9095, 0
  %v9226 = vsel %vm6629, %v9096, 0
  %v9229 = vsel %vm6629, %v9097, 0
  %v9232 = vsel %vm6629, %v9098, 0
  %v9235 = vsel %vm6629, %v9099, 0
  %v9238 = vsel %vm6629, %v9100, 0
  %v9241 = vsel %vm6629, %v9101, 0
  %v9244 = vsel %vm6629, %v9102, 0
  %v9247 = vsel %vm6629, %v9103, 0
  %v9250 = vsel %vm6629, %v9104, 0
  %v9253 = vsel %vm6629, %v9105, 0
  %v9256 = vsel %vm6629, %v9106, 0
  %v9259 = vsel %vm6629, %v9107, 0
  %v9262 = vsel %vm6629, %v9108, 0
  %v9265 = vsel %vm6629, %v9109, 0
  %v9268 = vsel %vm6629, %v9110, 0
  %v9271 = vsel %vm6629, %v9111, 0
  %v9274 = vsel %vm6629, %v9112, 0
  %v9277 = vsel %vm6629, %v9113, 0
  %v9280 = vsel %vm6629, %v9114, 0
  %v9283 = vsel %vm6629, %v9115, 0
  %v9286 = vsel %vm6629, %v9116, 0
  %v9289 = vsel %vm6629, %v9117, 0
  %v9292 = vsel %vm6629, %v9118, 0
  %v9295 = vsel %vm6629, %v9119, 0
  %v9298 = vsel %vm6629, %v9120, 0
  %v9301 = vsel %vm6629, %v9121, 0
  %v9304 = vsel %vm6629, %v9122, 0
  %v9307 = vsel %vm6629, %v9123, 0
  %v9310 = vsel %vm6629, %v9124, 0
  %v9313 = vsel %vm6629, %v9125, 0
  %v9316 = vsel %vm6629, %v9126, 0
  %v9319 = vsel %vm6629, %v9127, 0
  %v9322 = vsel %vm779, %v9128, 0
  %9324 = vmatprep.subr.mxu0 0.0
  %9325 = vmatpush1.msra.mxu0 0.0
  %9326 = vmatprep.subr.mxu0 0.0
  %9327 = vmatpush1.msra.mxu0 0.0
  %9328 = vmatprep.subr.mxu0 0.0
  %9329 = vmatpush1.msra.mxu0 0.0
  %9330 = vmatprep.subr.mxu0 0.0
  %9331 = vmatpush1.msra.mxu0 0.0
  %9332 = vmatprep.subr.mxu0 0.0
  %9333 = vmatpush1.msra.mxu0 0.0
  %9334 = vmatprep.subr.mxu0 0.0
  %9335 = vmatpush1.msra.mxu0 0.0
  %9336 = vmatprep.subr.mxu0 0.0
  %9337 = vmatpush1.msra.mxu0 0.0
  %9338 = vmatprep.subr.mxu0 0.0
  %9339 = vmatpush1.msra.mxu0 0.0
  %9340 = vmatprep.subr.mxu0 0.0
  %9341 = vmatpush1.msra.mxu0 0.0
  %9342 = vmatprep.subr.mxu0 0.0
  %9343 = vmatpush1.msra.mxu0 0.0
  %9344 = vmatprep.subr.mxu0 0.0
  %9345 = vmatpush1.msra.mxu0 0.0
  %9346 = vmatprep.subr.mxu0 0.0
  %9347 = vmatpush1.msra.mxu0 0.0
  %9348 = vmatprep.subr.mxu0 0.0
  %9349 = vmatpush1.msra.mxu0 0.0
  %9350 = vmatprep.subr.mxu0 0.0
  %9351 = vmatpush1.msra.mxu0 0.0
  %9352 = vmatprep.subr.mxu0 0.0
  %9353 = vmatpush1.msra.mxu0 0.0
  %9354 = vmatprep.subr.mxu0 0.0
  %9355 = vmatpush1.msra.mxu0 %v9322
  %9356 = vmatprep.subr.mxu0 0.0
  %9357 = vmatpush2.msra.mxu0 0.0
  %9358 = vmatprep.subr.mxu0 0.0
  %9359 = vmatpush2.msra.mxu0 0.0
  %9360 = vmatprep.subr.mxu0 0.0
  %9361 = vmatpush2.msra.mxu0 0.0
  %9362 = vmatprep.subr.mxu0 0.0
  %9363 = vmatpush2.msra.mxu0 0.0
  %9364 = vmatprep.subr.mxu0 0.0
  %9365 = vmatpush2.msra.mxu0 0.0
  %9366 = vmatprep.subr.mxu0 0.0
  %9367 = vmatpush2.msra.mxu0 0.0
  %9368 = vmatprep.subr.mxu0 0.0
  %9369 = vmatpush2.msra.mxu0 0.0
  %9370 = vmatprep.subr.mxu0 0.0
  %9371 = vmatpush2.msra.mxu0 0.0
  %9372 = vmatprep.subr.mxu0 0.0
  %9373 = vmatpush2.msra.mxu0 0.0
  %9374 = vmatprep.subr.mxu0 0.0
  %9375 = vmatpush2.msra.mxu0 0.0
  %9376 = vmatprep.subr.mxu0 0.0
  %9377 = vmatpush2.msra.mxu0 0.0
  %9378 = vmatprep.subr.mxu0 0.0
  %9379 = vmatpush2.msra.mxu0 0.0
  %9380 = vmatprep.subr.mxu0 0.0
  %9381 = vmatpush2.msra.mxu0 0.0
  %9382 = vmatprep.subr.mxu0 0.0
  %9383 = vmatpush2.msra.mxu0 0.0
  %9384 = vmatprep.subr.mxu0 0.0
  %9385 = vmatpush2.msra.mxu0 0.0
  %9386 = vmatprep.subr.mxu0 0.0
  %9387 = vmatpush2.msra.mxu0 0.0
  %9388 = vmatprep.mubr.f32.mxu0 0.0
  %9389 = vmatmul.mubr.f32.gmra.mxu0 %v9130
  %v9390 = vpop.f32.mrf.mxu0
  %v9391 = vadd.f32 0.0, %v9390
  %v9392 = vpop.f32.mrf.mxu0
  %9393 = vmatprep.mubr.f32.mxu0 0.0
  %9394 = vmatmul.mubr.f32.gmra.mxu0 %v9133
  %v9395 = vpop.f32.mrf.mxu0
  %v9396 = vadd.f32 0.0, %v9395
  %v9397 = vpop.f32.mrf.mxu0
  %9398 = vmatprep.mubr.f32.mxu0 0.0
  %9399 = vmatmul.mubr.f32.gmra.mxu0 %v9136
  %v9400 = vpop.f32.mrf.mxu0
  %v9401 = vadd.f32 0.0, %v9400
  %v9402 = vpop.f32.mrf.mxu0
  %9403 = vmatprep.mubr.f32.mxu0 0.0
  %9404 = vmatmul.mubr.f32.gmra.mxu0 %v9139
  %v9405 = vpop.f32.mrf.mxu0
  %v9406 = vadd.f32 0.0, %v9405
  %v9407 = vpop.f32.mrf.mxu0
  %9408 = vmatprep.mubr.f32.mxu0 0.0
  %9409 = vmatmul.mubr.f32.gmra.mxu0 %v9142
  %v9410 = vpop.f32.mrf.mxu0
  %v9411 = vadd.f32 0.0, %v9410
  %v9412 = vpop.f32.mrf.mxu0
  %9413 = vmatprep.mubr.f32.mxu0 0.0
  %9414 = vmatmul.mubr.f32.gmra.mxu0 %v9145
  %v9415 = vpop.f32.mrf.mxu0
  %v9416 = vadd.f32 0.0, %v9415
  %v9417 = vpop.f32.mrf.mxu0
  %9418 = vmatprep.mubr.f32.mxu0 0.0
  %9419 = vmatmul.mubr.f32.gmra.mxu0 %v9148
  %v9420 = vpop.f32.mrf.mxu0
  %v9421 = vadd.f32 0.0, %v9420
  %v9422 = vpop.f32.mrf.mxu0
  %9423 = vmatprep.mubr.f32.mxu0 0.0
  %9424 = vmatmul.mubr.f32.gmra.mxu0 %v9151
  %v9425 = vpop.f32.mrf.mxu0
  %v9426 = vadd.f32 0.0, %v9425
  %v9427 = vpop.f32.mrf.mxu0
  %9428 = vmatprep.mubr.f32.mxu0 0.0
  %9429 = vmatmul.mubr.f32.gmra.mxu0 %v9154
  %v9430 = vpop.f32.mrf.mxu0
  %v9431 = vadd.f32 0.0, %v9430
  %v9432 = vpop.f32.mrf.mxu0
  %9433 = vmatprep.mubr.f32.mxu0 0.0
  %9434 = vmatmul.mubr.f32.gmra.mxu0 %v9157
  %v9435 = vpop.f32.mrf.mxu0
  %v9436 = vadd.f32 0.0, %v9435
  %v9437 = vpop.f32.mrf.mxu0
  %9438 = vmatprep.mubr.f32.mxu0 0.0
  %9439 = vmatmul.mubr.f32.gmra.mxu0 %v9160
  %v9440 = vpop.f32.mrf.mxu0
  %v9441 = vadd.f32 0.0, %v9440
  %v9442 = vpop.f32.mrf.mxu0
  %9443 = vmatprep.mubr.f32.mxu0 0.0
  %9444 = vmatmul.mubr.f32.gmra.mxu0 %v9163
  %v9445 = vpop.f32.mrf.mxu0
  %v9446 = vadd.f32 0.0, %v9445
  %v9447 = vpop.f32.mrf.mxu0
  %9448 = vmatprep.mubr.f32.mxu0 0.0
  %9449 = vmatmul.mubr.f32.gmra.mxu0 %v9166
  %v9450 = vpop.f32.mrf.mxu0
  %v9451 = vadd.f32 0.0, %v9450
  %v9452 = vpop.f32.mrf.mxu0
  %9453 = vmatprep.mubr.f32.mxu0 0.0
  %9454 = vmatmul.mubr.f32.gmra.mxu0 %v9169
  %v9455 = vpop.f32.mrf.mxu0
  %v9456 = vadd.f32 0.0, %v9455
  %v9457 = vpop.f32.mrf.mxu0
  %9458 = vmatprep.mubr.f32.mxu0 0.0
  %9459 = vmatmul.mubr.f32.gmra.mxu0 %v9172
  %v9460 = vpop.f32.mrf.mxu0
  %v9461 = vadd.f32 0.0, %v9460
  %v9462 = vpop.f32.mrf.mxu0
  %9463 = vmatprep.mubr.f32.mxu0 0.0
  %9464 = vmatmul.mubr.f32.gmra.mxu0 %v9175
  %v9465 = vpop.f32.mrf.mxu0
  %v9466 = vadd.f32 0.0, %v9465
  %v9467 = vpop.f32.mrf.mxu0
  %9468 = vmatprep.mubr.f32.mxu0 0.0
  %9469 = vmatmul.mubr.f32.gmra.mxu0 %v9178
  %v9470 = vpop.f32.mrf.mxu0
  %v9471 = vadd.f32 0.0, %v9470
  %v9472 = vpop.f32.mrf.mxu0
  %9473 = vmatprep.mubr.f32.mxu0 0.0
  %9474 = vmatmul.mubr.f32.gmra.mxu0 %v9181
  %v9475 = vpop.f32.mrf.mxu0
  %v9476 = vadd.f32 0.0, %v9475
  %v9477 = vpop.f32.mrf.mxu0
  %9478 = vmatprep.mubr.f32.mxu0 0.0
  %9479 = vmatmul.mubr.f32.gmra.mxu0 %v9184
  %v9480 = vpop.f32.mrf.mxu0
  %v9481 = vadd.f32 0.0, %v9480
  %v9482 = vpop.f32.mrf.mxu0
  %9483 = vmatprep.mubr.f32.mxu0 0.0
  %9484 = vmatmul.mubr.f32.gmra.mxu0 %v9187
  %v9485 = vpop.f32.mrf.mxu0
  %v9486 = vadd.f32 0.0, %v9485
  %v9487 = vpop.f32.mrf.mxu0
  %9488 = vmatprep.mubr.f32.mxu0 0.0
  %9489 = vmatmul.mubr.f32.gmra.mxu0 %v9190
  %v9490 = vpop.f32.mrf.mxu0
  %v9491 = vadd.f32 0.0, %v9490
  %v9492 = vpop.f32.mrf.mxu0
  %9493 = vmatprep.mubr.f32.mxu0 0.0
  %9494 = vmatmul.mubr.f32.gmra.mxu0 %v9193
  %v9495 = vpop.f32.mrf.mxu0
  %v9496 = vadd.f32 0.0, %v9495
  %v9497 = vpop.f32.mrf.mxu0
  %9498 = vmatprep.mubr.f32.mxu0 0.0
  %9499 = vmatmul.mubr.f32.gmra.mxu0 %v9196
  %v9500 = vpop.f32.mrf.mxu0
  %v9501 = vadd.f32 0.0, %v9500
  %v9502 = vpop.f32.mrf.mxu0
  %9503 = vmatprep.mubr.f32.mxu0 0.0
  %9504 = vmatmul.mubr.f32.gmra.mxu0 %v9199
  %v9505 = vpop.f32.mrf.mxu0
  %v9506 = vadd.f32 0.0, %v9505
  %v9507 = vpop.f32.mrf.mxu0
  %9508 = vmatprep.mubr.f32.mxu0 0.0
  %9509 = vmatmul.mubr.f32.gmra.mxu0 %v9202
  %v9510 = vpop.f32.mrf.mxu0
  %v9511 = vadd.f32 0.0, %v9510
  %v9512 = vpop.f32.mrf.mxu0
  %9513 = vmatprep.mubr.f32.mxu0 0.0
  %9514 = vmatmul.mubr.f32.gmra.mxu0 %v9205
  %v9515 = vpop.f32.mrf.mxu0
  %v9516 = vadd.f32 0.0, %v9515
  %v9517 = vpop.f32.mrf.mxu0
  %9518 = vmatprep.mubr.f32.mxu0 0.0
  %9519 = vmatmul.mubr.f32.gmra.mxu0 %v9208
  %v9520 = vpop.f32.mrf.mxu0
  %v9521 = vadd.f32 0.0, %v9520
  %v9522 = vpop.f32.mrf.mxu0
  %9523 = vmatprep.mubr.f32.mxu0 0.0
  %9524 = vmatmul.mubr.f32.gmra.mxu0 %v9211
  %v9525 = vpop.f32.mrf.mxu0
  %v9526 = vadd.f32 0.0, %v9525
  %v9527 = vpop.f32.mrf.mxu0
  %9528 = vmatprep.mubr.f32.mxu0 0.0
  %9529 = vmatmul.mubr.f32.gmra.mxu0 %v9214
  %v9530 = vpop.f32.mrf.mxu0
  %v9531 = vadd.f32 0.0, %v9530
  %v9532 = vpop.f32.mrf.mxu0
  %9533 = vmatprep.mubr.f32.mxu0 0.0
  %9534 = vmatmul.mubr.f32.gmra.mxu0 %v9217
  %v9535 = vpop.f32.mrf.mxu0
  %v9536 = vadd.f32 0.0, %v9535
  %v9537 = vpop.f32.mrf.mxu0
  %9538 = vmatprep.mubr.f32.mxu0 0.0
  %9539 = vmatmul.mubr.f32.gmra.mxu0 %v9220
  %v9540 = vpop.f32.mrf.mxu0
  %v9541 = vadd.f32 0.0, %v9540
  %v9542 = vpop.f32.mrf.mxu0
  %9543 = vmatprep.mubr.f32.mxu0 0.0
  %9544 = vmatmul.mubr.f32.gmra.mxu0 %v9223
  %v9545 = vpop.f32.mrf.mxu0
  %v9546 = vadd.f32 0.0, %v9545
  %v9547 = vpop.f32.mrf.mxu0
  %9548 = vmatprep.mubr.f32.mxu0 0.0
  %9549 = vmatmul.mubr.f32.gmra.mxu0 %v9226
  %v9550 = vpop.f32.mrf.mxu0
  %v9551 = vadd.f32 0.0, %v9550
  %v9552 = vpop.f32.mrf.mxu0
  %9553 = vmatprep.mubr.f32.mxu0 0.0
  %9554 = vmatmul.mubr.f32.gmra.mxu0 %v9229
  %v9555 = vpop.f32.mrf.mxu0
  %v9556 = vadd.f32 0.0, %v9555
  %v9557 = vpop.f32.mrf.mxu0
  %9558 = vmatprep.mubr.f32.mxu0 0.0
  %9559 = vmatmul.mubr.f32.gmra.mxu0 %v9232
  %v9560 = vpop.f32.mrf.mxu0
  %v9561 = vadd.f32 0.0, %v9560
  %v9562 = vpop.f32.mrf.mxu0
  %9563 = vmatprep.mubr.f32.mxu0 0.0
  %9564 = vmatmul.mubr.f32.gmra.mxu0 %v9235
  %v9565 = vpop.f32.mrf.mxu0
  %v9566 = vadd.f32 0.0, %v9565
  %v9567 = vpop.f32.mrf.mxu0
  %9568 = vmatprep.mubr.f32.mxu0 0.0
  %9569 = vmatmul.mubr.f32.gmra.mxu0 %v9238
  %v9570 = vpop.f32.mrf.mxu0
  %v9571 = vadd.f32 0.0, %v9570
  %v9572 = vpop.f32.mrf.mxu0
  %9573 = vmatprep.mubr.f32.mxu0 0.0
  %9574 = vmatmul.mubr.f32.gmra.mxu0 %v9241
  %v9575 = vpop.f32.mrf.mxu0
  %v9576 = vadd.f32 0.0, %v9575
  %v9577 = vpop.f32.mrf.mxu0
  %9578 = vmatprep.mubr.f32.mxu0 0.0
  %9579 = vmatmul.mubr.f32.gmra.mxu0 %v9244
  %v9580 = vpop.f32.mrf.mxu0
  %v9581 = vadd.f32 0.0, %v9580
  %v9582 = vpop.f32.mrf.mxu0
  %9583 = vmatprep.mubr.f32.mxu0 0.0
  %9584 = vmatmul.mubr.f32.gmra.mxu0 %v9247
  %v9585 = vpop.f32.mrf.mxu0
  %v9586 = vadd.f32 0.0, %v9585
  %v9587 = vpop.f32.mrf.mxu0
  %9588 = vmatprep.mubr.f32.mxu0 0.0
  %9589 = vmatmul.mubr.f32.gmra.mxu0 %v9250
  %v9590 = vpop.f32.mrf.mxu0
  %v9591 = vadd.f32 0.0, %v9590
  %v9592 = vpop.f32.mrf.mxu0
  %9593 = vmatprep.mubr.f32.mxu0 0.0
  %9594 = vmatmul.mubr.f32.gmra.mxu0 %v9253
  %v9595 = vpop.f32.mrf.mxu0
  %v9596 = vadd.f32 0.0, %v9595
  %v9597 = vpop.f32.mrf.mxu0
  %9598 = vmatprep.mubr.f32.mxu0 0.0
  %9599 = vmatmul.mubr.f32.gmra.mxu0 %v9256
  %v9600 = vpop.f32.mrf.mxu0
  %v9601 = vadd.f32 0.0, %v9600
  %v9602 = vpop.f32.mrf.mxu0
  %9603 = vmatprep.mubr.f32.mxu0 0.0
  %9604 = vmatmul.mubr.f32.gmra.mxu0 %v9259
  %v9605 = vpop.f32.mrf.mxu0
  %v9606 = vadd.f32 0.0, %v9605
  %v9607 = vpop.f32.mrf.mxu0
  %9608 = vmatprep.mubr.f32.mxu0 0.0
  %9609 = vmatmul.mubr.f32.gmra.mxu0 %v9262
  %v9610 = vpop.f32.mrf.mxu0
  %v9611 = vadd.f32 0.0, %v9610
  %v9612 = vpop.f32.mrf.mxu0
  %9613 = vmatprep.mubr.f32.mxu0 0.0
  %9614 = vmatmul.mubr.f32.gmra.mxu0 %v9265
  %v9615 = vpop.f32.mrf.mxu0
  %v9616 = vadd.f32 0.0, %v9615
  %v9617 = vpop.f32.mrf.mxu0
  %9618 = vmatprep.mubr.f32.mxu0 0.0
  %9619 = vmatmul.mubr.f32.gmra.mxu0 %v9268
  %v9620 = vpop.f32.mrf.mxu0
  %v9621 = vadd.f32 0.0, %v9620
  %v9622 = vpop.f32.mrf.mxu0
  %9623 = vmatprep.mubr.f32.mxu0 0.0
  %9624 = vmatmul.mubr.f32.gmra.mxu0 %v9271
  %v9625 = vpop.f32.mrf.mxu0
  %v9626 = vadd.f32 0.0, %v9625
  %v9627 = vpop.f32.mrf.mxu0
  %9628 = vmatprep.mubr.f32.mxu0 0.0
  %9629 = vmatmul.mubr.f32.gmra.mxu0 %v9274
  %v9630 = vpop.f32.mrf.mxu0
  %v9631 = vadd.f32 0.0, %v9630
  %v9632 = vpop.f32.mrf.mxu0
  %9633 = vmatprep.mubr.f32.mxu0 0.0
  %9634 = vmatmul.mubr.f32.gmra.mxu0 %v9277
  %v9635 = vpop.f32.mrf.mxu0
  %v9636 = vadd.f32 0.0, %v9635
  %v9637 = vpop.f32.mrf.mxu0
  %9638 = vmatprep.mubr.f32.mxu0 0.0
  %9639 = vmatmul.mubr.f32.gmra.mxu0 %v9280
  %v9640 = vpop.f32.mrf.mxu0
  %v9641 = vadd.f32 0.0, %v9640
  %v9642 = vpop.f32.mrf.mxu0
  %9643 = vmatprep.mubr.f32.mxu0 0.0
  %9644 = vmatmul.mubr.f32.gmra.mxu0 %v9283
  %v9645 = vpop.f32.mrf.mxu0
  %v9646 = vadd.f32 0.0, %v9645
  %v9647 = vpop.f32.mrf.mxu0
  %9648 = vmatprep.mubr.f32.mxu0 0.0
  %9649 = vmatmul.mubr.f32.gmra.mxu0 %v9286
  %v9650 = vpop.f32.mrf.mxu0
  %v9651 = vadd.f32 0.0, %v9650
  %v9652 = vpop.f32.mrf.mxu0
  %9653 = vmatprep.mubr.f32.mxu0 0.0
  %9654 = vmatmul.mubr.f32.gmra.mxu0 %v9289
  %v9655 = vpop.f32.mrf.mxu0
  %v9656 = vadd.f32 0.0, %v9655
  %v9657 = vpop.f32.mrf.mxu0
  %9658 = vmatprep.mubr.f32.mxu0 0.0
  %9659 = vmatmul.mubr.f32.gmra.mxu0 %v9292
  %v9660 = vpop.f32.mrf.mxu0
  %v9661 = vadd.f32 0.0, %v9660
  %v9662 = vpop.f32.mrf.mxu0
  %9663 = vmatprep.mubr.f32.mxu0 0.0
  %9664 = vmatmul.mubr.f32.gmra.mxu0 %v9295
  %v9665 = vpop.f32.mrf.mxu0
  %v9666 = vadd.f32 0.0, %v9665
  %v9667 = vpop.f32.mrf.mxu0
  %9668 = vmatprep.mubr.f32.mxu0 0.0
  %9669 = vmatmul.mubr.f32.gmra.mxu0 %v9298
  %v9670 = vpop.f32.mrf.mxu0
  %v9671 = vadd.f32 0.0, %v9670
  %v9672 = vpop.f32.mrf.mxu0
  %9673 = vmatprep.mubr.f32.mxu0 0.0
  %9674 = vmatmul.mubr.f32.gmra.mxu0 %v9301
  %v9675 = vpop.f32.mrf.mxu0
  %v9676 = vadd.f32 0.0, %v9675
  %v9677 = vpop.f32.mrf.mxu0
  %9678 = vmatprep.mubr.f32.mxu0 0.0
  %9679 = vmatmul.mubr.f32.gmra.mxu0 %v9304
  %v9680 = vpop.f32.mrf.mxu0
  %v9681 = vadd.f32 0.0, %v9680
  %v9682 = vpop.f32.mrf.mxu0
  %9683 = vmatprep.mubr.f32.mxu0 0.0
  %9684 = vmatmul.mubr.f32.gmra.mxu0 %v9307
  %v9685 = vpop.f32.mrf.mxu0
  %v9686 = vadd.f32 0.0, %v9685
  %v9687 = vpop.f32.mrf.mxu0
  %9688 = vmatprep.mubr.f32.mxu0 0.0
  %9689 = vmatmul.mubr.f32.gmra.mxu0 %v9310
  %v9690 = vpop.f32.mrf.mxu0
  %v9691 = vadd.f32 0.0, %v9690
  %v9692 = vpop.f32.mrf.mxu0
  %9693 = vmatprep.mubr.f32.mxu0 0.0
  %9694 = vmatmul.mubr.f32.gmra.mxu0 %v9313
  %v9695 = vpop.f32.mrf.mxu0
  %v9696 = vadd.f32 0.0, %v9695
  %v9697 = vpop.f32.mrf.mxu0
  %9698 = vmatprep.mubr.f32.mxu0 0.0
  %9699 = vmatmul.mubr.f32.gmra.mxu0 %v9316
  %v9700 = vpop.f32.mrf.mxu0
  %v9701 = vadd.f32 0.0, %v9700
  %v9702 = vpop.f32.mrf.mxu0
  %9703 = vmatprep.mubr.f32.mxu0 0.0
  %9704 = vmatmul.mubr.f32.gmra.mxu0 %v9319
  %v9705 = vpop.f32.mrf.mxu0
  %v9706 = vadd.f32 0.0, %v9705
  %v9707 = vpop.f32.mrf.mxu0
  %9708 = vdwg.mxu0
  %s9709 = scalar_lea.vmem %s10, 4
  %v9710 = vld [vmem:[%s9709] sm:$0xf]
  %v9712 = vsel %vm779, %v9710, 0
  %9714 = vmatprep.subr.mxu0 0.0
  %9715 = vmatpush1.msra.mxu0 0.0
  %9716 = vmatprep.subr.mxu0 0.0
  %9717 = vmatpush1.msra.mxu0 0.0
  %9718 = vmatprep.subr.mxu0 0.0
  %9719 = vmatpush1.msra.mxu0 0.0
  %9720 = vmatprep.subr.mxu0 0.0
  %9721 = vmatpush1.msra.mxu0 0.0
  %9722 = vmatprep.subr.mxu0 0.0
  %9723 = vmatpush1.msra.mxu0 0.0
  %9724 = vmatprep.subr.mxu0 0.0
  %9725 = vmatpush1.msra.mxu0 0.0
  %9726 = vmatprep.subr.mxu0 0.0
  %9727 = vmatpush1.msra.mxu0 0.0
  %9728 = vmatprep.subr.mxu0 0.0
  %9729 = vmatpush1.msra.mxu0 0.0
  %9730 = vmatprep.subr.mxu0 0.0
  %9731 = vmatpush1.msra.mxu0 0.0
  %9732 = vmatprep.subr.mxu0 0.0
  %9733 = vmatpush1.msra.mxu0 0.0
  %9734 = vmatprep.subr.mxu0 0.0
  %9735 = vmatpush1.msra.mxu0 0.0
  %9736 = vmatprep.subr.mxu0 0.0
  %9737 = vmatpush1.msra.mxu0 0.0
  %9738 = vmatprep.subr.mxu0 0.0
  %9739 = vmatpush1.msra.mxu0 0.0
  %9740 = vmatprep.subr.mxu0 0.0
  %9741 = vmatpush1.msra.mxu0 0.0
  %9742 = vmatprep.subr.mxu0 0.0
  %9743 = vmatpush1.msra.mxu0 0.0
  %9744 = vmatprep.subr.mxu0 0.0
  %9745 = vmatpush1.msra.mxu0 %v9712
  %9746 = vmatprep.subr.mxu0 0.0
  %9747 = vmatpush2.msra.mxu0 0.0
  %9748 = vmatprep.subr.mxu0 0.0
  %9749 = vmatpush2.msra.mxu0 0.0
  %9750 = vmatprep.subr.mxu0 0.0
  %9751 = vmatpush2.msra.mxu0 0.0
  %9752 = vmatprep.subr.mxu0 0.0
  %9753 = vmatpush2.msra.mxu0 0.0
  %9754 = vmatprep.subr.mxu0 0.0
  %9755 = vmatpush2.msra.mxu0 0.0
  %9756 = vmatprep.subr.mxu0 0.0
  %9757 = vmatpush2.msra.mxu0 0.0
  %9758 = vmatprep.subr.mxu0 0.0
  %9759 = vmatpush2.msra.mxu0 0.0
  %9760 = vmatprep.subr.mxu0 0.0
  %9761 = vmatpush2.msra.mxu0 0.0
  %9762 = vmatprep.subr.mxu0 0.0
  %9763 = vmatpush2.msra.mxu0 0.0
  %9764 = vmatprep.subr.mxu0 0.0
  %9765 = vmatpush2.msra.mxu0 0.0
  %9766 = vmatprep.subr.mxu0 0.0
  %9767 = vmatpush2.msra.mxu0 0.0
  %9768 = vmatprep.subr.mxu0 0.0
  %9769 = vmatpush2.msra.mxu0 0.0
  %9770 = vmatprep.subr.mxu0 0.0
  %9771 = vmatpush2.msra.mxu0 0.0
  %9772 = vmatprep.subr.mxu0 0.0
  %9773 = vmatpush2.msra.mxu0 0.0
  %9774 = vmatprep.subr.mxu0 0.0
  %9775 = vmatpush2.msra.mxu0 0.0
  %9776 = vmatprep.subr.mxu0 0.0
  %9777 = vmatpush2.msra.mxu0 0.0
  %9778 = vmatprep.mubr.f32.mxu0 0.0
  %9779 = vmatmul.mubr.f32.gmra.mxu0 %v9130
  %v9780 = vpop.f32.mrf.mxu0
  %v9781 = vadd.f32 0.0, %v9780
  %v9782 = vpop.f32.mrf.mxu0
  %9783 = vmatprep.mubr.f32.mxu0 0.0
  %9784 = vmatmul.mubr.f32.gmra.mxu0 %v9133
  %v9785 = vpop.f32.mrf.mxu0
  %v9786 = vadd.f32 0.0, %v9785
  %v9787 = vpop.f32.mrf.mxu0
  %9788 = vmatprep.mubr.f32.mxu0 0.0
  %9789 = vmatmul.mubr.f32.gmra.mxu0 %v9136
  %v9790 = vpop.f32.mrf.mxu0
  %v9791 = vadd.f32 0.0, %v9790
  %v9792 = vpop.f32.mrf.mxu0
  %9793 = vmatprep.mubr.f32.mxu0 0.0
  %9794 = vmatmul.mubr.f32.gmra.mxu0 %v9139
  %v9795 = vpop.f32.mrf.mxu0
  %v9796 = vadd.f32 0.0, %v9795
  %v9797 = vpop.f32.mrf.mxu0
  %9798 = vmatprep.mubr.f32.mxu0 0.0
  %9799 = vmatmul.mubr.f32.gmra.mxu0 %v9142
  %v9800 = vpop.f32.mrf.mxu0
  %v9801 = vadd.f32 0.0, %v9800
  %v9802 = vpop.f32.mrf.mxu0
  %9803 = vmatprep.mubr.f32.mxu0 0.0
  %9804 = vmatmul.mubr.f32.gmra.mxu0 %v9145
  %v9805 = vpop.f32.mrf.mxu0
  %v9806 = vadd.f32 0.0, %v9805
  %v9807 = vpop.f32.mrf.mxu0
  %9808 = vmatprep.mubr.f32.mxu0 0.0
  %9809 = vmatmul.mubr.f32.gmra.mxu0 %v9148
  %v9810 = vpop.f32.mrf.mxu0
  %v9811 = vadd.f32 0.0, %v9810
  %v9812 = vpop.f32.mrf.mxu0
  %9813 = vmatprep.mubr.f32.mxu0 0.0
  %9814 = vmatmul.mubr.f32.gmra.mxu0 %v9151
  %v9815 = vpop.f32.mrf.mxu0
  %v9816 = vadd.f32 0.0, %v9815
  %v9817 = vpop.f32.mrf.mxu0
  %9818 = vmatprep.mubr.f32.mxu0 0.0
  %9819 = vmatmul.mubr.f32.gmra.mxu0 %v9154
  %v9820 = vpop.f32.mrf.mxu0
  %v9821 = vadd.f32 0.0, %v9820
  %v9822 = vpop.f32.mrf.mxu0
  %9823 = vmatprep.mubr.f32.mxu0 0.0
  %9824 = vmatmul.mubr.f32.gmra.mxu0 %v9157
  %v9825 = vpop.f32.mrf.mxu0
  %v9826 = vadd.f32 0.0, %v9825
  %v9827 = vpop.f32.mrf.mxu0
  %9828 = vmatprep.mubr.f32.mxu0 0.0
  %9829 = vmatmul.mubr.f32.gmra.mxu0 %v9160
  %v9830 = vpop.f32.mrf.mxu0
  %v9831 = vadd.f32 0.0, %v9830
  %v9832 = vpop.f32.mrf.mxu0
  %9833 = vmatprep.mubr.f32.mxu0 0.0
  %9834 = vmatmul.mubr.f32.gmra.mxu0 %v9163
  %v9835 = vpop.f32.mrf.mxu0
  %v9836 = vadd.f32 0.0, %v9835
  %v9837 = vpop.f32.mrf.mxu0
  %9838 = vmatprep.mubr.f32.mxu0 0.0
  %9839 = vmatmul.mubr.f32.gmra.mxu0 %v9166
  %v9840 = vpop.f32.mrf.mxu0
  %v9841 = vadd.f32 0.0, %v9840
  %v9842 = vpop.f32.mrf.mxu0
  %9843 = vmatprep.mubr.f32.mxu0 0.0
  %9844 = vmatmul.mubr.f32.gmra.mxu0 %v9169
  %v9845 = vpop.f32.mrf.mxu0
  %v9846 = vadd.f32 0.0, %v9845
  %v9847 = vpop.f32.mrf.mxu0
  %9848 = vmatprep.mubr.f32.mxu0 0.0
  %9849 = vmatmul.mubr.f32.gmra.mxu0 %v9172
  %v9850 = vpop.f32.mrf.mxu0
  %v9851 = vadd.f32 0.0, %v9850
  %v9852 = vpop.f32.mrf.mxu0
  %9853 = vmatprep.mubr.f32.mxu0 0.0
  %9854 = vmatmul.mubr.f32.gmra.mxu0 %v9175
  %v9855 = vpop.f32.mrf.mxu0
  %v9856 = vadd.f32 0.0, %v9855
  %v9857 = vpop.f32.mrf.mxu0
  %9858 = vmatprep.mubr.f32.mxu0 0.0
  %9859 = vmatmul.mubr.f32.gmra.mxu0 %v9178
  %v9860 = vpop.f32.mrf.mxu0
  %v9861 = vadd.f32 0.0, %v9860
  %v9862 = vpop.f32.mrf.mxu0
  %9863 = vmatprep.mubr.f32.mxu0 0.0
  %9864 = vmatmul.mubr.f32.gmra.mxu0 %v9181
  %v9865 = vpop.f32.mrf.mxu0
  %v9866 = vadd.f32 0.0, %v9865
  %v9867 = vpop.f32.mrf.mxu0
  %9868 = vmatprep.mubr.f32.mxu0 0.0
  %9869 = vmatmul.mubr.f32.gmra.mxu0 %v9184
  %v9870 = vpop.f32.mrf.mxu0
  %v9871 = vadd.f32 0.0, %v9870
  %v9872 = vpop.f32.mrf.mxu0
  %9873 = vmatprep.mubr.f32.mxu0 0.0
  %9874 = vmatmul.mubr.f32.gmra.mxu0 %v9187
  %v9875 = vpop.f32.mrf.mxu0
  %v9876 = vadd.f32 0.0, %v9875
  %v9877 = vpop.f32.mrf.mxu0
  %9878 = vmatprep.mubr.f32.mxu0 0.0
  %9879 = vmatmul.mubr.f32.gmra.mxu0 %v9190
  %v9880 = vpop.f32.mrf.mxu0
  %v9881 = vadd.f32 0.0, %v9880
  %v9882 = vpop.f32.mrf.mxu0
  %9883 = vmatprep.mubr.f32.mxu0 0.0
  %9884 = vmatmul.mubr.f32.gmra.mxu0 %v9193
  %v9885 = vpop.f32.mrf.mxu0
  %v9886 = vadd.f32 0.0, %v9885
  %v9887 = vpop.f32.mrf.mxu0
  %9888 = vmatprep.mubr.f32.mxu0 0.0
  %9889 = vmatmul.mubr.f32.gmra.mxu0 %v9196
  %v9890 = vpop.f32.mrf.mxu0
  %v9891 = vadd.f32 0.0, %v9890
  %v9892 = vpop.f32.mrf.mxu0
  %9893 = vmatprep.mubr.f32.mxu0 0.0
  %9894 = vmatmul.mubr.f32.gmra.mxu0 %v9199
  %v9895 = vpop.f32.mrf.mxu0
  %v9896 = vadd.f32 0.0, %v9895
  %v9897 = vpop.f32.mrf.mxu0
  %9898 = vmatprep.mubr.f32.mxu0 0.0
  %9899 = vmatmul.mubr.f32.gmra.mxu0 %v9202
  %v9900 = vpop.f32.mrf.mxu0
  %v9901 = vadd.f32 0.0, %v9900
  %v9902 = vpop.f32.mrf.mxu0
  %9903 = vmatprep.mubr.f32.mxu0 0.0
  %9904 = vmatmul.mubr.f32.gmra.mxu0 %v9205
  %v9905 = vpop.f32.mrf.mxu0
  %v9906 = vadd.f32 0.0, %v9905
  %v9907 = vpop.f32.mrf.mxu0
  %9908 = vmatprep.mubr.f32.mxu0 0.0
  %9909 = vmatmul.mubr.f32.gmra.mxu0 %v9208
  %v9910 = vpop.f32.mrf.mxu0
  %v9911 = vadd.f32 0.0, %v9910
  %v9912 = vpop.f32.mrf.mxu0
  %9913 = vmatprep.mubr.f32.mxu0 0.0
  %9914 = vmatmul.mubr.f32.gmra.mxu0 %v9211
  %v9915 = vpop.f32.mrf.mxu0
  %v9916 = vadd.f32 0.0, %v9915
  %v9917 = vpop.f32.mrf.mxu0
  %9918 = vmatprep.mubr.f32.mxu0 0.0
  %9919 = vmatmul.mubr.f32.gmra.mxu0 %v9214
  %v9920 = vpop.f32.mrf.mxu0
  %v9921 = vadd.f32 0.0, %v9920
  %v9922 = vpop.f32.mrf.mxu0
  %9923 = vmatprep.mubr.f32.mxu0 0.0
  %9924 = vmatmul.mubr.f32.gmra.mxu0 %v9217
  %v9925 = vpop.f32.mrf.mxu0
  %v9926 = vadd.f32 0.0, %v9925
  %v9927 = vpop.f32.mrf.mxu0
  %9928 = vmatprep.mubr.f32.mxu0 0.0
  %9929 = vmatmul.mubr.f32.gmra.mxu0 %v9220
  %v9930 = vpop.f32.mrf.mxu0
  %v9931 = vadd.f32 0.0, %v9930
  %v9932 = vpop.f32.mrf.mxu0
  %9933 = vmatprep.mubr.f32.mxu0 0.0
  %9934 = vmatmul.mubr.f32.gmra.mxu0 %v9223
  %v9935 = vpop.f32.mrf.mxu0
  %v9936 = vadd.f32 0.0, %v9935
  %v9937 = vpop.f32.mrf.mxu0
  %9938 = vmatprep.mubr.f32.mxu0 0.0
  %9939 = vmatmul.mubr.f32.gmra.mxu0 %v9226
  %v9940 = vpop.f32.mrf.mxu0
  %v9941 = vadd.f32 0.0, %v9940
  %v9942 = vpop.f32.mrf.mxu0
  %9943 = vmatprep.mubr.f32.mxu0 0.0
  %9944 = vmatmul.mubr.f32.gmra.mxu0 %v9229
  %v9945 = vpop.f32.mrf.mxu0
  %v9946 = vadd.f32 0.0, %v9945
  %v9947 = vpop.f32.mrf.mxu0
  %9948 = vmatprep.mubr.f32.mxu0 0.0
  %9949 = vmatmul.mubr.f32.gmra.mxu0 %v9232
  %v9950 = vpop.f32.mrf.mxu0
  %v9951 = vadd.f32 0.0, %v9950
  %v9952 = vpop.f32.mrf.mxu0
  %9953 = vmatprep.mubr.f32.mxu0 0.0
  %9954 = vmatmul.mubr.f32.gmra.mxu0 %v9235
  %v9955 = vpop.f32.mrf.mxu0
  %v9956 = vadd.f32 0.0, %v9955
  %v9957 = vpop.f32.mrf.mxu0
  %9958 = vmatprep.mubr.f32.mxu0 0.0
  %9959 = vmatmul.mubr.f32.gmra.mxu0 %v9238
  %v9960 = vpop.f32.mrf.mxu0
  %v9961 = vadd.f32 0.0, %v9960
  %v9962 = vpop.f32.mrf.mxu0
  %9963 = vmatprep.mubr.f32.mxu0 0.0
  %9964 = vmatmul.mubr.f32.gmra.mxu0 %v9241
  %v9965 = vpop.f32.mrf.mxu0
  %v9966 = vadd.f32 0.0, %v9965
  %v9967 = vpop.f32.mrf.mxu0
  %9968 = vmatprep.mubr.f32.mxu0 0.0
  %9969 = vmatmul.mubr.f32.gmra.mxu0 %v9244
  %v9970 = vpop.f32.mrf.mxu0
  %v9971 = vadd.f32 0.0, %v9970
  %v9972 = vpop.f32.mrf.mxu0
  %9973 = vmatprep.mubr.f32.mxu0 0.0
  %9974 = vmatmul.mubr.f32.gmra.mxu0 %v9247
  %v9975 = vpop.f32.mrf.mxu0
  %v9976 = vadd.f32 0.0, %v9975
  %v9977 = vpop.f32.mrf.mxu0
  %9978 = vmatprep.mubr.f32.mxu0 0.0
  %9979 = vmatmul.mubr.f32.gmra.mxu0 %v9250
  %v9980 = vpop.f32.mrf.mxu0
  %v9981 = vadd.f32 0.0, %v9980
  %v9982 = vpop.f32.mrf.mxu0
  %9983 = vmatprep.mubr.f32.mxu0 0.0
  %9984 = vmatmul.mubr.f32.gmra.mxu0 %v9253
  %v9985 = vpop.f32.mrf.mxu0
  %v9986 = vadd.f32 0.0, %v9985
  %v9987 = vpop.f32.mrf.mxu0
  %9988 = vmatprep.mubr.f32.mxu0 0.0
  %9989 = vmatmul.mubr.f32.gmra.mxu0 %v9256
  %v9990 = vpop.f32.mrf.mxu0
  %v9991 = vadd.f32 0.0, %v9990
  %v9992 = vpop.f32.mrf.mxu0
  %9993 = vmatprep.mubr.f32.mxu0 0.0
  %9994 = vmatmul.mubr.f32.gmra.mxu0 %v9259
  %v9995 = vpop.f32.mrf.mxu0
  %v9996 = vadd.f32 0.0, %v9995
  %v9997 = vpop.f32.mrf.mxu0
  %9998 = vmatprep.mubr.f32.mxu0 0.0
  %9999 = vmatmul.mubr.f32.gmra.mxu0 %v9262
  %v10000 = vpop.f32.mrf.mxu0
  %v10001 = vadd.f32 0.0, %v10000
  %v10002 = vpop.f32.mrf.mxu0
  %10003 = vmatprep.mubr.f32.mxu0 0.0
  %10004 = vmatmul.mubr.f32.gmra.mxu0 %v9265
  %v10005 = vpop.f32.mrf.mxu0
  %v10006 = vadd.f32 0.0, %v10005
  %v10007 = vpop.f32.mrf.mxu0
  %10008 = vmatprep.mubr.f32.mxu0 0.0
  %10009 = vmatmul.mubr.f32.gmra.mxu0 %v9268
  %v10010 = vpop.f32.mrf.mxu0
  %v10011 = vadd.f32 0.0, %v10010
  %v10012 = vpop.f32.mrf.mxu0
  %10013 = vmatprep.mubr.f32.mxu0 0.0
  %10014 = vmatmul.mubr.f32.gmra.mxu0 %v9271
  %v10015 = vpop.f32.mrf.mxu0
  %v10016 = vadd.f32 0.0, %v10015
  %v10017 = vpop.f32.mrf.mxu0
  %10018 = vmatprep.mubr.f32.mxu0 0.0
  %10019 = vmatmul.mubr.f32.gmra.mxu0 %v9274
  %v10020 = vpop.f32.mrf.mxu0
  %v10021 = vadd.f32 0.0, %v10020
  %v10022 = vpop.f32.mrf.mxu0
  %10023 = vmatprep.mubr.f32.mxu0 0.0
  %10024 = vmatmul.mubr.f32.gmra.mxu0 %v9277
  %v10025 = vpop.f32.mrf.mxu0
  %v10026 = vadd.f32 0.0, %v10025
  %v10027 = vpop.f32.mrf.mxu0
  %10028 = vmatprep.mubr.f32.mxu0 0.0
  %10029 = vmatmul.mubr.f32.gmra.mxu0 %v9280
  %v10030 = vpop.f32.mrf.mxu0
  %v10031 = vadd.f32 0.0, %v10030
  %v10032 = vpop.f32.mrf.mxu0
  %10033 = vmatprep.mubr.f32.mxu0 0.0
  %10034 = vmatmul.mubr.f32.gmra.mxu0 %v9283
  %v10035 = vpop.f32.mrf.mxu0
  %v10036 = vadd.f32 0.0, %v10035
  %v10037 = vpop.f32.mrf.mxu0
  %10038 = vmatprep.mubr.f32.mxu0 0.0
  %10039 = vmatmul.mubr.f32.gmra.mxu0 %v9286
  %v10040 = vpop.f32.mrf.mxu0
  %v10041 = vadd.f32 0.0, %v10040
  %v10042 = vpop.f32.mrf.mxu0
  %10043 = vmatprep.mubr.f32.mxu0 0.0
  %10044 = vmatmul.mubr.f32.gmra.mxu0 %v9289
  %v10045 = vpop.f32.mrf.mxu0
  %v10046 = vadd.f32 0.0, %v10045
  %v10047 = vpop.f32.mrf.mxu0
  %10048 = vmatprep.mubr.f32.mxu0 0.0
  %10049 = vmatmul.mubr.f32.gmra.mxu0 %v9292
  %v10050 = vpop.f32.mrf.mxu0
  %v10051 = vadd.f32 0.0, %v10050
  %v10052 = vpop.f32.mrf.mxu0
  %10053 = vmatprep.mubr.f32.mxu0 0.0
  %10054 = vmatmul.mubr.f32.gmra.mxu0 %v9295
  %v10055 = vpop.f32.mrf.mxu0
  %v10056 = vadd.f32 0.0, %v10055
  %v10057 = vpop.f32.mrf.mxu0
  %10058 = vmatprep.mubr.f32.mxu0 0.0
  %10059 = vmatmul.mubr.f32.gmra.mxu0 %v9298
  %v10060 = vpop.f32.mrf.mxu0
  %v10061 = vadd.f32 0.0, %v10060
  %v10062 = vpop.f32.mrf.mxu0
  %10063 = vmatprep.mubr.f32.mxu0 0.0
  %10064 = vmatmul.mubr.f32.gmra.mxu0 %v9301
  %v10065 = vpop.f32.mrf.mxu0
  %v10066 = vadd.f32 0.0, %v10065
  %v10067 = vpop.f32.mrf.mxu0
  %10068 = vmatprep.mubr.f32.mxu0 0.0
  %10069 = vmatmul.mubr.f32.gmra.mxu0 %v9304
  %v10070 = vpop.f32.mrf.mxu0
  %v10071 = vadd.f32 0.0, %v10070
  %v10072 = vpop.f32.mrf.mxu0
  %10073 = vmatprep.mubr.f32.mxu0 0.0
  %10074 = vmatmul.mubr.f32.gmra.mxu0 %v9307
  %v10075 = vpop.f32.mrf.mxu0
  %v10076 = vadd.f32 0.0, %v10075
  %v10077 = vpop.f32.mrf.mxu0
  %10078 = vmatprep.mubr.f32.mxu0 0.0
  %10079 = vmatmul.mubr.f32.gmra.mxu0 %v9310
  %v10080 = vpop.f32.mrf.mxu0
  %v10081 = vadd.f32 0.0, %v10080
  %v10082 = vpop.f32.mrf.mxu0
  %10083 = vmatprep.mubr.f32.mxu0 0.0
  %10084 = vmatmul.mubr.f32.gmra.mxu0 %v9313
  %v10085 = vpop.f32.mrf.mxu0
  %v10086 = vadd.f32 0.0, %v10085
  %v10087 = vpop.f32.mrf.mxu0
  %10088 = vmatprep.mubr.f32.mxu0 0.0
  %10089 = vmatmul.mubr.f32.gmra.mxu0 %v9316
  %v10090 = vpop.f32.mrf.mxu0
  %v10091 = vadd.f32 0.0, %v10090
  %v10092 = vpop.f32.mrf.mxu0
  %10093 = vmatprep.mubr.f32.mxu0 0.0
  %10094 = vmatmul.mubr.f32.gmra.mxu0 %v9319
  %v10095 = vpop.f32.mrf.mxu0
  %v10096 = vadd.f32 0.0, %v10095
  %v10097 = vpop.f32.mrf.mxu0
  %10098 = vdwg.mxu0
  %v10099 = vmax.f32 %v9391, %v9781
  %v10100 = vmax.f32 %v9396, %v9786
  %v10101 = vmax.f32 %v9401, %v9791
  %v10102 = vmax.f32 %v9406, %v9796
  %v10103 = vmax.f32 %v9411, %v9801
  %v10104 = vmax.f32 %v9416, %v9806
  %v10105 = vmax.f32 %v9421, %v9811
  %v10106 = vmax.f32 %v9426, %v9816
  %v10107 = vmax.f32 %v9431, %v9821
  %v10108 = vmax.f32 %v9436, %v9826
  %v10109 = vmax.f32 %v9441, %v9831
  %v10110 = vmax.f32 %v9446, %v9836
  %v10111 = vmax.f32 %v9451, %v9841
  %v10112 = vmax.f32 %v9456, %v9846
  %v10113 = vmax.f32 %v9461, %v9851
  %v10114 = vmax.f32 %v9466, %v9856
  %v10115 = vmax.f32 %v9471, %v9861
  %v10116 = vmax.f32 %v9476, %v9866
  %v10117 = vmax.f32 %v9481, %v9871
  %v10118 = vmax.f32 %v9486, %v9876
  %v10119 = vmax.f32 %v9491, %v9881
  %v10120 = vmax.f32 %v9496, %v9886
  %v10121 = vmax.f32 %v9501, %v9891
  %v10122 = vmax.f32 %v9506, %v9896
  %v10123 = vmax.f32 %v9511, %v9901
  %v10124 = vmax.f32 %v9516, %v9906
  %v10125 = vmax.f32 %v9521, %v9911
  %v10126 = vmax.f32 %v9526, %v9916
  %v10127 = vmax.f32 %v9531, %v9921
  %v10128 = vmax.f32 %v9536, %v9926
  %v10129 = vmax.f32 %v9541, %v9931
  %v10130 = vmax.f32 %v9546, %v9936
  %v10131 = vmax.f32 %v9551, %v9941
  %v10132 = vmax.f32 %v9556, %v9946
  %v10133 = vmax.f32 %v9561, %v9951
  %v10134 = vmax.f32 %v9566, %v9956
  %v10135 = vmax.f32 %v9571, %v9961
  %v10136 = vmax.f32 %v9576, %v9966
  %v10137 = vmax.f32 %v9581, %v9971
  %v10138 = vmax.f32 %v9586, %v9976
  %v10139 = vmax.f32 %v9591, %v9981
  %v10140 = vmax.f32 %v9596, %v9986
  %v10141 = vmax.f32 %v9601, %v9991
  %v10142 = vmax.f32 %v9606, %v9996
  %v10143 = vmax.f32 %v9611, %v10001
  %v10144 = vmax.f32 %v9616, %v10006
  %v10145 = vmax.f32 %v9621, %v10011
  %v10146 = vmax.f32 %v9626, %v10016
  %v10147 = vmax.f32 %v9631, %v10021
  %v10148 = vmax.f32 %v9636, %v10026
  %v10149 = vmax.f32 %v9641, %v10031
  %v10150 = vmax.f32 %v9646, %v10036
  %v10151 = vmax.f32 %v9651, %v10041
  %v10152 = vmax.f32 %v9656, %v10046
  %v10153 = vmax.f32 %v9661, %v10051
  %v10154 = vmax.f32 %v9666, %v10056
  %v10155 = vmax.f32 %v9671, %v10061
  %v10156 = vmax.f32 %v9676, %v10066
  %v10157 = vmax.f32 %v9681, %v10071
  %v10158 = vmax.f32 %v9686, %v10076
  %v10159 = vmax.f32 %v9691, %v10081
  %v10160 = vmax.f32 %v9696, %v10086
  %v10161 = vmax.f32 %v9701, %v10091
  %v10162 = vmax.f32 %v9706, %v10096
  %s10163 = scalar_lea.vmem %s10, 8
  %v10164 = vld [vmem:[%s10163] sm:$0xf]
  %v10166 = vsel %vm779, %v10164, 0
  %10168 = vmatprep.subr.mxu0 0.0
  %10169 = vmatpush1.msra.mxu0 0.0
  %10170 = vmatprep.subr.mxu0 0.0
  %10171 = vmatpush1.msra.mxu0 0.0
  %10172 = vmatprep.subr.mxu0 0.0
  %10173 = vmatpush1.msra.mxu0 0.0
  %10174 = vmatprep.subr.mxu0 0.0
  %10175 = vmatpush1.msra.mxu0 0.0
  %10176 = vmatprep.subr.mxu0 0.0
  %10177 = vmatpush1.msra.mxu0 0.0
  %10178 = vmatprep.subr.mxu0 0.0
  %10179 = vmatpush1.msra.mxu0 0.0
  %10180 = vmatprep.subr.mxu0 0.0
  %10181 = vmatpush1.msra.mxu0 0.0
  %10182 = vmatprep.subr.mxu0 0.0
  %10183 = vmatpush1.msra.mxu0 0.0
  %10184 = vmatprep.subr.mxu0 0.0
  %10185 = vmatpush1.msra.mxu0 0.0
  %10186 = vmatprep.subr.mxu0 0.0
  %10187 = vmatpush1.msra.mxu0 0.0
  %10188 = vmatprep.subr.mxu0 0.0
  %10189 = vmatpush1.msra.mxu0 0.0
  %10190 = vmatprep.subr.mxu0 0.0
  %10191 = vmatpush1.msra.mxu0 0.0
  %10192 = vmatprep.subr.mxu0 0.0
  %10193 = vmatpush1.msra.mxu0 0.0
  %10194 = vmatprep.subr.mxu0 0.0
  %10195 = vmatpush1.msra.mxu0 0.0
  %10196 = vmatprep.subr.mxu0 0.0
  %10197 = vmatpush1.msra.mxu0 0.0
  %10198 = vmatprep.subr.mxu0 0.0
  %10199 = vmatpush1.msra.mxu0 %v10166
  %10200 = vmatprep.subr.mxu0 0.0
  %10201 = vmatpush2.msra.mxu0 0.0
  %10202 = vmatprep.subr.mxu0 0.0
  %10203 = vmatpush2.msra.mxu0 0.0
  %10204 = vmatprep.subr.mxu0 0.0
  %10205 = vmatpush2.msra.mxu0 0.0
  %10206 = vmatprep.subr.mxu0 0.0
  %10207 = vmatpush2.msra.mxu0 0.0
  %10208 = vmatprep.subr.mxu0 0.0
  %10209 = vmatpush2.msra.mxu0 0.0
  %10210 = vmatprep.subr.mxu0 0.0
  %10211 = vmatpush2.msra.mxu0 0.0
  %10212 = vmatprep.subr.mxu0 0.0
  %10213 = vmatpush2.msra.mxu0 0.0
  %10214 = vmatprep.subr.mxu0 0.0
  %10215 = vmatpush2.msra.mxu0 0.0
  %10216 = vmatprep.subr.mxu0 0.0
  %10217 = vmatpush2.msra.mxu0 0.0
  %10218 = vmatprep.subr.mxu0 0.0
  %10219 = vmatpush2.msra.mxu0 0.0
  %10220 = vmatprep.subr.mxu0 0.0
  %10221 = vmatpush2.msra.mxu0 0.0
  %10222 = vmatprep.subr.mxu0 0.0
  %10223 = vmatpush2.msra.mxu0 0.0
  %10224 = vmatprep.subr.mxu0 0.0
  %10225 = vmatpush2.msra.mxu0 0.0
  %10226 = vmatprep.subr.mxu0 0.0
  %10227 = vmatpush2.msra.mxu0 0.0
  %10228 = vmatprep.subr.mxu0 0.0
  %10229 = vmatpush2.msra.mxu0 0.0
  %10230 = vmatprep.subr.mxu0 0.0
  %10231 = vmatpush2.msra.mxu0 0.0
  %10232 = vmatprep.mubr.f32.mxu0 0.0
  %10233 = vmatmul.mubr.f32.gmra.mxu0 %v9130
  %v10234 = vpop.f32.mrf.mxu0
  %v10235 = vadd.f32 0.0, %v10234
  %v10236 = vpop.f32.mrf.mxu0
  %10237 = vmatprep.mubr.f32.mxu0 0.0
  %10238 = vmatmul.mubr.f32.gmra.mxu0 %v9133
  %v10239 = vpop.f32.mrf.mxu0
  %v10240 = vadd.f32 0.0, %v10239
  %v10241 = vpop.f32.mrf.mxu0
  %10242 = vmatprep.mubr.f32.mxu0 0.0
  %10243 = vmatmul.mubr.f32.gmra.mxu0 %v9136
  %v10244 = vpop.f32.mrf.mxu0
  %v10245 = vadd.f32 0.0, %v10244
  %v10246 = vpop.f32.mrf.mxu0
  %10247 = vmatprep.mubr.f32.mxu0 0.0
  %10248 = vmatmul.mubr.f32.gmra.mxu0 %v9139
  %v10249 = vpop.f32.mrf.mxu0
  %v10250 = vadd.f32 0.0, %v10249
  %v10251 = vpop.f32.mrf.mxu0
  %10252 = vmatprep.mubr.f32.mxu0 0.0
  %10253 = vmatmul.mubr.f32.gmra.mxu0 %v9142
  %v10254 = vpop.f32.mrf.mxu0
  %v10255 = vadd.f32 0.0, %v10254
  %v10256 = vpop.f32.mrf.mxu0
  %10257 = vmatprep.mubr.f32.mxu0 0.0
  %10258 = vmatmul.mubr.f32.gmra.mxu0 %v9145
  %v10259 = vpop.f32.mrf.mxu0
  %v10260 = vadd.f32 0.0, %v10259
  %v10261 = vpop.f32.mrf.mxu0
  %10262 = vmatprep.mubr.f32.mxu0 0.0
  %10263 = vmatmul.mubr.f32.gmra.mxu0 %v9148
  %v10264 = vpop.f32.mrf.mxu0
  %v10265 = vadd.f32 0.0, %v10264
  %v10266 = vpop.f32.mrf.mxu0
  %10267 = vmatprep.mubr.f32.mxu0 0.0
  %10268 = vmatmul.mubr.f32.gmra.mxu0 %v9151
  %v10269 = vpop.f32.mrf.mxu0
  %v10270 = vadd.f32 0.0, %v10269
  %v10271 = vpop.f32.mrf.mxu0
  %10272 = vmatprep.mubr.f32.mxu0 0.0
  %10273 = vmatmul.mubr.f32.gmra.mxu0 %v9154
  %v10274 = vpop.f32.mrf.mxu0
  %v10275 = vadd.f32 0.0, %v10274
  %v10276 = vpop.f32.mrf.mxu0
  %10277 = vmatprep.mubr.f32.mxu0 0.0
  %10278 = vmatmul.mubr.f32.gmra.mxu0 %v9157
  %v10279 = vpop.f32.mrf.mxu0
  %v10280 = vadd.f32 0.0, %v10279
  %v10281 = vpop.f32.mrf.mxu0
  %10282 = vmatprep.mubr.f32.mxu0 0.0
  %10283 = vmatmul.mubr.f32.gmra.mxu0 %v9160
  %v10284 = vpop.f32.mrf.mxu0
  %v10285 = vadd.f32 0.0, %v10284
  %v10286 = vpop.f32.mrf.mxu0
  %10287 = vmatprep.mubr.f32.mxu0 0.0
  %10288 = vmatmul.mubr.f32.gmra.mxu0 %v9163
  %v10289 = vpop.f32.mrf.mxu0
  %v10290 = vadd.f32 0.0, %v10289
  %v10291 = vpop.f32.mrf.mxu0
  %10292 = vmatprep.mubr.f32.mxu0 0.0
  %10293 = vmatmul.mubr.f32.gmra.mxu0 %v9166
  %v10294 = vpop.f32.mrf.mxu0
  %v10295 = vadd.f32 0.0, %v10294
  %v10296 = vpop.f32.mrf.mxu0
  %10297 = vmatprep.mubr.f32.mxu0 0.0
  %10298 = vmatmul.mubr.f32.gmra.mxu0 %v9169
  %v10299 = vpop.f32.mrf.mxu0
  %v10300 = vadd.f32 0.0, %v10299
  %v10301 = vpop.f32.mrf.mxu0
  %10302 = vmatprep.mubr.f32.mxu0 0.0
  %10303 = vmatmul.mubr.f32.gmra.mxu0 %v9172
  %v10304 = vpop.f32.mrf.mxu0
  %v10305 = vadd.f32 0.0, %v10304
  %v10306 = vpop.f32.mrf.mxu0
  %10307 = vmatprep.mubr.f32.mxu0 0.0
  %10308 = vmatmul.mubr.f32.gmra.mxu0 %v9175
  %v10309 = vpop.f32.mrf.mxu0
  %v10310 = vadd.f32 0.0, %v10309
  %v10311 = vpop.f32.mrf.mxu0
  %10312 = vmatprep.mubr.f32.mxu0 0.0
  %10313 = vmatmul.mubr.f32.gmra.mxu0 %v9178
  %v10314 = vpop.f32.mrf.mxu0
  %v10315 = vadd.f32 0.0, %v10314
  %v10316 = vpop.f32.mrf.mxu0
  %10317 = vmatprep.mubr.f32.mxu0 0.0
  %10318 = vmatmul.mubr.f32.gmra.mxu0 %v9181
  %v10319 = vpop.f32.mrf.mxu0
  %v10320 = vadd.f32 0.0, %v10319
  %v10321 = vpop.f32.mrf.mxu0
  %10322 = vmatprep.mubr.f32.mxu0 0.0
  %10323 = vmatmul.mubr.f32.gmra.mxu0 %v9184
  %v10324 = vpop.f32.mrf.mxu0
  %v10325 = vadd.f32 0.0, %v10324
  %v10326 = vpop.f32.mrf.mxu0
  %10327 = vmatprep.mubr.f32.mxu0 0.0
  %10328 = vmatmul.mubr.f32.gmra.mxu0 %v9187
  %v10329 = vpop.f32.mrf.mxu0
  %v10330 = vadd.f32 0.0, %v10329
  %v10331 = vpop.f32.mrf.mxu0
  %10332 = vmatprep.mubr.f32.mxu0 0.0
  %10333 = vmatmul.mubr.f32.gmra.mxu0 %v9190
  %v10334 = vpop.f32.mrf.mxu0
  %v10335 = vadd.f32 0.0, %v10334
  %v10336 = vpop.f32.mrf.mxu0
  %10337 = vmatprep.mubr.f32.mxu0 0.0
  %10338 = vmatmul.mubr.f32.gmra.mxu0 %v9193
  %v10339 = vpop.f32.mrf.mxu0
  %v10340 = vadd.f32 0.0, %v10339
  %v10341 = vpop.f32.mrf.mxu0
  %10342 = vmatprep.mubr.f32.mxu0 0.0
  %10343 = vmatmul.mubr.f32.gmra.mxu0 %v9196
  %v10344 = vpop.f32.mrf.mxu0
  %v10345 = vadd.f32 0.0, %v10344
  %v10346 = vpop.f32.mrf.mxu0
  %10347 = vmatprep.mubr.f32.mxu0 0.0
  %10348 = vmatmul.mubr.f32.gmra.mxu0 %v9199
  %v10349 = vpop.f32.mrf.mxu0
  %v10350 = vadd.f32 0.0, %v10349
  %v10351 = vpop.f32.mrf.mxu0
  %10352 = vmatprep.mubr.f32.mxu0 0.0
  %10353 = vmatmul.mubr.f32.gmra.mxu0 %v9202
  %v10354 = vpop.f32.mrf.mxu0
  %v10355 = vadd.f32 0.0, %v10354
  %v10356 = vpop.f32.mrf.mxu0
  %10357 = vmatprep.mubr.f32.mxu0 0.0
  %10358 = vmatmul.mubr.f32.gmra.mxu0 %v9205
  %v10359 = vpop.f32.mrf.mxu0
  %v10360 = vadd.f32 0.0, %v10359
  %v10361 = vpop.f32.mrf.mxu0
  %10362 = vmatprep.mubr.f32.mxu0 0.0
  %10363 = vmatmul.mubr.f32.gmra.mxu0 %v9208
  %v10364 = vpop.f32.mrf.mxu0
  %v10365 = vadd.f32 0.0, %v10364
  %v10366 = vpop.f32.mrf.mxu0
  %10367 = vmatprep.mubr.f32.mxu0 0.0
  %10368 = vmatmul.mubr.f32.gmra.mxu0 %v9211
  %v10369 = vpop.f32.mrf.mxu0
  %v10370 = vadd.f32 0.0, %v10369
  %v10371 = vpop.f32.mrf.mxu0
  %10372 = vmatprep.mubr.f32.mxu0 0.0
  %10373 = vmatmul.mubr.f32.gmra.mxu0 %v9214
  %v10374 = vpop.f32.mrf.mxu0
  %v10375 = vadd.f32 0.0, %v10374
  %v10376 = vpop.f32.mrf.mxu0
  %10377 = vmatprep.mubr.f32.mxu0 0.0
  %10378 = vmatmul.mubr.f32.gmra.mxu0 %v9217
  %v10379 = vpop.f32.mrf.mxu0
  %v10380 = vadd.f32 0.0, %v10379
  %v10381 = vpop.f32.mrf.mxu0
  %10382 = vmatprep.mubr.f32.mxu0 0.0
  %10383 = vmatmul.mubr.f32.gmra.mxu0 %v9220
  %v10384 = vpop.f32.mrf.mxu0
  %v10385 = vadd.f32 0.0, %v10384
  %v10386 = vpop.f32.mrf.mxu0
  %10387 = vmatprep.mubr.f32.mxu0 0.0
  %10388 = vmatmul.mubr.f32.gmra.mxu0 %v9223
  %v10389 = vpop.f32.mrf.mxu0
  %v10390 = vadd.f32 0.0, %v10389
  %v10391 = vpop.f32.mrf.mxu0
  %10392 = vmatprep.mubr.f32.mxu0 0.0
  %10393 = vmatmul.mubr.f32.gmra.mxu0 %v9226
  %v10394 = vpop.f32.mrf.mxu0
  %v10395 = vadd.f32 0.0, %v10394
  %v10396 = vpop.f32.mrf.mxu0
  %10397 = vmatprep.mubr.f32.mxu0 0.0
  %10398 = vmatmul.mubr.f32.gmra.mxu0 %v9229
  %v10399 = vpop.f32.mrf.mxu0
  %v10400 = vadd.f32 0.0, %v10399
  %v10401 = vpop.f32.mrf.mxu0
  %10402 = vmatprep.mubr.f32.mxu0 0.0
  %10403 = vmatmul.mubr.f32.gmra.mxu0 %v9232
  %v10404 = vpop.f32.mrf.mxu0
  %v10405 = vadd.f32 0.0, %v10404
  %v10406 = vpop.f32.mrf.mxu0
  %10407 = vmatprep.mubr.f32.mxu0 0.0
  %10408 = vmatmul.mubr.f32.gmra.mxu0 %v9235
  %v10409 = vpop.f32.mrf.mxu0
  %v10410 = vadd.f32 0.0, %v10409
  %v10411 = vpop.f32.mrf.mxu0
  %10412 = vmatprep.mubr.f32.mxu0 0.0
  %10413 = vmatmul.mubr.f32.gmra.mxu0 %v9238
  %v10414 = vpop.f32.mrf.mxu0
  %v10415 = vadd.f32 0.0, %v10414
  %v10416 = vpop.f32.mrf.mxu0
  %10417 = vmatprep.mubr.f32.mxu0 0.0
  %10418 = vmatmul.mubr.f32.gmra.mxu0 %v9241
  %v10419 = vpop.f32.mrf.mxu0
  %v10420 = vadd.f32 0.0, %v10419
  %v10421 = vpop.f32.mrf.mxu0
  %10422 = vmatprep.mubr.f32.mxu0 0.0
  %10423 = vmatmul.mubr.f32.gmra.mxu0 %v9244
  %v10424 = vpop.f32.mrf.mxu0
  %v10425 = vadd.f32 0.0, %v10424
  %v10426 = vpop.f32.mrf.mxu0
  %10427 = vmatprep.mubr.f32.mxu0 0.0
  %10428 = vmatmul.mubr.f32.gmra.mxu0 %v9247
  %v10429 = vpop.f32.mrf.mxu0
  %v10430 = vadd.f32 0.0, %v10429
  %v10431 = vpop.f32.mrf.mxu0
  %10432 = vmatprep.mubr.f32.mxu0 0.0
  %10433 = vmatmul.mubr.f32.gmra.mxu0 %v9250
  %v10434 = vpop.f32.mrf.mxu0
  %v10435 = vadd.f32 0.0, %v10434
  %v10436 = vpop.f32.mrf.mxu0
  %10437 = vmatprep.mubr.f32.mxu0 0.0
  %10438 = vmatmul.mubr.f32.gmra.mxu0 %v9253
  %v10439 = vpop.f32.mrf.mxu0
  %v10440 = vadd.f32 0.0, %v10439
  %v10441 = vpop.f32.mrf.mxu0
  %10442 = vmatprep.mubr.f32.mxu0 0.0
  %10443 = vmatmul.mubr.f32.gmra.mxu0 %v9256
  %v10444 = vpop.f32.mrf.mxu0
  %v10445 = vadd.f32 0.0, %v10444
  %v10446 = vpop.f32.mrf.mxu0
  %10447 = vmatprep.mubr.f32.mxu0 0.0
  %10448 = vmatmul.mubr.f32.gmra.mxu0 %v9259
  %v10449 = vpop.f32.mrf.mxu0
  %v10450 = vadd.f32 0.0, %v10449
  %v10451 = vpop.f32.mrf.mxu0
  %10452 = vmatprep.mubr.f32.mxu0 0.0
  %10453 = vmatmul.mubr.f32.gmra.mxu0 %v9262
  %v10454 = vpop.f32.mrf.mxu0
  %v10455 = vadd.f32 0.0, %v10454
  %v10456 = vpop.f32.mrf.mxu0
  %10457 = vmatprep.mubr.f32.mxu0 0.0
  %10458 = vmatmul.mubr.f32.gmra.mxu0 %v9265
  %v10459 = vpop.f32.mrf.mxu0
  %v10460 = vadd.f32 0.0, %v10459
  %v10461 = vpop.f32.mrf.mxu0
  %10462 = vmatprep.mubr.f32.mxu0 0.0
  %10463 = vmatmul.mubr.f32.gmra.mxu0 %v9268
  %v10464 = vpop.f32.mrf.mxu0
  %v10465 = vadd.f32 0.0, %v10464
  %v10466 = vpop.f32.mrf.mxu0
  %10467 = vmatprep.mubr.f32.mxu0 0.0
  %10468 = vmatmul.mubr.f32.gmra.mxu0 %v9271
  %v10469 = vpop.f32.mrf.mxu0
  %v10470 = vadd.f32 0.0, %v10469
  %v10471 = vpop.f32.mrf.mxu0
  %10472 = vmatprep.mubr.f32.mxu0 0.0
  %10473 = vmatmul.mubr.f32.gmra.mxu0 %v9274
  %v10474 = vpop.f32.mrf.mxu0
  %v10475 = vadd.f32 0.0, %v10474
  %v10476 = vpop.f32.mrf.mxu0
  %10477 = vmatprep.mubr.f32.mxu0 0.0
  %10478 = vmatmul.mubr.f32.gmra.mxu0 %v9277
  %v10479 = vpop.f32.mrf.mxu0
  %v10480 = vadd.f32 0.0, %v10479
  %v10481 = vpop.f32.mrf.mxu0
  %10482 = vmatprep.mubr.f32.mxu0 0.0
  %10483 = vmatmul.mubr.f32.gmra.mxu0 %v9280
  %v10484 = vpop.f32.mrf.mxu0
  %v10485 = vadd.f32 0.0, %v10484
  %v10486 = vpop.f32.mrf.mxu0
  %10487 = vmatprep.mubr.f32.mxu0 0.0
  %10488 = vmatmul.mubr.f32.gmra.mxu0 %v9283
  %v10489 = vpop.f32.mrf.mxu0
  %v10490 = vadd.f32 0.0, %v10489
  %v10491 = vpop.f32.mrf.mxu0
  %10492 = vmatprep.mubr.f32.mxu0 0.0
  %10493 = vmatmul.mubr.f32.gmra.mxu0 %v9286
  %v10494 = vpop.f32.mrf.mxu0
  %v10495 = vadd.f32 0.0, %v10494
  %v10496 = vpop.f32.mrf.mxu0
  %10497 = vmatprep.mubr.f32.mxu0 0.0
  %10498 = vmatmul.mubr.f32.gmra.mxu0 %v9289
  %v10499 = vpop.f32.mrf.mxu0
  %v10500 = vadd.f32 0.0, %v10499
  %v10501 = vpop.f32.mrf.mxu0
  %10502 = vmatprep.mubr.f32.mxu0 0.0
  %10503 = vmatmul.mubr.f32.gmra.mxu0 %v9292
  %v10504 = vpop.f32.mrf.mxu0
  %v10505 = vadd.f32 0.0, %v10504
  %v10506 = vpop.f32.mrf.mxu0
  %10507 = vmatprep.mubr.f32.mxu0 0.0
  %10508 = vmatmul.mubr.f32.gmra.mxu0 %v9295
  %v10509 = vpop.f32.mrf.mxu0
  %v10510 = vadd.f32 0.0, %v10509
  %v10511 = vpop.f32.mrf.mxu0
  %10512 = vmatprep.mubr.f32.mxu0 0.0
  %10513 = vmatmul.mubr.f32.gmra.mxu0 %v9298
  %v10514 = vpop.f32.mrf.mxu0
  %v10515 = vadd.f32 0.0, %v10514
  %v10516 = vpop.f32.mrf.mxu0
  %10517 = vmatprep.mubr.f32.mxu0 0.0
  %10518 = vmatmul.mubr.f32.gmra.mxu0 %v9301
  %v10519 = vpop.f32.mrf.mxu0
  %v10520 = vadd.f32 0.0, %v10519
  %v10521 = vpop.f32.mrf.mxu0
  %10522 = vmatprep.mubr.f32.mxu0 0.0
  %10523 = vmatmul.mubr.f32.gmra.mxu0 %v9304
  %v10524 = vpop.f32.mrf.mxu0
  %v10525 = vadd.f32 0.0, %v10524
  %v10526 = vpop.f32.mrf.mxu0
  %10527 = vmatprep.mubr.f32.mxu0 0.0
  %10528 = vmatmul.mubr.f32.gmra.mxu0 %v9307
  %v10529 = vpop.f32.mrf.mxu0
  %v10530 = vadd.f32 0.0, %v10529
  %v10531 = vpop.f32.mrf.mxu0
  %10532 = vmatprep.mubr.f32.mxu0 0.0
  %10533 = vmatmul.mubr.f32.gmra.mxu0 %v9310
  %v10534 = vpop.f32.mrf.mxu0
  %v10535 = vadd.f32 0.0, %v10534
  %v10536 = vpop.f32.mrf.mxu0
  %10537 = vmatprep.mubr.f32.mxu0 0.0
  %10538 = vmatmul.mubr.f32.gmra.mxu0 %v9313
  %v10539 = vpop.f32.mrf.mxu0
  %v10540 = vadd.f32 0.0, %v10539
  %v10541 = vpop.f32.mrf.mxu0
  %10542 = vmatprep.mubr.f32.mxu0 0.0
  %10543 = vmatmul.mubr.f32.gmra.mxu0 %v9316
  %v10544 = vpop.f32.mrf.mxu0
  %v10545 = vadd.f32 0.0, %v10544
  %v10546 = vpop.f32.mrf.mxu0
  %10547 = vmatprep.mubr.f32.mxu0 0.0
  %10548 = vmatmul.mubr.f32.gmra.mxu0 %v9319
  %v10549 = vpop.f32.mrf.mxu0
  %v10550 = vadd.f32 0.0, %v10549
  %v10551 = vpop.f32.mrf.mxu0
  %10552 = vdwg.mxu0
  %v10553 = vmax.f32 %v10099, %v10235
  %v10554 = vmax.f32 %v10100, %v10240
  %v10555 = vmax.f32 %v10101, %v10245
  %v10556 = vmax.f32 %v10102, %v10250
  %v10557 = vmax.f32 %v10103, %v10255
  %v10558 = vmax.f32 %v10104, %v10260
  %v10559 = vmax.f32 %v10105, %v10265
  %v10560 = vmax.f32 %v10106, %v10270
  %v10561 = vmax.f32 %v10107, %v10275
  %v10562 = vmax.f32 %v10108, %v10280
  %v10563 = vmax.f32 %v10109, %v10285
  %v10564 = vmax.f32 %v10110, %v10290
  %v10565 = vmax.f32 %v10111, %v10295
  %v10566 = vmax.f32 %v10112, %v10300
  %v10567 = vmax.f32 %v10113, %v10305
  %v10568 = vmax.f32 %v10114, %v10310
  %v10569 = vmax.f32 %v10115, %v10315
  %v10570 = vmax.f32 %v10116, %v10320
  %v10571 = vmax.f32 %v10117, %v10325
  %v10572 = vmax.f32 %v10118, %v10330
  %v10573 = vmax.f32 %v10119, %v10335
  %v10574 = vmax.f32 %v10120, %v10340
  %v10575 = vmax.f32 %v10121, %v10345
  %v10576 = vmax.f32 %v10122, %v10350
  %v10577 = vmax.f32 %v10123, %v10355
  %v10578 = vmax.f32 %v10124, %v10360
  %v10579 = vmax.f32 %v10125, %v10365
  %v10580 = vmax.f32 %v10126, %v10370
  %v10581 = vmax.f32 %v10127, %v10375
  %v10582 = vmax.f32 %v10128, %v10380
  %v10583 = vmax.f32 %v10129, %v10385
  %v10584 = vmax.f32 %v10130, %v10390
  %v10585 = vmax.f32 %v10131, %v10395
  %v10586 = vmax.f32 %v10132, %v10400
  %v10587 = vmax.f32 %v10133, %v10405
  %v10588 = vmax.f32 %v10134, %v10410
  %v10589 = vmax.f32 %v10135, %v10415
  %v10590 = vmax.f32 %v10136, %v10420
  %v10591 = vmax.f32 %v10137, %v10425
  %v10592 = vmax.f32 %v10138, %v10430
  %v10593 = vmax.f32 %v10139, %v10435
  %v10594 = vmax.f32 %v10140, %v10440
  %v10595 = vmax.f32 %v10141, %v10445
  %v10596 = vmax.f32 %v10142, %v10450
  %v10597 = vmax.f32 %v10143, %v10455
  %v10598 = vmax.f32 %v10144, %v10460
  %v10599 = vmax.f32 %v10145, %v10465
  %v10600 = vmax.f32 %v10146, %v10470
  %v10601 = vmax.f32 %v10147, %v10475
  %v10602 = vmax.f32 %v10148, %v10480
  %v10603 = vmax.f32 %v10149, %v10485
  %v10604 = vmax.f32 %v10150, %v10490
  %v10605 = vmax.f32 %v10151, %v10495
  %v10606 = vmax.f32 %v10152, %v10500
  %v10607 = vmax.f32 %v10153, %v10505
  %v10608 = vmax.f32 %v10154, %v10510
  %v10609 = vmax.f32 %v10155, %v10515
  %v10610 = vmax.f32 %v10156, %v10520
  %v10611 = vmax.f32 %v10157, %v10525
  %v10612 = vmax.f32 %v10158, %v10530
  %v10613 = vmax.f32 %v10159, %v10535
  %v10614 = vmax.f32 %v10160, %v10540
  %v10615 = vmax.f32 %v10161, %v10545
  %v10616 = vmax.f32 %v10162, %v10550
  %s10617 = scalar_lea.vmem %s10, 12
  %v10618 = vld [vmem:[%s10617] sm:$0xf]
  %v10620 = vsel %vm779, %v10618, 0
  %10622 = vmatprep.subr.mxu0 0.0
  %10623 = vmatpush1.msra.mxu0 0.0
  %10624 = vmatprep.subr.mxu0 0.0
  %10625 = vmatpush1.msra.mxu0 0.0
  %10626 = vmatprep.subr.mxu0 0.0
  %10627 = vmatpush1.msra.mxu0 0.0
  %10628 = vmatprep.subr.mxu0 0.0
  %10629 = vmatpush1.msra.mxu0 0.0
  %10630 = vmatprep.subr.mxu0 0.0
  %10631 = vmatpush1.msra.mxu0 0.0
  %10632 = vmatprep.subr.mxu0 0.0
  %10633 = vmatpush1.msra.mxu0 0.0
  %10634 = vmatprep.subr.mxu0 0.0
  %10635 = vmatpush1.msra.mxu0 0.0
  %10636 = vmatprep.subr.mxu0 0.0
  %10637 = vmatpush1.msra.mxu0 0.0
  %10638 = vmatprep.subr.mxu0 0.0
  %10639 = vmatpush1.msra.mxu0 0.0
  %10640 = vmatprep.subr.mxu0 0.0
  %10641 = vmatpush1.msra.mxu0 0.0
  %10642 = vmatprep.subr.mxu0 0.0
  %10643 = vmatpush1.msra.mxu0 0.0
  %10644 = vmatprep.subr.mxu0 0.0
  %10645 = vmatpush1.msra.mxu0 0.0
  %10646 = vmatprep.subr.mxu0 0.0
  %10647 = vmatpush1.msra.mxu0 0.0
  %10648 = vmatprep.subr.mxu0 0.0
  %10649 = vmatpush1.msra.mxu0 0.0
  %10650 = vmatprep.subr.mxu0 0.0
  %10651 = vmatpush1.msra.mxu0 0.0
  %10652 = vmatprep.subr.mxu0 0.0
  %10653 = vmatpush1.msra.mxu0 %v10620
  %10654 = vmatprep.subr.mxu0 0.0
  %10655 = vmatpush2.msra.mxu0 0.0
  %10656 = vmatprep.subr.mxu0 0.0
  %10657 = vmatpush2.msra.mxu0 0.0
  %10658 = vmatprep.subr.mxu0 0.0
  %10659 = vmatpush2.msra.mxu0 0.0
  %10660 = vmatprep.subr.mxu0 0.0
  %10661 = vmatpush2.msra.mxu0 0.0
  %10662 = vmatprep.subr.mxu0 0.0
  %10663 = vmatpush2.msra.mxu0 0.0
  %10664 = vmatprep.subr.mxu0 0.0
  %10665 = vmatpush2.msra.mxu0 0.0
  %10666 = vmatprep.subr.mxu0 0.0
  %10667 = vmatpush2.msra.mxu0 0.0
  %10668 = vmatprep.subr.mxu0 0.0
  %10669 = vmatpush2.msra.mxu0 0.0
  %10670 = vmatprep.subr.mxu0 0.0
  %10671 = vmatpush2.msra.mxu0 0.0
  %10672 = vmatprep.subr.mxu0 0.0
  %10673 = vmatpush2.msra.mxu0 0.0
  %10674 = vmatprep.subr.mxu0 0.0
  %10675 = vmatpush2.msra.mxu0 0.0
  %10676 = vmatprep.subr.mxu0 0.0
  %10677 = vmatpush2.msra.mxu0 0.0
  %10678 = vmatprep.subr.mxu0 0.0
  %10679 = vmatpush2.msra.mxu0 0.0
  %10680 = vmatprep.subr.mxu0 0.0
  %10681 = vmatpush2.msra.mxu0 0.0
  %10682 = vmatprep.subr.mxu0 0.0
  %10683 = vmatpush2.msra.mxu0 0.0
  %10684 = vmatprep.subr.mxu0 0.0
  %10685 = vmatpush2.msra.mxu0 0.0
  %10686 = vmatprep.mubr.f32.mxu0 0.0
  %10687 = vmatmul.mubr.f32.gmra.mxu0 %v9130
  %v10688 = vpop.f32.mrf.mxu0
  %v10689 = vadd.f32 0.0, %v10688
  %v10690 = vpop.f32.mrf.mxu0
  %10691 = vmatprep.mubr.f32.mxu0 0.0
  %10692 = vmatmul.mubr.f32.gmra.mxu0 %v9133
  %v10693 = vpop.f32.mrf.mxu0
  %v10694 = vadd.f32 0.0, %v10693
  %v10695 = vpop.f32.mrf.mxu0
  %10696 = vmatprep.mubr.f32.mxu0 0.0
  %10697 = vmatmul.mubr.f32.gmra.mxu0 %v9136
  %v10698 = vpop.f32.mrf.mxu0
  %v10699 = vadd.f32 0.0, %v10698
  %v10700 = vpop.f32.mrf.mxu0
  %10701 = vmatprep.mubr.f32.mxu0 0.0
  %10702 = vmatmul.mubr.f32.gmra.mxu0 %v9139
  %v10703 = vpop.f32.mrf.mxu0
  %v10704 = vadd.f32 0.0, %v10703
  %v10705 = vpop.f32.mrf.mxu0
  %10706 = vmatprep.mubr.f32.mxu0 0.0
  %10707 = vmatmul.mubr.f32.gmra.mxu0 %v9142
  %v10708 = vpop.f32.mrf.mxu0
  %v10709 = vadd.f32 0.0, %v10708
  %v10710 = vpop.f32.mrf.mxu0
  %10711 = vmatprep.mubr.f32.mxu0 0.0
  %10712 = vmatmul.mubr.f32.gmra.mxu0 %v9145
  %v10713 = vpop.f32.mrf.mxu0
  %v10714 = vadd.f32 0.0, %v10713
  %v10715 = vpop.f32.mrf.mxu0
  %10716 = vmatprep.mubr.f32.mxu0 0.0
  %10717 = vmatmul.mubr.f32.gmra.mxu0 %v9148
  %v10718 = vpop.f32.mrf.mxu0
  %v10719 = vadd.f32 0.0, %v10718
  %v10720 = vpop.f32.mrf.mxu0
  %10721 = vmatprep.mubr.f32.mxu0 0.0
  %10722 = vmatmul.mubr.f32.gmra.mxu0 %v9151
  %v10723 = vpop.f32.mrf.mxu0
  %v10724 = vadd.f32 0.0, %v10723
  %v10725 = vpop.f32.mrf.mxu0
  %10726 = vmatprep.mubr.f32.mxu0 0.0
  %10727 = vmatmul.mubr.f32.gmra.mxu0 %v9154
  %v10728 = vpop.f32.mrf.mxu0
  %v10729 = vadd.f32 0.0, %v10728
  %v10730 = vpop.f32.mrf.mxu0
  %10731 = vmatprep.mubr.f32.mxu0 0.0
  %10732 = vmatmul.mubr.f32.gmra.mxu0 %v9157
  %v10733 = vpop.f32.mrf.mxu0
  %v10734 = vadd.f32 0.0, %v10733
  %v10735 = vpop.f32.mrf.mxu0
  %10736 = vmatprep.mubr.f32.mxu0 0.0
  %10737 = vmatmul.mubr.f32.gmra.mxu0 %v9160
  %v10738 = vpop.f32.mrf.mxu0
  %v10739 = vadd.f32 0.0, %v10738
  %v10740 = vpop.f32.mrf.mxu0
  %10741 = vmatprep.mubr.f32.mxu0 0.0
  %10742 = vmatmul.mubr.f32.gmra.mxu0 %v9163
  %v10743 = vpop.f32.mrf.mxu0
  %v10744 = vadd.f32 0.0, %v10743
  %v10745 = vpop.f32.mrf.mxu0
  %10746 = vmatprep.mubr.f32.mxu0 0.0
  %10747 = vmatmul.mubr.f32.gmra.mxu0 %v9166
  %v10748 = vpop.f32.mrf.mxu0
  %v10749 = vadd.f32 0.0, %v10748
  %v10750 = vpop.f32.mrf.mxu0
  %10751 = vmatprep.mubr.f32.mxu0 0.0
  %10752 = vmatmul.mubr.f32.gmra.mxu0 %v9169
  %v10753 = vpop.f32.mrf.mxu0
  %v10754 = vadd.f32 0.0, %v10753
  %v10755 = vpop.f32.mrf.mxu0
  %10756 = vmatprep.mubr.f32.mxu0 0.0
  %10757 = vmatmul.mubr.f32.gmra.mxu0 %v9172
  %v10758 = vpop.f32.mrf.mxu0
  %v10759 = vadd.f32 0.0, %v10758
  %v10760 = vpop.f32.mrf.mxu0
  %10761 = vmatprep.mubr.f32.mxu0 0.0
  %10762 = vmatmul.mubr.f32.gmra.mxu0 %v9175
  %v10763 = vpop.f32.mrf.mxu0
  %v10764 = vadd.f32 0.0, %v10763
  %v10765 = vpop.f32.mrf.mxu0
  %10766 = vmatprep.mubr.f32.mxu0 0.0
  %10767 = vmatmul.mubr.f32.gmra.mxu0 %v9178
  %v10768 = vpop.f32.mrf.mxu0
  %v10769 = vadd.f32 0.0, %v10768
  %v10770 = vpop.f32.mrf.mxu0
  %10771 = vmatprep.mubr.f32.mxu0 0.0
  %10772 = vmatmul.mubr.f32.gmra.mxu0 %v9181
  %v10773 = vpop.f32.mrf.mxu0
  %v10774 = vadd.f32 0.0, %v10773
  %v10775 = vpop.f32.mrf.mxu0
  %10776 = vmatprep.mubr.f32.mxu0 0.0
  %10777 = vmatmul.mubr.f32.gmra.mxu0 %v9184
  %v10778 = vpop.f32.mrf.mxu0
  %v10779 = vadd.f32 0.0, %v10778
  %v10780 = vpop.f32.mrf.mxu0
  %10781 = vmatprep.mubr.f32.mxu0 0.0
  %10782 = vmatmul.mubr.f32.gmra.mxu0 %v9187
  %v10783 = vpop.f32.mrf.mxu0
  %v10784 = vadd.f32 0.0, %v10783
  %v10785 = vpop.f32.mrf.mxu0
  %10786 = vmatprep.mubr.f32.mxu0 0.0
  %10787 = vmatmul.mubr.f32.gmra.mxu0 %v9190
  %v10788 = vpop.f32.mrf.mxu0
  %v10789 = vadd.f32 0.0, %v10788
  %v10790 = vpop.f32.mrf.mxu0
  %10791 = vmatprep.mubr.f32.mxu0 0.0
  %10792 = vmatmul.mubr.f32.gmra.mxu0 %v9193
  %v10793 = vpop.f32.mrf.mxu0
  %v10794 = vadd.f32 0.0, %v10793
  %v10795 = vpop.f32.mrf.mxu0
  %10796 = vmatprep.mubr.f32.mxu0 0.0
  %10797 = vmatmul.mubr.f32.gmra.mxu0 %v9196
  %v10798 = vpop.f32.mrf.mxu0
  %v10799 = vadd.f32 0.0, %v10798
  %v10800 = vpop.f32.mrf.mxu0
  %10801 = vmatprep.mubr.f32.mxu0 0.0
  %10802 = vmatmul.mubr.f32.gmra.mxu0 %v9199
  %v10803 = vpop.f32.mrf.mxu0
  %v10804 = vadd.f32 0.0, %v10803
  %v10805 = vpop.f32.mrf.mxu0
  %10806 = vmatprep.mubr.f32.mxu0 0.0
  %10807 = vmatmul.mubr.f32.gmra.mxu0 %v9202
  %v10808 = vpop.f32.mrf.mxu0
  %v10809 = vadd.f32 0.0, %v10808
  %v10810 = vpop.f32.mrf.mxu0
  %10811 = vmatprep.mubr.f32.mxu0 0.0
  %10812 = vmatmul.mubr.f32.gmra.mxu0 %v9205
  %v10813 = vpop.f32.mrf.mxu0
  %v10814 = vadd.f32 0.0, %v10813
  %v10815 = vpop.f32.mrf.mxu0
  %10816 = vmatprep.mubr.f32.mxu0 0.0
  %10817 = vmatmul.mubr.f32.gmra.mxu0 %v9208
  %v10818 = vpop.f32.mrf.mxu0
  %v10819 = vadd.f32 0.0, %v10818
  %v10820 = vpop.f32.mrf.mxu0
  %10821 = vmatprep.mubr.f32.mxu0 0.0
  %10822 = vmatmul.mubr.f32.gmra.mxu0 %v9211
  %v10823 = vpop.f32.mrf.mxu0
  %v10824 = vadd.f32 0.0, %v10823
  %v10825 = vpop.f32.mrf.mxu0
  %10826 = vmatprep.mubr.f32.mxu0 0.0
  %10827 = vmatmul.mubr.f32.gmra.mxu0 %v9214
  %v10828 = vpop.f32.mrf.mxu0
  %v10829 = vadd.f32 0.0, %v10828
  %v10830 = vpop.f32.mrf.mxu0
  %10831 = vmatprep.mubr.f32.mxu0 0.0
  %10832 = vmatmul.mubr.f32.gmra.mxu0 %v9217
  %v10833 = vpop.f32.mrf.mxu0
  %v10834 = vadd.f32 0.0, %v10833
  %v10835 = vpop.f32.mrf.mxu0
  %10836 = vmatprep.mubr.f32.mxu0 0.0
  %10837 = vmatmul.mubr.f32.gmra.mxu0 %v9220
  %v10838 = vpop.f32.mrf.mxu0
  %v10839 = vadd.f32 0.0, %v10838
  %v10840 = vpop.f32.mrf.mxu0
  %10841 = vmatprep.mubr.f32.mxu0 0.0
  %10842 = vmatmul.mubr.f32.gmra.mxu0 %v9223
  %v10843 = vpop.f32.mrf.mxu0
  %v10844 = vadd.f32 0.0, %v10843
  %v10845 = vpop.f32.mrf.mxu0
  %10846 = vmatprep.mubr.f32.mxu0 0.0
  %10847 = vmatmul.mubr.f32.gmra.mxu0 %v9226
  %v10848 = vpop.f32.mrf.mxu0
  %v10849 = vadd.f32 0.0, %v10848
  %v10850 = vpop.f32.mrf.mxu0
  %10851 = vmatprep.mubr.f32.mxu0 0.0
  %10852 = vmatmul.mubr.f32.gmra.mxu0 %v9229
  %v10853 = vpop.f32.mrf.mxu0
  %v10854 = vadd.f32 0.0, %v10853
  %v10855 = vpop.f32.mrf.mxu0
  %10856 = vmatprep.mubr.f32.mxu0 0.0
  %10857 = vmatmul.mubr.f32.gmra.mxu0 %v9232
  %v10858 = vpop.f32.mrf.mxu0
  %v10859 = vadd.f32 0.0, %v10858
  %v10860 = vpop.f32.mrf.mxu0
  %10861 = vmatprep.mubr.f32.mxu0 0.0
  %10862 = vmatmul.mubr.f32.gmra.mxu0 %v9235
  %v10863 = vpop.f32.mrf.mxu0
  %v10864 = vadd.f32 0.0, %v10863
  %v10865 = vpop.f32.mrf.mxu0
  %10866 = vmatprep.mubr.f32.mxu0 0.0
  %10867 = vmatmul.mubr.f32.gmra.mxu0 %v9238
  %v10868 = vpop.f32.mrf.mxu0
  %v10869 = vadd.f32 0.0, %v10868
  %v10870 = vpop.f32.mrf.mxu0
  %10871 = vmatprep.mubr.f32.mxu0 0.0
  %10872 = vmatmul.mubr.f32.gmra.mxu0 %v9241
  %v10873 = vpop.f32.mrf.mxu0
  %v10874 = vadd.f32 0.0, %v10873
  %v10875 = vpop.f32.mrf.mxu0
  %10876 = vmatprep.mubr.f32.mxu0 0.0
  %10877 = vmatmul.mubr.f32.gmra.mxu0 %v9244
  %v10878 = vpop.f32.mrf.mxu0
  %v10879 = vadd.f32 0.0, %v10878
  %v10880 = vpop.f32.mrf.mxu0
  %10881 = vmatprep.mubr.f32.mxu0 0.0
  %10882 = vmatmul.mubr.f32.gmra.mxu0 %v9247
  %v10883 = vpop.f32.mrf.mxu0
  %v10884 = vadd.f32 0.0, %v10883
  %v10885 = vpop.f32.mrf.mxu0
  %10886 = vmatprep.mubr.f32.mxu0 0.0
  %10887 = vmatmul.mubr.f32.gmra.mxu0 %v9250
  %v10888 = vpop.f32.mrf.mxu0
  %v10889 = vadd.f32 0.0, %v10888
  %v10890 = vpop.f32.mrf.mxu0
  %10891 = vmatprep.mubr.f32.mxu0 0.0
  %10892 = vmatmul.mubr.f32.gmra.mxu0 %v9253
  %v10893 = vpop.f32.mrf.mxu0
  %v10894 = vadd.f32 0.0, %v10893
  %v10895 = vpop.f32.mrf.mxu0
  %10896 = vmatprep.mubr.f32.mxu0 0.0
  %10897 = vmatmul.mubr.f32.gmra.mxu0 %v9256
  %v10898 = vpop.f32.mrf.mxu0
  %v10899 = vadd.f32 0.0, %v10898
  %v10900 = vpop.f32.mrf.mxu0
  %10901 = vmatprep.mubr.f32.mxu0 0.0
  %10902 = vmatmul.mubr.f32.gmra.mxu0 %v9259
  %v10903 = vpop.f32.mrf.mxu0
  %v10904 = vadd.f32 0.0, %v10903
  %v10905 = vpop.f32.mrf.mxu0
  %10906 = vmatprep.mubr.f32.mxu0 0.0
  %10907 = vmatmul.mubr.f32.gmra.mxu0 %v9262
  %v10908 = vpop.f32.mrf.mxu0
  %v10909 = vadd.f32 0.0, %v10908
  %v10910 = vpop.f32.mrf.mxu0
  %10911 = vmatprep.mubr.f32.mxu0 0.0
  %10912 = vmatmul.mubr.f32.gmra.mxu0 %v9265
  %v10913 = vpop.f32.mrf.mxu0
  %v10914 = vadd.f32 0.0, %v10913
  %v10915 = vpop.f32.mrf.mxu0
  %10916 = vmatprep.mubr.f32.mxu0 0.0
  %10917 = vmatmul.mubr.f32.gmra.mxu0 %v9268
  %v10918 = vpop.f32.mrf.mxu0
  %v10919 = vadd.f32 0.0, %v10918
  %v10920 = vpop.f32.mrf.mxu0
  %10921 = vmatprep.mubr.f32.mxu0 0.0
  %10922 = vmatmul.mubr.f32.gmra.mxu0 %v9271
  %v10923 = vpop.f32.mrf.mxu0
  %v10924 = vadd.f32 0.0, %v10923
  %v10925 = vpop.f32.mrf.mxu0
  %10926 = vmatprep.mubr.f32.mxu0 0.0
  %10927 = vmatmul.mubr.f32.gmra.mxu0 %v9274
  %v10928 = vpop.f32.mrf.mxu0
  %v10929 = vadd.f32 0.0, %v10928
  %v10930 = vpop.f32.mrf.mxu0
  %10931 = vmatprep.mubr.f32.mxu0 0.0
  %10932 = vmatmul.mubr.f32.gmra.mxu0 %v9277
  %v10933 = vpop.f32.mrf.mxu0
  %v10934 = vadd.f32 0.0, %v10933
  %v10935 = vpop.f32.mrf.mxu0
  %10936 = vmatprep.mubr.f32.mxu0 0.0
  %10937 = vmatmul.mubr.f32.gmra.mxu0 %v9280
  %v10938 = vpop.f32.mrf.mxu0
  %v10939 = vadd.f32 0.0, %v10938
  %v10940 = vpop.f32.mrf.mxu0
  %10941 = vmatprep.mubr.f32.mxu0 0.0
  %10942 = vmatmul.mubr.f32.gmra.mxu0 %v9283
  %v10943 = vpop.f32.mrf.mxu0
  %v10944 = vadd.f32 0.0, %v10943
  %v10945 = vpop.f32.mrf.mxu0
  %10946 = vmatprep.mubr.f32.mxu0 0.0
  %10947 = vmatmul.mubr.f32.gmra.mxu0 %v9286
  %v10948 = vpop.f32.mrf.mxu0
  %v10949 = vadd.f32 0.0, %v10948
  %v10950 = vpop.f32.mrf.mxu0
  %10951 = vmatprep.mubr.f32.mxu0 0.0
  %10952 = vmatmul.mubr.f32.gmra.mxu0 %v9289
  %v10953 = vpop.f32.mrf.mxu0
  %v10954 = vadd.f32 0.0, %v10953
  %v10955 = vpop.f32.mrf.mxu0
  %10956 = vmatprep.mubr.f32.mxu0 0.0
  %10957 = vmatmul.mubr.f32.gmra.mxu0 %v9292
  %v10958 = vpop.f32.mrf.mxu0
  %v10959 = vadd.f32 0.0, %v10958
  %v10960 = vpop.f32.mrf.mxu0
  %10961 = vmatprep.mubr.f32.mxu0 0.0
  %10962 = vmatmul.mubr.f32.gmra.mxu0 %v9295
  %v10963 = vpop.f32.mrf.mxu0
  %v10964 = vadd.f32 0.0, %v10963
  %v10965 = vpop.f32.mrf.mxu0
  %10966 = vmatprep.mubr.f32.mxu0 0.0
  %10967 = vmatmul.mubr.f32.gmra.mxu0 %v9298
  %v10968 = vpop.f32.mrf.mxu0
  %v10969 = vadd.f32 0.0, %v10968
  %v10970 = vpop.f32.mrf.mxu0
  %10971 = vmatprep.mubr.f32.mxu0 0.0
  %10972 = vmatmul.mubr.f32.gmra.mxu0 %v9301
  %v10973 = vpop.f32.mrf.mxu0
  %v10974 = vadd.f32 0.0, %v10973
  %v10975 = vpop.f32.mrf.mxu0
  %10976 = vmatprep.mubr.f32.mxu0 0.0
  %10977 = vmatmul.mubr.f32.gmra.mxu0 %v9304
  %v10978 = vpop.f32.mrf.mxu0
  %v10979 = vadd.f32 0.0, %v10978
  %v10980 = vpop.f32.mrf.mxu0
  %10981 = vmatprep.mubr.f32.mxu0 0.0
  %10982 = vmatmul.mubr.f32.gmra.mxu0 %v9307
  %v10983 = vpop.f32.mrf.mxu0
  %v10984 = vadd.f32 0.0, %v10983
  %v10985 = vpop.f32.mrf.mxu0
  %10986 = vmatprep.mubr.f32.mxu0 0.0
  %10987 = vmatmul.mubr.f32.gmra.mxu0 %v9310
  %v10988 = vpop.f32.mrf.mxu0
  %v10989 = vadd.f32 0.0, %v10988
  %v10990 = vpop.f32.mrf.mxu0
  %10991 = vmatprep.mubr.f32.mxu0 0.0
  %10992 = vmatmul.mubr.f32.gmra.mxu0 %v9313
  %v10993 = vpop.f32.mrf.mxu0
  %v10994 = vadd.f32 0.0, %v10993
  %v10995 = vpop.f32.mrf.mxu0
  %10996 = vmatprep.mubr.f32.mxu0 0.0
  %10997 = vmatmul.mubr.f32.gmra.mxu0 %v9316
  %v10998 = vpop.f32.mrf.mxu0
  %v10999 = vadd.f32 0.0, %v10998
  %v11000 = vpop.f32.mrf.mxu0
  %11001 = vmatprep.mubr.f32.mxu0 0.0
  %11002 = vmatmul.mubr.f32.gmra.mxu0 %v9319
  %v11003 = vpop.f32.mrf.mxu0
  %v11004 = vadd.f32 0.0, %v11003
  %v11005 = vpop.f32.mrf.mxu0
  %11006 = vdwg.mxu0
  %v11007 = vmax.f32 %v10553, %v10689
  %v11008 = vmax.f32 %v10554, %v10694
  %v11009 = vmax.f32 %v10555, %v10699
  %v11010 = vmax.f32 %v10556, %v10704
  %v11011 = vmax.f32 %v10557, %v10709
  %v11012 = vmax.f32 %v10558, %v10714
  %v11013 = vmax.f32 %v10559, %v10719
  %v11014 = vmax.f32 %v10560, %v10724
  %v11015 = vmax.f32 %v10561, %v10729
  %v11016 = vmax.f32 %v10562, %v10734
  %v11017 = vmax.f32 %v10563, %v10739
  %v11018 = vmax.f32 %v10564, %v10744
  %v11019 = vmax.f32 %v10565, %v10749
  %v11020 = vmax.f32 %v10566, %v10754
  %v11021 = vmax.f32 %v10567, %v10759
  %v11022 = vmax.f32 %v10568, %v10764
  %v11023 = vmax.f32 %v10569, %v10769
  %v11024 = vmax.f32 %v10570, %v10774
  %v11025 = vmax.f32 %v10571, %v10779
  %v11026 = vmax.f32 %v10572, %v10784
  %v11027 = vmax.f32 %v10573, %v10789
  %v11028 = vmax.f32 %v10574, %v10794
  %v11029 = vmax.f32 %v10575, %v10799
  %v11030 = vmax.f32 %v10576, %v10804
  %v11031 = vmax.f32 %v10577, %v10809
  %v11032 = vmax.f32 %v10578, %v10814
  %v11033 = vmax.f32 %v10579, %v10819
  %v11034 = vmax.f32 %v10580, %v10824
  %v11035 = vmax.f32 %v10581, %v10829
  %v11036 = vmax.f32 %v10582, %v10834
  %v11037 = vmax.f32 %v10583, %v10839
  %v11038 = vmax.f32 %v10584, %v10844
  %v11039 = vmax.f32 %v10585, %v10849
  %v11040 = vmax.f32 %v10586, %v10854
  %v11041 = vmax.f32 %v10587, %v10859
  %v11042 = vmax.f32 %v10588, %v10864
  %v11043 = vmax.f32 %v10589, %v10869
  %v11044 = vmax.f32 %v10590, %v10874
  %v11045 = vmax.f32 %v10591, %v10879
  %v11046 = vmax.f32 %v10592, %v10884
  %v11047 = vmax.f32 %v10593, %v10889
  %v11048 = vmax.f32 %v10594, %v10894
  %v11049 = vmax.f32 %v10595, %v10899
  %v11050 = vmax.f32 %v10596, %v10904
  %v11051 = vmax.f32 %v10597, %v10909
  %v11052 = vmax.f32 %v10598, %v10914
  %v11053 = vmax.f32 %v10599, %v10919
  %v11054 = vmax.f32 %v10600, %v10924
  %v11055 = vmax.f32 %v10601, %v10929
  %v11056 = vmax.f32 %v10602, %v10934
  %v11057 = vmax.f32 %v10603, %v10939
  %v11058 = vmax.f32 %v10604, %v10944
  %v11059 = vmax.f32 %v10605, %v10949
  %v11060 = vmax.f32 %v10606, %v10954
  %v11061 = vmax.f32 %v10607, %v10959
  %v11062 = vmax.f32 %v10608, %v10964
  %v11063 = vmax.f32 %v10609, %v10969
  %v11064 = vmax.f32 %v10610, %v10974
  %v11065 = vmax.f32 %v10611, %v10979
  %v11066 = vmax.f32 %v10612, %v10984
  %v11067 = vmax.f32 %v10613, %v10989
  %v11068 = vmax.f32 %v10614, %v10994
  %v11069 = vmax.f32 %v10615, %v10999
  %v11070 = vmax.f32 %v10616, %v11004
  %11071 = vst.msk [vmem:[%s11] sm:$0xff] %vm6629, %v11007
  %11072 = vst.msk [vmem:[%s11 + $0x8] sm:$0xff] %vm6629, %v11008
  %11073 = vst.msk [vmem:[%s11 + $0x10] sm:$0xff] %vm6629, %v11009
  %11074 = vst.msk [vmem:[%s11 + $0x18] sm:$0xff] %vm6629, %v11010
  %11075 = vst.msk [vmem:[%s11 + $0x20] sm:$0xff] %vm6629, %v11011
  %11076 = vst.msk [vmem:[%s11 + $0x28] sm:$0xff] %vm6629, %v11012
  %11077 = vst.msk [vmem:[%s11 + $0x30] sm:$0xff] %vm6629, %v11013
  %11078 = vst.msk [vmem:[%s11 + $0x38] sm:$0xff] %vm6629, %v11014
  %11079 = vst.msk [vmem:[%s11 + $0x40] sm:$0xff] %vm6629, %v11015
  %11080 = vst.msk [vmem:[%s11 + $0x48] sm:$0xff] %vm6629, %v11016
  %11081 = vst.msk [vmem:[%s11 + $0x50] sm:$0xff] %vm6629, %v11017
  %11082 = vst.msk [vmem:[%s11 + $0x58] sm:$0xff] %vm6629, %v11018
  %11083 = vst.msk [vmem:[%s11 + $0x60] sm:$0xff] %vm6629, %v11019
  %11084 = vst.msk [vmem:[%s11 + $0x68] sm:$0xff] %vm6629, %v11020
  %11085 = vst.msk [vmem:[%s11 + $0x70] sm:$0xff] %vm6629, %v11021
  %11086 = vst.msk [vmem:[%s11 + $0x78] sm:$0xff] %vm6629, %v11022
  %11087 = vst.msk [vmem:[%s11 + $0x80] sm:$0xff] %vm6629, %v11023
  %11088 = vst.msk [vmem:[%s11 + $0x88] sm:$0xff] %vm6629, %v11024
  %11089 = vst.msk [vmem:[%s11 + $0x90] sm:$0xff] %vm6629, %v11025
  %11090 = vst.msk [vmem:[%s11 + $0x98] sm:$0xff] %vm6629, %v11026
  %11091 = vst.msk [vmem:[%s11 + $0xa0] sm:$0xff] %vm6629, %v11027
  %11092 = vst.msk [vmem:[%s11 + $0xa8] sm:$0xff] %vm6629, %v11028
  %11093 = vst.msk [vmem:[%s11 + $0xb0] sm:$0xff] %vm6629, %v11029
  %11094 = vst.msk [vmem:[%s11 + $0xb8] sm:$0xff] %vm6629, %v11030
  %11095 = vst.msk [vmem:[%s11 + $0xc0] sm:$0xff] %vm6629, %v11031
  %11096 = vst.msk [vmem:[%s11 + $0xc8] sm:$0xff] %vm6629, %v11032
  %11097 = vst.msk [vmem:[%s11 + $0xd0] sm:$0xff] %vm6629, %v11033
  %11098 = vst.msk [vmem:[%s11 + $0xd8] sm:$0xff] %vm6629, %v11034
  %11099 = vst.msk [vmem:[%s11 + $0xe0] sm:$0xff] %vm6629, %v11035
  %11100 = vst.msk [vmem:[%s11 + $0xe8] sm:$0xff] %vm6629, %v11036
  %11101 = vst.msk [vmem:[%s11 + $0xf0] sm:$0xff] %vm6629, %v11037
  %11102 = vst.msk [vmem:[%s11 + $0xf8] sm:$0xff] %vm6629, %v11038
  %11103 = vst.msk [vmem:[%s11 + $0x100] sm:$0xff] %vm6629, %v11039
  %11104 = vst.msk [vmem:[%s11 + $0x108] sm:$0xff] %vm6629, %v11040
  %11105 = vst.msk [vmem:[%s11 + $0x110] sm:$0xff] %vm6629, %v11041
  %11106 = vst.msk [vmem:[%s11 + $0x118] sm:$0xff] %vm6629, %v11042
  %11107 = vst.msk [vmem:[%s11 + $0x120] sm:$0xff] %vm6629, %v11043
  %11108 = vst.msk [vmem:[%s11 + $0x128] sm:$0xff] %vm6629, %v11044
  %11109 = vst.msk [vmem:[%s11 + $0x130] sm:$0xff] %vm6629, %v11045
  %11110 = vst.msk [vmem:[%s11 + $0x138] sm:$0xff] %vm6629, %v11046
  %11111 = vst.msk [vmem:[%s11 + $0x140] sm:$0xff] %vm6629, %v11047
  %11112 = vst.msk [vmem:[%s11 + $0x148] sm:$0xff] %vm6629, %v11048
  %11113 = vst.msk [vmem:[%s11 + $0x150] sm:$0xff] %vm6629, %v11049
  %11114 = vst.msk [vmem:[%s11 + $0x158] sm:$0xff] %vm6629, %v11050
  %11115 = vst.msk [vmem:[%s11 + $0x160] sm:$0xff] %vm6629, %v11051
  %11116 = vst.msk [vmem:[%s11 + $0x168] sm:$0xff] %vm6629, %v11052
  %11117 = vst.msk [vmem:[%s11 + $0x170] sm:$0xff] %vm6629, %v11053
  %11118 = vst.msk [vmem:[%s11 + $0x178] sm:$0xff] %vm6629, %v11054
  %11119 = vst.msk [vmem:[%s11 + $0x180] sm:$0xff] %vm6629, %v11055
  %11120 = vst.msk [vmem:[%s11 + $0x188] sm:$0xff] %vm6629, %v11056
  %11121 = vst.msk [vmem:[%s11 + $0x190] sm:$0xff] %vm6629, %v11057
  %11122 = vst.msk [vmem:[%s11 + $0x198] sm:$0xff] %vm6629, %v11058
  %11123 = vst.msk [vmem:[%s11 + $0x1a0] sm:$0xff] %vm6629, %v11059
  %11124 = vst.msk [vmem:[%s11 + $0x1a8] sm:$0xff] %vm6629, %v11060
  %11125 = vst.msk [vmem:[%s11 + $0x1b0] sm:$0xff] %vm6629, %v11061
  %11126 = vst.msk [vmem:[%s11 + $0x1b8] sm:$0xff] %vm6629, %v11062
  %11127 = vst.msk [vmem:[%s11 + $0x1c0] sm:$0xff] %vm6629, %v11063
  %11128 = vst.msk [vmem:[%s11 + $0x1c8] sm:$0xff] %vm6629, %v11064
  %11129 = vst.msk [vmem:[%s11 + $0x1d0] sm:$0xff] %vm6629, %v11065
  %11130 = vst.msk [vmem:[%s11 + $0x1d8] sm:$0xff] %vm6629, %v11066
  %11131 = vst.msk [vmem:[%s11 + $0x1e0] sm:$0xff] %vm6629, %v11067
  %11132 = vst.msk [vmem:[%s11 + $0x1e8] sm:$0xff] %vm6629, %v11068
  %11133 = vst.msk [vmem:[%s11 + $0x1f0] sm:$0xff] %vm6629, %v11069
  %11134 = vst.msk [vmem:[%s11 + $0x1f8] sm:$0xff] %vm6629, %v11070
  %11199 = vrot.lane.b32.xlu0 %v6565, 4
  %v11200 = vpop.permute.xlu0 %11199
  %11201 = vrot.lane.b32.xlu0 %v6566, 4
  %v11202 = vpop.permute.xlu0 %11201
  %11203 = vrot.lane.b32.xlu0 %v6567, 4
  %v11204 = vpop.permute.xlu0 %11203
  %11205 = vrot.lane.b32.xlu0 %v6568, 4
  %v11206 = vpop.permute.xlu0 %11205
  %11207 = vrot.lane.b32.xlu0 %v6569, 4
  %v11208 = vpop.permute.xlu0 %11207
  %11209 = vrot.lane.b32.xlu0 %v6570, 4
  %v11210 = vpop.permute.xlu0 %11209
  %11211 = vrot.lane.b32.xlu0 %v6571, 4
  %v11212 = vpop.permute.xlu0 %11211
  %11213 = vrot.lane.b32.xlu0 %v6572, 4
  %v11214 = vpop.permute.xlu0 %11213
  %11215 = vrot.lane.b32.xlu0 %v6573, 4
  %v11216 = vpop.permute.xlu0 %11215
  %11217 = vrot.lane.b32.xlu0 %v6574, 4
  %v11218 = vpop.permute.xlu0 %11217
  %11219 = vrot.lane.b32.xlu0 %v6575, 4
  %v11220 = vpop.permute.xlu0 %11219
  %11221 = vrot.lane.b32.xlu0 %v6576, 4
  %v11222 = vpop.permute.xlu0 %11221
  %11223 = vrot.lane.b32.xlu0 %v6577, 4
  %v11224 = vpop.permute.xlu0 %11223
  %11225 = vrot.lane.b32.xlu0 %v6578, 4
  %v11226 = vpop.permute.xlu0 %11225
  %11227 = vrot.lane.b32.xlu0 %v6579, 4
  %v11228 = vpop.permute.xlu0 %11227
  %11229 = vrot.lane.b32.xlu0 %v6580, 4
  %v11230 = vpop.permute.xlu0 %11229
  %11231 = vrot.lane.b32.xlu0 %v6581, 4
  %v11232 = vpop.permute.xlu0 %11231
  %11233 = vrot.lane.b32.xlu0 %v6582, 4
  %v11234 = vpop.permute.xlu0 %11233
  %11235 = vrot.lane.b32.xlu0 %v6583, 4
  %v11236 = vpop.permute.xlu0 %11235
  %11237 = vrot.lane.b32.xlu0 %v6584, 4
  %v11238 = vpop.permute.xlu0 %11237
  %11239 = vrot.lane.b32.xlu0 %v6585, 4
  %v11240 = vpop.permute.xlu0 %11239
  %11241 = vrot.lane.b32.xlu0 %v6586, 4
  %v11242 = vpop.permute.xlu0 %11241
  %11243 = vrot.lane.b32.xlu0 %v6587, 4
  %v11244 = vpop.permute.xlu0 %11243
  %11245 = vrot.lane.b32.xlu0 %v6588, 4
  %v11246 = vpop.permute.xlu0 %11245
  %11247 = vrot.lane.b32.xlu0 %v6589, 4
  %v11248 = vpop.permute.xlu0 %11247
  %11249 = vrot.lane.b32.xlu0 %v6590, 4
  %v11250 = vpop.permute.xlu0 %11249
  %11251 = vrot.lane.b32.xlu0 %v6591, 4
  %v11252 = vpop.permute.xlu0 %11251
  %11253 = vrot.lane.b32.xlu0 %v6592, 4
  %v11254 = vpop.permute.xlu0 %11253
  %11255 = vrot.lane.b32.xlu0 %v6593, 4
  %v11256 = vpop.permute.xlu0 %11255
  %11257 = vrot.lane.b32.xlu0 %v6594, 4
  %v11258 = vpop.permute.xlu0 %11257
  %11259 = vrot.lane.b32.xlu0 %v6595, 4
  %v11260 = vpop.permute.xlu0 %11259
  %11261 = vrot.lane.b32.xlu0 %v6596, 4
  %v11262 = vpop.permute.xlu0 %11261
  %11263 = vrot.lane.b32.xlu0 %v6597, 4
  %v11264 = vpop.permute.xlu0 %11263
  %11265 = vrot.lane.b32.xlu0 %v6598, 4
  %v11266 = vpop.permute.xlu0 %11265
  %11267 = vrot.lane.b32.xlu0 %v6599, 4
  %v11268 = vpop.permute.xlu0 %11267
  %11269 = vrot.lane.b32.xlu0 %v6600, 4
  %v11270 = vpop.permute.xlu0 %11269
  %11271 = vrot.lane.b32.xlu0 %v6601, 4
  %v11272 = vpop.permute.xlu0 %11271
  %11273 = vrot.lane.b32.xlu0 %v6602, 4
  %v11274 = vpop.permute.xlu0 %11273
  %11275 = vrot.lane.b32.xlu0 %v6603, 4
  %v11276 = vpop.permute.xlu0 %11275
  %11277 = vrot.lane.b32.xlu0 %v6604, 4
  %v11278 = vpop.permute.xlu0 %11277
  %11279 = vrot.lane.b32.xlu0 %v6605, 4
  %v11280 = vpop.permute.xlu0 %11279
  %11281 = vrot.lane.b32.xlu0 %v6606, 4
  %v11282 = vpop.permute.xlu0 %11281
  %11283 = vrot.lane.b32.xlu0 %v6607, 4
  %v11284 = vpop.permute.xlu0 %11283
  %11285 = vrot.lane.b32.xlu0 %v6608, 4
  %v11286 = vpop.permute.xlu0 %11285
  %11287 = vrot.lane.b32.xlu0 %v6609, 4
  %v11288 = vpop.permute.xlu0 %11287
  %11289 = vrot.lane.b32.xlu0 %v6610, 4
  %v11290 = vpop.permute.xlu0 %11289
  %11291 = vrot.lane.b32.xlu0 %v6611, 4
  %v11292 = vpop.permute.xlu0 %11291
  %11293 = vrot.lane.b32.xlu0 %v6612, 4
  %v11294 = vpop.permute.xlu0 %11293
  %11295 = vrot.lane.b32.xlu0 %v6613, 4
  %v11296 = vpop.permute.xlu0 %11295
  %11297 = vrot.lane.b32.xlu0 %v6614, 4
  %v11298 = vpop.permute.xlu0 %11297
  %11299 = vrot.lane.b32.xlu0 %v6615, 4
  %v11300 = vpop.permute.xlu0 %11299
  %11301 = vrot.lane.b32.xlu0 %v6616, 4
  %v11302 = vpop.permute.xlu0 %11301
  %11303 = vrot.lane.b32.xlu0 %v6617, 4
  %v11304 = vpop.permute.xlu0 %11303
  %11305 = vrot.lane.b32.xlu0 %v6618, 4
  %v11306 = vpop.permute.xlu0 %11305
  %11307 = vrot.lane.b32.xlu0 %v6619, 4
  %v11308 = vpop.permute.xlu0 %11307
  %11309 = vrot.lane.b32.xlu0 %v6620, 4
  %v11310 = vpop.permute.xlu0 %11309
  %11311 = vrot.lane.b32.xlu0 %v6621, 4
  %v11312 = vpop.permute.xlu0 %11311
  %11313 = vrot.lane.b32.xlu0 %v6622, 4
  %v11314 = vpop.permute.xlu0 %11313
  %11315 = vrot.lane.b32.xlu0 %v6623, 4
  %v11316 = vpop.permute.xlu0 %11315
  %11317 = vrot.lane.b32.xlu0 %v6624, 4
  %v11318 = vpop.permute.xlu0 %11317
  %11319 = vrot.lane.b32.xlu0 %v6625, 4
  %v11320 = vpop.permute.xlu0 %11319
  %11321 = vrot.lane.b32.xlu0 %v6626, 4
  %v11322 = vpop.permute.xlu0 %11321
  %11323 = vrot.lane.b32.xlu0 %v6627, 4
  %v11324 = vpop.permute.xlu0 %11323
  %11325 = vrot.lane.b32.xlu0 %v6628, 4
  %v11326 = vpop.permute.xlu0 %11325
  %vm11391 = vcmask 64544
  %11392 = vst.msk [vmem:[%s11] sm:$0xff] %vm11391, %v11200
  %11393 = vst.msk [vmem:[%s11 + $0x8] sm:$0xff] %vm11391, %v11202
  %11394 = vst.msk [vmem:[%s11 + $0x10] sm:$0xff] %vm11391, %v11204
  %11395 = vst.msk [vmem:[%s11 + $0x18] sm:$0xff] %vm11391, %v11206
  %11396 = vst.msk [vmem:[%s11 + $0x20] sm:$0xff] %vm11391, %v11208
  %11397 = vst.msk [vmem:[%s11 + $0x28] sm:$0xff] %vm11391, %v11210
  %11398 = vst.msk [vmem:[%s11 + $0x30] sm:$0xff] %vm11391, %v11212
  %11399 = vst.msk [vmem:[%s11 + $0x38] sm:$0xff] %vm11391, %v11214
  %11400 = vst.msk [vmem:[%s11 + $0x40] sm:$0xff] %vm11391, %v11216
  %11401 = vst.msk [vmem:[%s11 + $0x48] sm:$0xff] %vm11391, %v11218
  %11402 = vst.msk [vmem:[%s11 + $0x50] sm:$0xff] %vm11391, %v11220
  %11403 = vst.msk [vmem:[%s11 + $0x58] sm:$0xff] %vm11391, %v11222
  %11404 = vst.msk [vmem:[%s11 + $0x60] sm:$0xff] %vm11391, %v11224
  %11405 = vst.msk [vmem:[%s11 + $0x68] sm:$0xff] %vm11391, %v11226
  %11406 = vst.msk [vmem:[%s11 + $0x70] sm:$0xff] %vm11391, %v11228
  %11407 = vst.msk [vmem:[%s11 + $0x78] sm:$0xff] %vm11391, %v11230
  %11408 = vst.msk [vmem:[%s11 + $0x80] sm:$0xff] %vm11391, %v11232
  %11409 = vst.msk [vmem:[%s11 + $0x88] sm:$0xff] %vm11391, %v11234
  %11410 = vst.msk [vmem:[%s11 + $0x90] sm:$0xff] %vm11391, %v11236
  %11411 = vst.msk [vmem:[%s11 + $0x98] sm:$0xff] %vm11391, %v11238
  %11412 = vst.msk [vmem:[%s11 + $0xa0] sm:$0xff] %vm11391, %v11240
  %11413 = vst.msk [vmem:[%s11 + $0xa8] sm:$0xff] %vm11391, %v11242
  %11414 = vst.msk [vmem:[%s11 + $0xb0] sm:$0xff] %vm11391, %v11244
  %11415 = vst.msk [vmem:[%s11 + $0xb8] sm:$0xff] %vm11391, %v11246
  %11416 = vst.msk [vmem:[%s11 + $0xc0] sm:$0xff] %vm11391, %v11248
  %11417 = vst.msk [vmem:[%s11 + $0xc8] sm:$0xff] %vm11391, %v11250
  %11418 = vst.msk [vmem:[%s11 + $0xd0] sm:$0xff] %vm11391, %v11252
  %11419 = vst.msk [vmem:[%s11 + $0xd8] sm:$0xff] %vm11391, %v11254
  %11420 = vst.msk [vmem:[%s11 + $0xe0] sm:$0xff] %vm11391, %v11256
  %11421 = vst.msk [vmem:[%s11 + $0xe8] sm:$0xff] %vm11391, %v11258
  %11422 = vst.msk [vmem:[%s11 + $0xf0] sm:$0xff] %vm11391, %v11260
  %11423 = vst.msk [vmem:[%s11 + $0xf8] sm:$0xff] %vm11391, %v11262
  %11424 = vst.msk [vmem:[%s11 + $0x100] sm:$0xff] %vm11391, %v11264
  %11425 = vst.msk [vmem:[%s11 + $0x108] sm:$0xff] %vm11391, %v11266
  %11426 = vst.msk [vmem:[%s11 + $0x110] sm:$0xff] %vm11391, %v11268
  %11427 = vst.msk [vmem:[%s11 + $0x118] sm:$0xff] %vm11391, %v11270
  %11428 = vst.msk [vmem:[%s11 + $0x120] sm:$0xff] %vm11391, %v11272
  %11429 = vst.msk [vmem:[%s11 + $0x128] sm:$0xff] %vm11391, %v11274
  %11430 = vst.msk [vmem:[%s11 + $0x130] sm:$0xff] %vm11391, %v11276
  %11431 = vst.msk [vmem:[%s11 + $0x138] sm:$0xff] %vm11391, %v11278
  %11432 = vst.msk [vmem:[%s11 + $0x140] sm:$0xff] %vm11391, %v11280
  %11433 = vst.msk [vmem:[%s11 + $0x148] sm:$0xff] %vm11391, %v11282
  %11434 = vst.msk [vmem:[%s11 + $0x150] sm:$0xff] %vm11391, %v11284
  %11435 = vst.msk [vmem:[%s11 + $0x158] sm:$0xff] %vm11391, %v11286
  %11436 = vst.msk [vmem:[%s11 + $0x160] sm:$0xff] %vm11391, %v11288
  %11437 = vst.msk [vmem:[%s11 + $0x168] sm:$0xff] %vm11391, %v11290
  %11438 = vst.msk [vmem:[%s11 + $0x170] sm:$0xff] %vm11391, %v11292
  %11439 = vst.msk [vmem:[%s11 + $0x178] sm:$0xff] %vm11391, %v11294
  %11440 = vst.msk [vmem:[%s11 + $0x180] sm:$0xff] %vm11391, %v11296
  %11441 = vst.msk [vmem:[%s11 + $0x188] sm:$0xff] %vm11391, %v11298
  %11442 = vst.msk [vmem:[%s11 + $0x190] sm:$0xff] %vm11391, %v11300
  %11443 = vst.msk [vmem:[%s11 + $0x198] sm:$0xff] %vm11391, %v11302
  %11444 = vst.msk [vmem:[%s11 + $0x1a0] sm:$0xff] %vm11391, %v11304
  %11445 = vst.msk [vmem:[%s11 + $0x1a8] sm:$0xff] %vm11391, %v11306
  %11446 = vst.msk [vmem:[%s11 + $0x1b0] sm:$0xff] %vm11391, %v11308
  %11447 = vst.msk [vmem:[%s11 + $0x1b8] sm:$0xff] %vm11391, %v11310
  %11448 = vst.msk [vmem:[%s11 + $0x1c0] sm:$0xff] %vm11391, %v11312
  %11449 = vst.msk [vmem:[%s11 + $0x1c8] sm:$0xff] %vm11391, %v11314
  %11450 = vst.msk [vmem:[%s11 + $0x1d0] sm:$0xff] %vm11391, %v11316
  %11451 = vst.msk [vmem:[%s11 + $0x1d8] sm:$0xff] %vm11391, %v11318
  %11452 = vst.msk [vmem:[%s11 + $0x1e0] sm:$0xff] %vm11391, %v11320
  %11453 = vst.msk [vmem:[%s11 + $0x1e8] sm:$0xff] %vm11391, %v11322
  %11454 = vst.msk [vmem:[%s11 + $0x1f0] sm:$0xff] %vm11391, %v11324
  %11455 = vst.msk [vmem:[%s11 + $0x1f8] sm:$0xff] %vm11391, %v11326
  %11520 = vrot.lane.b32.xlu0 %v39, 8
  %v11521 = vpop.permute.xlu0 %11520
  %11522 = vrot.lane.b32.xlu0 %v40, 8
  %v11523 = vpop.permute.xlu0 %11522
  %11524 = vrot.lane.b32.xlu0 %v41, 8
  %v11525 = vpop.permute.xlu0 %11524
  %11526 = vrot.lane.b32.xlu0 %v42, 8
  %v11527 = vpop.permute.xlu0 %11526
  %11528 = vrot.lane.b32.xlu0 %v43, 8
  %v11529 = vpop.permute.xlu0 %11528
  %11530 = vrot.lane.b32.xlu0 %v44, 8
  %v11531 = vpop.permute.xlu0 %11530
  %11532 = vrot.lane.b32.xlu0 %v45, 8
  %v11533 = vpop.permute.xlu0 %11532
  %11534 = vrot.lane.b32.xlu0 %v46, 8
  %v11535 = vpop.permute.xlu0 %11534
  %11536 = vrot.lane.b32.xlu0 %v47, 8
  %v11537 = vpop.permute.xlu0 %11536
  %11538 = vrot.lane.b32.xlu0 %v48, 8
  %v11539 = vpop.permute.xlu0 %11538
  %11540 = vrot.lane.b32.xlu0 %v49, 8
  %v11541 = vpop.permute.xlu0 %11540
  %11542 = vrot.lane.b32.xlu0 %v50, 8
  %v11543 = vpop.permute.xlu0 %11542
  %11544 = vrot.lane.b32.xlu0 %v51, 8
  %v11545 = vpop.permute.xlu0 %11544
  %11546 = vrot.lane.b32.xlu0 %v52, 8
  %v11547 = vpop.permute.xlu0 %11546
  %11548 = vrot.lane.b32.xlu0 %v53, 8
  %v11549 = vpop.permute.xlu0 %11548
  %11550 = vrot.lane.b32.xlu0 %v54, 8
  %v11551 = vpop.permute.xlu0 %11550
  %11552 = vrot.lane.b32.xlu0 %v55, 8
  %v11553 = vpop.permute.xlu0 %11552
  %11554 = vrot.lane.b32.xlu0 %v56, 8
  %v11555 = vpop.permute.xlu0 %11554
  %11556 = vrot.lane.b32.xlu0 %v57, 8
  %v11557 = vpop.permute.xlu0 %11556
  %11558 = vrot.lane.b32.xlu0 %v58, 8
  %v11559 = vpop.permute.xlu0 %11558
  %11560 = vrot.lane.b32.xlu0 %v59, 8
  %v11561 = vpop.permute.xlu0 %11560
  %11562 = vrot.lane.b32.xlu0 %v60, 8
  %v11563 = vpop.permute.xlu0 %11562
  %11564 = vrot.lane.b32.xlu0 %v61, 8
  %v11565 = vpop.permute.xlu0 %11564
  %11566 = vrot.lane.b32.xlu0 %v62, 8
  %v11567 = vpop.permute.xlu0 %11566
  %11568 = vrot.lane.b32.xlu0 %v63, 8
  %v11569 = vpop.permute.xlu0 %11568
  %11570 = vrot.lane.b32.xlu0 %v64, 8
  %v11571 = vpop.permute.xlu0 %11570
  %11572 = vrot.lane.b32.xlu0 %v65, 8
  %v11573 = vpop.permute.xlu0 %11572
  %11574 = vrot.lane.b32.xlu0 %v66, 8
  %v11575 = vpop.permute.xlu0 %11574
  %11576 = vrot.lane.b32.xlu0 %v67, 8
  %v11577 = vpop.permute.xlu0 %11576
  %11578 = vrot.lane.b32.xlu0 %v68, 8
  %v11579 = vpop.permute.xlu0 %11578
  %11580 = vrot.lane.b32.xlu0 %v69, 8
  %v11581 = vpop.permute.xlu0 %11580
  %11582 = vrot.lane.b32.xlu0 %v70, 8
  %v11583 = vpop.permute.xlu0 %11582
  %11584 = vrot.lane.b32.xlu0 %v71, 8
  %v11585 = vpop.permute.xlu0 %11584
  %11586 = vrot.lane.b32.xlu0 %v72, 8
  %v11587 = vpop.permute.xlu0 %11586
  %11588 = vrot.lane.b32.xlu0 %v73, 8
  %v11589 = vpop.permute.xlu0 %11588
  %11590 = vrot.lane.b32.xlu0 %v74, 8
  %v11591 = vpop.permute.xlu0 %11590
  %11592 = vrot.lane.b32.xlu0 %v75, 8
  %v11593 = vpop.permute.xlu0 %11592
  %11594 = vrot.lane.b32.xlu0 %v76, 8
  %v11595 = vpop.permute.xlu0 %11594
  %11596 = vrot.lane.b32.xlu0 %v77, 8
  %v11597 = vpop.permute.xlu0 %11596
  %11598 = vrot.lane.b32.xlu0 %v78, 8
  %v11599 = vpop.permute.xlu0 %11598
  %11600 = vrot.lane.b32.xlu0 %v79, 8
  %v11601 = vpop.permute.xlu0 %11600
  %11602 = vrot.lane.b32.xlu0 %v80, 8
  %v11603 = vpop.permute.xlu0 %11602
  %11604 = vrot.lane.b32.xlu0 %v81, 8
  %v11605 = vpop.permute.xlu0 %11604
  %11606 = vrot.lane.b32.xlu0 %v82, 8
  %v11607 = vpop.permute.xlu0 %11606
  %11608 = vrot.lane.b32.xlu0 %v83, 8
  %v11609 = vpop.permute.xlu0 %11608
  %11610 = vrot.lane.b32.xlu0 %v84, 8
  %v11611 = vpop.permute.xlu0 %11610
  %11612 = vrot.lane.b32.xlu0 %v85, 8
  %v11613 = vpop.permute.xlu0 %11612
  %11614 = vrot.lane.b32.xlu0 %v86, 8
  %v11615 = vpop.permute.xlu0 %11614
  %11616 = vrot.lane.b32.xlu0 %v87, 8
  %v11617 = vpop.permute.xlu0 %11616
  %11618 = vrot.lane.b32.xlu0 %v88, 8
  %v11619 = vpop.permute.xlu0 %11618
  %11620 = vrot.lane.b32.xlu0 %v89, 8
  %v11621 = vpop.permute.xlu0 %11620
  %11622 = vrot.lane.b32.xlu0 %v90, 8
  %v11623 = vpop.permute.xlu0 %11622
  %11624 = vrot.lane.b32.xlu0 %v91, 8
  %v11625 = vpop.permute.xlu0 %11624
  %11626 = vrot.lane.b32.xlu0 %v92, 8
  %v11627 = vpop.permute.xlu0 %11626
  %11628 = vrot.lane.b32.xlu0 %v93, 8
  %v11629 = vpop.permute.xlu0 %11628
  %11630 = vrot.lane.b32.xlu0 %v94, 8
  %v11631 = vpop.permute.xlu0 %11630
  %11632 = vrot.lane.b32.xlu0 %v95, 8
  %v11633 = vpop.permute.xlu0 %11632
  %11634 = vrot.lane.b32.xlu0 %v96, 8
  %v11635 = vpop.permute.xlu0 %11634
  %11636 = vrot.lane.b32.xlu0 %v97, 8
  %v11637 = vpop.permute.xlu0 %11636
  %11638 = vrot.lane.b32.xlu0 %v98, 8
  %v11639 = vpop.permute.xlu0 %11638
  %11640 = vrot.lane.b32.xlu0 %v99, 8
  %v11641 = vpop.permute.xlu0 %11640
  %11642 = vrot.lane.b32.xlu0 %v100, 8
  %v11643 = vpop.permute.xlu0 %11642
  %11644 = vrot.lane.b32.xlu0 %v101, 8
  %v11645 = vpop.permute.xlu0 %11644
  %11646 = vrot.lane.b32.xlu0 %v102, 8
  %v11647 = vpop.permute.xlu0 %11646
  %vm11712 = vcmask 97344
  %11713 = vst.msk [vmem:[%s11] sm:$0xff] %vm11712, %v11521
  %11714 = vst.msk [vmem:[%s11 + $0x8] sm:$0xff] %vm11712, %v11523
  %11715 = vst.msk [vmem:[%s11 + $0x10] sm:$0xff] %vm11712, %v11525
  %11716 = vst.msk [vmem:[%s11 + $0x18] sm:$0xff] %vm11712, %v11527
  %11717 = vst.msk [vmem:[%s11 + $0x20] sm:$0xff] %vm11712, %v11529
  %11718 = vst.msk [vmem:[%s11 + $0x28] sm:$0xff] %vm11712, %v11531
  %11719 = vst.msk [vmem:[%s11 + $0x30] sm:$0xff] %vm11712, %v11533
  %11720 = vst.msk [vmem:[%s11 + $0x38] sm:$0xff] %vm11712, %v11535
  %11721 = vst.msk [vmem:[%s11 + $0x40] sm:$0xff] %vm11712, %v11537
  %11722 = vst.msk [vmem:[%s11 + $0x48] sm:$0xff] %vm11712, %v11539
  %11723 = vst.msk [vmem:[%s11 + $0x50] sm:$0xff] %vm11712, %v11541
  %11724 = vst.msk [vmem:[%s11 + $0x58] sm:$0xff] %vm11712, %v11543
  %11725 = vst.msk [vmem:[%s11 + $0x60] sm:$0xff] %vm11712, %v11545
  %11726 = vst.msk [vmem:[%s11 + $0x68] sm:$0xff] %vm11712, %v11547
  %11727 = vst.msk [vmem:[%s11 + $0x70] sm:$0xff] %vm11712, %v11549
  %11728 = vst.msk [vmem:[%s11 + $0x78] sm:$0xff] %vm11712, %v11551
  %11729 = vst.msk [vmem:[%s11 + $0x80] sm:$0xff] %vm11712, %v11553
  %11730 = vst.msk [vmem:[%s11 + $0x88] sm:$0xff] %vm11712, %v11555
  %11731 = vst.msk [vmem:[%s11 + $0x90] sm:$0xff] %vm11712, %v11557
  %11732 = vst.msk [vmem:[%s11 + $0x98] sm:$0xff] %vm11712, %v11559
  %11733 = vst.msk [vmem:[%s11 + $0xa0] sm:$0xff] %vm11712, %v11561
  %11734 = vst.msk [vmem:[%s11 + $0xa8] sm:$0xff] %vm11712, %v11563
  %11735 = vst.msk [vmem:[%s11 + $0xb0] sm:$0xff] %vm11712, %v11565
  %11736 = vst.msk [vmem:[%s11 + $0xb8] sm:$0xff] %vm11712, %v11567
  %11737 = vst.msk [vmem:[%s11 + $0xc0] sm:$0xff] %vm11712, %v11569
  %11738 = vst.msk [vmem:[%s11 + $0xc8] sm:$0xff] %vm11712, %v11571
  %11739 = vst.msk [vmem:[%s11 + $0xd0] sm:$0xff] %vm11712, %v11573
  %11740 = vst.msk [vmem:[%s11 + $0xd8] sm:$0xff] %vm11712, %v11575
  %11741 = vst.msk [vmem:[%s11 + $0xe0] sm:$0xff] %vm11712, %v11577
  %11742 = vst.msk [vmem:[%s11 + $0xe8] sm:$0xff] %vm11712, %v11579
  %11743 = vst.msk [vmem:[%s11 + $0xf0] sm:$0xff] %vm11712, %v11581
  %11744 = vst.msk [vmem:[%s11 + $0xf8] sm:$0xff] %vm11712, %v11583
  %11745 = vst.msk [vmem:[%s11 + $0x100] sm:$0xff] %vm11712, %v11585
  %11746 = vst.msk [vmem:[%s11 + $0x108] sm:$0xff] %vm11712, %v11587
  %11747 = vst.msk [vmem:[%s11 + $0x110] sm:$0xff] %vm11712, %v11589
  %11748 = vst.msk [vmem:[%s11 + $0x118] sm:$0xff] %vm11712, %v11591
  %11749 = vst.msk [vmem:[%s11 + $0x120] sm:$0xff] %vm11712, %v11593
  %11750 = vst.msk [vmem:[%s11 + $0x128] sm:$0xff] %vm11712, %v11595
  %11751 = vst.msk [vmem:[%s11 + $0x130] sm:$0xff] %vm11712, %v11597
  %11752 = vst.msk [vmem:[%s11 + $0x138] sm:$0xff] %vm11712, %v11599
  %11753 = vst.msk [vmem:[%s11 + $0x140] sm:$0xff] %vm11712, %v11601
  %11754 = vst.msk [vmem:[%s11 + $0x148] sm:$0xff] %vm11712, %v11603
  %11755 = vst.msk [vmem:[%s11 + $0x150] sm:$0xff] %vm11712, %v11605
  %11756 = vst.msk [vmem:[%s11 + $0x158] sm:$0xff] %vm11712, %v11607
  %11757 = vst.msk [vmem:[%s11 + $0x160] sm:$0xff] %vm11712, %v11609
  %11758 = vst.msk [vmem:[%s11 + $0x168] sm:$0xff] %vm11712, %v11611
  %11759 = vst.msk [vmem:[%s11 + $0x170] sm:$0xff] %vm11712, %v11613
  %11760 = vst.msk [vmem:[%s11 + $0x178] sm:$0xff] %vm11712, %v11615
  %11761 = vst.msk [vmem:[%s11 + $0x180] sm:$0xff] %vm11712, %v11617
  %11762 = vst.msk [vmem:[%s11 + $0x188] sm:$0xff] %vm11712, %v11619
  %11763 = vst.msk [vmem:[%s11 + $0x190] sm:$0xff] %vm11712, %v11621
  %11764 = vst.msk [vmem:[%s11 + $0x198] sm:$0xff] %vm11712, %v11623
  %11765 = vst.msk [vmem:[%s11 + $0x1a0] sm:$0xff] %vm11712, %v11625
  %11766 = vst.msk [vmem:[%s11 + $0x1a8] sm:$0xff] %vm11712, %v11627
  %11767 = vst.msk [vmem:[%s11 + $0x1b0] sm:$0xff] %vm11712, %v11629
  %11768 = vst.msk [vmem:[%s11 + $0x1b8] sm:$0xff] %vm11712, %v11631
  %11769 = vst.msk [vmem:[%s11 + $0x1c0] sm:$0xff] %vm11712, %v11633
  %11770 = vst.msk [vmem:[%s11 + $0x1c8] sm:$0xff] %vm11712, %v11635
  %11771 = vst.msk [vmem:[%s11 + $0x1d0] sm:$0xff] %vm11712, %v11637
  %11772 = vst.msk [vmem:[%s11 + $0x1d8] sm:$0xff] %vm11712, %v11639
  %11773 = vst.msk [vmem:[%s11 + $0x1e0] sm:$0xff] %vm11712, %v11641
  %11774 = vst.msk [vmem:[%s11 + $0x1e8] sm:$0xff] %vm11712, %v11643
  %11775 = vst.msk [vmem:[%s11 + $0x1f0] sm:$0xff] %vm11712, %v11645
  %11776 = vst.msk [vmem:[%s11 + $0x1f8] sm:$0xff] %vm11712, %v11647
  // Predicated region
  $region46: #{prcn_forward.1} parent=0 // pred_check
    _
  $region47: #{prcn_forward.1} parent=0 // pred_check_branch
    %11778 = sbr.rel (0) target = $region49
  $region48: #{prcn_forward.1} parent=0 // pred_region
    _
  $region49: #{prcn_forward.1} parent=0 // pred_fallthru
    _
  // Predicated region
  $region50: #{prcn_forward.1} parent=0 // pred_check
    _
  $region51: #{prcn_forward.1} parent=0 // pred_check_branch
    %11780 = sbr.rel (0) target = $region53
  $region52: #{prcn_forward.1} parent=0 // pred_region
    _
  $region53: #{prcn_forward.1} parent=0 // pred_fallthru
    _

</llo_original>
